<compile_context>
chip_gen: v6e
topology: v6e:2x2x1
jax: 0.10.0
libtpu: 0.0.40
codegen_flags: <defaults>
</compile_context>

<pallas_src>
import math
import functools

import jax
import jax.numpy as jnp
from jax.experimental import pallas as pl
from jax.experimental.pallas import tpu as pltpu

EPS = 1e-5  # PyTorch LayerNorm default eps


# ----------------------------- in-kernel helpers ----------------------------

def _layer_norm(z, gamma, beta):
    mu = jnp.mean(z, axis=-1, keepdims=True)
    var = jnp.mean((z - mu) ** 2, axis=-1, keepdims=True)
    return (z - mu) * jax.lax.rsqrt(var + EPS) * gamma + beta


def _mha_compute(xq, xkv, wq, bq, wkv, bkv, wo, bo, gamma, beta, mask,
                 attn_ref, nhead, scale):
    """Fused MHA sub-block: QKV proj -> per-head softmax attention (batched
    over B) -> single out-projection -> residual add -> LayerNorm.
    xq: (B, Lq, E) value, xkv: (B, Lk, E) value, attn_ref: (B, Lq, E) VMEM."""
    B, Lq, E = xq.shape
    Lk = xkv.shape[1]
    dh = E // nhead

    xq2 = xq.reshape(B * Lq, E)      # leading-dim merge: layout preserving
    xkv2 = xkv.reshape(B * Lk, E)

    q = (jnp.dot(xq2, wq, preferred_element_type=jnp.float32) + bq
         ).reshape(B, Lq, E)
    kv = jnp.dot(xkv2, wkv, preferred_element_type=jnp.float32) + bkv
    k = kv[:, :E].reshape(B, Lk, E)
    v = kv[:, E:].reshape(B, Lk, E)

    for h in range(nhead):
        sl = slice(h * dh, (h + 1) * dh)
        s = jnp.einsum('bqd,bkd->bqk', q[:, :, sl], k[:, :, sl],
                       preferred_element_type=jnp.float32) * scale
        if mask is not None:
            s = s + mask
        s = s - jnp.max(s, axis=-1, keepdims=True)
        p = jnp.exp(s)
        p = p * pl.reciprocal(jnp.sum(p, axis=-1, keepdims=True), approx=True)
        # write head output into its lane slot of the concat buffer
        attn_ref[:, :, sl] = jnp.einsum('bqk,bkd->bqd', p, v[:, :, sl],
                                        preferred_element_type=jnp.float32)

    attn2 = attn_ref[...].reshape(B * Lq, E)
    proj = jnp.dot(attn2, wo, preferred_element_type=jnp.float32) + bo
    z = _layer_norm(xq2 + proj, gamma, beta)          # post-norm
    return z.reshape(B, Lq, E)


def _ffn_compute(x, w1, b1, w2, b2, gamma, beta):
    """Fused FFN sub-block: lin1 + relu + lin2 + residual + LayerNorm."""
    B, L, E = x.shape
    x2 = x.reshape(B * L, E)
    h = jnp.maximum(jnp.dot(x2, w1, preferred_element_type=jnp.float32) + b1,
                    0.0)
    ff = jnp.dot(h, w2, preferred_element_type=jnp.float32) + b2
    z = _layer_norm(x2 + ff, gamma, beta)
    return z.reshape(B, L, E)


# ------------------------------ stack kernels -------------------------------

def _encoder_stack_kernel(src_ref, *rest, nhead, scale, use_mask):
    """One grid step == one encoder layer.  Activation carried in VMEM."""
    idx = 0
    mask = None
    if use_mask:
        mask = rest[0][...]
        idx = 1
    (wq, bq, wkv, bkv, wo, bo, g1, be1,
     w1, bf1, w2, bf2, g2, be2,
     out_ref, act_ref, attn_ref) = rest[idx:]

    l = pl.program_id(0)

    @pl.when(l == 0)
    def _():
        act_ref[...] = src_ref[...]

    x = act_ref[...]
    x = _mha_compute(x, x, wq[0], bq[0], wkv[0], bkv[0], wo[0], bo[0],
                     g1[0], be1[0], mask, attn_ref, nhead, scale)
    x = _ffn_compute(x, w1[0], bf1[0], w2[0], bf2[0], g2[0], be2[0])
    act_ref[...] = x
    out_ref[...] = x


def _decoder_stack_kernel(tgt_ref, mem_ref, *rest, nhead, scale,
                          use_tgt_mask, use_mem_mask):
    """One grid step == one decoder layer (self-attn, cross-attn, FFN)."""
    idx = 0
    tmask = None
    mmask = None
    if use_tgt_mask:
        tmask = rest[idx][...]
        idx += 1
    if use_mem_mask:
        mmask = rest[idx][...]
        idx += 1
    (s_wq, s_bq, s_wkv, s_bkv, s_wo, s_bo, g1, be1,
     c_wq, c_bq, c_wkv, c_bkv, c_wo, c_bo, g2, be2,
     w1, bf1, w2, bf2, g3, be3,
     out_ref, act_ref, attn_ref) = rest[idx:]

    l = pl.program_id(0)

    @pl.when(l == 0)
    def _():
        act_ref[...] = tgt_ref[...]

    x = act_ref[...]
    mem = mem_ref[...]
    x = _mha_compute(x, x, s_wq[0], s_bq[0], s_wkv[0], s_bkv[0], s_wo[0],
                     s_bo[0], g1[0], be1[0], tmask, attn_ref, nhead, scale)
    x = _mha_compute(x, mem, c_wq[0], c_bq[0], c_wkv[0], c_bkv[0], c_wo[0],
                     c_bo[0], g2[0], be2[0], mmask, attn_ref, nhead, scale)
    x = _ffn_compute(x, w1[0], bf1[0], w2[0], bf2[0], g3[0], be3[0])
    act_ref[...] = x
    out_ref[...] = x


# ------------------------------ BlockSpec helpers ----------------------------

def _layer_spec(trailing):
    """Per-layer weight block: pick layer l of a (L, *trailing) stacked array."""
    trailing = tuple(trailing)
    zeros = (0,) * len(trailing)
    return pl.BlockSpec((1,) + trailing, lambda l: (l,) + zeros)


def _full_spec(shape):
    """Full-array block, resident across all layer steps."""
    shape = tuple(shape)
    zeros = (0,) * len(shape)
    return pl.BlockSpec(shape, lambda l: zeros)


_ENC_WEIGHT_NAMES = ("wq", "bq", "wkv", "bkv", "wo", "bo", "g1", "be1",
                     "w1", "bf1", "w2", "bf2", "g2", "be2")

_DEC_WEIGHT_NAMES = ("s_wq", "s_bq", "s_wkv", "s_bkv", "s_wo", "s_bo",
                     "g1", "be1",
                     "c_wq", "c_bq", "c_wkv", "c_bkv", "c_wo", "c_bo",
                     "g2", "be2",
                     "w1", "bf1", "w2", "bf2", "g3", "be3")


# ------------------------------ stack wrappers -------------------------------

def encoder_stack(src_b, p, nhead, src_mask=None):
    """src_b: (B, S, E). Returns encoder memory (B, S, E)."""
    B, S, E = src_b.shape
    n_layers = p["wq"].shape[0]
    scale = 1.0 / math.sqrt(E // nhead)
    use_mask = src_mask is not None

    kern = functools.partial(_encoder_stack_kernel, nhead=nhead, scale=scale,
                             use_mask=use_mask)
    args = [src_b]
    specs = [_full_spec((B, S, E))]
    if use_mask:
        args.append(src_mask)
        specs.append(_full_spec(src_mask.shape))
    for name in _ENC_WEIGHT_NAMES:
        w = p[name]
        args.append(w)
        specs.append(_layer_spec(w.shape[1:]))

    return pl.pallas_call(
        kern,
        out_shape=jax.ShapeDtypeStruct((B, S, E), jnp.float32),
        grid=(n_layers,),
        in_specs=specs,
        out_specs=pl.BlockSpec((B, S, E), lambda l: (0, 0, 0)),
        scratch_shapes=[pltpu.VMEM((B, S, E), jnp.float32),   # activation carry
                        pltpu.VMEM((B, S, E), jnp.float32)],  # head concat buf
        compiler_params=pltpu.CompilerParams(
            dimension_semantics=("arbitrary",)),
    )(*args)


def decoder_stack(tgt_b, memory, p, nhead, tgt_mask=None, memory_mask=None):
    """tgt_b: (B, T, E), memory: (B, S, E). Returns decoder output (B, T, E)."""
    B, T, E = tgt_b.shape
    S = memory.shape[1]
    n_layers = p["s_wq"].shape[0]
    scale = 1.0 / math.sqrt(E // nhead)
    use_tmask = tgt_mask is not None
    use_mmask = memory_mask is not None

    kern = functools.partial(_decoder_stack_kernel, nhead=nhead, scale=scale,
                             use_tgt_mask=use_tmask, use_mem_mask=use_mmask)
    args = [tgt_b, memory]
    specs = [_full_spec((B, T, E)), _full_spec((B, S, E))]
    if use_tmask:
        args.append(tgt_mask)
        specs.append(_full_spec(tgt_mask.shape))
    if use_mmask:
        args.append(memory_mask)
        specs.append(_full_spec(memory_mask.shape))
    for name in _DEC_WEIGHT_NAMES:
        w = p[name]
        args.append(w)
        specs.append(_layer_spec(w.shape[1:]))

    return pl.pallas_call(
        kern,
        out_shape=jax.ShapeDtypeStruct((B, T, E), jnp.float32),
        grid=(n_layers,),
        in_specs=specs,
        out_specs=pl.BlockSpec((B, T, E), lambda l: (0, 0, 0)),
        scratch_shapes=[pltpu.VMEM((B, T, E), jnp.float32),   # activation carry
                        pltpu.VMEM((B, T, E), jnp.float32)],  # head concat buf
        compiler_params=pltpu.CompilerParams(
            dimension_semantics=("arbitrary",)),
    )(*args)


# --------------------------------- forward ----------------------------------

def _transformer_forward(src, tgt, enc_params, dec_params, nhead,
                         src_mask=None, tgt_mask=None, memory_mask=None):
    # src: (S, B, E), tgt: (T, B, E) -- PyTorch batch_first=False layout.
    src_b = jnp.transpose(src, (1, 0, 2))
    tgt_b = jnp.transpose(tgt, (1, 0, 2))
    memory = encoder_stack(src_b, enc_params, nhead, src_mask)
    out = decoder_stack(tgt_b, memory, dec_params, nhead, tgt_mask, memory_mask)
    # normalize_before=False -> encoder/decoder final norm are None
    return jnp.transpose(out, (1, 0, 2))


transformer_forward = jax.jit(_transformer_forward, static_argnames=("nhead",))


# ------------------------------- param init ---------------------------------

def _xavier(key, shape):
    fan_out, fan_in = shape
    bound = math.sqrt(6.0 / (fan_in + fan_out))
    return jax.random.uniform(key, shape, jnp.float32, -bound, bound)


def _mha_weights(key, E):
    k1, k2 = jax.random.split(key)
    in_w = _xavier(k1, (3 * E, E))     # PyTorch packed (3E, E) [q; k; v]
    out_w = _xavier(k2, (E, E))
    return dict(
        wq=jnp.asarray(in_w[:E].T),                    # (E, E)
        bq=jnp.zeros((1, E), jnp.float32),
        wkv=jnp.asarray(in_w[E:].T),                   # (E, 2E) = [Wk.T | Wv.T]
        bkv=jnp.zeros((1, 2 * E), jnp.float32),
        wo=jnp.asarray(out_w.T),                       # (E, E)
        bo=jnp.zeros((1, E), jnp.float32),
    )


def init_encoder_params(key, n_layers, E, F):
    layers = []
    for i in range(n_layers):
        k = jax.random.fold_in(key, i)
        k1, k2, k3 = jax.random.split(k, 3)
        layers.append(dict(
            **_mha_weights(k1, E),
            g1=jnp.ones((1, E), jnp.float32), be1=jnp.zeros((1, E), jnp.float32),
            w1=jnp.asarray(_xavier(k2, (F, E)).T),      # (E, F)
            bf1=jnp.zeros((1, F), jnp.float32),
            w2=jnp.asarray(_xavier(k3, (E, F)).T),      # (F, E)
            bf2=jnp.zeros((1, E), jnp.float32),
            g2=jnp.ones((1, E), jnp.float32), be2=jnp.zeros((1, E), jnp.float32),
        ))
    return {n: jnp.stack([l[n] for l in layers]) for n in _ENC_WEIGHT_NAMES}


def init_decoder_params(key, n_layers, E, F):
    layers = []
    for i in range(n_layers):
        k = jax.random.fold_in(key, i)
        k1, k2, k3, k4 = jax.random.split(k, 4)
        sa = {"s_" + n: v for n, v in _mha_weights(k1, E).items()}
        ca = {"c_" + n: v for n, v in _mha_weights(k2, E).items()}
        layers.append(dict(
            **sa, **ca,
            g1=jnp.ones((1, E), jnp.float32), be1=jnp.zeros((1, E), jnp.float32),
            g2=jnp.ones((1, E), jnp.float32), be2=jnp.zeros((1, E), jnp.float32),
            w1=jnp.asarray(_xavier(k3, (F, E)).T),
            bf1=jnp.zeros((1, F), jnp.float32),
            w2=jnp.asarray(_xavier(k4, (E, F)).T),
            bf2=jnp.zeros((1, E), jnp.float32),
            g3=jnp.ones((1, E), jnp.float32), be3=jnp.zeros((1, E), jnp.float32),
        ))
    return {n: jnp.stack([l[n] for l in layers]) for n in _DEC_WEIGHT_NAMES}


# ---------------------------------- main -------------------------------------

if __name__ == "__main__":
    d_model, nhead, dim_ff = 32, 4, 64
    num_encoder_layers, num_decoder_layers = 1, 4
    S, T, B = 8, 8, 2   # src len, tgt len, batch

    key = jax.random.PRNGKey(0)
    k_enc, k_dec, ks, kt = jax.random.split(key, 4)

    enc_params = init_encoder_params(k_enc, num_encoder_layers, d_model, dim_ff)
    dec_params = init_decoder_params(k_dec, num_decoder_layers, d_model, dim_ff)

    src = jax.random.normal(ks, (S, B, d_model), jnp.float32)
    tgt = jax.random.normal(kt, (T, B, d_model), jnp.float32)

    # causal tgt mask (additive -inf above diagonal, like
    # nn.Transformer.generate_square_subsequent_mask)
    causal = jnp.where(
        jnp.arange(T)[:, None] >= jnp.arange(T)[None, :], 0.0, -jnp.inf
    ).astype(jnp.float32)

    out = transformer_forward(src, tgt, enc_params, dec_params, nhead=nhead,
                              src_mask=None, tgt_mask=causal,
                              memory_mask=None)
    out = jax.block_until_ready(out)
    assert out.shape == (T, B, d_model)
    assert bool(jnp.all(jnp.isfinite(out)))
    print("KERNEL_OK")
</pallas_src>

<mosaic_0001>
module attributes {stable_mosaic.version = 11 : i64} {
  func.func @_encoder_stack_kernel(%arg0: i32, %arg1: memref<2x8x32xf32, #tpu.memory_space<vmem>>, %arg2: memref<1x32x32xf32, #tpu.memory_space<vmem>>, %arg3: memref<1x1x32xf32, #tpu.memory_space<vmem>>, %arg4: memref<1x32x64xf32, #tpu.memory_space<vmem>>, %arg5: memref<1x1x64xf32, #tpu.memory_space<vmem>>, %arg6: memref<1x32x32xf32, #tpu.memory_space<vmem>>, %arg7: memref<1x1x32xf32, #tpu.memory_space<vmem>>, %arg8: memref<1x1x32xf32, #tpu.memory_space<vmem>>, %arg9: memref<1x1x32xf32, #tpu.memory_space<vmem>>, %arg10: memref<1x32x64xf32, #tpu.memory_space<vmem>>, %arg11: memref<1x1x64xf32, #tpu.memory_space<vmem>>, %arg12: memref<1x64x32xf32, #tpu.memory_space<vmem>>, %arg13: memref<1x1x32xf32, #tpu.memory_space<vmem>>, %arg14: memref<1x1x32xf32, #tpu.memory_space<vmem>>, %arg15: memref<1x1x32xf32, #tpu.memory_space<vmem>>, %arg16: memref<2x8x32xf32, #tpu.memory_space<vmem>>, %arg17: memref<2x8x32xf32, #tpu.memory_space<vmem>>, %arg18: memref<2x8x32xf32, #tpu.memory_space<vmem>>) attributes {dimension_semantics = [#tpu.dimension_semantics<arbitrary>], iteration_bounds = array<i64: 1>, scalar_prefetch = 0 : i64, scratch_operands = 2 : i64, tpu.core_type = #tpu.core_type<tc>, window_params = [{pipeline_mode = #tpu.pipeline_mode<synchronous>, transform_indices = @transform_0, window_bounds = array<i64: 2, 8, 32>}, {transform_indices = @transform_1, window_bounds = array<i64: 1, 32, 32>}, {transform_indices = @transform_2, window_bounds = array<i64: 1, 1, 32>}, {transform_indices = @transform_3, window_bounds = array<i64: 1, 32, 64>}, {transform_indices = @transform_4, window_bounds = array<i64: 1, 1, 64>}, {transform_indices = @transform_5, window_bounds = array<i64: 1, 32, 32>}, {transform_indices = @transform_6, window_bounds = array<i64: 1, 1, 32>}, {transform_indices = @transform_7, window_bounds = array<i64: 1, 1, 32>}, {transform_indices = @transform_8, window_bounds = array<i64: 1, 1, 32>}, {transform_indices = @transform_9, window_bounds = array<i64: 1, 32, 64>}, {transform_indices = @transform_10, window_bounds = array<i64: 1, 1, 64>}, {transform_indices = @transform_11, window_bounds = array<i64: 1, 64, 32>}, {transform_indices = @transform_12, window_bounds = array<i64: 1, 1, 32>}, {transform_indices = @transform_13, window_bounds = array<i64: 1, 1, 32>}, {transform_indices = @transform_14, window_bounds = array<i64: 1, 1, 32>}, {pipeline_mode = #tpu.pipeline_mode<synchronous>, transform_indices = @transform_15, window_bounds = array<i64: 2, 8, 32>}]} {
    %c0_i32 = arith.constant 0 : i32
    %0 = arith.cmpi eq, %arg0, %c0_i32 : i32
    %1 = arith.extui %0 : i1 to i32
    %c0_i32_0 = arith.constant 0 : i32
    %2 = arith.cmpi ne, %1, %c0_i32_0 : i32
    scf.if %2 {
      %c0_98 = arith.constant 0 : index
      %c0_99 = arith.constant 0 : index
      %c0_100 = arith.constant 0 : index
      %181 = vector.load %arg1[%c0_98, %c0_99, %c0_100] : memref<2x8x32xf32, #tpu.memory_space<vmem>>, vector<2x8x32xf32>
      %c0_101 = arith.constant 0 : index
      %c0_102 = arith.constant 0 : index
      %c0_103 = arith.constant 0 : index
      %182 = vector.load %arg17[%c0_101, %c0_102, %c0_103] : memref<2x8x32xf32, #tpu.memory_space<vmem>>, vector<2x8x32xf32>
      tpu.vector_store %arg17[%c0_101, %c0_102, %c0_103], %181 {strides = array<i32>} : memref<2x8x32xf32, #tpu.memory_space<vmem>>, vector<2x8x32xf32>,
    } else {
    }
    %c0 = arith.constant 0 : index
    %c0_1 = arith.constant 0 : index
    %c0_2 = arith.constant 0 : index
    %3 = vector.load %arg17[%c0, %c0_1, %c0_2] : memref<2x8x32xf32, #tpu.memory_space<vmem>>, vector<2x8x32xf32>
    %c0_3 = arith.constant 0 : index
    %c0_4 = arith.constant 0 : index
    %c0_5 = arith.constant 0 : index
    %4 = vector.load %arg2[%c0_3, %c0_4, %c0_5] : memref<1x32x32xf32, #tpu.memory_space<vmem>>, vector<1x32x32xf32>
    %5 = vector.shape_cast %4 : vector<1x32x32xf32> to vector<32x32xf32>
    %c0_6 = arith.constant 0 : index
    %c0_7 = arith.constant 0 : index
    %c0_8 = arith.constant 0 : index
    %6 = vector.load %arg3[%c0_6, %c0_7, %c0_8] : memref<1x1x32xf32, #tpu.memory_space<vmem>>, vector<1x1x32xf32>
    %7 = vector.shape_cast %6 : vector<1x1x32xf32> to vector<1x32xf32>
    %c0_9 = arith.constant 0 : index
    %c0_10 = arith.constant 0 : index
    %c0_11 = arith.constant 0 : index
    %8 = vector.load %arg4[%c0_9, %c0_10, %c0_11] : memref<1x32x64xf32, #tpu.memory_space<vmem>>, vector<1x32x64xf32>
    %9 = vector.shape_cast %8 : vector<1x32x64xf32> to vector<32x64xf32>
    %c0_12 = arith.constant 0 : index
    %c0_13 = arith.constant 0 : index
    %c0_14 = arith.constant 0 : index
    %10 = vector.load %arg5[%c0_12, %c0_13, %c0_14] : memref<1x1x64xf32, #tpu.memory_space<vmem>>, vector<1x1x64xf32>
    %11 = vector.shape_cast %10 : vector<1x1x64xf32> to vector<1x64xf32>
    %c0_15 = arith.constant 0 : index
    %c0_16 = arith.constant 0 : index
    %c0_17 = arith.constant 0 : index
    %12 = vector.load %arg6[%c0_15, %c0_16, %c0_17] : memref<1x32x32xf32, #tpu.memory_space<vmem>>, vector<1x32x32xf32>
    %13 = vector.shape_cast %12 : vector<1x32x32xf32> to vector<32x32xf32>
    %c0_18 = arith.constant 0 : index
    %c0_19 = arith.constant 0 : index
    %c0_20 = arith.constant 0 : index
    %14 = vector.load %arg7[%c0_18, %c0_19, %c0_20] : memref<1x1x32xf32, #tpu.memory_space<vmem>>, vector<1x1x32xf32>
    %15 = vector.shape_cast %14 : vector<1x1x32xf32> to vector<1x32xf32>
    %c0_21 = arith.constant 0 : index
    %c0_22 = arith.constant 0 : index
    %c0_23 = arith.constant 0 : index
    %16 = vector.load %arg8[%c0_21, %c0_22, %c0_23] : memref<1x1x32xf32, #tpu.memory_space<vmem>>, vector<1x1x32xf32>
    %17 = vector.shape_cast %16 : vector<1x1x32xf32> to vector<1x32xf32>
    %c0_24 = arith.constant 0 : index
    %c0_25 = arith.constant 0 : index
    %c0_26 = arith.constant 0 : index
    %18 = vector.load %arg9[%c0_24, %c0_25, %c0_26] : memref<1x1x32xf32, #tpu.memory_space<vmem>>, vector<1x1x32xf32>
    %19 = vector.shape_cast %18 : vector<1x1x32xf32> to vector<1x32xf32>
    %20 = vector.shape_cast %3 : vector<2x8x32xf32> to vector<16x32xf32>
    %21 = vector.shape_cast %3 : vector<2x8x32xf32> to vector<16x32xf32>
    %cst = arith.constant dense<0.000000e+00> : vector<16x32xf32>
    %22 = tpu.matmul %20, %5, %cst {dimension_numbers = #tpu.dot_dimension_numbers<[1], [0], [0], [1], [0, 0, 1, 1], [], []>} : vector<16x32xf32>, vector<32x32xf32>, vector<16x32xf32> -> vector<16x32xf32>
    %23 = vector.broadcast %7 : vector<1x32xf32> to vector<16x32xf32>
    %24 = arith.addf %22, %23 : vector<16x32xf32>
    %25 = vector.shape_cast %24 : vector<16x32xf32> to vector<2x8x32xf32>
    %cst_27 = arith.constant dense<0.000000e+00> : vector<16x64xf32>
    %26 = tpu.matmul %21, %9, %cst_27 {dimension_numbers = #tpu.dot_dimension_numbers<[1], [0], [0], [1], [0, 0, 1, 1], [], []>} : vector<16x32xf32>, vector<32x64xf32>, vector<16x64xf32> -> vector<16x64xf32>
    %27 = vector.broadcast %11 : vector<1x64xf32> to vector<16x64xf32>
    %28 = arith.addf %26, %27 : vector<16x64xf32>
    %29 = vector.extract_strided_slice %28 {offsets = [0, 0], sizes = [16, 32], strides = [1, 1]} : vector<16x64xf32> to vector<16x32xf32>
    %30 = vector.shape_cast %29 : vector<16x32xf32> to vector<2x8x32xf32>
    %31 = vector.extract_strided_slice %28 {offsets = [0, 32], sizes = [16, 32], strides = [1, 1]} : vector<16x64xf32> to vector<16x32xf32>
    %32 = vector.shape_cast %31 : vector<16x32xf32> to vector<2x8x32xf32>
    %33 = vector.extract_strided_slice %25 {offsets = [0, 0, 0], sizes = [2, 8, 8], strides = [1, 1, 1]} : vector<2x8x32xf32> to vector<2x8x8xf32>
    %34 = vector.extract_strided_slice %30 {offsets = [0, 0, 0], sizes = [2, 8, 8], strides = [1, 1, 1]} : vector<2x8x32xf32> to vector<2x8x8xf32>
    "tpu.trace_start"() <{level = 10 : i32, message = "bqd,bkd->bqk"}> : () -> ()
    %cst_28 = arith.constant dense<0.000000e+00> : vector<2x8x8xf32>
    %35 = tpu.matmul %33, %34, %cst_28 {dimension_numbers = #tpu.dot_dimension_numbers<[2], [2], [1], [1], [0, 0, 0, 1, 1, 1], [0], [0]>} : vector<2x8x8xf32>, vector<2x8x8xf32>, vector<2x8x8xf32> -> vector<2x8x8xf32>
    "tpu.trace_stop"() : () -> ()
    %cst_29 = arith.constant 0.353553385 : f32
    %36 = vector.broadcast %cst_29 : f32 to vector<2x8x8xf32>
    %37 = arith.mulf %35, %36 : vector<2x8x8xf32>
    %cst_30 = arith.constant dense<0xFF800000> : vector<2x8xf32>
    %38 = vector.multi_reduction <maximumf>, %37, %cst_30 [2] : vector<2x8x8xf32> to vector<2x8xf32>
    %39 = vector.shape_cast %38 : vector<2x8xf32> to vector<2x8x1xf32>
    %40 = vector.broadcast %39 : vector<2x8x1xf32> to vector<2x8x8xf32>
    %41 = arith.subf %37, %40 : vector<2x8x8xf32>
    %42 = math.exp %41 : vector<2x8x8xf32>
    %cst_31 = arith.constant dense<0.000000e+00> : vector<2x8xf32>
    %43 = vector.multi_reduction <add>, %42, %cst_31 [2] : vector<2x8x8xf32> to vector<2x8xf32>
    %44 = vector.shape_cast %43 : vector<2x8xf32> to vector<2x8x1xf32>
    %45 = tpu.reciprocal %44 {approx = true} : vector<2x8x1xf32> -> vector<2x8x1xf32>
    %46 = vector.broadcast %45 : vector<2x8x1xf32> to vector<2x8x8xf32>
    %47 = arith.mulf %42, %46 : vector<2x8x8xf32>
    %48 = vector.extract_strided_slice %32 {offsets = [0, 0, 0], sizes = [2, 8, 8], strides = [1, 1, 1]} : vector<2x8x32xf32> to vector<2x8x8xf32>
    "tpu.trace_start"() <{level = 10 : i32, message = "bqk,bkd->bqd"}> : () -> ()
    %cst_32 = arith.constant dense<0.000000e+00> : vector<2x8x8xf32>
    %49 = tpu.matmul %47, %48, %cst_32 {dimension_numbers = #tpu.dot_dimension_numbers<[2], [1], [1], [2], [0, 0, 0, 1, 1, 2], [0], [0]>} : vector<2x8x8xf32>, vector<2x8x8xf32>, vector<2x8x8xf32> -> vector<2x8x8xf32>
    "tpu.trace_stop"() : () -> ()
    %c0_33 = arith.constant 0 : index
    %c0_34 = arith.constant 0 : index
    %c0_35 = arith.constant 0 : index
    %50 = vector.load %arg18[%c0_33, %c0_34, %c0_35] : memref<2x8x32xf32, #tpu.memory_space<vmem>>, vector<2x8x8xf32>
    tpu.vector_store %arg18[%c0_33, %c0_34, %c0_35], %49 {strides = array<i32>} : memref<2x8x32xf32, #tpu.memory_space<vmem>>, vector<2x8x8xf32>,
    %51 = vector.extract_strided_slice %25 {offsets = [0, 0, 8], sizes = [2, 8, 8], strides = [1, 1, 1]} : vector<2x8x32xf32> to vector<2x8x8xf32>
    %52 = vector.extract_strided_slice %30 {offsets = [0, 0, 8], sizes = [2, 8, 8], strides = [1, 1, 1]} : vector<2x8x32xf32> to vector<2x8x8xf32>
    "tpu.trace_start"() <{level = 10 : i32, message = "bqd,bkd->bqk"}> : () -> ()
    %cst_36 = arith.constant dense<0.000000e+00> : vector<2x8x8xf32>
    %53 = tpu.matmul %51, %52, %cst_36 {dimension_numbers = #tpu.dot_dimension_numbers<[2], [2], [1], [1], [0, 0, 0, 1, 1, 1], [0], [0]>} : vector<2x8x8xf32>, vector<2x8x8xf32>, vector<2x8x8xf32> -> vector<2x8x8xf32>
    "tpu.trace_stop"() : () -> ()
    %cst_37 = arith.constant 0.353553385 : f32
    %54 = vector.broadcast %cst_37 : f32 to vector<2x8x8xf32>
    %55 = arith.mulf %53, %54 : vector<2x8x8xf32>
    %cst_38 = arith.constant dense<0xFF800000> : vector<2x8xf32>
    %56 = vector.multi_reduction <maximumf>, %55, %cst_38 [2] : vector<2x8x8xf32> to vector<2x8xf32>
    %57 = vector.shape_cast %56 : vector<2x8xf32> to vector<2x8x1xf32>
    %58 = vector.broadcast %57 : vector<2x8x1xf32> to vector<2x8x8xf32>
    %59 = arith.subf %55, %58 : vector<2x8x8xf32>
    %60 = math.exp %59 : vector<2x8x8xf32>
    %cst_39 = arith.constant dense<0.000000e+00> : vector<2x8xf32>
    %61 = vector.multi_reduction <add>, %60, %cst_39 [2] : vector<2x8x8xf32> to vector<2x8xf32>
    %62 = vector.shape_cast %61 : vector<2x8xf32> to vector<2x8x1xf32>
    %63 = tpu.reciprocal %62 {approx = true} : vector<2x8x1xf32> -> vector<2x8x1xf32>
    %64 = vector.broadcast %63 : vector<2x8x1xf32> to vector<2x8x8xf32>
    %65 = arith.mulf %60, %64 : vector<2x8x8xf32>
    %66 = vector.extract_strided_slice %32 {offsets = [0, 0, 8], sizes = [2, 8, 8], strides = [1, 1, 1]} : vector<2x8x32xf32> to vector<2x8x8xf32>
    "tpu.trace_start"() <{level = 10 : i32, message = "bqk,bkd->bqd"}> : () -> ()
    %cst_40 = arith.constant dense<0.000000e+00> : vector<2x8x8xf32>
    %67 = tpu.matmul %65, %66, %cst_40 {dimension_numbers = #tpu.dot_dimension_numbers<[2], [1], [1], [2], [0, 0, 0, 1, 1, 2], [0], [0]>} : vector<2x8x8xf32>, vector<2x8x8xf32>, vector<2x8x8xf32> -> vector<2x8x8xf32>
    "tpu.trace_stop"() : () -> ()
    %c0_41 = arith.constant 0 : index
    %c0_42 = arith.constant 0 : index
    %c8 = arith.constant 8 : index
    %68 = vector.load %arg18[%c0_41, %c0_42, %c8] : memref<2x8x32xf32, #tpu.memory_space<vmem>>, vector<2x8x8xf32>
    tpu.vector_store %arg18[%c0_41, %c0_42, %c8], %67 {strides = array<i32>} : memref<2x8x32xf32, #tpu.memory_space<vmem>>, vector<2x8x8xf32>,
    %69 = vector.extract_strided_slice %25 {offsets = [0, 0, 16], sizes = [2, 8, 8], strides = [1, 1, 1]} : vector<2x8x32xf32> to vector<2x8x8xf32>
    %70 = vector.extract_strided_slice %30 {offsets = [0, 0, 16], sizes = [2, 8, 8], strides = [1, 1, 1]} : vector<2x8x32xf32> to vector<2x8x8xf32>
    "tpu.trace_start"() <{level = 10 : i32, message = "bqd,bkd->bqk"}> : () -> ()
    %cst_43 = arith.constant dense<0.000000e+00> : vector<2x8x8xf32>
    %71 = tpu.matmul %69, %70, %cst_43 {dimension_numbers = #tpu.dot_dimension_numbers<[2], [2], [1], [1], [0, 0, 0, 1, 1, 1], [0], [0]>} : vector<2x8x8xf32>, vector<2x8x8xf32>, vector<2x8x8xf32> -> vector<2x8x8xf32>
    "tpu.trace_stop"() : () -> ()
    %cst_44 = arith.constant 0.353553385 : f32
    %72 = vector.broadcast %cst_44 : f32 to vector<2x8x8xf32>
    %73 = arith.mulf %71, %72 : vector<2x8x8xf32>
    %cst_45 = arith.constant dense<0xFF800000> : vector<2x8xf32>
    %74 = vector.multi_reduction <maximumf>, %73, %cst_45 [2] : vector<2x8x8xf32> to vector<2x8xf32>
    %75 = vector.shape_cast %74 : vector<2x8xf32> to vector<2x8x1xf32>
    %76 = vector.broadcast %75 : vector<2x8x1xf32> to vector<2x8x8xf32>
    %77 = arith.subf %73, %76 : vector<2x8x8xf32>
    %78 = math.exp %77 : vector<2x8x8xf32>
    %cst_46 = arith.constant dense<0.000000e+00> : vector<2x8xf32>
    %79 = vector.multi_reduction <add>, %78, %cst_46 [2] : vector<2x8x8xf32> to vector<2x8xf32>
    %80 = vector.shape_cast %79 : vector<2x8xf32> to vector<2x8x1xf32>
    %81 = tpu.reciprocal %80 {approx = true} : vector<2x8x1xf32> -> vector<2x8x1xf32>
    %82 = vector.broadcast %81 : vector<2x8x1xf32> to vector<2x8x8xf32>
    %83 = arith.mulf %78, %82 : vector<2x8x8xf32>
    %84 = vector.extract_strided_slice %32 {offsets = [0, 0, 16], sizes = [2, 8, 8], strides = [1, 1, 1]} : vector<2x8x32xf32> to vector<2x8x8xf32>
    "tpu.trace_start"() <{level = 10 : i32, message = "bqk,bkd->bqd"}> : () -> ()
    %cst_47 = arith.constant dense<0.000000e+00> : vector<2x8x8xf32>
    %85 = tpu.matmul %83, %84, %cst_47 {dimension_numbers = #tpu.dot_dimension_numbers<[2], [1], [1], [2], [0, 0, 0, 1, 1, 2], [0], [0]>} : vector<2x8x8xf32>, vector<2x8x8xf32>, vector<2x8x8xf32> -> vector<2x8x8xf32>
    "tpu.trace_stop"() : () -> ()
    %c0_48 = arith.constant 0 : index
    %c0_49 = arith.constant 0 : index
    %c16 = arith.constant 16 : index
    %86 = vector.load %arg18[%c0_48, %c0_49, %c16] : memref<2x8x32xf32, #tpu.memory_space<vmem>>, vector<2x8x8xf32>
    tpu.vector_store %arg18[%c0_48, %c0_49, %c16], %85 {strides = array<i32>} : memref<2x8x32xf32, #tpu.memory_space<vmem>>, vector<2x8x8xf32>,
    %87 = vector.extract_strided_slice %25 {offsets = [0, 0, 24], sizes = [2, 8, 8], strides = [1, 1, 1]} : vector<2x8x32xf32> to vector<2x8x8xf32>
    %88 = vector.extract_strided_slice %30 {offsets = [0, 0, 24], sizes = [2, 8, 8], strides = [1, 1, 1]} : vector<2x8x32xf32> to vector<2x8x8xf32>
    "tpu.trace_start"() <{level = 10 : i32, message = "bqd,bkd->bqk"}> : () -> ()
    %cst_50 = arith.constant dense<0.000000e+00> : vector<2x8x8xf32>
    %89 = tpu.matmul %87, %88, %cst_50 {dimension_numbers = #tpu.dot_dimension_numbers<[2], [2], [1], [1], [0, 0, 0, 1, 1, 1], [0], [0]>} : vector<2x8x8xf32>, vector<2x8x8xf32>, vector<2x8x8xf32> -> vector<2x8x8xf32>
    "tpu.trace_stop"() : () -> ()
    %cst_51 = arith.constant 0.353553385 : f32
    %90 = vector.broadcast %cst_51 : f32 to vector<2x8x8xf32>
    %91 = arith.mulf %89, %90 : vector<2x8x8xf32>
    %cst_52 = arith.constant dense<0xFF800000> : vector<2x8xf32>
    %92 = vector.multi_reduction <maximumf>, %91, %cst_52 [2] : vector<2x8x8xf32> to vector<2x8xf32>
    %93 = vector.shape_cast %92 : vector<2x8xf32> to vector<2x8x1xf32>
    %94 = vector.broadcast %93 : vector<2x8x1xf32> to vector<2x8x8xf32>
    %95 = arith.subf %91, %94 : vector<2x8x8xf32>
    %96 = math.exp %95 : vector<2x8x8xf32>
    %cst_53 = arith.constant dense<0.000000e+00> : vector<2x8xf32>
    %97 = vector.multi_reduction <add>, %96, %cst_53 [2] : vector<2x8x8xf32> to vector<2x8xf32>
    %98 = vector.shape_cast %97 : vector<2x8xf32> to vector<2x8x1xf32>
    %99 = tpu.reciprocal %98 {approx = true} : vector<2x8x1xf32> -> vector<2x8x1xf32>
    %100 = vector.broadcast %99 : vector<2x8x1xf32> to vector<2x8x8xf32>
    %101 = arith.mulf %96, %100 : vector<2x8x8xf32>
    %102 = vector.extract_strided_slice %32 {offsets = [0, 0, 24], sizes = [2, 8, 8], strides = [1, 1, 1]} : vector<2x8x32xf32> to vector<2x8x8xf32>
    "tpu.trace_start"() <{level = 10 : i32, message = "bqk,bkd->bqd"}> : () -> ()
    %cst_54 = arith.constant dense<0.000000e+00> : vector<2x8x8xf32>
    %103 = tpu.matmul %101, %102, %cst_54 {dimension_numbers = #tpu.dot_dimension_numbers<[2], [1], [1], [2], [0, 0, 0, 1, 1, 2], [0], [0]>} : vector<2x8x8xf32>, vector<2x8x8xf32>, vector<2x8x8xf32> -> vector<2x8x8xf32>
    "tpu.trace_stop"() : () -> ()
    %c0_55 = arith.constant 0 : index
    %c0_56 = arith.constant 0 : index
    %c24 = arith.constant 24 : index
    %104 = vector.load %arg18[%c0_55, %c0_56, %c24] : memref<2x8x32xf32, #tpu.memory_space<vmem>>, vector<2x8x8xf32>
    tpu.vector_store %arg18[%c0_55, %c0_56, %c24], %103 {strides = array<i32>} : memref<2x8x32xf32, #tpu.memory_space<vmem>>, vector<2x8x8xf32>,
    %c0_57 = arith.constant 0 : index
    %c0_58 = arith.constant 0 : index
    %c0_59 = arith.constant 0 : index
    %105 = vector.load %arg18[%c0_57, %c0_58, %c0_59] : memref<2x8x32xf32, #tpu.memory_space<vmem>>, vector<2x8x32xf32>
    %106 = vector.shape_cast %105 : vector<2x8x32xf32> to vector<16x32xf32>
    %cst_60 = arith.constant dense<0.000000e+00> : vector<16x32xf32>
    %107 = tpu.matmul %106, %13, %cst_60 {dimension_numbers = #tpu.dot_dimension_numbers<[1], [0], [0], [1], [0, 0, 1, 1], [], []>} : vector<16x32xf32>, vector<32x32xf32>, vector<16x32xf32> -> vector<16x32xf32>
    %108 = vector.broadcast %15 : vector<1x32xf32> to vector<16x32xf32>
    %109 = arith.addf %107, %108 : vector<16x32xf32>
    %110 = arith.addf %20, %109 : vector<16x32xf32>
    %cst_61 = arith.constant dense<0.000000e+00> : vector<16xf32>
    %111 = vector.multi_reduction <add>, %110, %cst_61 [1] : vector<16x32xf32> to vector<16xf32>
    %112 = vector.shape_cast %111 : vector<16xf32> to vector<16x1xf32>
    %cst_62 = arith.constant 3.200000e+01 : f32
    %113 = vector.broadcast %cst_62 : f32 to vector<16x1xf32>
    %114 = arith.divf %112, %113 : vector<16x1xf32>
    %115 = vector.broadcast %114 : vector<16x1xf32> to vector<16x32xf32>
    %116 = arith.subf %110, %115 : vector<16x32xf32>
    %117 = arith.mulf %116, %116 : vector<16x32xf32>
    %cst_63 = arith.constant dense<0.000000e+00> : vector<16xf32>
    %118 = vector.multi_reduction <add>, %117, %cst_63 [1] : vector<16x32xf32> to vector<16xf32>
    %119 = vector.shape_cast %118 : vector<16xf32> to vector<16x1xf32>
    %cst_64 = arith.constant 3.200000e+01 : f32
    %120 = vector.broadcast %cst_64 : f32 to vector<16x1xf32>
    %121 = arith.divf %119, %120 : vector<16x1xf32>
    %122 = vector.broadcast %114 : vector<16x1xf32> to vector<16x32xf32>
    %123 = arith.subf %110, %122 : vector<16x32xf32>
    %cst_65 = arith.constant 9.99999974E-6 : f32
    %124 = vector.broadcast %cst_65 : f32 to vector<16x1xf32>
    %125 = arith.addf %121, %124 : vector<16x1xf32>
    %126 = math.rsqrt %125 : vector<16x1xf32>
    %127 = vector.broadcast %126 : vector<16x1xf32> to vector<16x32xf32>
    %128 = arith.mulf %123, %127 : vector<16x32xf32>
    %129 = vector.broadcast %17 : vector<1x32xf32> to vector<16x32xf32>
    %130 = arith.mulf %128, %129 : vector<16x32xf32>
    %131 = vector.broadcast %19 : vector<1x32xf32> to vector<16x32xf32>
    %132 = arith.addf %130, %131 : vector<16x32xf32>
    %133 = vector.shape_cast %132 : vector<16x32xf32> to vector<2x8x32xf32>
    %c0_66 = arith.constant 0 : index
    %c0_67 = arith.constant 0 : index
    %c0_68 = arith.constant 0 : index
    %134 = vector.load %arg10[%c0_66, %c0_67, %c0_68] : memref<1x32x64xf32, #tpu.memory_space<vmem>>, vector<1x32x64xf32>
    %135 = vector.shape_cast %134 : vector<1x32x64xf32> to vector<32x64xf32>
    %c0_69 = arith.constant 0 : index
    %c0_70 = arith.constant 0 : index
    %c0_71 = arith.constant 0 : index
    %136 = vector.load %arg11[%c0_69, %c0_70, %c0_71] : memref<1x1x64xf32, #tpu.memory_space<vmem>>, vector<1x1x64xf32>
    %137 = vector.shape_cast %136 : vector<1x1x64xf32> to vector<1x64xf32>
    %c0_72 = arith.constant 0 : index
    %c0_73 = arith.constant 0 : index
    %c0_74 = arith.constant 0 : index
    %138 = vector.load %arg12[%c0_72, %c0_73, %c0_74] : memref<1x64x32xf32, #tpu.memory_space<vmem>>, vector<1x64x32xf32>
    %139 = vector.shape_cast %138 : vector<1x64x32xf32> to vector<64x32xf32>
    %c0_75 = arith.constant 0 : index
    %c0_76 = arith.constant 0 : index
    %c0_77 = arith.constant 0 : index
    %140 = vector.load %arg13[%c0_75, %c0_76, %c0_77] : memref<1x1x32xf32, #tpu.memory_space<vmem>>, vector<1x1x32xf32>
    %141 = vector.shape_cast %140 : vector<1x1x32xf32> to vector<1x32xf32>
    %c0_78 = arith.constant 0 : index
    %c0_79 = arith.constant 0 : index
    %c0_80 = arith.constant 0 : index
    %142 = vector.load %arg14[%c0_78, %c0_79, %c0_80] : memref<1x1x32xf32, #tpu.memory_space<vmem>>, vector<1x1x32xf32>
    %143 = vector.shape_cast %142 : vector<1x1x32xf32> to vector<1x32xf32>
    %c0_81 = arith.constant 0 : index
    %c0_82 = arith.constant 0 : index
    %c0_83 = arith.constant 0 : index
    %144 = vector.load %arg15[%c0_81, %c0_82, %c0_83] : memref<1x1x32xf32, #tpu.memory_space<vmem>>, vector<1x1x32xf32>
    %145 = vector.shape_cast %144 : vector<1x1x32xf32> to vector<1x32xf32>
    %146 = vector.shape_cast %133 : vector<2x8x32xf32> to vector<16x32xf32>
    %cst_84 = arith.constant dense<0.000000e+00> : vector<16x64xf32>
    %147 = tpu.matmul %146, %135, %cst_84 {dimension_numbers = #tpu.dot_dimension_numbers<[1], [0], [0], [1], [0, 0, 1, 1], [], []>} : vector<16x32xf32>, vector<32x64xf32>, vector<16x64xf32> -> vector<16x64xf32>
    %148 = vector.broadcast %137 : vector<1x64xf32> to vector<16x64xf32>
    %149 = arith.addf %147, %148 : vector<16x64xf32>
    %cst_85 = arith.constant 0.000000e+00 : f32
    %150 = vector.broadcast %cst_85 : f32 to vector<16x64xf32>
    %151 = arith.maximumf %149, %150 : vector<16x64xf32>
    %cst_86 = arith.constant dense<0.000000e+00> : vector<16x32xf32>
    %152 = tpu.matmul %151, %139, %cst_86 {dimension_numbers = #tpu.dot_dimension_numbers<[1], [0], [0], [1], [0, 0, 1, 1], [], []>} : vector<16x64xf32>, vector<64x32xf32>, vector<16x32xf32> -> vector<16x32xf32>
    %153 = vector.broadcast %141 : vector<1x32xf32> to vector<16x32xf32>
    %154 = arith.addf %152, %153 : vector<16x32xf32>
    %155 = arith.addf %146, %154 : vector<16x32xf32>
    %cst_87 = arith.constant dense<0.000000e+00> : vector<16xf32>
    %156 = vector.multi_reduction <add>, %155, %cst_87 [1] : vector<16x32xf32> to vector<16xf32>
    %157 = vector.shape_cast %156 : vector<16xf32> to vector<16x1xf32>
    %cst_88 = arith.constant 3.200000e+01 : f32
    %158 = vector.broadcast %cst_88 : f32 to vector<16x1xf32>
    %159 = arith.divf %157, %158 : vector<16x1xf32>
    %160 = vector.broadcast %159 : vector<16x1xf32> to vector<16x32xf32>
    %161 = arith.subf %155, %160 : vector<16x32xf32>
    %162 = arith.mulf %161, %161 : vector<16x32xf32>
    %cst_89 = arith.constant dense<0.000000e+00> : vector<16xf32>
    %163 = vector.multi_reduction <add>, %162, %cst_89 [1] : vector<16x32xf32> to vector<16xf32>
    %164 = vector.shape_cast %163 : vector<16xf32> to vector<16x1xf32>
    %cst_90 = arith.constant 3.200000e+01 : f32
    %165 = vector.broadcast %cst_90 : f32 to vector<16x1xf32>
    %166 = arith.divf %164, %165 : vector<16x1xf32>
    %167 = vector.broadcast %159 : vector<16x1xf32> to vector<16x32xf32>
    %168 = arith.subf %155, %167 : vector<16x32xf32>
    %cst_91 = arith.constant 9.99999974E-6 : f32
    %169 = vector.broadcast %cst_91 : f32 to vector<16x1xf32>
    %170 = arith.addf %166, %169 : vector<16x1xf32>
    %171 = math.rsqrt %170 : vector<16x1xf32>
    %172 = vector.broadcast %171 : vector<16x1xf32> to vector<16x32xf32>
    %173 = arith.mulf %168, %172 : vector<16x32xf32>
    %174 = vector.broadcast %143 : vector<1x32xf32> to vector<16x32xf32>
    %175 = arith.mulf %173, %174 : vector<16x32xf32>
    %176 = vector.broadcast %145 : vector<1x32xf32> to vector<16x32xf32>
    %177 = arith.addf %175, %176 : vector<16x32xf32>
    %178 = vector.shape_cast %177 : vector<16x32xf32> to vector<2x8x32xf32>
    %c0_92 = arith.constant 0 : index
    %c0_93 = arith.constant 0 : index
    %c0_94 = arith.constant 0 : index
    %179 = vector.load %arg17[%c0_92, %c0_93, %c0_94] : memref<2x8x32xf32, #tpu.memory_space<vmem>>, vector<2x8x32xf32>
    tpu.vector_store %arg17[%c0_92, %c0_93, %c0_94], %178 {strides = array<i32>} : memref<2x8x32xf32, #tpu.memory_space<vmem>>, vector<2x8x32xf32>,
    %c0_95 = arith.constant 0 : index
    %c0_96 = arith.constant 0 : index
    %c0_97 = arith.constant 0 : index
    %180 = vector.load %arg16[%c0_95, %c0_96, %c0_97] : memref<2x8x32xf32, #tpu.memory_space<vmem>>, vector<2x8x32xf32>
    tpu.vector_store %arg16[%c0_95, %c0_96, %c0_97], %178 {strides = array<i32>} : memref<2x8x32xf32, #tpu.memory_space<vmem>>, vector<2x8x32xf32>,
    return
  }
  func.func @transform_0(%arg0: i32) -> (i32, i32, i32) {
    %c0_i32 = arith.constant 0 : i32
    %c0_i32_0 = arith.constant 0 : i32
    %c0_i32_1 = arith.constant 0 : i32
    %c0_i32_2 = arith.constant 0 : i32
    return %c0_i32, %c0_i32_0, %c0_i32_1 : i32, i32, i32
  }
  func.func @transform_1(%arg0: i32) -> (i32, i32, i32) {
    %c0_i32 = arith.constant 0 : i32
    %c0_i32_0 = arith.constant 0 : i32
    %c0_i32_1 = arith.constant 0 : i32
    return %arg0, %c0_i32, %c0_i32_0 : i32, i32, i32
  }
  func.func @transform_2(%arg0: i32) -> (i32, i32, i32) {
    %c0_i32 = arith.constant 0 : i32
    %c0_i32_0 = arith.constant 0 : i32
    %c0_i32_1 = arith.constant 0 : i32
    return %arg0, %c0_i32, %c0_i32_0 : i32, i32, i32
  }
  func.func @transform_3(%arg0: i32) -> (i32, i32, i32) {
    %c0_i32 = arith.constant 0 : i32
    %c0_i32_0 = arith.constant 0 : i32
    %c0_i32_1 = arith.constant 0 : i32
    return %arg0, %c0_i32, %c0_i32_0 : i32, i32, i32
  }
  func.func @transform_4(%arg0: i32) -> (i32, i32, i32) {
    %c0_i32 = arith.constant 0 : i32
    %c0_i32_0 = arith.constant 0 : i32
    %c0_i32_1 = arith.constant 0 : i32
    return %arg0, %c0_i32, %c0_i32_0 : i32, i32, i32
  }
  func.func @transform_5(%arg0: i32) -> (i32, i32, i32) {
    %c0_i32 = arith.constant 0 : i32
    %c0_i32_0 = arith.constant 0 : i32
    %c0_i32_1 = arith.constant 0 : i32
    return %arg0, %c0_i32, %c0_i32_0 : i32, i32, i32
  }
  func.func @transform_6(%arg0: i32) -> (i32, i32, i32) {
    %c0_i32 = arith.constant 0 : i32
    %c0_i32_0 = arith.constant 0 : i32
    %c0_i32_1 = arith.constant 0 : i32
    return %arg0, %c0_i32, %c0_i32_0 : i32, i32, i32
  }
  func.func @transform_7(%arg0: i32) -> (i32, i32, i32) {
    %c0_i32 = arith.constant 0 : i32
    %c0_i32_0 = arith.constant 0 : i32
    %c0_i32_1 = arith.constant 0 : i32
    return %arg0, %c0_i32, %c0_i32_0 : i32, i32, i32
  }
  func.func @transform_8(%arg0: i32) -> (i32, i32, i32) {
    %c0_i32 = arith.constant 0 : i32
    %c0_i32_0 = arith.constant 0 : i32
    %c0_i32_1 = arith.constant 0 : i32
    return %arg0, %c0_i32, %c0_i32_0 : i32, i32, i32
  }
  func.func @transform_9(%arg0: i32) -> (i32, i32, i32) {
    %c0_i32 = arith.constant 0 : i32
    %c0_i32_0 = arith.constant 0 : i32
    %c0_i32_1 = arith.constant 0 : i32
    return %arg0, %c0_i32, %c0_i32_0 : i32, i32, i32
  }
  func.func @transform_10(%arg0: i32) -> (i32, i32, i32) {
    %c0_i32 = arith.constant 0 : i32
    %c0_i32_0 = arith.constant 0 : i32
    %c0_i32_1 = arith.constant 0 : i32
    return %arg0, %c0_i32, %c0_i32_0 : i32, i32, i32
  }
  func.func @transform_11(%arg0: i32) -> (i32, i32, i32) {
    %c0_i32 = arith.constant 0 : i32
    %c0_i32_0 = arith.constant 0 : i32
    %c0_i32_1 = arith.constant 0 : i32
    return %arg0, %c0_i32, %c0_i32_0 : i32, i32, i32
  }
  func.func @transform_12(%arg0: i32) -> (i32, i32, i32) {
    %c0_i32 = arith.constant 0 : i32
    %c0_i32_0 = arith.constant 0 : i32
    %c0_i32_1 = arith.constant 0 : i32
    return %arg0, %c0_i32, %c0_i32_0 : i32, i32, i32
  }
  func.func @transform_13(%arg0: i32) -> (i32, i32, i32) {
    %c0_i32 = arith.constant 0 : i32
    %c0_i32_0 = arith.constant 0 : i32
    %c0_i32_1 = arith.constant 0 : i32
    return %arg0, %c0_i32, %c0_i32_0 : i32, i32, i32
  }
  func.func @transform_14(%arg0: i32) -> (i32, i32, i32) {
    %c0_i32 = arith.constant 0 : i32
    %c0_i32_0 = arith.constant 0 : i32
    %c0_i32_1 = arith.constant 0 : i32
    return %arg0, %c0_i32, %c0_i32_0 : i32, i32, i32
  }
  func.func @transform_15(%arg0: i32) -> (i32, i32, i32) {
    %c0_i32 = arith.constant 0 : i32
    %c0_i32_0 = arith.constant 0 : i32
    %c0_i32_1 = arith.constant 0 : i32
    %c0_i32_2 = arith.constant 0 : i32
    return %c0_i32, %c0_i32_0, %c0_i32_1 : i32, i32, i32
  }
}

module attributes {stable_mosaic.version = 11 : i64} {
  func.func @_decoder_stack_kernel(%arg0: i32, %arg1: memref<2x8x32xf32, #tpu.memory_space<vmem>>, %arg2: memref<2x8x32xf32, #tpu.memory_space<vmem>>, %arg3: memref<8x8xf32, #tpu.memory_space<vmem>>, %arg4: memref<1x32x32xf32, #tpu.memory_space<vmem>>, %arg5: memref<1x1x32xf32, #tpu.memory_space<vmem>>, %arg6: memref<1x32x64xf32, #tpu.memory_space<vmem>>, %arg7: memref<1x1x64xf32, #tpu.memory_space<vmem>>, %arg8: memref<1x32x32xf32, #tpu.memory_space<vmem>>, %arg9: memref<1x1x32xf32, #tpu.memory_space<vmem>>, %arg10: memref<1x1x32xf32, #tpu.memory_space<vmem>>, %arg11: memref<1x1x32xf32, #tpu.memory_space<vmem>>, %arg12: memref<1x32x32xf32, #tpu.memory_space<vmem>>, %arg13: memref<1x1x32xf32, #tpu.memory_space<vmem>>, %arg14: memref<1x32x64xf32, #tpu.memory_space<vmem>>, %arg15: memref<1x1x64xf32, #tpu.memory_space<vmem>>, %arg16: memref<1x32x32xf32, #tpu.memory_space<vmem>>, %arg17: memref<1x1x32xf32, #tpu.memory_space<vmem>>, %arg18: memref<1x1x32xf32, #tpu.memory_space<vmem>>, %arg19: memref<1x1x32xf32, #tpu.memory_space<vmem>>, %arg20: memref<1x32x64xf32, #tpu.memory_space<vmem>>, %arg21: memref<1x1x64xf32, #tpu.memory_space<vmem>>, %arg22: memref<1x64x32xf32, #tpu.memory_space<vmem>>, %arg23: memref<1x1x32xf32, #tpu.memory_space<vmem>>, %arg24: memref<1x1x32xf32, #tpu.memory_space<vmem>>, %arg25: memref<1x1x32xf32, #tpu.memory_space<vmem>>, %arg26: memref<2x8x32xf32, #tpu.memory_space<vmem>>, %arg27: memref<2x8x32xf32, #tpu.memory_space<vmem>>, %arg28: memref<2x8x32xf32, #tpu.memory_space<vmem>>) attributes {dimension_semantics = [#tpu.dimension_semantics<arbitrary>], iteration_bounds = array<i64: 4>, scalar_prefetch = 0 : i64, scratch_operands = 2 : i64, tpu.core_type = #tpu.core_type<tc>, window_params = [{pipeline_mode = #tpu.pipeline_mode<synchronous>, transform_indices = @transform_0, window_bounds = array<i64: 2, 8, 32>}, {pipeline_mode = #tpu.pipeline_mode<synchronous>, transform_indices = @transform_1, window_bounds = array<i64: 2, 8, 32>}, {pipeline_mode = #tpu.pipeline_mode<synchronous>, transform_indices = @transform_2, window_bounds = array<i64: 8, 8>}, {transform_indices = @transform_3, window_bounds = array<i64: 1, 32, 32>}, {transform_indices = @transform_4, window_bounds = array<i64: 1, 1, 32>}, {transform_indices = @transform_5, window_bounds = array<i64: 1, 32, 64>}, {transform_indices = @transform_6, window_bounds = array<i64: 1, 1, 64>}, {transform_indices = @transform_7, window_bounds = array<i64: 1, 32, 32>}, {transform_indices = @transform_8, window_bounds = array<i64: 1, 1, 32>}, {transform_indices = @transform_9, window_bounds = array<i64: 1, 1, 32>}, {transform_indices = @transform_10, window_bounds = array<i64: 1, 1, 32>}, {transform_indices = @transform_11, window_bounds = array<i64: 1, 32, 32>}, {transform_indices = @transform_12, window_bounds = array<i64: 1, 1, 32>}, {transform_indices = @transform_13, window_bounds = array<i64: 1, 32, 64>}, {transform_indices = @transform_14, window_bounds = array<i64: 1, 1, 64>}, {transform_indices = @transform_15, window_bounds = array<i64: 1, 32, 32>}, {transform_indices = @transform_16, window_bounds = array<i64: 1, 1, 32>}, {transform_indices = @transform_17, window_bounds = array<i64: 1, 1, 32>}, {transform_indices = @transform_18, window_bounds = array<i64: 1, 1, 32>}, {transform_indices = @transform_19, window_bounds = array<i64: 1, 32, 64>}, {transform_indices = @transform_20, window_bounds = array<i64: 1, 1, 64>}, {transform_indices = @transform_21, window_bounds = array<i64: 1, 64, 32>}, {transform_indices = @transform_22, window_bounds = array<i64: 1, 1, 32>}, {transform_indices = @transform_23, window_bounds = array<i64: 1, 1, 32>}, {transform_indices = @transform_24, window_bounds = array<i64: 1, 1, 32>}, {pipeline_mode = #tpu.pipeline_mode<synchronous>, transform_indices = @transform_25, window_bounds = array<i64: 2, 8, 32>}]} {
    %c0 = arith.constant 0 : index
    %c0_0 = arith.constant 0 : index
    %0 = vector.load %arg3[%c0, %c0_0] : memref<8x8xf32, #tpu.memory_space<vmem>>, vector<8x8xf32>
    %c0_i32 = arith.constant 0 : i32
    %1 = arith.cmpi eq, %arg0, %c0_i32 : i32
    %2 = arith.extui %1 : i1 to i32
    %c0_i32_1 = arith.constant 0 : i32
    %3 = arith.cmpi ne, %2, %c0_i32_1 : i32
    scf.if %3 {
      %c0_170 = arith.constant 0 : index
      %c0_171 = arith.constant 0 : index
      %c0_172 = arith.constant 0 : index
      %325 = vector.load %arg1[%c0_170, %c0_171, %c0_172] : memref<2x8x32xf32, #tpu.memory_space<vmem>>, vector<2x8x32xf32>
      %c0_173 = arith.constant 0 : index
      %c0_174 = arith.constant 0 : index
      %c0_175 = arith.constant 0 : index
      %326 = vector.load %arg27[%c0_173, %c0_174, %c0_175] : memref<2x8x32xf32, #tpu.memory_space<vmem>>, vector<2x8x32xf32>
      tpu.vector_store %arg27[%c0_173, %c0_174, %c0_175], %325 {strides = array<i32>} : memref<2x8x32xf32, #tpu.memory_space<vmem>>, vector<2x8x32xf32>,
    } else {
    }
    %c0_2 = arith.constant 0 : index
    %c0_3 = arith.constant 0 : index
    %c0_4 = arith.constant 0 : index
    %4 = vector.load %arg27[%c0_2, %c0_3, %c0_4] : memref<2x8x32xf32, #tpu.memory_space<vmem>>, vector<2x8x32xf32>
    %c0_5 = arith.constant 0 : index
    %c0_6 = arith.constant 0 : index
    %c0_7 = arith.constant 0 : index
    %5 = vector.load %arg2[%c0_5, %c0_6, %c0_7] : memref<2x8x32xf32, #tpu.memory_space<vmem>>, vector<2x8x32xf32>
    %c0_8 = arith.constant 0 : index
    %c0_9 = arith.constant 0 : index
    %c0_10 = arith.constant 0 : index
    %6 = vector.load %arg4[%c0_8, %c0_9, %c0_10] : memref<1x32x32xf32, #tpu.memory_space<vmem>>, vector<1x32x32xf32>
    %7 = vector.shape_cast %6 : vector<1x32x32xf32> to vector<32x32xf32>
    %c0_11 = arith.constant 0 : index
    %c0_12 = arith.constant 0 : index
    %c0_13 = arith.constant 0 : index
    %8 = vector.load %arg5[%c0_11, %c0_12, %c0_13] : memref<1x1x32xf32, #tpu.memory_space<vmem>>, vector<1x1x32xf32>
    %9 = vector.shape_cast %8 : vector<1x1x32xf32> to vector<1x32xf32>
    %c0_14 = arith.constant 0 : index
    %c0_15 = arith.constant 0 : index
    %c0_16 = arith.constant 0 : index
    %10 = vector.load %arg6[%c0_14, %c0_15, %c0_16] : memref<1x32x64xf32, #tpu.memory_space<vmem>>, vector<1x32x64xf32>
    %11 = vector.shape_cast %10 : vector<1x32x64xf32> to vector<32x64xf32>
    %c0_17 = arith.constant 0 : index
    %c0_18 = arith.constant 0 : index
    %c0_19 = arith.constant 0 : index
    %12 = vector.load %arg7[%c0_17, %c0_18, %c0_19] : memref<1x1x64xf32, #tpu.memory_space<vmem>>, vector<1x1x64xf32>
    %13 = vector.shape_cast %12 : vector<1x1x64xf32> to vector<1x64xf32>
    %c0_20 = arith.constant 0 : index
    %c0_21 = arith.constant 0 : index
    %c0_22 = arith.constant 0 : index
    %14 = vector.load %arg8[%c0_20, %c0_21, %c0_22] : memref<1x32x32xf32, #tpu.memory_space<vmem>>, vector<1x32x32xf32>
    %15 = vector.shape_cast %14 : vector<1x32x32xf32> to vector<32x32xf32>
    %c0_23 = arith.constant 0 : index
    %c0_24 = arith.constant 0 : index
    %c0_25 = arith.constant 0 : index
    %16 = vector.load %arg9[%c0_23, %c0_24, %c0_25] : memref<1x1x32xf32, #tpu.memory_space<vmem>>, vector<1x1x32xf32>
    %17 = vector.shape_cast %16 : vector<1x1x32xf32> to vector<1x32xf32>
    %c0_26 = arith.constant 0 : index
    %c0_27 = arith.constant 0 : index
    %c0_28 = arith.constant 0 : index
    %18 = vector.load %arg10[%c0_26, %c0_27, %c0_28] : memref<1x1x32xf32, #tpu.memory_space<vmem>>, vector<1x1x32xf32>
    %19 = vector.shape_cast %18 : vector<1x1x32xf32> to vector<1x32xf32>
    %c0_29 = arith.constant 0 : index
    %c0_30 = arith.constant 0 : index
    %c0_31 = arith.constant 0 : index
    %20 = vector.load %arg11[%c0_29, %c0_30, %c0_31] : memref<1x1x32xf32, #tpu.memory_space<vmem>>, vector<1x1x32xf32>
    %21 = vector.shape_cast %20 : vector<1x1x32xf32> to vector<1x32xf32>
    %22 = vector.shape_cast %4 : vector<2x8x32xf32> to vector<16x32xf32>
    %23 = vector.shape_cast %4 : vector<2x8x32xf32> to vector<16x32xf32>
    %cst = arith.constant dense<0.000000e+00> : vector<16x32xf32>
    %24 = tpu.matmul %22, %7, %cst {dimension_numbers = #tpu.dot_dimension_numbers<[1], [0], [0], [1], [0, 0, 1, 1], [], []>} : vector<16x32xf32>, vector<32x32xf32>, vector<16x32xf32> -> vector<16x32xf32>
    %25 = vector.broadcast %9 : vector<1x32xf32> to vector<16x32xf32>
    %26 = arith.addf %24, %25 : vector<16x32xf32>
    %27 = vector.shape_cast %26 : vector<16x32xf32> to vector<2x8x32xf32>
    %cst_32 = arith.constant dense<0.000000e+00> : vector<16x64xf32>
    %28 = tpu.matmul %23, %11, %cst_32 {dimension_numbers = #tpu.dot_dimension_numbers<[1], [0], [0], [1], [0, 0, 1, 1], [], []>} : vector<16x32xf32>, vector<32x64xf32>, vector<16x64xf32> -> vector<16x64xf32>
    %29 = vector.broadcast %13 : vector<1x64xf32> to vector<16x64xf32>
    %30 = arith.addf %28, %29 : vector<16x64xf32>
    %31 = vector.extract_strided_slice %30 {offsets = [0, 0], sizes = [16, 32], strides = [1, 1]} : vector<16x64xf32> to vector<16x32xf32>
    %32 = vector.shape_cast %31 : vector<16x32xf32> to vector<2x8x32xf32>
    %33 = vector.extract_strided_slice %30 {offsets = [0, 32], sizes = [16, 32], strides = [1, 1]} : vector<16x64xf32> to vector<16x32xf32>
    %34 = vector.shape_cast %33 : vector<16x32xf32> to vector<2x8x32xf32>
    %35 = vector.extract_strided_slice %27 {offsets = [0, 0, 0], sizes = [2, 8, 8], strides = [1, 1, 1]} : vector<2x8x32xf32> to vector<2x8x8xf32>
    %36 = vector.extract_strided_slice %32 {offsets = [0, 0, 0], sizes = [2, 8, 8], strides = [1, 1, 1]} : vector<2x8x32xf32> to vector<2x8x8xf32>
    "tpu.trace_start"() <{level = 10 : i32, message = "bqd,bkd->bqk"}> : () -> ()
    %cst_33 = arith.constant dense<0.000000e+00> : vector<2x8x8xf32>
    %37 = tpu.matmul %35, %36, %cst_33 {dimension_numbers = #tpu.dot_dimension_numbers<[2], [2], [1], [1], [0, 0, 0, 1, 1, 1], [0], [0]>} : vector<2x8x8xf32>, vector<2x8x8xf32>, vector<2x8x8xf32> -> vector<2x8x8xf32>
    "tpu.trace_stop"() : () -> ()
    %cst_34 = arith.constant 0.353553385 : f32
    %38 = vector.broadcast %cst_34 : f32 to vector<2x8x8xf32>
    %39 = arith.mulf %37, %38 : vector<2x8x8xf32>
    %40 = vector.shape_cast %0 : vector<8x8xf32> to vector<1x8x8xf32>
    %41 = vector.broadcast %40 : vector<1x8x8xf32> to vector<2x8x8xf32>
    %42 = arith.addf %39, %41 : vector<2x8x8xf32>
    %cst_35 = arith.constant dense<0xFF800000> : vector<2x8xf32>
    %43 = vector.multi_reduction <maximumf>, %42, %cst_35 [2] : vector<2x8x8xf32> to vector<2x8xf32>
    %44 = vector.shape_cast %43 : vector<2x8xf32> to vector<2x8x1xf32>
    %45 = vector.broadcast %44 : vector<2x8x1xf32> to vector<2x8x8xf32>
    %46 = arith.subf %42, %45 : vector<2x8x8xf32>
    %47 = math.exp %46 : vector<2x8x8xf32>
    %cst_36 = arith.constant dense<0.000000e+00> : vector<2x8xf32>
    %48 = vector.multi_reduction <add>, %47, %cst_36 [2] : vector<2x8x8xf32> to vector<2x8xf32>
    %49 = vector.shape_cast %48 : vector<2x8xf32> to vector<2x8x1xf32>
    %50 = tpu.reciprocal %49 {approx = true} : vector<2x8x1xf32> -> vector<2x8x1xf32>
    %51 = vector.broadcast %50 : vector<2x8x1xf32> to vector<2x8x8xf32>
    %52 = arith.mulf %47, %51 : vector<2x8x8xf32>
    %53 = vector.extract_strided_slice %34 {offsets = [0, 0, 0], sizes = [2, 8, 8], strides = [1, 1, 1]} : vector<2x8x32xf32> to vector<2x8x8xf32>
    "tpu.trace_start"() <{level = 10 : i32, message = "bqk,bkd->bqd"}> : () -> ()
    %cst_37 = arith.constant dense<0.000000e+00> : vector<2x8x8xf32>
    %54 = tpu.matmul %52, %53, %cst_37 {dimension_numbers = #tpu.dot_dimension_numbers<[2], [1], [1], [2], [0, 0, 0, 1, 1, 2], [0], [0]>} : vector<2x8x8xf32>, vector<2x8x8xf32>, vector<2x8x8xf32> -> vector<2x8x8xf32>
    "tpu.trace_stop"() : () -> ()
    %c0_38 = arith.constant 0 : index
    %c0_39 = arith.constant 0 : index
    %c0_40 = arith.constant 0 : index
    %55 = vector.load %arg28[%c0_38, %c0_39, %c0_40] : memref<2x8x32xf32, #tpu.memory_space<vmem>>, vector<2x8x8xf32>
    tpu.vector_store %arg28[%c0_38, %c0_39, %c0_40], %54 {strides = array<i32>} : memref<2x8x32xf32, #tpu.memory_space<vmem>>, vector<2x8x8xf32>,
    %56 = vector.extract_strided_slice %27 {offsets = [0, 0, 8], sizes = [2, 8, 8], strides = [1, 1, 1]} : vector<2x8x32xf32> to vector<2x8x8xf32>
    %57 = vector.extract_strided_slice %32 {offsets = [0, 0, 8], sizes = [2, 8, 8], strides = [1, 1, 1]} : vector<2x8x32xf32> to vector<2x8x8xf32>
    "tpu.trace_start"() <{level = 10 : i32, message = "bqd,bkd->bqk"}> : () -> ()
    %cst_41 = arith.constant dense<0.000000e+00> : vector<2x8x8xf32>
    %58 = tpu.matmul %56, %57, %cst_41 {dimension_numbers = #tpu.dot_dimension_numbers<[2], [2], [1], [1], [0, 0, 0, 1, 1, 1], [0], [0]>} : vector<2x8x8xf32>, vector<2x8x8xf32>, vector<2x8x8xf32> -> vector<2x8x8xf32>
    "tpu.trace_stop"() : () -> ()
    %cst_42 = arith.constant 0.353553385 : f32
    %59 = vector.broadcast %cst_42 : f32 to vector<2x8x8xf32>
    %60 = arith.mulf %58, %59 : vector<2x8x8xf32>
    %61 = vector.shape_cast %0 : vector<8x8xf32> to vector<1x8x8xf32>
    %62 = vector.broadcast %61 : vector<1x8x8xf32> to vector<2x8x8xf32>
    %63 = arith.addf %60, %62 : vector<2x8x8xf32>
    %cst_43 = arith.constant dense<0xFF800000> : vector<2x8xf32>
    %64 = vector.multi_reduction <maximumf>, %63, %cst_43 [2] : vector<2x8x8xf32> to vector<2x8xf32>
    %65 = vector.shape_cast %64 : vector<2x8xf32> to vector<2x8x1xf32>
    %66 = vector.broadcast %65 : vector<2x8x1xf32> to vector<2x8x8xf32>
    %67 = arith.subf %63, %66 : vector<2x8x8xf32>
    %68 = math.exp %67 : vector<2x8x8xf32>
    %cst_44 = arith.constant dense<0.000000e+00> : vector<2x8xf32>
    %69 = vector.multi_reduction <add>, %68, %cst_44 [2] : vector<2x8x8xf32> to vector<2x8xf32>
    %70 = vector.shape_cast %69 : vector<2x8xf32> to vector<2x8x1xf32>
    %71 = tpu.reciprocal %70 {approx = true} : vector<2x8x1xf32> -> vector<2x8x1xf32>
    %72 = vector.broadcast %71 : vector<2x8x1xf32> to vector<2x8x8xf32>
    %73 = arith.mulf %68, %72 : vector<2x8x8xf32>
    %74 = vector.extract_strided_slice %34 {offsets = [0, 0, 8], sizes = [2, 8, 8], strides = [1, 1, 1]} : vector<2x8x32xf32> to vector<2x8x8xf32>
    "tpu.trace_start"() <{level = 10 : i32, message = "bqk,bkd->bqd"}> : () -> ()
    %cst_45 = arith.constant dense<0.000000e+00> : vector<2x8x8xf32>
    %75 = tpu.matmul %73, %74, %cst_45 {dimension_numbers = #tpu.dot_dimension_numbers<[2], [1], [1], [2], [0, 0, 0, 1, 1, 2], [0], [0]>} : vector<2x8x8xf32>, vector<2x8x8xf32>, vector<2x8x8xf32> -> vector<2x8x8xf32>
    "tpu.trace_stop"() : () -> ()
    %c0_46 = arith.constant 0 : index
    %c0_47 = arith.constant 0 : index
    %c8 = arith.constant 8 : index
    %76 = vector.load %arg28[%c0_46, %c0_47, %c8] : memref<2x8x32xf32, #tpu.memory_space<vmem>>, vector<2x8x8xf32>
    tpu.vector_store %arg28[%c0_46, %c0_47, %c8], %75 {strides = array<i32>} : memref<2x8x32xf32, #tpu.memory_space<vmem>>, vector<2x8x8xf32>,
    %77 = vector.extract_strided_slice %27 {offsets = [0, 0, 16], sizes = [2, 8, 8], strides = [1, 1, 1]} : vector<2x8x32xf32> to vector<2x8x8xf32>
    %78 = vector.extract_strided_slice %32 {offsets = [0, 0, 16], sizes = [2, 8, 8], strides = [1, 1, 1]} : vector<2x8x32xf32> to vector<2x8x8xf32>
    "tpu.trace_start"() <{level = 10 : i32, message = "bqd,bkd->bqk"}> : () -> ()
    %cst_48 = arith.constant dense<0.000000e+00> : vector<2x8x8xf32>
    %79 = tpu.matmul %77, %78, %cst_48 {dimension_numbers = #tpu.dot_dimension_numbers<[2], [2], [1], [1], [0, 0, 0, 1, 1, 1], [0], [0]>} : vector<2x8x8xf32>, vector<2x8x8xf32>, vector<2x8x8xf32> -> vector<2x8x8xf32>
    "tpu.trace_stop"() : () -> ()
    %cst_49 = arith.constant 0.353553385 : f32
    %80 = vector.broadcast %cst_49 : f32 to vector<2x8x8xf32>
    %81 = arith.mulf %79, %80 : vector<2x8x8xf32>
    %82 = vector.shape_cast %0 : vector<8x8xf32> to vector<1x8x8xf32>
    %83 = vector.broadcast %82 : vector<1x8x8xf32> to vector<2x8x8xf32>
    %84 = arith.addf %81, %83 : vector<2x8x8xf32>
    %cst_50 = arith.constant dense<0xFF800000> : vector<2x8xf32>
    %85 = vector.multi_reduction <maximumf>, %84, %cst_50 [2] : vector<2x8x8xf32> to vector<2x8xf32>
    %86 = vector.shape_cast %85 : vector<2x8xf32> to vector<2x8x1xf32>
    %87 = vector.broadcast %86 : vector<2x8x1xf32> to vector<2x8x8xf32>
    %88 = arith.subf %84, %87 : vector<2x8x8xf32>
    %89 = math.exp %88 : vector<2x8x8xf32>
    %cst_51 = arith.constant dense<0.000000e+00> : vector<2x8xf32>
    %90 = vector.multi_reduction <add>, %89, %cst_51 [2] : vector<2x8x8xf32> to vector<2x8xf32>
    %91 = vector.shape_cast %90 : vector<2x8xf32> to vector<2x8x1xf32>
    %92 = tpu.reciprocal %91 {approx = true} : vector<2x8x1xf32> -> vector<2x8x1xf32>
    %93 = vector.broadcast %92 : vector<2x8x1xf32> to vector<2x8x8xf32>
    %94 = arith.mulf %89, %93 : vector<2x8x8xf32>
    %95 = vector.extract_strided_slice %34 {offsets = [0, 0, 16], sizes = [2, 8, 8], strides = [1, 1, 1]} : vector<2x8x32xf32> to vector<2x8x8xf32>
    "tpu.trace_start"() <{level = 10 : i32, message = "bqk,bkd->bqd"}> : () -> ()
    %cst_52 = arith.constant dense<0.000000e+00> : vector<2x8x8xf32>
    %96 = tpu.matmul %94, %95, %cst_52 {dimension_numbers = #tpu.dot_dimension_numbers<[2], [1], [1], [2], [0, 0, 0, 1, 1, 2], [0], [0]>} : vector<2x8x8xf32>, vector<2x8x8xf32>, vector<2x8x8xf32> -> vector<2x8x8xf32>
    "tpu.trace_stop"() : () -> ()
    %c0_53 = arith.constant 0 : index
    %c0_54 = arith.constant 0 : index
    %c16 = arith.constant 16 : index
    %97 = vector.load %arg28[%c0_53, %c0_54, %c16] : memref<2x8x32xf32, #tpu.memory_space<vmem>>, vector<2x8x8xf32>
    tpu.vector_store %arg28[%c0_53, %c0_54, %c16], %96 {strides = array<i32>} : memref<2x8x32xf32, #tpu.memory_space<vmem>>, vector<2x8x8xf32>,
    %98 = vector.extract_strided_slice %27 {offsets = [0, 0, 24], sizes = [2, 8, 8], strides = [1, 1, 1]} : vector<2x8x32xf32> to vector<2x8x8xf32>
    %99 = vector.extract_strided_slice %32 {offsets = [0, 0, 24], sizes = [2, 8, 8], strides = [1, 1, 1]} : vector<2x8x32xf32> to vector<2x8x8xf32>
    "tpu.trace_start"() <{level = 10 : i32, message = "bqd,bkd->bqk"}> : () -> ()
    %cst_55 = arith.constant dense<0.000000e+00> : vector<2x8x8xf32>
    %100 = tpu.matmul %98, %99, %cst_55 {dimension_numbers = #tpu.dot_dimension_numbers<[2], [2], [1], [1], [0, 0, 0, 1, 1, 1], [0], [0]>} : vector<2x8x8xf32>, vector<2x8x8xf32>, vector<2x8x8xf32> -> vector<2x8x8xf32>
    "tpu.trace_stop"() : () -> ()
    %cst_56 = arith.constant 0.353553385 : f32
    %101 = vector.broadcast %cst_56 : f32 to vector<2x8x8xf32>
    %102 = arith.mulf %100, %101 : vector<2x8x8xf32>
    %103 = vector.shape_cast %0 : vector<8x8xf32> to vector<1x8x8xf32>
    %104 = vector.broadcast %103 : vector<1x8x8xf32> to vector<2x8x8xf32>
    %105 = arith.addf %102, %104 : vector<2x8x8xf32>
    %cst_57 = arith.constant dense<0xFF800000> : vector<2x8xf32>
    %106 = vector.multi_reduction <maximumf>, %105, %cst_57 [2] : vector<2x8x8xf32> to vector<2x8xf32>
    %107 = vector.shape_cast %106 : vector<2x8xf32> to vector<2x8x1xf32>
    %108 = vector.broadcast %107 : vector<2x8x1xf32> to vector<2x8x8xf32>
    %109 = arith.subf %105, %108 : vector<2x8x8xf32>
    %110 = math.exp %109 : vector<2x8x8xf32>
    %cst_58 = arith.constant dense<0.000000e+00> : vector<2x8xf32>
    %111 = vector.multi_reduction <add>, %110, %cst_58 [2] : vector<2x8x8xf32> to vector<2x8xf32>
    %112 = vector.shape_cast %111 : vector<2x8xf32> to vector<2x8x1xf32>
    %113 = tpu.reciprocal %112 {approx = true} : vector<2x8x1xf32> -> vector<2x8x1xf32>
    %114 = vector.broadcast %113 : vector<2x8x1xf32> to vector<2x8x8xf32>
    %115 = arith.mulf %110, %114 : vector<2x8x8xf32>
    %116 = vector.extract_strided_slice %34 {offsets = [0, 0, 24], sizes = [2, 8, 8], strides = [1, 1, 1]} : vector<2x8x32xf32> to vector<2x8x8xf32>
    "tpu.trace_start"() <{level = 10 : i32, message = "bqk,bkd->bqd"}> : () -> ()
    %cst_59 = arith.constant dense<0.000000e+00> : vector<2x8x8xf32>
    %117 = tpu.matmul %115, %116, %cst_59 {dimension_numbers = #tpu.dot_dimension_numbers<[2], [1], [1], [2], [0, 0, 0, 1, 1, 2], [0], [0]>} : vector<2x8x8xf32>, vector<2x8x8xf32>, vector<2x8x8xf32> -> vector<2x8x8xf32>
    "tpu.trace_stop"() : () -> ()
    %c0_60 = arith.constant 0 : index
    %c0_61 = arith.constant 0 : index
    %c24 = arith.constant 24 : index
    %118 = vector.load %arg28[%c0_60, %c0_61, %c24] : memref<2x8x32xf32, #tpu.memory_space<vmem>>, vector<2x8x8xf32>
    tpu.vector_store %arg28[%c0_60, %c0_61, %c24], %117 {strides = array<i32>} : memref<2x8x32xf32, #tpu.memory_space<vmem>>, vector<2x8x8xf32>,
    %c0_62 = arith.constant 0 : index
    %c0_63 = arith.constant 0 : index
    %c0_64 = arith.constant 0 : index
    %119 = vector.load %arg28[%c0_62, %c0_63, %c0_64] : memref<2x8x32xf32, #tpu.memory_space<vmem>>, vector<2x8x32xf32>
    %120 = vector.shape_cast %119 : vector<2x8x32xf32> to vector<16x32xf32>
    %cst_65 = arith.constant dense<0.000000e+00> : vector<16x32xf32>
    %121 = tpu.matmul %120, %15, %cst_65 {dimension_numbers = #tpu.dot_dimension_numbers<[1], [0], [0], [1], [0, 0, 1, 1], [], []>} : vector<16x32xf32>, vector<32x32xf32>, vector<16x32xf32> -> vector<16x32xf32>
    %122 = vector.broadcast %17 : vector<1x32xf32> to vector<16x32xf32>
    %123 = arith.addf %121, %122 : vector<16x32xf32>
    %124 = arith.addf %22, %123 : vector<16x32xf32>
    %cst_66 = arith.constant dense<0.000000e+00> : vector<16xf32>
    %125 = vector.multi_reduction <add>, %124, %cst_66 [1] : vector<16x32xf32> to vector<16xf32>
    %126 = vector.shape_cast %125 : vector<16xf32> to vector<16x1xf32>
    %cst_67 = arith.constant 3.200000e+01 : f32
    %127 = vector.broadcast %cst_67 : f32 to vector<16x1xf32>
    %128 = arith.divf %126, %127 : vector<16x1xf32>
    %129 = vector.broadcast %128 : vector<16x1xf32> to vector<16x32xf32>
    %130 = arith.subf %124, %129 : vector<16x32xf32>
    %131 = arith.mulf %130, %130 : vector<16x32xf32>
    %cst_68 = arith.constant dense<0.000000e+00> : vector<16xf32>
    %132 = vector.multi_reduction <add>, %131, %cst_68 [1] : vector<16x32xf32> to vector<16xf32>
    %133 = vector.shape_cast %132 : vector<16xf32> to vector<16x1xf32>
    %cst_69 = arith.constant 3.200000e+01 : f32
    %134 = vector.broadcast %cst_69 : f32 to vector<16x1xf32>
    %135 = arith.divf %133, %134 : vector<16x1xf32>
    %136 = vector.broadcast %128 : vector<16x1xf32> to vector<16x32xf32>
    %137 = arith.subf %124, %136 : vector<16x32xf32>
    %cst_70 = arith.constant 9.99999974E-6 : f32
    %138 = vector.broadcast %cst_70 : f32 to vector<16x1xf32>
    %139 = arith.addf %135, %138 : vector<16x1xf32>
    %140 = math.rsqrt %139 : vector<16x1xf32>
    %141 = vector.broadcast %140 : vector<16x1xf32> to vector<16x32xf32>
    %142 = arith.mulf %137, %141 : vector<16x32xf32>
    %143 = vector.broadcast %19 : vector<1x32xf32> to vector<16x32xf32>
    %144 = arith.mulf %142, %143 : vector<16x32xf32>
    %145 = vector.broadcast %21 : vector<1x32xf32> to vector<16x32xf32>
    %146 = arith.addf %144, %145 : vector<16x32xf32>
    %147 = vector.shape_cast %146 : vector<16x32xf32> to vector<2x8x32xf32>
    %c0_71 = arith.constant 0 : index
    %c0_72 = arith.constant 0 : index
    %c0_73 = arith.constant 0 : index
    %148 = vector.load %arg12[%c0_71, %c0_72, %c0_73] : memref<1x32x32xf32, #tpu.memory_space<vmem>>, vector<1x32x32xf32>
    %149 = vector.shape_cast %148 : vector<1x32x32xf32> to vector<32x32xf32>
    %c0_74 = arith.constant 0 : index
    %c0_75 = arith.constant 0 : index
    %c0_76 = arith.constant 0 : index
    %150 = vector.load %arg13[%c0_74, %c0_75, %c0_76] : memref<1x1x32xf32, #tpu.memory_space<vmem>>, vector<1x1x32xf32>
    %151 = vector.shape_cast %150 : vector<1x1x32xf32> to vector<1x32xf32>
    %c0_77 = arith.constant 0 : index
    %c0_78 = arith.constant 0 : index
    %c0_79 = arith.constant 0 : index
    %152 = vector.load %arg14[%c0_77, %c0_78, %c0_79] : memref<1x32x64xf32, #tpu.memory_space<vmem>>, vector<1x32x64xf32>
    %153 = vector.shape_cast %152 : vector<1x32x64xf32> to vector<32x64xf32>
    %c0_80 = arith.constant 0 : index
    %c0_81 = arith.constant 0 : index
    %c0_82 = arith.constant 0 : index
    %154 = vector.load %arg15[%c0_80, %c0_81, %c0_82] : memref<1x1x64xf32, #tpu.memory_space<vmem>>, vector<1x1x64xf32>
    %155 = vector.shape_cast %154 : vector<1x1x64xf32> to vector<1x64xf32>
    %c0_83 = arith.constant 0 : index
    %c0_84 = arith.constant 0 : index
    %c0_85 = arith.constant 0 : index
    %156 = vector.load %arg16[%c0_83, %c0_84, %c0_85] : memref<1x32x32xf32, #tpu.memory_space<vmem>>, vector<1x32x32xf32>
    %157 = vector.shape_cast %156 : vector<1x32x32xf32> to vector<32x32xf32>
    %c0_86 = arith.constant 0 : index
    %c0_87 = arith.constant 0 : index
    %c0_88 = arith.constant 0 : index
    %158 = vector.load %arg17[%c0_86, %c0_87, %c0_88] : memref<1x1x32xf32, #tpu.memory_space<vmem>>, vector<1x1x32xf32>
    %159 = vector.shape_cast %158 : vector<1x1x32xf32> to vector<1x32xf32>
    %c0_89 = arith.constant 0 : index
    %c0_90 = arith.constant 0 : index
    %c0_91 = arith.constant 0 : index
    %160 = vector.load %arg18[%c0_89, %c0_90, %c0_91] : memref<1x1x32xf32, #tpu.memory_space<vmem>>, vector<1x1x32xf32>
    %161 = vector.shape_cast %160 : vector<1x1x32xf32> to vector<1x32xf32>
    %c0_92 = arith.constant 0 : index
    %c0_93 = arith.constant 0 : index
    %c0_94 = arith.constant 0 : index
    %162 = vector.load %arg19[%c0_92, %c0_93, %c0_94] : memref<1x1x32xf32, #tpu.memory_space<vmem>>, vector<1x1x32xf32>
    %163 = vector.shape_cast %162 : vector<1x1x32xf32> to vector<1x32xf32>
    %164 = vector.shape_cast %147 : vector<2x8x32xf32> to vector<16x32xf32>
    %165 = vector.shape_cast %5 : vector<2x8x32xf32> to vector<16x32xf32>
    %cst_95 = arith.constant dense<0.000000e+00> : vector<16x32xf32>
    %166 = tpu.matmul %164, %149, %cst_95 {dimension_numbers = #tpu.dot_dimension_numbers<[1], [0], [0], [1], [0, 0, 1, 1], [], []>} : vector<16x32xf32>, vector<32x32xf32>, vector<16x32xf32> -> vector<16x32xf32>
    %167 = vector.broadcast %151 : vector<1x32xf32> to vector<16x32xf32>
    %168 = arith.addf %166, %167 : vector<16x32xf32>
    %169 = vector.shape_cast %168 : vector<16x32xf32> to vector<2x8x32xf32>
    %cst_96 = arith.constant dense<0.000000e+00> : vector<16x64xf32>
    %170 = tpu.matmul %165, %153, %cst_96 {dimension_numbers = #tpu.dot_dimension_numbers<[1], [0], [0], [1], [0, 0, 1, 1], [], []>} : vector<16x32xf32>, vector<32x64xf32>, vector<16x64xf32> -> vector<16x64xf32>
    %171 = vector.broadcast %155 : vector<1x64xf32> to vector<16x64xf32>
    %172 = arith.addf %170, %171 : vector<16x64xf32>
    %173 = vector.extract_strided_slice %172 {offsets = [0, 0], sizes = [16, 32], strides = [1, 1]} : vector<16x64xf32> to vector<16x32xf32>
    %174 = vector.shape_cast %173 : vector<16x32xf32> to vector<2x8x32xf32>
    %175 = vector.extract_strided_slice %172 {offsets = [0, 32], sizes = [16, 32], strides = [1, 1]} : vector<16x64xf32> to vector<16x32xf32>
    %176 = vector.shape_cast %175 : vector<16x32xf32> to vector<2x8x32xf32>
    %177 = vector.extract_strided_slice %169 {offsets = [0, 0, 0], sizes = [2, 8, 8], strides = [1, 1, 1]} : vector<2x8x32xf32> to vector<2x8x8xf32>
    %178 = vector.extract_strided_slice %174 {offsets = [0, 0, 0], sizes = [2, 8, 8], strides = [1, 1, 1]} : vector<2x8x32xf32> to vector<2x8x8xf32>
    "tpu.trace_start"() <{level = 10 : i32, message = "bqd,bkd->bqk"}> : () -> ()
    %cst_97 = arith.constant dense<0.000000e+00> : vector<2x8x8xf32>
    %179 = tpu.matmul %177, %178, %cst_97 {dimension_numbers = #tpu.dot_dimension_numbers<[2], [2], [1], [1], [0, 0, 0, 1, 1, 1], [0], [0]>} : vector<2x8x8xf32>, vector<2x8x8xf32>, vector<2x8x8xf32> -> vector<2x8x8xf32>
    "tpu.trace_stop"() : () -> ()
    %cst_98 = arith.constant 0.353553385 : f32
    %180 = vector.broadcast %cst_98 : f32 to vector<2x8x8xf32>
    %181 = arith.mulf %179, %180 : vector<2x8x8xf32>
    %cst_99 = arith.constant dense<0xFF800000> : vector<2x8xf32>
    %182 = vector.multi_reduction <maximumf>, %181, %cst_99 [2] : vector<2x8x8xf32> to vector<2x8xf32>
    %183 = vector.shape_cast %182 : vector<2x8xf32> to vector<2x8x1xf32>
    %184 = vector.broadcast %183 : vector<2x8x1xf32> to vector<2x8x8xf32>
    %185 = arith.subf %181, %184 : vector<2x8x8xf32>
    %186 = math.exp %185 : vector<2x8x8xf32>
    %cst_100 = arith.constant dense<0.000000e+00> : vector<2x8xf32>
    %187 = vector.multi_reduction <add>, %186, %cst_100 [2] : vector<2x8x8xf32> to vector<2x8xf32>
    %188 = vector.shape_cast %187 : vector<2x8xf32> to vector<2x8x1xf32>
    %189 = tpu.reciprocal %188 {approx = true} : vector<2x8x1xf32> -> vector<2x8x1xf32>
    %190 = vector.broadcast %189 : vector<2x8x1xf32> to vector<2x8x8xf32>
    %191 = arith.mulf %186, %190 : vector<2x8x8xf32>
    %192 = vector.extract_strided_slice %176 {offsets = [0, 0, 0], sizes = [2, 8, 8], strides = [1, 1, 1]} : vector<2x8x32xf32> to vector<2x8x8xf32>
    "tpu.trace_start"() <{level = 10 : i32, message = "bqk,bkd->bqd"}> : () -> ()
    %cst_101 = arith.constant dense<0.000000e+00> : vector<2x8x8xf32>
    %193 = tpu.matmul %191, %192, %cst_101 {dimension_numbers = #tpu.dot_dimension_numbers<[2], [1], [1], [2], [0, 0, 0, 1, 1, 2], [0], [0]>} : vector<2x8x8xf32>, vector<2x8x8xf32>, vector<2x8x8xf32> -> vector<2x8x8xf32>
    "tpu.trace_stop"() : () -> ()
    %c0_102 = arith.constant 0 : index
    %c0_103 = arith.constant 0 : index
    %c0_104 = arith.constant 0 : index
    %194 = vector.load %arg28[%c0_102, %c0_103, %c0_104] : memref<2x8x32xf32, #tpu.memory_space<vmem>>, vector<2x8x8xf32>
    tpu.vector_store %arg28[%c0_102, %c0_103, %c0_104], %193 {strides = array<i32>} : memref<2x8x32xf32, #tpu.memory_space<vmem>>, vector<2x8x8xf32>,
    %195 = vector.extract_strided_slice %169 {offsets = [0, 0, 8], sizes = [2, 8, 8], strides = [1, 1, 1]} : vector<2x8x32xf32> to vector<2x8x8xf32>
    %196 = vector.extract_strided_slice %174 {offsets = [0, 0, 8], sizes = [2, 8, 8], strides = [1, 1, 1]} : vector<2x8x32xf32> to vector<2x8x8xf32>
    "tpu.trace_start"() <{level = 10 : i32, message = "bqd,bkd->bqk"}> : () -> ()
    %cst_105 = arith.constant dense<0.000000e+00> : vector<2x8x8xf32>
    %197 = tpu.matmul %195, %196, %cst_105 {dimension_numbers = #tpu.dot_dimension_numbers<[2], [2], [1], [1], [0, 0, 0, 1, 1, 1], [0], [0]>} : vector<2x8x8xf32>, vector<2x8x8xf32>, vector<2x8x8xf32> -> vector<2x8x8xf32>
    "tpu.trace_stop"() : () -> ()
    %cst_106 = arith.constant 0.353553385 : f32
    %198 = vector.broadcast %cst_106 : f32 to vector<2x8x8xf32>
    %199 = arith.mulf %197, %198 : vector<2x8x8xf32>
    %cst_107 = arith.constant dense<0xFF800000> : vector<2x8xf32>
    %200 = vector.multi_reduction <maximumf>, %199, %cst_107 [2] : vector<2x8x8xf32> to vector<2x8xf32>
    %201 = vector.shape_cast %200 : vector<2x8xf32> to vector<2x8x1xf32>
    %202 = vector.broadcast %201 : vector<2x8x1xf32> to vector<2x8x8xf32>
    %203 = arith.subf %199, %202 : vector<2x8x8xf32>
    %204 = math.exp %203 : vector<2x8x8xf32>
    %cst_108 = arith.constant dense<0.000000e+00> : vector<2x8xf32>
    %205 = vector.multi_reduction <add>, %204, %cst_108 [2] : vector<2x8x8xf32> to vector<2x8xf32>
    %206 = vector.shape_cast %205 : vector<2x8xf32> to vector<2x8x1xf32>
    %207 = tpu.reciprocal %206 {approx = true} : vector<2x8x1xf32> -> vector<2x8x1xf32>
    %208 = vector.broadcast %207 : vector<2x8x1xf32> to vector<2x8x8xf32>
    %209 = arith.mulf %204, %208 : vector<2x8x8xf32>
    %210 = vector.extract_strided_slice %176 {offsets = [0, 0, 8], sizes = [2, 8, 8], strides = [1, 1, 1]} : vector<2x8x32xf32> to vector<2x8x8xf32>
    "tpu.trace_start"() <{level = 10 : i32, message = "bqk,bkd->bqd"}> : () -> ()
    %cst_109 = arith.constant dense<0.000000e+00> : vector<2x8x8xf32>
    %211 = tpu.matmul %209, %210, %cst_109 {dimension_numbers = #tpu.dot_dimension_numbers<[2], [1], [1], [2], [0, 0, 0, 1, 1, 2], [0], [0]>} : vector<2x8x8xf32>, vector<2x8x8xf32>, vector<2x8x8xf32> -> vector<2x8x8xf32>
    "tpu.trace_stop"() : () -> ()
    %c0_110 = arith.constant 0 : index
    %c0_111 = arith.constant 0 : index
    %c8_112 = arith.constant 8 : index
    %212 = vector.load %arg28[%c0_110, %c0_111, %c8_112] : memref<2x8x32xf32, #tpu.memory_space<vmem>>, vector<2x8x8xf32>
    tpu.vector_store %arg28[%c0_110, %c0_111, %c8_112], %211 {strides = array<i32>} : memref<2x8x32xf32, #tpu.memory_space<vmem>>, vector<2x8x8xf32>,
    %213 = vector.extract_strided_slice %169 {offsets = [0, 0, 16], sizes = [2, 8, 8], strides = [1, 1, 1]} : vector<2x8x32xf32> to vector<2x8x8xf32>
    %214 = vector.extract_strided_slice %174 {offsets = [0, 0, 16], sizes = [2, 8, 8], strides = [1, 1, 1]} : vector<2x8x32xf32> to vector<2x8x8xf32>
    "tpu.trace_start"() <{level = 10 : i32, message = "bqd,bkd->bqk"}> : () -> ()
    %cst_113 = arith.constant dense<0.000000e+00> : vector<2x8x8xf32>
    %215 = tpu.matmul %213, %214, %cst_113 {dimension_numbers = #tpu.dot_dimension_numbers<[2], [2], [1], [1], [0, 0, 0, 1, 1, 1], [0], [0]>} : vector<2x8x8xf32>, vector<2x8x8xf32>, vector<2x8x8xf32> -> vector<2x8x8xf32>
    "tpu.trace_stop"() : () -> ()
    %cst_114 = arith.constant 0.353553385 : f32
    %216 = vector.broadcast %cst_114 : f32 to vector<2x8x8xf32>
    %217 = arith.mulf %215, %216 : vector<2x8x8xf32>
    %cst_115 = arith.constant dense<0xFF800000> : vector<2x8xf32>
    %218 = vector.multi_reduction <maximumf>, %217, %cst_115 [2] : vector<2x8x8xf32> to vector<2x8xf32>
    %219 = vector.shape_cast %218 : vector<2x8xf32> to vector<2x8x1xf32>
    %220 = vector.broadcast %219 : vector<2x8x1xf32> to vector<2x8x8xf32>
    %221 = arith.subf %217, %220 : vector<2x8x8xf32>
    %222 = math.exp %221 : vector<2x8x8xf32>
    %cst_116 = arith.constant dense<0.000000e+00> : vector<2x8xf32>
    %223 = vector.multi_reduction <add>, %222, %cst_116 [2] : vector<2x8x8xf32> to vector<2x8xf32>
    %224 = vector.shape_cast %223 : vector<2x8xf32> to vector<2x8x1xf32>
    %225 = tpu.reciprocal %224 {approx = true} : vector<2x8x1xf32> -> vector<2x8x1xf32>
    %226 = vector.broadcast %225 : vector<2x8x1xf32> to vector<2x8x8xf32>
    %227 = arith.mulf %222, %226 : vector<2x8x8xf32>
    %228 = vector.extract_strided_slice %176 {offsets = [0, 0, 16], sizes = [2, 8, 8], strides = [1, 1, 1]} : vector<2x8x32xf32> to vector<2x8x8xf32>
    "tpu.trace_start"() <{level = 10 : i32, message = "bqk,bkd->bqd"}> : () -> ()
    %cst_117 = arith.constant dense<0.000000e+00> : vector<2x8x8xf32>
    %229 = tpu.matmul %227, %228, %cst_117 {dimension_numbers = #tpu.dot_dimension_numbers<[2], [1], [1], [2], [0, 0, 0, 1, 1, 2], [0], [0]>} : vector<2x8x8xf32>, vector<2x8x8xf32>, vector<2x8x8xf32> -> vector<2x8x8xf32>
    "tpu.trace_stop"() : () -> ()
    %c0_118 = arith.constant 0 : index
    %c0_119 = arith.constant 0 : index
    %c16_120 = arith.constant 16 : index
    %230 = vector.load %arg28[%c0_118, %c0_119, %c16_120] : memref<2x8x32xf32, #tpu.memory_space<vmem>>, vector<2x8x8xf32>
    tpu.vector_store %arg28[%c0_118, %c0_119, %c16_120], %229 {strides = array<i32>} : memref<2x8x32xf32, #tpu.memory_space<vmem>>, vector<2x8x8xf32>,
    %231 = vector.extract_strided_slice %169 {offsets = [0, 0, 24], sizes = [2, 8, 8], strides = [1, 1, 1]} : vector<2x8x32xf32> to vector<2x8x8xf32>
    %232 = vector.extract_strided_slice %174 {offsets = [0, 0, 24], sizes = [2, 8, 8], strides = [1, 1, 1]} : vector<2x8x32xf32> to vector<2x8x8xf32>
    "tpu.trace_start"() <{level = 10 : i32, message = "bqd,bkd->bqk"}> : () -> ()
    %cst_121 = arith.constant dense<0.000000e+00> : vector<2x8x8xf32>
    %233 = tpu.matmul %231, %232, %cst_121 {dimension_numbers = #tpu.dot_dimension_numbers<[2], [2], [1], [1], [0, 0, 0, 1, 1, 1], [0], [0]>} : vector<2x8x8xf32>, vector<2x8x8xf32>, vector<2x8x8xf32> -> vector<2x8x8xf32>
    "tpu.trace_stop"() : () -> ()
    %cst_122 = arith.constant 0.353553385 : f32
    %234 = vector.broadcast %cst_122 : f32 to vector<2x8x8xf32>
    %235 = arith.mulf %233, %234 : vector<2x8x8xf32>
    %cst_123 = arith.constant dense<0xFF800000> : vector<2x8xf32>
    %236 = vector.multi_reduction <maximumf>, %235, %cst_123 [2] : vector<2x8x8xf32> to vector<2x8xf32>
    %237 = vector.shape_cast %236 : vector<2x8xf32> to vector<2x8x1xf32>
    %238 = vector.broadcast %237 : vector<2x8x1xf32> to vector<2x8x8xf32>
    %239 = arith.subf %235, %238 : vector<2x8x8xf32>
    %240 = math.exp %239 : vector<2x8x8xf32>
    %cst_124 = arith.constant dense<0.000000e+00> : vector<2x8xf32>
    %241 = vector.multi_reduction <add>, %240, %cst_124 [2] : vector<2x8x8xf32> to vector<2x8xf32>
    %242 = vector.shape_cast %241 : vector<2x8xf32> to vector<2x8x1xf32>
    %243 = tpu.reciprocal %242 {approx = true} : vector<2x8x1xf32> -> vector<2x8x1xf32>
    %244 = vector.broadcast %243 : vector<2x8x1xf32> to vector<2x8x8xf32>
    %245 = arith.mulf %240, %244 : vector<2x8x8xf32>
    %246 = vector.extract_strided_slice %176 {offsets = [0, 0, 24], sizes = [2, 8, 8], strides = [1, 1, 1]} : vector<2x8x32xf32> to vector<2x8x8xf32>
    "tpu.trace_start"() <{level = 10 : i32, message = "bqk,bkd->bqd"}> : () -> ()
    %cst_125 = arith.constant dense<0.000000e+00> : vector<2x8x8xf32>
    %247 = tpu.matmul %245, %246, %cst_125 {dimension_numbers = #tpu.dot_dimension_numbers<[2], [1], [1], [2], [0, 0, 0, 1, 1, 2], [0], [0]>} : vector<2x8x8xf32>, vector<2x8x8xf32>, vector<2x8x8xf32> -> vector<2x8x8xf32>
    "tpu.trace_stop"() : () -> ()
    %c0_126 = arith.constant 0 : index
    %c0_127 = arith.constant 0 : index
    %c24_128 = arith.constant 24 : index
    %248 = vector.load %arg28[%c0_126, %c0_127, %c24_128] : memref<2x8x32xf32, #tpu.memory_space<vmem>>, vector<2x8x8xf32>
    tpu.vector_store %arg28[%c0_126, %c0_127, %c24_128], %247 {strides = array<i32>} : memref<2x8x32xf32, #tpu.memory_space<vmem>>, vector<2x8x8xf32>,
    %c0_129 = arith.constant 0 : index
    %c0_130 = arith.constant 0 : index
    %c0_131 = arith.constant 0 : index
    %249 = vector.load %arg28[%c0_129, %c0_130, %c0_131] : memref<2x8x32xf32, #tpu.memory_space<vmem>>, vector<2x8x32xf32>
    %250 = vector.shape_cast %249 : vector<2x8x32xf32> to vector<16x32xf32>
    %cst_132 = arith.constant dense<0.000000e+00> : vector<16x32xf32>
    %251 = tpu.matmul %250, %157, %cst_132 {dimension_numbers = #tpu.dot_dimension_numbers<[1], [0], [0], [1], [0, 0, 1, 1], [], []>} : vector<16x32xf32>, vector<32x32xf32>, vector<16x32xf32> -> vector<16x32xf32>
    %252 = vector.broadcast %159 : vector<1x32xf32> to vector<16x32xf32>
    %253 = arith.addf %251, %252 : vector<16x32xf32>
    %254 = arith.addf %164, %253 : vector<16x32xf32>
    %cst_133 = arith.constant dense<0.000000e+00> : vector<16xf32>
    %255 = vector.multi_reduction <add>, %254, %cst_133 [1] : vector<16x32xf32> to vector<16xf32>
    %256 = vector.shape_cast %255 : vector<16xf32> to vector<16x1xf32>
    %cst_134 = arith.constant 3.200000e+01 : f32
    %257 = vector.broadcast %cst_134 : f32 to vector<16x1xf32>
    %258 = arith.divf %256, %257 : vector<16x1xf32>
    %259 = vector.broadcast %258 : vector<16x1xf32> to vector<16x32xf32>
    %260 = arith.subf %254, %259 : vector<16x32xf32>
    %261 = arith.mulf %260, %260 : vector<16x32xf32>
    %cst_135 = arith.constant dense<0.000000e+00> : vector<16xf32>
    %262 = vector.multi_reduction <add>, %261, %cst_135 [1] : vector<16x32xf32> to vector<16xf32>
    %263 = vector.shape_cast %262 : vector<16xf32> to vector<16x1xf32>
    %cst_136 = arith.constant 3.200000e+01 : f32
    %264 = vector.broadcast %cst_136 : f32 to vector<16x1xf32>
    %265 = arith.divf %263, %264 : vector<16x1xf32>
    %266 = vector.broadcast %258 : vector<16x1xf32> to vector<16x32xf32>
    %267 = arith.subf %254, %266 : vector<16x32xf32>
    %cst_137 = arith.constant 9.99999974E-6 : f32
    %268 = vector.broadcast %cst_137 : f32 to vector<16x1xf32>
    %269 = arith.addf %265, %268 : vector<16x1xf32>
    %270 = math.rsqrt %269 : vector<16x1xf32>
    %271 = vector.broadcast %270 : vector<16x1xf32> to vector<16x32xf32>
    %272 = arith.mulf %267, %271 : vector<16x32xf32>
    %273 = vector.broadcast %161 : vector<1x32xf32> to vector<16x32xf32>
    %274 = arith.mulf %272, %273 : vector<16x32xf32>
    %275 = vector.broadcast %163 : vector<1x32xf32> to vector<16x32xf32>
    %276 = arith.addf %274, %275 : vector<16x32xf32>
    %277 = vector.shape_cast %276 : vector<16x32xf32> to vector<2x8x32xf32>
    %c0_138 = arith.constant 0 : index
    %c0_139 = arith.constant 0 : index
    %c0_140 = arith.constant 0 : index
    %278 = vector.load %arg20[%c0_138, %c0_139, %c0_140] : memref<1x32x64xf32, #tpu.memory_space<vmem>>, vector<1x32x64xf32>
    %279 = vector.shape_cast %278 : vector<1x32x64xf32> to vector<32x64xf32>
    %c0_141 = arith.constant 0 : index
    %c0_142 = arith.constant 0 : index
    %c0_143 = arith.constant 0 : index
    %280 = vector.load %arg21[%c0_141, %c0_142, %c0_143] : memref<1x1x64xf32, #tpu.memory_space<vmem>>, vector<1x1x64xf32>
    %281 = vector.shape_cast %280 : vector<1x1x64xf32> to vector<1x64xf32>
    %c0_144 = arith.constant 0 : index
    %c0_145 = arith.constant 0 : index
    %c0_146 = arith.constant 0 : index
    %282 = vector.load %arg22[%c0_144, %c0_145, %c0_146] : memref<1x64x32xf32, #tpu.memory_space<vmem>>, vector<1x64x32xf32>
    %283 = vector.shape_cast %282 : vector<1x64x32xf32> to vector<64x32xf32>
    %c0_147 = arith.constant 0 : index
    %c0_148 = arith.constant 0 : index
    %c0_149 = arith.constant 0 : index
    %284 = vector.load %arg23[%c0_147, %c0_148, %c0_149] : memref<1x1x32xf32, #tpu.memory_space<vmem>>, vector<1x1x32xf32>
    %285 = vector.shape_cast %284 : vector<1x1x32xf32> to vector<1x32xf32>
    %c0_150 = arith.constant 0 : index
    %c0_151 = arith.constant 0 : index
    %c0_152 = arith.constant 0 : index
    %286 = vector.load %arg24[%c0_150, %c0_151, %c0_152] : memref<1x1x32xf32, #tpu.memory_space<vmem>>, vector<1x1x32xf32>
    %287 = vector.shape_cast %286 : vector<1x1x32xf32> to vector<1x32xf32>
    %c0_153 = arith.constant 0 : index
    %c0_154 = arith.constant 0 : index
    %c0_155 = arith.constant 0 : index
    %288 = vector.load %arg25[%c0_153, %c0_154, %c0_155] : memref<1x1x32xf32, #tpu.memory_space<vmem>>, vector<1x1x32xf32>
    %289 = vector.shape_cast %288 : vector<1x1x32xf32> to vector<1x32xf32>
    %290 = vector.shape_cast %277 : vector<2x8x32xf32> to vector<16x32xf32>
    %cst_156 = arith.constant dense<0.000000e+00> : vector<16x64xf32>
    %291 = tpu.matmul %290, %279, %cst_156 {dimension_numbers = #tpu.dot_dimension_numbers<[1], [0], [0], [1], [0, 0, 1, 1], [], []>} : vector<16x32xf32>, vector<32x64xf32>, vector<16x64xf32> -> vector<16x64xf32>
    %292 = vector.broadcast %281 : vector<1x64xf32> to vector<16x64xf32>
    %293 = arith.addf %291, %292 : vector<16x64xf32>
    %cst_157 = arith.constant 0.000000e+00 : f32
    %294 = vector.broadcast %cst_157 : f32 to vector<16x64xf32>
    %295 = arith.maximumf %293, %294 : vector<16x64xf32>
    %cst_158 = arith.constant dense<0.000000e+00> : vector<16x32xf32>
    %296 = tpu.matmul %295, %283, %cst_158 {dimension_numbers = #tpu.dot_dimension_numbers<[1], [0], [0], [1], [0, 0, 1, 1], [], []>} : vector<16x64xf32>, vector<64x32xf32>, vector<16x32xf32> -> vector<16x32xf32>
    %297 = vector.broadcast %285 : vector<1x32xf32> to vector<16x32xf32>
    %298 = arith.addf %296, %297 : vector<16x32xf32>
    %299 = arith.addf %290, %298 : vector<16x32xf32>
    %cst_159 = arith.constant dense<0.000000e+00> : vector<16xf32>
    %300 = vector.multi_reduction <add>, %299, %cst_159 [1] : vector<16x32xf32> to vector<16xf32>
    %301 = vector.shape_cast %300 : vector<16xf32> to vector<16x1xf32>
    %cst_160 = arith.constant 3.200000e+01 : f32
    %302 = vector.broadcast %cst_160 : f32 to vector<16x1xf32>
    %303 = arith.divf %301, %302 : vector<16x1xf32>
    %304 = vector.broadcast %303 : vector<16x1xf32> to vector<16x32xf32>
    %305 = arith.subf %299, %304 : vector<16x32xf32>
    %306 = arith.mulf %305, %305 : vector<16x32xf32>
    %cst_161 = arith.constant dense<0.000000e+00> : vector<16xf32>
    %307 = vector.multi_reduction <add>, %306, %cst_161 [1] : vector<16x32xf32> to vector<16xf32>
    %308 = vector.shape_cast %307 : vector<16xf32> to vector<16x1xf32>
    %cst_162 = arith.constant 3.200000e+01 : f32
    %309 = vector.broadcast %cst_162 : f32 to vector<16x1xf32>
    %310 = arith.divf %308, %309 : vector<16x1xf32>
    %311 = vector.broadcast %303 : vector<16x1xf32> to vector<16x32xf32>
    %312 = arith.subf %299, %311 : vector<16x32xf32>
    %cst_163 = arith.constant 9.99999974E-6 : f32
    %313 = vector.broadcast %cst_163 : f32 to vector<16x1xf32>
    %314 = arith.addf %310, %313 : vector<16x1xf32>
    %315 = math.rsqrt %314 : vector<16x1xf32>
    %316 = vector.broadcast %315 : vector<16x1xf32> to vector<16x32xf32>
    %317 = arith.mulf %312, %316 : vector<16x32xf32>
    %318 = vector.broadcast %287 : vector<1x32xf32> to vector<16x32xf32>
    %319 = arith.mulf %317, %318 : vector<16x32xf32>
    %320 = vector.broadcast %289 : vector<1x32xf32> to vector<16x32xf32>
    %321 = arith.addf %319, %320 : vector<16x32xf32>
    %322 = vector.shape_cast %321 : vector<16x32xf32> to vector<2x8x32xf32>
    %c0_164 = arith.constant 0 : index
    %c0_165 = arith.constant 0 : index
    %c0_166 = arith.constant 0 : index
    %323 = vector.load %arg27[%c0_164, %c0_165, %c0_166] : memref<2x8x32xf32, #tpu.memory_space<vmem>>, vector<2x8x32xf32>
    tpu.vector_store %arg27[%c0_164, %c0_165, %c0_166], %322 {strides = array<i32>} : memref<2x8x32xf32, #tpu.memory_space<vmem>>, vector<2x8x32xf32>,
    %c0_167 = arith.constant 0 : index
    %c0_168 = arith.constant 0 : index
    %c0_169 = arith.constant 0 : index
    %324 = vector.load %arg26[%c0_167, %c0_168, %c0_169] : memref<2x8x32xf32, #tpu.memory_space<vmem>>, vector<2x8x32xf32>
    tpu.vector_store %arg26[%c0_167, %c0_168, %c0_169], %322 {strides = array<i32>} : memref<2x8x32xf32, #tpu.memory_space<vmem>>, vector<2x8x32xf32>,
    return
  }
  func.func @transform_0(%arg0: i32) -> (i32, i32, i32) {
    %c0_i32 = arith.constant 0 : i32
    %c0_i32_0 = arith.constant 0 : i32
    %c0_i32_1 = arith.constant 0 : i32
    %c0_i32_2 = arith.constant 0 : i32
    return %c0_i32, %c0_i32_0, %c0_i32_1 : i32, i32, i32
  }
  func.func @transform_1(%arg0: i32) -> (i32, i32, i32) {
    %c0_i32 = arith.constant 0 : i32
    %c0_i32_0 = arith.constant 0 : i32
    %c0_i32_1 = arith.constant 0 : i32
    %c0_i32_2 = arith.constant 0 : i32
    return %c0_i32, %c0_i32_0, %c0_i32_1 : i32, i32, i32
  }
  func.func @transform_2(%arg0: i32) -> (i32, i32) {
    %c0_i32 = arith.constant 0 : i32
    %c0_i32_0 = arith.constant 0 : i32
    %c0_i32_1 = arith.constant 0 : i32
    return %c0_i32, %c0_i32_0 : i32, i32
  }
  func.func @transform_3(%arg0: i32) -> (i32, i32, i32) {
    %c0_i32 = arith.constant 0 : i32
    %c0_i32_0 = arith.constant 0 : i32
    %c0_i32_1 = arith.constant 0 : i32
    return %arg0, %c0_i32, %c0_i32_0 : i32, i32, i32
  }
  func.func @transform_4(%arg0: i32) -> (i32, i32, i32) {
    %c0_i32 = arith.constant 0 : i32
    %c0_i32_0 = arith.constant 0 : i32
    %c0_i32_1 = arith.constant 0 : i32
    return %arg0, %c0_i32, %c0_i32_0 : i32, i32, i32
  }
  func.func @transform_5(%arg0: i32) -> (i32, i32, i32) {
    %c0_i32 = arith.constant 0 : i32
    %c0_i32_0 = arith.constant 0 : i32
    %c0_i32_1 = arith.constant 0 : i32
    return %arg0, %c0_i32, %c0_i32_0 : i32, i32, i32
  }
  func.func @transform_6(%arg0: i32) -> (i32, i32, i32) {
    %c0_i32 = arith.constant 0 : i32
    %c0_i32_0 = arith.constant 0 : i32
    %c0_i32_1 = arith.constant 0 : i32
    return %arg0, %c0_i32, %c0_i32_0 : i32, i32, i32
  }
  func.func @transform_7(%arg0: i32) -> (i32, i32, i32) {
    %c0_i32 = arith.constant 0 : i32
    %c0_i32_0 = arith.constant 0 : i32
    %c0_i32_1 = arith.constant 0 : i32
    return %arg0, %c0_i32, %c0_i32_0 : i32, i32, i32
  }
  func.func @transform_8(%arg0: i32) -> (i32, i32, i32) {
    %c0_i32 = arith.constant 0 : i32
    %c0_i32_0 = arith.constant 0 : i32
    %c0_i32_1 = arith.constant 0 : i32
    return %arg0, %c0_i32, %c0_i32_0 : i32, i32, i32
  }
  func.func @transform_9(%arg0: i32) -> (i32, i32, i32) {
    %c0_i32 = arith.constant 0 : i32
    %c0_i32_0 = arith.constant 0 : i32
    %c0_i32_1 = arith.constant 0 : i32
    return %arg0, %c0_i32, %c0_i32_0 : i32, i32, i32
  }
  func.func @transform_10(%arg0: i32) -> (i32, i32, i32) {
    %c0_i32 = arith.constant 0 : i32
    %c0_i32_0 = arith.constant 0 : i32
    %c0_i32_1 = arith.constant 0 : i32
    return %arg0, %c0_i32, %c0_i32_0 : i32, i32, i32
  }
  func.func @transform_11(%arg0: i32) -> (i32, i32, i32) {
    %c0_i32 = arith.constant 0 : i32
    %c0_i32_0 = arith.constant 0 : i32
    %c0_i32_1 = arith.constant 0 : i32
    return %arg0, %c0_i32, %c0_i32_0 : i32, i32, i32
  }
  func.func @transform_12(%arg0: i32) -> (i32, i32, i32) {
    %c0_i32 = arith.constant 0 : i32
    %c0_i32_0 = arith.constant 0 : i32
    %c0_i32_1 = arith.constant 0 : i32
    return %arg0, %c0_i32, %c0_i32_0 : i32, i32, i32
  }
  func.func @transform_13(%arg0: i32) -> (i32, i32, i32) {
    %c0_i32 = arith.constant 0 : i32
    %c0_i32_0 = arith.constant 0 : i32
    %c0_i32_1 = arith.constant 0 : i32
    return %arg0, %c0_i32, %c0_i32_0 : i32, i32, i32
  }
  func.func @transform_14(%arg0: i32) -> (i32, i32, i32) {
    %c0_i32 = arith.constant 0 : i32
    %c0_i32_0 = arith.constant 0 : i32
    %c0_i32_1 = arith.constant 0 : i32
    return %arg0, %c0_i32, %c0_i32_0 : i32, i32, i32
  }
  func.func @transform_15(%arg0: i32) -> (i32, i32, i32) {
    %c0_i32 = arith.constant 0 : i32
    %c0_i32_0 = arith.constant 0 : i32
    %c0_i32_1 = arith.constant 0 : i32
    return %arg0, %c0_i32, %c0_i32_0 : i32, i32, i32
  }
  func.func @transform_16(%arg0: i32) -> (i32, i32, i32) {
    %c0_i32 = arith.constant 0 : i32
    %c0_i32_0 = arith.constant 0 : i32
    %c0_i32_1 = arith.constant 0 : i32
    return %arg0, %c0_i32, %c0_i32_0 : i32, i32, i32
  }
  func.func @transform_17(%arg0: i32) -> (i32, i32, i32) {
    %c0_i32 = arith.constant 0 : i32
    %c0_i32_0 = arith.constant 0 : i32
    %c0_i32_1 = arith.constant 0 : i32
    return %arg0, %c0_i32, %c0_i32_0 : i32, i32, i32
  }
  func.func @transform_18(%arg0: i32) -> (i32, i32, i32) {
    %c0_i32 = arith.constant 0 : i32
    %c0_i32_0 = arith.constant 0 : i32
    %c0_i32_1 = arith.constant 0 : i32
    return %arg0, %c0_i32, %c0_i32_0 : i32, i32, i32
  }
  func.func @transform_19(%arg0: i32) -> (i32, i32, i32) {
    %c0_i32 = arith.constant 0 : i32
    %c0_i32_0 = arith.constant 0 : i32
    %c0_i32_1 = arith.constant 0 : i32
    return %arg0, %c0_i32, %c0_i32_0 : i32, i32, i32
  }
  func.func @transform_20(%arg0: i32) -> (i32, i32, i32) {
    %c0_i32 = arith.constant 0 : i32
    %c0_i32_0 = arith.constant 0 : i32
    %c0_i32_1 = arith.constant 0 : i32
    return %arg0, %c0_i32, %c0_i32_0 : i32, i32, i32
  }
  func.func @transform_21(%arg0: i32) -> (i32, i32, i32) {
    %c0_i32 = arith.constant 0 : i32
    %c0_i32_0 = arith.constant 0 : i32
    %c0_i32_1 = arith.constant 0 : i32
    return %arg0, %c0_i32, %c0_i32_0 : i32, i32, i32
  }
  func.func @transform_22(%arg0: i32) -> (i32, i32, i32) {
    %c0_i32 = arith.constant 0 : i32
    %c0_i32_0 = arith.constant 0 : i32
    %c0_i32_1 = arith.constant 0 : i32
    return %arg0, %c0_i32, %c0_i32_0 : i32, i32, i32
  }
  func.func @transform_23(%arg0: i32) -> (i32, i32, i32) {
    %c0_i32 = arith.constant 0 : i32
    %c0_i32_0 = arith.constant 0 : i32
    %c0_i32_1 = arith.constant 0 : i32
    return %arg0, %c0_i32, %c0_i32_0 : i32, i32, i32
  }
  func.func @transform_24(%arg0: i32) -> (i32, i32, i32) {
    %c0_i32 = arith.constant 0 : i32
    %c0_i32_0 = arith.constant 0 : i32
    %c0_i32_1 = arith.constant 0 : i32
    return %arg0, %c0_i32, %c0_i32_0 : i32, i32, i32
  }
  func.func @transform_25(%arg0: i32) -> (i32, i32, i32) {
    %c0_i32 = arith.constant 0 : i32
    %c0_i32_0 = arith.constant 0 : i32
    %c0_i32_1 = arith.constant 0 : i32
    %c0_i32_2 = arith.constant 0 : i32
    return %c0_i32, %c0_i32_0, %c0_i32_1 : i32, i32, i32
  }
}

</mosaic_0001>

<llo_original>
// kernel: _transformer_forward.2
$region0: #{_transformer_forward.2}
  #allocation0 [shape = 'u32[]', space=smem, size = 0x4, offset = 0x4, fixed_abs, tag = 'smem constant byte address 0x4 - core index']
  #allocation1 [shape = 'u32[144,128]{1,0:T(1,128)}', space=vmem, size = 0x12000, scoped, tag = 'internal scratch']
  #allocation2 [shape = 'f32[2,8,32]{2,1,0:T(8,128)}', space=vmem, size = 0x2000, scoped, tag = 'scratch operand']
  #allocation3 [shape = 'f32[2,8,32]{2,1,0:T(8,128)}', space=vmem, size = 0x2000, scoped, tag = 'scratch operand']
  %s0 = inlined_call_operand.vmem [shape: f32[2,8,32], index: 0, kind: input, shape index: {}]
  %s1 = inlined_call_operand.vmem [shape: f32[1,32,32], index: 1, kind: input, shape index: {}]
  %s2 = inlined_call_operand.hbm [shape: f32[1,1,32], index: 2, kind: input, shape index: {}]
  %s3 = inlined_call_operand.hbm [shape: f32[1,32,64], index: 3, kind: input, shape index: {}]
  %s4 = inlined_call_operand.hbm [shape: f32[1,1,64], index: 4, kind: input, shape index: {}]
  %s5 = inlined_call_operand.hbm [shape: f32[1,32,32], index: 5, kind: input, shape index: {}]
  %s6 = inlined_call_operand.hbm [shape: f32[1,1,32], index: 6, kind: input, shape index: {}]
  %s7 = inlined_call_operand.hbm [shape: f32[1,1,32], index: 7, kind: input, shape index: {}]
  %s8 = inlined_call_operand.hbm [shape: f32[1,1,32], index: 8, kind: input, shape index: {}]
  %s9 = inlined_call_operand.hbm [shape: f32[1,32,64], index: 9, kind: input, shape index: {}]
  %s10 = inlined_call_operand.hbm [shape: f32[1,1,64], index: 10, kind: input, shape index: {}]
  %s11 = inlined_call_operand.vmem [shape: f32[1,64,32], index: 11, kind: input, shape index: {}]
  %s12 = inlined_call_operand.hbm [shape: f32[1,1,32], index: 12, kind: input, shape index: {}]
  %s13 = inlined_call_operand.hbm [shape: f32[1,1,32], index: 13, kind: input, shape index: {}]
  %s14 = inlined_call_operand.hbm [shape: f32[1,1,32], index: 14, kind: input, shape index: {}]
  %s15 = inlined_call_operand.vmem [shape: f32[2,8,32], index: 15, kind: output, shape index: {}]
  %s16 = sld [smem:[#allocation0]]
  $region122: #{_transformer_forward.2} parent=0
    _
  %s18 = ssub.s32 1, %s16
  %s19 = scalar_select 0, %s18, %s16
  $region1: #{_transformer_forward.2} parent=0
    #allocation4 [shape = 'u8[512]{0}', space=vmem, size = 0x400, scoped, tag = 'input window, operand 2, single buffered']
    #allocation5 [shape = 's32[1]{0}', space=sflag, size = 0x4, scoped, tag = 'scoped memory for _transformer_forward.2']
    #allocation6 [shape = 'u8[16384]{0}', space=vmem, size = 0x4000, scoped, tag = 'input window, operand 3, single buffered']
    #allocation7 [shape = 's32[1]{0}', space=sflag, size = 0x4, scoped, tag = 'scoped memory for _transformer_forward.2']
    #allocation8 [shape = 'u8[512]{0}', space=vmem, size = 0x400, scoped, tag = 'input window, operand 4, single buffered']
    #allocation9 [shape = 'u8[16384]{0}', space=vmem, size = 0x4000, scoped, tag = 'input window, operand 5, single buffered']
    #allocation10 [shape = 's32[1]{0}', space=sflag, size = 0x4, scoped, tag = 'scoped memory for _transformer_forward.2']
    #allocation11 [shape = 'u8[512]{0}', space=vmem, size = 0x400, scoped, tag = 'input window, operand 6, single buffered']
    #allocation12 [shape = 'u8[512]{0}', space=vmem, size = 0x400, scoped, tag = 'input window, operand 7, single buffered']
    #allocation13 [shape = 's32[1]{0}', space=sflag, size = 0x4, scoped, tag = 'scoped memory for _transformer_forward.2']
    #allocation14 [shape = 'u8[512]{0}', space=vmem, size = 0x400, scoped, tag = 'input window, operand 8, single buffered']
    #allocation15 [shape = 'u8[16384]{0}', space=vmem, size = 0x4000, scoped, tag = 'input window, operand 9, single buffered']
    #allocation16 [shape = 's32[1]{0}', space=sflag, size = 0x4, scoped, tag = 'scoped memory for _transformer_forward.2']
    #allocation17 [shape = 'u8[512]{0}', space=vmem, size = 0x400, scoped, tag = 'input window, operand 10, single buffered']
    #allocation18 [shape = 'u8[512]{0}', space=vmem, size = 0x400, scoped, tag = 'input window, operand 12, single buffered']
    #allocation19 [shape = 's32[1]{0}', space=sflag, size = 0x4, scoped, tag = 'scoped memory for _transformer_forward.2']
    #allocation20 [shape = 'u8[512]{0}', space=vmem, size = 0x400, scoped, tag = 'input window, operand 13, single buffered']
    #allocation21 [shape = 'u8[512]{0}', space=vmem, size = 0x400, scoped, tag = 'input window, operand 14, single buffered']
    #allocation22 [shape = 's32[1]{0}', space=sflag, size = 0x4, scoped, tag = 'scoped memory for _transformer_forward.2']
    %20 = vsyncpa [#allocation5], 0
    %21 = vsyncpa [#allocation7], 0
    %22 = vsyncpa [#allocation10], 0
    %23 = vsyncpa [#allocation13], 0
    %24 = vsyncpa [#allocation16], 0
    %25 = vsyncpa [#allocation19], 0
    %26 = vsyncpa [#allocation22], 0
    // Predicated region
    $region2: #{_transformer_forward.2} parent=1 // pred_check
      _
    $region3: #{_transformer_forward.2} parent=1 // pred_check_branch
      %28 = sbr.rel (0) target = $region5
    $region4: #{_transformer_forward.2} parent=1 // pred_region
      _
    $region5: #{_transformer_forward.2} parent=1 // pred_fallthru
      _
    // Predicated region
    $region6: #{_transformer_forward.2} parent=1 // pred_check
      _
    $region7: #{_transformer_forward.2} parent=1 // pred_check_branch
      %30 = sbr.rel (0) target = $region9
    $region8: #{_transformer_forward.2} parent=1 // pred_region
      _
    $region9: #{_transformer_forward.2} parent=1 // pred_fallthru
      _
    // Predicated region
    $region10: #{_transformer_forward.2} parent=1 // pred_check
      _
    $region11: #{_transformer_forward.2} parent=1 // pred_check_branch
      %32 = sbr.rel (0) target = $region13
    $region12: #{_transformer_forward.2} parent=1 // pred_region
      %s34 = ssub.s32 16, 16
      %35 = vsyncadd [#allocation5], %s34
      %s37 = sshll.u32 [#allocation4], 4
      %s38 = int_to_ptr.vmem [resolvable:$true] %s37
      %40 = dma.hbm_to_vmem [thread:$0]  %s2, 16, %s38, [#allocation5]
    $region13: #{_transformer_forward.2} parent=1 // pred_fallthru
      _
    // Predicated region
    $region14: #{_transformer_forward.2} parent=1 // pred_check
      _
    $region15: #{_transformer_forward.2} parent=1 // pred_check_branch
      %42 = sbr.rel (0) target = $region17
    $region16: #{_transformer_forward.2} parent=1 // pred_region
      %s44 = ssub.s32 512, 512
      %45 = vsyncadd [#allocation7], %s44
      %s46 = sshll.u32 [#allocation6], 4
      %s47 = int_to_ptr.vmem [resolvable:$true] %s46
      %52 = dma.hbm_to_vmem [thread:$0]  %s3, 512, %s47, [#allocation7], 128, 128, 8
    $region17: #{_transformer_forward.2} parent=1 // pred_fallthru
      _
    // Predicated region
    $region18: #{_transformer_forward.2} parent=1 // pred_check
      _
    $region19: #{_transformer_forward.2} parent=1 // pred_check_branch
      %54 = sbr.rel (0) target = $region21
    $region20: #{_transformer_forward.2} parent=1 // pred_region
      %s56 = ssub.s32 16, 16
      %57 = vsyncadd [#allocation7], %s56
      %s59 = sshll.u32 [#allocation8], 4
      %s60 = int_to_ptr.vmem [resolvable:$true] %s59
      %62 = dma.hbm_to_vmem [thread:$0]  %s4, 16, %s60, [#allocation7]
    $region21: #{_transformer_forward.2} parent=1 // pred_fallthru
      _
    // Predicated region
    $region22: #{_transformer_forward.2} parent=1 // pred_check
      _
    $region23: #{_transformer_forward.2} parent=1 // pred_check_branch
      %64 = sbr.rel (0) target = $region25
    $region24: #{_transformer_forward.2} parent=1 // pred_region
      %s66 = ssub.s32 512, 512
      %67 = vsyncadd [#allocation10], %s66
      %s68 = sshll.u32 [#allocation9], 4
      %s69 = int_to_ptr.vmem [resolvable:$true] %s68
      %74 = dma.hbm_to_vmem [thread:$0]  %s5, 512, %s69, [#allocation10], 128, 128, 8
    $region25: #{_transformer_forward.2} parent=1 // pred_fallthru
      _
    // Predicated region
    $region26: #{_transformer_forward.2} parent=1 // pred_check
      _
    $region27: #{_transformer_forward.2} parent=1 // pred_check_branch
      %76 = sbr.rel (0) target = $region29
    $region28: #{_transformer_forward.2} parent=1 // pred_region
      %s78 = ssub.s32 16, 16
      %79 = vsyncadd [#allocation10], %s78
      %s81 = sshll.u32 [#allocation11], 4
      %s82 = int_to_ptr.vmem [resolvable:$true] %s81
      %84 = dma.hbm_to_vmem [thread:$0]  %s6, 16, %s82, [#allocation10]
    $region29: #{_transformer_forward.2} parent=1 // pred_fallthru
      _
    // Predicated region
    $region30: #{_transformer_forward.2} parent=1 // pred_check
      _
    $region31: #{_transformer_forward.2} parent=1 // pred_check_branch
      %86 = sbr.rel (0) target = $region33
    $region32: #{_transformer_forward.2} parent=1 // pred_region
      %s88 = ssub.s32 16, 16
      %89 = vsyncadd [#allocation13], %s88
      %s91 = sshll.u32 [#allocation12], 4
      %s92 = int_to_ptr.vmem [resolvable:$true] %s91
      %94 = dma.hbm_to_vmem [thread:$0]  %s7, 16, %s92, [#allocation13]
    $region33: #{_transformer_forward.2} parent=1 // pred_fallthru
      _
    // Predicated region
    $region34: #{_transformer_forward.2} parent=1 // pred_check
      _
    $region35: #{_transformer_forward.2} parent=1 // pred_check_branch
      %96 = sbr.rel (0) target = $region37
    $region36: #{_transformer_forward.2} parent=1 // pred_region
      %s98 = ssub.s32 16, 16
      %99 = vsyncadd [#allocation13], %s98
      %s101 = sshll.u32 [#allocation14], 4
      %s102 = int_to_ptr.vmem [resolvable:$true] %s101
      %104 = dma.hbm_to_vmem [thread:$0]  %s8, 16, %s102, [#allocation13]
    $region37: #{_transformer_forward.2} parent=1 // pred_fallthru
      _
    // Predicated region
    $region38: #{_transformer_forward.2} parent=1 // pred_check
      _
    $region39: #{_transformer_forward.2} parent=1 // pred_check_branch
      %106 = sbr.rel (0) target = $region41
    $region40: #{_transformer_forward.2} parent=1 // pred_region
      %s108 = ssub.s32 512, 512
      %109 = vsyncadd [#allocation16], %s108
      %s110 = sshll.u32 [#allocation15], 4
      %s111 = int_to_ptr.vmem [resolvable:$true] %s110
      %116 = dma.hbm_to_vmem [thread:$0]  %s9, 512, %s111, [#allocation16], 128, 128, 8
    $region41: #{_transformer_forward.2} parent=1 // pred_fallthru
      _
    // Predicated region
    $region42: #{_transformer_forward.2} parent=1 // pred_check
      _
    $region43: #{_transformer_forward.2} parent=1 // pred_check_branch
      %118 = sbr.rel (0) target = $region45
    $region44: #{_transformer_forward.2} parent=1 // pred_region
      %s120 = ssub.s32 16, 16
      %121 = vsyncadd [#allocation16], %s120
      %s123 = sshll.u32 [#allocation17], 4
      %s124 = int_to_ptr.vmem [resolvable:$true] %s123
      %126 = dma.hbm_to_vmem [thread:$0]  %s10, 16, %s124, [#allocation16]
    $region45: #{_transformer_forward.2} parent=1 // pred_fallthru
      _
    // Predicated region
    $region46: #{_transformer_forward.2} parent=1 // pred_check
      _
    $region47: #{_transformer_forward.2} parent=1 // pred_check_branch
      %128 = sbr.rel (0) target = $region49
    $region48: #{_transformer_forward.2} parent=1 // pred_region
      _
    $region49: #{_transformer_forward.2} parent=1 // pred_fallthru
      _
    // Predicated region
    $region50: #{_transformer_forward.2} parent=1 // pred_check
      _
    $region51: #{_transformer_forward.2} parent=1 // pred_check_branch
      %130 = sbr.rel (0) target = $region53
    $region52: #{_transformer_forward.2} parent=1 // pred_region
      %s132 = ssub.s32 16, 16
      %133 = vsyncadd [#allocation19], %s132
      %s135 = sshll.u32 [#allocation18], 4
      %s136 = int_to_ptr.vmem [resolvable:$true] %s135
      %138 = dma.hbm_to_vmem [thread:$0]  %s12, 16, %s136, [#allocation19]
    $region53: #{_transformer_forward.2} parent=1 // pred_fallthru
      _
    // Predicated region
    $region54: #{_transformer_forward.2} parent=1 // pred_check
      _
    $region55: #{_transformer_forward.2} parent=1 // pred_check_branch
      %140 = sbr.rel (0) target = $region57
    $region56: #{_transformer_forward.2} parent=1 // pred_region
      %s142 = ssub.s32 16, 16
      %143 = vsyncadd [#allocation19], %s142
      %s145 = sshll.u32 [#allocation20], 4
      %s146 = int_to_ptr.vmem [resolvable:$true] %s145
      %148 = dma.hbm_to_vmem [thread:$0]  %s13, 16, %s146, [#allocation19]
    $region57: #{_transformer_forward.2} parent=1 // pred_fallthru
      _
    // Predicated region
    $region58: #{_transformer_forward.2} parent=1 // pred_check
      _
    $region59: #{_transformer_forward.2} parent=1 // pred_check_branch
      %150 = sbr.rel (0) target = $region61
    $region60: #{_transformer_forward.2} parent=1 // pred_region
      %s152 = ssub.s32 16, 16
      %153 = vsyncadd [#allocation22], %s152
      %s155 = sshll.u32 [#allocation21], 4
      %s156 = int_to_ptr.vmem [resolvable:$true] %s155
      %158 = dma.hbm_to_vmem [thread:$0]  %s14, 16, %s156, [#allocation22]
    $region61: #{_transformer_forward.2} parent=1 // pred_fallthru
      _
    // Predicated region
    $region62: #{_transformer_forward.2} parent=1 // pred_check
      _
    $region63: #{_transformer_forward.2} parent=1 // pred_check_branch
      %160 = sbr.rel (0) target = $region65
    $region64: #{_transformer_forward.2} parent=1 // pred_region
      %161 = dma.done [#allocation5], 16
    $region65: #{_transformer_forward.2} parent=1 // pred_fallthru
      _
    // Predicated region
    $region66: #{_transformer_forward.2} parent=1 // pred_check
      _
    $region67: #{_transformer_forward.2} parent=1 // pred_check_branch
      %163 = sbr.rel (0) target = $region69
    $region68: #{_transformer_forward.2} parent=1 // pred_region
      %164 = dma.done [#allocation7], 512
    $region69: #{_transformer_forward.2} parent=1 // pred_fallthru
      _
    // Predicated region
    $region70: #{_transformer_forward.2} parent=1 // pred_check
      _
    $region71: #{_transformer_forward.2} parent=1 // pred_check_branch
      %166 = sbr.rel (0) target = $region73
    $region72: #{_transformer_forward.2} parent=1 // pred_region
      %167 = dma.done [#allocation7], 16
    $region73: #{_transformer_forward.2} parent=1 // pred_fallthru
      _
    // Predicated region
    $region74: #{_transformer_forward.2} parent=1 // pred_check
      _
    $region75: #{_transformer_forward.2} parent=1 // pred_check_branch
      %169 = sbr.rel (0) target = $region77
    $region76: #{_transformer_forward.2} parent=1 // pred_region
      %170 = dma.done [#allocation10], 512
    $region77: #{_transformer_forward.2} parent=1 // pred_fallthru
      _
    // Predicated region
    $region78: #{_transformer_forward.2} parent=1 // pred_check
      _
    $region79: #{_transformer_forward.2} parent=1 // pred_check_branch
      %172 = sbr.rel (0) target = $region81
    $region80: #{_transformer_forward.2} parent=1 // pred_region
      %173 = dma.done [#allocation10], 16
    $region81: #{_transformer_forward.2} parent=1 // pred_fallthru
      _
    // Predicated region
    $region82: #{_transformer_forward.2} parent=1 // pred_check
      _
    $region83: #{_transformer_forward.2} parent=1 // pred_check_branch
      %175 = sbr.rel (0) target = $region85
    $region84: #{_transformer_forward.2} parent=1 // pred_region
      %176 = dma.done [#allocation13], 16
    $region85: #{_transformer_forward.2} parent=1 // pred_fallthru
      _
    // Predicated region
    $region86: #{_transformer_forward.2} parent=1 // pred_check
      _
    $region87: #{_transformer_forward.2} parent=1 // pred_check_branch
      %178 = sbr.rel (0) target = $region89
    $region88: #{_transformer_forward.2} parent=1 // pred_region
      %179 = dma.done [#allocation13], 16
    $region89: #{_transformer_forward.2} parent=1 // pred_fallthru
      _
    // Predicated region
    $region90: #{_transformer_forward.2} parent=1 // pred_check
      _
    $region91: #{_transformer_forward.2} parent=1 // pred_check_branch
      %181 = sbr.rel (0) target = $region93
    $region92: #{_transformer_forward.2} parent=1 // pred_region
      %182 = dma.done [#allocation16], 512
    $region93: #{_transformer_forward.2} parent=1 // pred_fallthru
      _
    // Predicated region
    $region94: #{_transformer_forward.2} parent=1 // pred_check
      _
    $region95: #{_transformer_forward.2} parent=1 // pred_check_branch
      %184 = sbr.rel (0) target = $region97
    $region96: #{_transformer_forward.2} parent=1 // pred_region
      %185 = dma.done [#allocation16], 16
    $region97: #{_transformer_forward.2} parent=1 // pred_fallthru
      _
    // Predicated region
    $region98: #{_transformer_forward.2} parent=1 // pred_check
      _
    $region99: #{_transformer_forward.2} parent=1 // pred_check_branch
      %187 = sbr.rel (0) target = $region101
    $region100: #{_transformer_forward.2} parent=1 // pred_region
      %188 = dma.done [#allocation19], 16
    $region101: #{_transformer_forward.2} parent=1 // pred_fallthru
      _
    // Predicated region
    $region102: #{_transformer_forward.2} parent=1 // pred_check
      _
    $region103: #{_transformer_forward.2} parent=1 // pred_check_branch
      %190 = sbr.rel (0) target = $region105
    $region104: #{_transformer_forward.2} parent=1 // pred_region
      %191 = dma.done [#allocation19], 16
    $region105: #{_transformer_forward.2} parent=1 // pred_fallthru
      _
    // Predicated region
    $region106: #{_transformer_forward.2} parent=1 // pred_check
      _
    $region107: #{_transformer_forward.2} parent=1 // pred_check_branch
      %193 = sbr.rel (0) target = $region109
    $region108: #{_transformer_forward.2} parent=1 // pred_region
      %194 = dma.done [#allocation22], 16
    $region109: #{_transformer_forward.2} parent=1 // pred_fallthru
      _
    %p195 = scmp.eq.s32.totalorder 0, 0
    // Predicated region
    $region110: #{_transformer_forward.2} parent=1 // pred_check
      %p196 = pneg %p195
    $region111: #{_transformer_forward.2} parent=1 // pred_check_branch
      %198 = sbr.rel (%p196) target = $region113
    $region112: #{_transformer_forward.2} parent=1 // pred_region
      %v199 = vld [vmem:[%s0] sm:$0xff]
      %v200 = vld [vmem:[%s0 + $0x8] sm:$0xff]
      %vm201 = vcmask 261120
      %202 = vst.msk [vmem:[#allocation2] sm:$0xff] %vm201, %v199
      %203 = vst.msk [vmem:[#allocation2 + $0x8] sm:$0xff] %vm201, %v200
    $region113: #{_transformer_forward.2} parent=1 // pred_fallthru
      _
    %v204 = vld [vmem:[#allocation2] sm:$0xff]
    %v205 = vld [vmem:[#allocation2 + $0x8] sm:$0xff]
    %v206 = vld [vmem:[%s1] sm:$0xff]
    %v207 = vld [vmem:[%s1 + $0x8] sm:$0xff]
    %v208 = vld [vmem:[%s1 + $0x10] sm:$0xff]
    %v209 = vld [vmem:[%s1 + $0x18] sm:$0xff]
    %v210 = vld [vmem:[#allocation4] sm:$0x1]
    %v211 = vld [vmem:[#allocation6] sm:$0xff]
    %v212 = vld [vmem:[#allocation6 + $0x8] sm:$0xff]
    %v213 = vld [vmem:[#allocation6 + $0x10] sm:$0xff]
    %v214 = vld [vmem:[#allocation6 + $0x18] sm:$0xff]
    %v215 = vld [vmem:[#allocation8] sm:$0x1]
    %v216 = vld [vmem:[#allocation9] sm:$0xff]
    %v217 = vld [vmem:[#allocation9 + $0x8] sm:$0xff]
    %v218 = vld [vmem:[#allocation9 + $0x10] sm:$0xff]
    %v219 = vld [vmem:[#allocation9 + $0x18] sm:$0xff]
    %v220 = vld [vmem:[#allocation11] sm:$0x1]
    %v221 = vld [vmem:[#allocation12] sm:$0x1]
    %v222 = vld [vmem:[#allocation14] sm:$0x1]
    %v224 = vlaneseq
    %v225 = vshrl.u32 %v224, 7
    %v226 = vsub.s32 0, %v225
    %v227 = vrot.slane %v210, %v226
    %vm229 = vcmask 261120
    %v231 = vsel %vm229, %v204, 0
    %v234 = vsel %vm229, %v205, 0
    %236 = vmatprep.subr.mxu0 0.0
    %237 = vmatpush1.msra.mxu0 0.0
    %238 = vmatprep.subr.mxu0 0.0
    %239 = vmatpush1.msra.mxu0 0.0
    %240 = vmatprep.subr.mxu0 0.0
    %241 = vmatpush1.msra.mxu0 0.0
    %242 = vmatprep.subr.mxu0 0.0
    %243 = vmatpush1.msra.mxu0 0.0
    %244 = vmatprep.subr.mxu0 0.0
    %245 = vmatpush1.msra.mxu0 0.0
    %246 = vmatprep.subr.mxu0 0.0
    %247 = vmatpush1.msra.mxu0 0.0
    %248 = vmatprep.subr.mxu0 0.0
    %249 = vmatpush1.msra.mxu0 0.0
    %250 = vmatprep.subr.mxu0 0.0
    %251 = vmatpush1.msra.mxu0 0.0
    %252 = vmatprep.subr.mxu0 0.0
    %253 = vmatpush1.msra.mxu0 0.0
    %254 = vmatprep.subr.mxu0 0.0
    %255 = vmatpush1.msra.mxu0 0.0
    %256 = vmatprep.subr.mxu0 0.0
    %257 = vmatpush1.msra.mxu0 0.0
    %258 = vmatprep.subr.mxu0 0.0
    %259 = vmatpush1.msra.mxu0 0.0
    %260 = vmatprep.subr.mxu0 0.0
    %261 = vmatpush1.msra.mxu0 %v209
    %262 = vmatprep.subr.mxu0 0.0
    %263 = vmatpush1.msra.mxu0 %v208
    %264 = vmatprep.subr.mxu0 0.0
    %265 = vmatpush1.msra.mxu0 %v207
    %266 = vmatprep.subr.mxu0 0.0
    %267 = vmatpush1.msra.mxu0 %v206
    %268 = vmatprep.subr.mxu0 0.0
    %269 = vmatpush2.msra.mxu0 0.0
    %270 = vmatprep.subr.mxu0 0.0
    %271 = vmatpush2.msra.mxu0 0.0
    %272 = vmatprep.subr.mxu0 0.0
    %273 = vmatpush2.msra.mxu0 0.0
    %274 = vmatprep.subr.mxu0 0.0
    %275 = vmatpush2.msra.mxu0 0.0
    %276 = vmatprep.subr.mxu0 0.0
    %277 = vmatpush2.msra.mxu0 0.0
    %278 = vmatprep.subr.mxu0 0.0
    %279 = vmatpush2.msra.mxu0 0.0
    %280 = vmatprep.subr.mxu0 0.0
    %281 = vmatpush2.msra.mxu0 0.0
    %282 = vmatprep.subr.mxu0 0.0
    %283 = vmatpush2.msra.mxu0 0.0
    %284 = vmatprep.subr.mxu0 0.0
    %285 = vmatpush2.msra.mxu0 0.0
    %286 = vmatprep.subr.mxu0 0.0
    %287 = vmatpush2.msra.mxu0 0.0
    %288 = vmatprep.subr.mxu0 0.0
    %289 = vmatpush2.msra.mxu0 0.0
    %290 = vmatprep.subr.mxu0 0.0
    %291 = vmatpush2.msra.mxu0 0.0
    %292 = vmatprep.subr.mxu0 0.0
    %293 = vmatpush2.msra.mxu0 0.0
    %294 = vmatprep.subr.mxu0 0.0
    %295 = vmatpush2.msra.mxu0 0.0
    %296 = vmatprep.subr.mxu0 0.0
    %297 = vmatpush2.msra.mxu0 0.0
    %298 = vmatprep.subr.mxu0 0.0
    %299 = vmatpush2.msra.mxu0 0.0
    %300 = vmatprep.mubr.f32.mxu0 0.0
    %301 = vmatmul.mubr.f32.gmra.mxu0 %v231
    %v302 = vpop.f32.mrf.mxu0
    %v303 = vadd.f32 %v227, %v302
    %v304 = vpop.f32.mrf.mxu0
    %305 = vmatprep.mubr.f32.mxu0 0.0
    %306 = vmatmul.mubr.f32.gmra.mxu0 %v234
    %v307 = vpop.f32.mrf.mxu0
    %v308 = vadd.f32 %v227, %v307
    %v309 = vpop.f32.mrf.mxu0
    %310 = vdwg.mxu0
    %v312 = vlaneseq
    %v313 = vshrl.u32 %v312, 7
    %v314 = vsub.s32 0, %v313
    %v315 = vrot.slane %v215, %v314
    %317 = vmatprep.subr.mxu0 0.0
    %318 = vmatpush1.msra.mxu0 0.0
    %319 = vmatprep.subr.mxu0 0.0
    %320 = vmatpush1.msra.mxu0 0.0
    %321 = vmatprep.subr.mxu0 0.0
    %322 = vmatpush1.msra.mxu0 0.0
    %323 = vmatprep.subr.mxu0 0.0
    %324 = vmatpush1.msra.mxu0 0.0
    %325 = vmatprep.subr.mxu0 0.0
    %326 = vmatpush1.msra.mxu0 0.0
    %327 = vmatprep.subr.mxu0 0.0
    %328 = vmatpush1.msra.mxu0 0.0
    %329 = vmatprep.subr.mxu0 0.0
    %330 = vmatpush1.msra.mxu0 0.0
    %331 = vmatprep.subr.mxu0 0.0
    %332 = vmatpush1.msra.mxu0 0.0
    %333 = vmatprep.subr.mxu0 0.0
    %334 = vmatpush1.msra.mxu0 0.0
    %335 = vmatprep.subr.mxu0 0.0
    %336 = vmatpush1.msra.mxu0 0.0
    %337 = vmatprep.subr.mxu0 0.0
    %338 = vmatpush1.msra.mxu0 0.0
    %339 = vmatprep.subr.mxu0 0.0
    %340 = vmatpush1.msra.mxu0 0.0
    %341 = vmatprep.subr.mxu0 0.0
    %342 = vmatpush1.msra.mxu0 %v214
    %343 = vmatprep.subr.mxu0 0.0
    %344 = vmatpush1.msra.mxu0 %v213
    %345 = vmatprep.subr.mxu0 0.0
    %346 = vmatpush1.msra.mxu0 %v212
    %347 = vmatprep.subr.mxu0 0.0
    %348 = vmatpush1.msra.mxu0 %v211
    %349 = vmatprep.subr.mxu0 0.0
    %350 = vmatpush2.msra.mxu0 0.0
    %351 = vmatprep.subr.mxu0 0.0
    %352 = vmatpush2.msra.mxu0 0.0
    %353 = vmatprep.subr.mxu0 0.0
    %354 = vmatpush2.msra.mxu0 0.0
    %355 = vmatprep.subr.mxu0 0.0
    %356 = vmatpush2.msra.mxu0 0.0
    %357 = vmatprep.subr.mxu0 0.0
    %358 = vmatpush2.msra.mxu0 0.0
    %359 = vmatprep.subr.mxu0 0.0
    %360 = vmatpush2.msra.mxu0 0.0
    %361 = vmatprep.subr.mxu0 0.0
    %362 = vmatpush2.msra.mxu0 0.0
    %363 = vmatprep.subr.mxu0 0.0
    %364 = vmatpush2.msra.mxu0 0.0
    %365 = vmatprep.subr.mxu0 0.0
    %366 = vmatpush2.msra.mxu0 0.0
    %367 = vmatprep.subr.mxu0 0.0
    %368 = vmatpush2.msra.mxu0 0.0
    %369 = vmatprep.subr.mxu0 0.0
    %370 = vmatpush2.msra.mxu0 0.0
    %371 = vmatprep.subr.mxu0 0.0
    %372 = vmatpush2.msra.mxu0 0.0
    %373 = vmatprep.subr.mxu0 0.0
    %374 = vmatpush2.msra.mxu0 0.0
    %375 = vmatprep.subr.mxu0 0.0
    %376 = vmatpush2.msra.mxu0 0.0
    %377 = vmatprep.subr.mxu0 0.0
    %378 = vmatpush2.msra.mxu0 0.0
    %379 = vmatprep.subr.mxu0 0.0
    %380 = vmatpush2.msra.mxu0 0.0
    %381 = vmatprep.mubr.f32.mxu0 0.0
    %382 = vmatmul.mubr.f32.gmra.mxu0 %v231
    %v383 = vpop.f32.mrf.mxu0
    %v384 = vadd.f32 %v315, %v383
    %v385 = vpop.f32.mrf.mxu0
    %386 = vmatprep.mubr.f32.mxu0 0.0
    %387 = vmatmul.mubr.f32.gmra.mxu0 %v234
    %v388 = vpop.f32.mrf.mxu0
    %v389 = vadd.f32 %v315, %v388
    %v390 = vpop.f32.mrf.mxu0
    %391 = vdwg.mxu0
    %vm392 = vcmask 64512
    %v394 = vsel %vm392, %v303, 0
    %v397 = vsel %vm392, %v384, 0
    %399 = vmatprep.subr.mxu0 0.0
    %400 = vmatpush1.xpose.msra.mxu0 0.0
    %401 = vmatprep.subr.mxu0 0.0
    %402 = vmatpush1.xpose.msra.mxu0 0.0
    %403 = vmatprep.subr.mxu0 0.0
    %404 = vmatpush1.xpose.msra.mxu0 0.0
    %405 = vmatprep.subr.mxu0 0.0
    %406 = vmatpush1.xpose.msra.mxu0 0.0
    %407 = vmatprep.subr.mxu0 0.0
    %408 = vmatpush1.xpose.msra.mxu0 0.0
    %409 = vmatprep.subr.mxu0 0.0
    %410 = vmatpush1.xpose.msra.mxu0 0.0
    %411 = vmatprep.subr.mxu0 0.0
    %412 = vmatpush1.xpose.msra.mxu0 0.0
    %413 = vmatprep.subr.mxu0 0.0
    %414 = vmatpush1.xpose.msra.mxu0 0.0
    %415 = vmatprep.subr.mxu0 0.0
    %416 = vmatpush1.xpose.msra.mxu0 0.0
    %417 = vmatprep.subr.mxu0 0.0
    %418 = vmatpush1.xpose.msra.mxu0 0.0
    %419 = vmatprep.subr.mxu0 0.0
    %420 = vmatpush1.xpose.msra.mxu0 0.0
    %421 = vmatprep.subr.mxu0 0.0
    %422 = vmatpush1.xpose.msra.mxu0 0.0
    %423 = vmatprep.subr.mxu0 0.0
    %424 = vmatpush1.xpose.msra.mxu0 0.0
    %425 = vmatprep.subr.mxu0 0.0
    %426 = vmatpush1.xpose.msra.mxu0 0.0
    %427 = vmatprep.subr.mxu0 0.0
    %428 = vmatpush1.xpose.msra.mxu0 0.0
    %429 = vmatprep.subr.mxu0 0.0
    %430 = vmatpush1.xpose.msra.mxu0 %v397
    %431 = vmatprep.subr.mxu0 0.0
    %432 = vmatpush2.xpose.msra.mxu0 0.0
    %433 = vmatprep.subr.mxu0 0.0
    %434 = vmatpush2.xpose.msra.mxu0 0.0
    %435 = vmatprep.subr.mxu0 0.0
    %436 = vmatpush2.xpose.msra.mxu0 0.0
    %437 = vmatprep.subr.mxu0 0.0
    %438 = vmatpush2.xpose.msra.mxu0 0.0
    %439 = vmatprep.subr.mxu0 0.0
    %440 = vmatpush2.xpose.msra.mxu0 0.0
    %441 = vmatprep.subr.mxu0 0.0
    %442 = vmatpush2.xpose.msra.mxu0 0.0
    %443 = vmatprep.subr.mxu0 0.0
    %444 = vmatpush2.xpose.msra.mxu0 0.0
    %445 = vmatprep.subr.mxu0 0.0
    %446 = vmatpush2.xpose.msra.mxu0 0.0
    %447 = vmatprep.subr.mxu0 0.0
    %448 = vmatpush2.xpose.msra.mxu0 0.0
    %449 = vmatprep.subr.mxu0 0.0
    %450 = vmatpush2.xpose.msra.mxu0 0.0
    %451 = vmatprep.subr.mxu0 0.0
    %452 = vmatpush2.xpose.msra.mxu0 0.0
    %453 = vmatprep.subr.mxu0 0.0
    %454 = vmatpush2.xpose.msra.mxu0 0.0
    %455 = vmatprep.subr.mxu0 0.0
    %456 = vmatpush2.xpose.msra.mxu0 0.0
    %457 = vmatprep.subr.mxu0 0.0
    %458 = vmatpush2.xpose.msra.mxu0 0.0
    %459 = vmatprep.subr.mxu0 0.0
    %460 = vmatpush2.xpose.msra.mxu0 0.0
    %461 = vmatprep.subr.mxu0 0.0
    %462 = vmatpush2.xpose.msra.mxu0 0.0
    %463 = vmatprep.mubr.f32.mxu0 0.0
    %464 = vmatmul.mubr.f32.gmra.mxu0 %v394
    %v465 = vpop.f32.mrf.mxu0
    %v466 = vadd.f32 0.0, %v465
    %v467 = vpop.f32.mrf.mxu0
    %468 = vdwg.mxu0
    %v470 = vsel %vm392, %v308, 0
    %v473 = vsel %vm392, %v389, 0
    %475 = vmatprep.subr.mxu0 0.0
    %476 = vmatpush1.xpose.msra.mxu0 0.0
    %477 = vmatprep.subr.mxu0 0.0
    %478 = vmatpush1.xpose.msra.mxu0 0.0
    %479 = vmatprep.subr.mxu0 0.0
    %480 = vmatpush1.xpose.msra.mxu0 0.0
    %481 = vmatprep.subr.mxu0 0.0
    %482 = vmatpush1.xpose.msra.mxu0 0.0
    %483 = vmatprep.subr.mxu0 0.0
    %484 = vmatpush1.xpose.msra.mxu0 0.0
    %485 = vmatprep.subr.mxu0 0.0
    %486 = vmatpush1.xpose.msra.mxu0 0.0
    %487 = vmatprep.subr.mxu0 0.0
    %488 = vmatpush1.xpose.msra.mxu0 0.0
    %489 = vmatprep.subr.mxu0 0.0
    %490 = vmatpush1.xpose.msra.mxu0 0.0
    %491 = vmatprep.subr.mxu0 0.0
    %492 = vmatpush1.xpose.msra.mxu0 0.0
    %493 = vmatprep.subr.mxu0 0.0
    %494 = vmatpush1.xpose.msra.mxu0 0.0
    %495 = vmatprep.subr.mxu0 0.0
    %496 = vmatpush1.xpose.msra.mxu0 0.0
    %497 = vmatprep.subr.mxu0 0.0
    %498 = vmatpush1.xpose.msra.mxu0 0.0
    %499 = vmatprep.subr.mxu0 0.0
    %500 = vmatpush1.xpose.msra.mxu0 0.0
    %501 = vmatprep.subr.mxu0 0.0
    %502 = vmatpush1.xpose.msra.mxu0 0.0
    %503 = vmatprep.subr.mxu0 0.0
    %504 = vmatpush1.xpose.msra.mxu0 0.0
    %505 = vmatprep.subr.mxu0 0.0
    %506 = vmatpush1.xpose.msra.mxu0 %v473
    %507 = vmatprep.subr.mxu0 0.0
    %508 = vmatpush2.xpose.msra.mxu0 0.0
    %509 = vmatprep.subr.mxu0 0.0
    %510 = vmatpush2.xpose.msra.mxu0 0.0
    %511 = vmatprep.subr.mxu0 0.0
    %512 = vmatpush2.xpose.msra.mxu0 0.0
    %513 = vmatprep.subr.mxu0 0.0
    %514 = vmatpush2.xpose.msra.mxu0 0.0
    %515 = vmatprep.subr.mxu0 0.0
    %516 = vmatpush2.xpose.msra.mxu0 0.0
    %517 = vmatprep.subr.mxu0 0.0
    %518 = vmatpush2.xpose.msra.mxu0 0.0
    %519 = vmatprep.subr.mxu0 0.0
    %520 = vmatpush2.xpose.msra.mxu0 0.0
    %521 = vmatprep.subr.mxu0 0.0
    %522 = vmatpush2.xpose.msra.mxu0 0.0
    %523 = vmatprep.subr.mxu0 0.0
    %524 = vmatpush2.xpose.msra.mxu0 0.0
    %525 = vmatprep.subr.mxu0 0.0
    %526 = vmatpush2.xpose.msra.mxu0 0.0
    %527 = vmatprep.subr.mxu0 0.0
    %528 = vmatpush2.xpose.msra.mxu0 0.0
    %529 = vmatprep.subr.mxu0 0.0
    %530 = vmatpush2.xpose.msra.mxu0 0.0
    %531 = vmatprep.subr.mxu0 0.0
    %532 = vmatpush2.xpose.msra.mxu0 0.0
    %533 = vmatprep.subr.mxu0 0.0
    %534 = vmatpush2.xpose.msra.mxu0 0.0
    %535 = vmatprep.subr.mxu0 0.0
    %536 = vmatpush2.xpose.msra.mxu0 0.0
    %537 = vmatprep.subr.mxu0 0.0
    %538 = vmatpush2.xpose.msra.mxu0 0.0
    %539 = vmatprep.mubr.f32.mxu0 0.0
    %540 = vmatmul.mubr.f32.gmra.mxu0 %v470
    %v541 = vpop.f32.mrf.mxu0
    %v542 = vadd.f32 0.0, %v541
    %v543 = vpop.f32.mrf.mxu0
    %544 = vdwg.mxu0
    %v545 = vmul.f32 %v466, 0.35355338
    %v546 = vmul.f32 %v542, 0.35355338
    %v547 = vsel %vm392, %v545, -inf
    %548 = vmax.xlane.f32.xlu0 %v547
    %v549 = vpop.xlane.xlu0 %548
    %v550 = vsel %vm392, %v546, -inf
    %551 = vmax.xlane.f32.xlu0 %v550
    %v552 = vpop.xlane.xlu0 %551
    %v553 = vsub.f32 %v545, %v549
    %v554 = vsub.f32 %v546, %v552
    %v555 = vmul.f32 %v553, 1.442695
    %v556 = vpow.pop %v555
    %v557 = vmul.f32 %v554, 1.442695
    %v558 = vpow.pop %v557
    %v559 = vsel %vm392, %v556, 0.0
    %560 = vadd.xlane.f32.xlu0 %v559
    %v561 = vpop.xlane.xlu0 %560
    %v562 = vsel %vm392, %v558, 0.0
    %563 = vadd.xlane.f32.xlu0 %v562
    %v564 = vpop.xlane.xlu0 %563
    %v565 = vrcp.pop %v561
    %v566 = vrcp.pop %v564
    %v567 = vmul.f32 %v556, %v565
    %v568 = vmul.f32 %v558, %v566
    %569 = vrot.lane.b32.xlu0 %v384, 96
    %v570 = vpop.permute.xlu0 %569
    %v573 = vsel %vm392, %v567, 0
    %575 = vmatprep.subr.mxu0 0.0
    %576 = vmatpush1.msra.mxu0 0.0
    %577 = vmatprep.subr.mxu0 0.0
    %578 = vmatpush1.msra.mxu0 0.0
    %579 = vmatprep.subr.mxu0 0.0
    %580 = vmatpush1.msra.mxu0 0.0
    %581 = vmatprep.subr.mxu0 0.0
    %582 = vmatpush1.msra.mxu0 0.0
    %583 = vmatprep.subr.mxu0 0.0
    %584 = vmatpush1.msra.mxu0 0.0
    %585 = vmatprep.subr.mxu0 0.0
    %586 = vmatpush1.msra.mxu0 0.0
    %587 = vmatprep.subr.mxu0 0.0
    %588 = vmatpush1.msra.mxu0 0.0
    %589 = vmatprep.subr.mxu0 0.0
    %590 = vmatpush1.msra.mxu0 0.0
    %591 = vmatprep.subr.mxu0 0.0
    %592 = vmatpush1.msra.mxu0 0.0
    %593 = vmatprep.subr.mxu0 0.0
    %594 = vmatpush1.msra.mxu0 0.0
    %595 = vmatprep.subr.mxu0 0.0
    %596 = vmatpush1.msra.mxu0 0.0
    %597 = vmatprep.subr.mxu0 0.0
    %598 = vmatpush1.msra.mxu0 0.0
    %599 = vmatprep.subr.mxu0 0.0
    %600 = vmatpush1.msra.mxu0 0.0
    %601 = vmatprep.subr.mxu0 0.0
    %602 = vmatpush1.msra.mxu0 0.0
    %603 = vmatprep.subr.mxu0 0.0
    %604 = vmatpush1.msra.mxu0 0.0
    %605 = vmatprep.subr.mxu0 0.0
    %606 = vmatpush1.msra.mxu0 %v570
    %607 = vmatprep.subr.mxu0 0.0
    %608 = vmatpush2.msra.mxu0 0.0
    %609 = vmatprep.subr.mxu0 0.0
    %610 = vmatpush2.msra.mxu0 0.0
    %611 = vmatprep.subr.mxu0 0.0
    %612 = vmatpush2.msra.mxu0 0.0
    %613 = vmatprep.subr.mxu0 0.0
    %614 = vmatpush2.msra.mxu0 0.0
    %615 = vmatprep.subr.mxu0 0.0
    %616 = vmatpush2.msra.mxu0 0.0
    %617 = vmatprep.subr.mxu0 0.0
    %618 = vmatpush2.msra.mxu0 0.0
    %619 = vmatprep.subr.mxu0 0.0
    %620 = vmatpush2.msra.mxu0 0.0
    %621 = vmatprep.subr.mxu0 0.0
    %622 = vmatpush2.msra.mxu0 0.0
    %623 = vmatprep.subr.mxu0 0.0
    %624 = vmatpush2.msra.mxu0 0.0
    %625 = vmatprep.subr.mxu0 0.0
    %626 = vmatpush2.msra.mxu0 0.0
    %627 = vmatprep.subr.mxu0 0.0
    %628 = vmatpush2.msra.mxu0 0.0
    %629 = vmatprep.subr.mxu0 0.0
    %630 = vmatpush2.msra.mxu0 0.0
    %631 = vmatprep.subr.mxu0 0.0
    %632 = vmatpush2.msra.mxu0 0.0
    %633 = vmatprep.subr.mxu0 0.0
    %634 = vmatpush2.msra.mxu0 0.0
    %635 = vmatprep.subr.mxu0 0.0
    %636 = vmatpush2.msra.mxu0 0.0
    %637 = vmatprep.subr.mxu0 0.0
    %638 = vmatpush2.msra.mxu0 0.0
    %639 = vmatprep.mubr.f32.mxu0 0.0
    %640 = vmatmul.mubr.f32.gmra.mxu0 %v573
    %v641 = vpop.f32.mrf.mxu0
    %v642 = vadd.f32 0.0, %v641
    %v643 = vpop.f32.mrf.mxu0
    %644 = vdwg.mxu0
    %645 = vrot.lane.b32.xlu0 %v389, 96
    %v646 = vpop.permute.xlu0 %645
    %v649 = vsel %vm392, %v568, 0
    %651 = vmatprep.subr.mxu0 0.0
    %652 = vmatpush1.msra.mxu0 0.0
    %653 = vmatprep.subr.mxu0 0.0
    %654 = vmatpush1.msra.mxu0 0.0
    %655 = vmatprep.subr.mxu0 0.0
    %656 = vmatpush1.msra.mxu0 0.0
    %657 = vmatprep.subr.mxu0 0.0
    %658 = vmatpush1.msra.mxu0 0.0
    %659 = vmatprep.subr.mxu0 0.0
    %660 = vmatpush1.msra.mxu0 0.0
    %661 = vmatprep.subr.mxu0 0.0
    %662 = vmatpush1.msra.mxu0 0.0
    %663 = vmatprep.subr.mxu0 0.0
    %664 = vmatpush1.msra.mxu0 0.0
    %665 = vmatprep.subr.mxu0 0.0
    %666 = vmatpush1.msra.mxu0 0.0
    %667 = vmatprep.subr.mxu0 0.0
    %668 = vmatpush1.msra.mxu0 0.0
    %669 = vmatprep.subr.mxu0 0.0
    %670 = vmatpush1.msra.mxu0 0.0
    %671 = vmatprep.subr.mxu0 0.0
    %672 = vmatpush1.msra.mxu0 0.0
    %673 = vmatprep.subr.mxu0 0.0
    %674 = vmatpush1.msra.mxu0 0.0
    %675 = vmatprep.subr.mxu0 0.0
    %676 = vmatpush1.msra.mxu0 0.0
    %677 = vmatprep.subr.mxu0 0.0
    %678 = vmatpush1.msra.mxu0 0.0
    %679 = vmatprep.subr.mxu0 0.0
    %680 = vmatpush1.msra.mxu0 0.0
    %681 = vmatprep.subr.mxu0 0.0
    %682 = vmatpush1.msra.mxu0 %v646
    %683 = vmatprep.subr.mxu0 0.0
    %684 = vmatpush2.msra.mxu0 0.0
    %685 = vmatprep.subr.mxu0 0.0
    %686 = vmatpush2.msra.mxu0 0.0
    %687 = vmatprep.subr.mxu0 0.0
    %688 = vmatpush2.msra.mxu0 0.0
    %689 = vmatprep.subr.mxu0 0.0
    %690 = vmatpush2.msra.mxu0 0.0
    %691 = vmatprep.subr.mxu0 0.0
    %692 = vmatpush2.msra.mxu0 0.0
    %693 = vmatprep.subr.mxu0 0.0
    %694 = vmatpush2.msra.mxu0 0.0
    %695 = vmatprep.subr.mxu0 0.0
    %696 = vmatpush2.msra.mxu0 0.0
    %697 = vmatprep.subr.mxu0 0.0
    %698 = vmatpush2.msra.mxu0 0.0
    %699 = vmatprep.subr.mxu0 0.0
    %700 = vmatpush2.msra.mxu0 0.0
    %701 = vmatprep.subr.mxu0 0.0
    %702 = vmatpush2.msra.mxu0 0.0
    %703 = vmatprep.subr.mxu0 0.0
    %704 = vmatpush2.msra.mxu0 0.0
    %705 = vmatprep.subr.mxu0 0.0
    %706 = vmatpush2.msra.mxu0 0.0
    %707 = vmatprep.subr.mxu0 0.0
    %708 = vmatpush2.msra.mxu0 0.0
    %709 = vmatprep.subr.mxu0 0.0
    %710 = vmatpush2.msra.mxu0 0.0
    %711 = vmatprep.subr.mxu0 0.0
    %712 = vmatpush2.msra.mxu0 0.0
    %713 = vmatprep.subr.mxu0 0.0
    %714 = vmatpush2.msra.mxu0 0.0
    %715 = vmatprep.mubr.f32.mxu0 0.0
    %716 = vmatmul.mubr.f32.gmra.mxu0 %v649
    %v717 = vpop.f32.mrf.mxu0
    %v718 = vadd.f32 0.0, %v717
    %v719 = vpop.f32.mrf.mxu0
    %720 = vdwg.mxu0
    %721 = vst.msk [vmem:[#allocation3] sm:$0xff] %vm392, %v642
    %722 = vst.msk [vmem:[#allocation3 + $0x8] sm:$0xff] %vm392, %v718
    %723 = vrot.lane.b32.xlu0 %v303, 120
    %v724 = vpop.permute.xlu0 %723
    %725 = vrot.lane.b32.xlu0 %v384, 120
    %v726 = vpop.permute.xlu0 %725
    %v727 = vsel %vm392, %v724, 0
    %v729 = vsel %vm392, %v726, 0
    %731 = vmatprep.subr.mxu0 0.0
    %732 = vmatpush1.xpose.msra.mxu0 0.0
    %733 = vmatprep.subr.mxu0 0.0
    %734 = vmatpush1.xpose.msra.mxu0 0.0
    %735 = vmatprep.subr.mxu0 0.0
    %736 = vmatpush1.xpose.msra.mxu0 0.0
    %737 = vmatprep.subr.mxu0 0.0
    %738 = vmatpush1.xpose.msra.mxu0 0.0
    %739 = vmatprep.subr.mxu0 0.0
    %740 = vmatpush1.xpose.msra.mxu0 0.0
    %741 = vmatprep.subr.mxu0 0.0
    %742 = vmatpush1.xpose.msra.mxu0 0.0
    %743 = vmatprep.subr.mxu0 0.0
    %744 = vmatpush1.xpose.msra.mxu0 0.0
    %745 = vmatprep.subr.mxu0 0.0
    %746 = vmatpush1.xpose.msra.mxu0 0.0
    %747 = vmatprep.subr.mxu0 0.0
    %748 = vmatpush1.xpose.msra.mxu0 0.0
    %749 = vmatprep.subr.mxu0 0.0
    %750 = vmatpush1.xpose.msra.mxu0 0.0
    %751 = vmatprep.subr.mxu0 0.0
    %752 = vmatpush1.xpose.msra.mxu0 0.0
    %753 = vmatprep.subr.mxu0 0.0
    %754 = vmatpush1.xpose.msra.mxu0 0.0
    %755 = vmatprep.subr.mxu0 0.0
    %756 = vmatpush1.xpose.msra.mxu0 0.0
    %757 = vmatprep.subr.mxu0 0.0
    %758 = vmatpush1.xpose.msra.mxu0 0.0
    %759 = vmatprep.subr.mxu0 0.0
    %760 = vmatpush1.xpose.msra.mxu0 0.0
    %761 = vmatprep.subr.mxu0 0.0
    %762 = vmatpush1.xpose.msra.mxu0 %v729
    %763 = vmatprep.subr.mxu0 0.0
    %764 = vmatpush2.xpose.msra.mxu0 0.0
    %765 = vmatprep.subr.mxu0 0.0
    %766 = vmatpush2.xpose.msra.mxu0 0.0
    %767 = vmatprep.subr.mxu0 0.0
    %768 = vmatpush2.xpose.msra.mxu0 0.0
    %769 = vmatprep.subr.mxu0 0.0
    %770 = vmatpush2.xpose.msra.mxu0 0.0
    %771 = vmatprep.subr.mxu0 0.0
    %772 = vmatpush2.xpose.msra.mxu0 0.0
    %773 = vmatprep.subr.mxu0 0.0
    %774 = vmatpush2.xpose.msra.mxu0 0.0
    %775 = vmatprep.subr.mxu0 0.0
    %776 = vmatpush2.xpose.msra.mxu0 0.0
    %777 = vmatprep.subr.mxu0 0.0
    %778 = vmatpush2.xpose.msra.mxu0 0.0
    %779 = vmatprep.subr.mxu0 0.0
    %780 = vmatpush2.xpose.msra.mxu0 0.0
    %781 = vmatprep.subr.mxu0 0.0
    %782 = vmatpush2.xpose.msra.mxu0 0.0
    %783 = vmatprep.subr.mxu0 0.0
    %784 = vmatpush2.xpose.msra.mxu0 0.0
    %785 = vmatprep.subr.mxu0 0.0
    %786 = vmatpush2.xpose.msra.mxu0 0.0
    %787 = vmatprep.subr.mxu0 0.0
    %788 = vmatpush2.xpose.msra.mxu0 0.0
    %789 = vmatprep.subr.mxu0 0.0
    %790 = vmatpush2.xpose.msra.mxu0 0.0
    %791 = vmatprep.subr.mxu0 0.0
    %792 = vmatpush2.xpose.msra.mxu0 0.0
    %793 = vmatprep.subr.mxu0 0.0
    %794 = vmatpush2.xpose.msra.mxu0 0.0
    %795 = vmatprep.mubr.f32.mxu0 0.0
    %796 = vmatmul.mubr.f32.gmra.mxu0 %v727
    %v797 = vpop.f32.mrf.mxu0
    %v798 = vadd.f32 0.0, %v797
    %v799 = vpop.f32.mrf.mxu0
    %800 = vdwg.mxu0
    %801 = vrot.lane.b32.xlu0 %v308, 120
    %v802 = vpop.permute.xlu0 %801
    %803 = vrot.lane.b32.xlu0 %v389, 120
    %v804 = vpop.permute.xlu0 %803
    %v805 = vsel %vm392, %v802, 0
    %v807 = vsel %vm392, %v804, 0
    %809 = vmatprep.subr.mxu0 0.0
    %810 = vmatpush1.xpose.msra.mxu0 0.0
    %811 = vmatprep.subr.mxu0 0.0
    %812 = vmatpush1.xpose.msra.mxu0 0.0
    %813 = vmatprep.subr.mxu0 0.0
    %814 = vmatpush1.xpose.msra.mxu0 0.0
    %815 = vmatprep.subr.mxu0 0.0
    %816 = vmatpush1.xpose.msra.mxu0 0.0
    %817 = vmatprep.subr.mxu0 0.0
    %818 = vmatpush1.xpose.msra.mxu0 0.0
    %819 = vmatprep.subr.mxu0 0.0
    %820 = vmatpush1.xpose.msra.mxu0 0.0
    %821 = vmatprep.subr.mxu0 0.0
    %822 = vmatpush1.xpose.msra.mxu0 0.0
    %823 = vmatprep.subr.mxu0 0.0
    %824 = vmatpush1.xpose.msra.mxu0 0.0
    %825 = vmatprep.subr.mxu0 0.0
    %826 = vmatpush1.xpose.msra.mxu0 0.0
    %827 = vmatprep.subr.mxu0 0.0
    %828 = vmatpush1.xpose.msra.mxu0 0.0
    %829 = vmatprep.subr.mxu0 0.0
    %830 = vmatpush1.xpose.msra.mxu0 0.0
    %831 = vmatprep.subr.mxu0 0.0
    %832 = vmatpush1.xpose.msra.mxu0 0.0
    %833 = vmatprep.subr.mxu0 0.0
    %834 = vmatpush1.xpose.msra.mxu0 0.0
    %835 = vmatprep.subr.mxu0 0.0
    %836 = vmatpush1.xpose.msra.mxu0 0.0
    %837 = vmatprep.subr.mxu0 0.0
    %838 = vmatpush1.xpose.msra.mxu0 0.0
    %839 = vmatprep.subr.mxu0 0.0
    %840 = vmatpush1.xpose.msra.mxu0 %v807
    %841 = vmatprep.subr.mxu0 0.0
    %842 = vmatpush2.xpose.msra.mxu0 0.0
    %843 = vmatprep.subr.mxu0 0.0
    %844 = vmatpush2.xpose.msra.mxu0 0.0
    %845 = vmatprep.subr.mxu0 0.0
    %846 = vmatpush2.xpose.msra.mxu0 0.0
    %847 = vmatprep.subr.mxu0 0.0
    %848 = vmatpush2.xpose.msra.mxu0 0.0
    %849 = vmatprep.subr.mxu0 0.0
    %850 = vmatpush2.xpose.msra.mxu0 0.0
    %851 = vmatprep.subr.mxu0 0.0
    %852 = vmatpush2.xpose.msra.mxu0 0.0
    %853 = vmatprep.subr.mxu0 0.0
    %854 = vmatpush2.xpose.msra.mxu0 0.0
    %855 = vmatprep.subr.mxu0 0.0
    %856 = vmatpush2.xpose.msra.mxu0 0.0
    %857 = vmatprep.subr.mxu0 0.0
    %858 = vmatpush2.xpose.msra.mxu0 0.0
    %859 = vmatprep.subr.mxu0 0.0
    %860 = vmatpush2.xpose.msra.mxu0 0.0
    %861 = vmatprep.subr.mxu0 0.0
    %862 = vmatpush2.xpose.msra.mxu0 0.0
    %863 = vmatprep.subr.mxu0 0.0
    %864 = vmatpush2.xpose.msra.mxu0 0.0
    %865 = vmatprep.subr.mxu0 0.0
    %866 = vmatpush2.xpose.msra.mxu0 0.0
    %867 = vmatprep.subr.mxu0 0.0
    %868 = vmatpush2.xpose.msra.mxu0 0.0
    %869 = vmatprep.subr.mxu0 0.0
    %870 = vmatpush2.xpose.msra.mxu0 0.0
    %871 = vmatprep.subr.mxu0 0.0
    %872 = vmatpush2.xpose.msra.mxu0 0.0
    %873 = vmatprep.mubr.f32.mxu0 0.0
    %874 = vmatmul.mubr.f32.gmra.mxu0 %v805
    %v875 = vpop.f32.mrf.mxu0
    %v876 = vadd.f32 0.0, %v875
    %v877 = vpop.f32.mrf.mxu0
    %878 = vdwg.mxu0
    %v879 = vmul.f32 %v798, 0.35355338
    %v880 = vmul.f32 %v876, 0.35355338
    %v881 = vsel %vm392, %v879, -inf
    %882 = vmax.xlane.f32.xlu0 %v881
    %v883 = vpop.xlane.xlu0 %882
    %v884 = vsel %vm392, %v880, -inf
    %885 = vmax.xlane.f32.xlu0 %v884
    %v886 = vpop.xlane.xlu0 %885
    %v887 = vsub.f32 %v879, %v883
    %v888 = vsub.f32 %v880, %v886
    %v889 = vmul.f32 %v887, 1.442695
    %v890 = vpow.pop %v889
    %v891 = vmul.f32 %v888, 1.442695
    %v892 = vpow.pop %v891
    %v893 = vsel %vm392, %v890, 0.0
    %894 = vadd.xlane.f32.xlu0 %v893
    %v895 = vpop.xlane.xlu0 %894
    %v896 = vsel %vm392, %v892, 0.0
    %897 = vadd.xlane.f32.xlu0 %v896
    %v898 = vpop.xlane.xlu0 %897
    %v899 = vrcp.pop %v895
    %v900 = vrcp.pop %v898
    %v901 = vmul.f32 %v890, %v899
    %v902 = vmul.f32 %v892, %v900
    %903 = vrot.lane.b32.xlu0 %v384, 88
    %v904 = vpop.permute.xlu0 %903
    %v907 = vsel %vm392, %v901, 0
    %909 = vmatprep.subr.mxu0 0.0
    %910 = vmatpush1.msra.mxu0 0.0
    %911 = vmatprep.subr.mxu0 0.0
    %912 = vmatpush1.msra.mxu0 0.0
    %913 = vmatprep.subr.mxu0 0.0
    %914 = vmatpush1.msra.mxu0 0.0
    %915 = vmatprep.subr.mxu0 0.0
    %916 = vmatpush1.msra.mxu0 0.0
    %917 = vmatprep.subr.mxu0 0.0
    %918 = vmatpush1.msra.mxu0 0.0
    %919 = vmatprep.subr.mxu0 0.0
    %920 = vmatpush1.msra.mxu0 0.0
    %921 = vmatprep.subr.mxu0 0.0
    %922 = vmatpush1.msra.mxu0 0.0
    %923 = vmatprep.subr.mxu0 0.0
    %924 = vmatpush1.msra.mxu0 0.0
    %925 = vmatprep.subr.mxu0 0.0
    %926 = vmatpush1.msra.mxu0 0.0
    %927 = vmatprep.subr.mxu0 0.0
    %928 = vmatpush1.msra.mxu0 0.0
    %929 = vmatprep.subr.mxu0 0.0
    %930 = vmatpush1.msra.mxu0 0.0
    %931 = vmatprep.subr.mxu0 0.0
    %932 = vmatpush1.msra.mxu0 0.0
    %933 = vmatprep.subr.mxu0 0.0
    %934 = vmatpush1.msra.mxu0 0.0
    %935 = vmatprep.subr.mxu0 0.0
    %936 = vmatpush1.msra.mxu0 0.0
    %937 = vmatprep.subr.mxu0 0.0
    %938 = vmatpush1.msra.mxu0 0.0
    %939 = vmatprep.subr.mxu0 0.0
    %940 = vmatpush1.msra.mxu0 %v904
    %941 = vmatprep.subr.mxu0 0.0
    %942 = vmatpush2.msra.mxu0 0.0
    %943 = vmatprep.subr.mxu0 0.0
    %944 = vmatpush2.msra.mxu0 0.0
    %945 = vmatprep.subr.mxu0 0.0
    %946 = vmatpush2.msra.mxu0 0.0
    %947 = vmatprep.subr.mxu0 0.0
    %948 = vmatpush2.msra.mxu0 0.0
    %949 = vmatprep.subr.mxu0 0.0
    %950 = vmatpush2.msra.mxu0 0.0
    %951 = vmatprep.subr.mxu0 0.0
    %952 = vmatpush2.msra.mxu0 0.0
    %953 = vmatprep.subr.mxu0 0.0
    %954 = vmatpush2.msra.mxu0 0.0
    %955 = vmatprep.subr.mxu0 0.0
    %956 = vmatpush2.msra.mxu0 0.0
    %957 = vmatprep.subr.mxu0 0.0
    %958 = vmatpush2.msra.mxu0 0.0
    %959 = vmatprep.subr.mxu0 0.0
    %960 = vmatpush2.msra.mxu0 0.0
    %961 = vmatprep.subr.mxu0 0.0
    %962 = vmatpush2.msra.mxu0 0.0
    %963 = vmatprep.subr.mxu0 0.0
    %964 = vmatpush2.msra.mxu0 0.0
    %965 = vmatprep.subr.mxu0 0.0
    %966 = vmatpush2.msra.mxu0 0.0
    %967 = vmatprep.subr.mxu0 0.0
    %968 = vmatpush2.msra.mxu0 0.0
    %969 = vmatprep.subr.mxu0 0.0
    %970 = vmatpush2.msra.mxu0 0.0
    %971 = vmatprep.subr.mxu0 0.0
    %972 = vmatpush2.msra.mxu0 0.0
    %973 = vmatprep.mubr.f32.mxu0 0.0
    %974 = vmatmul.mubr.f32.gmra.mxu0 %v907
    %v975 = vpop.f32.mrf.mxu0
    %v976 = vadd.f32 0.0, %v975
    %v977 = vpop.f32.mrf.mxu0
    %978 = vdwg.mxu0
    %979 = vrot.lane.b32.xlu0 %v389, 88
    %v980 = vpop.permute.xlu0 %979
    %v983 = vsel %vm392, %v902, 0
    %985 = vmatprep.subr.mxu0 0.0
    %986 = vmatpush1.msra.mxu0 0.0
    %987 = vmatprep.subr.mxu0 0.0
    %988 = vmatpush1.msra.mxu0 0.0
    %989 = vmatprep.subr.mxu0 0.0
    %990 = vmatpush1.msra.mxu0 0.0
    %991 = vmatprep.subr.mxu0 0.0
    %992 = vmatpush1.msra.mxu0 0.0
    %993 = vmatprep.subr.mxu0 0.0
    %994 = vmatpush1.msra.mxu0 0.0
    %995 = vmatprep.subr.mxu0 0.0
    %996 = vmatpush1.msra.mxu0 0.0
    %997 = vmatprep.subr.mxu0 0.0
    %998 = vmatpush1.msra.mxu0 0.0
    %999 = vmatprep.subr.mxu0 0.0
    %1000 = vmatpush1.msra.mxu0 0.0
    %1001 = vmatprep.subr.mxu0 0.0
    %1002 = vmatpush1.msra.mxu0 0.0
    %1003 = vmatprep.subr.mxu0 0.0
    %1004 = vmatpush1.msra.mxu0 0.0
    %1005 = vmatprep.subr.mxu0 0.0
    %1006 = vmatpush1.msra.mxu0 0.0
    %1007 = vmatprep.subr.mxu0 0.0
    %1008 = vmatpush1.msra.mxu0 0.0
    %1009 = vmatprep.subr.mxu0 0.0
    %1010 = vmatpush1.msra.mxu0 0.0
    %1011 = vmatprep.subr.mxu0 0.0
    %1012 = vmatpush1.msra.mxu0 0.0
    %1013 = vmatprep.subr.mxu0 0.0
    %1014 = vmatpush1.msra.mxu0 0.0
    %1015 = vmatprep.subr.mxu0 0.0
    %1016 = vmatpush1.msra.mxu0 %v980
    %1017 = vmatprep.subr.mxu0 0.0
    %1018 = vmatpush2.msra.mxu0 0.0
    %1019 = vmatprep.subr.mxu0 0.0
    %1020 = vmatpush2.msra.mxu0 0.0
    %1021 = vmatprep.subr.mxu0 0.0
    %1022 = vmatpush2.msra.mxu0 0.0
    %1023 = vmatprep.subr.mxu0 0.0
    %1024 = vmatpush2.msra.mxu0 0.0
    %1025 = vmatprep.subr.mxu0 0.0
    %1026 = vmatpush2.msra.mxu0 0.0
    %1027 = vmatprep.subr.mxu0 0.0
    %1028 = vmatpush2.msra.mxu0 0.0
    %1029 = vmatprep.subr.mxu0 0.0
    %1030 = vmatpush2.msra.mxu0 0.0
    %1031 = vmatprep.subr.mxu0 0.0
    %1032 = vmatpush2.msra.mxu0 0.0
    %1033 = vmatprep.subr.mxu0 0.0
    %1034 = vmatpush2.msra.mxu0 0.0
    %1035 = vmatprep.subr.mxu0 0.0
    %1036 = vmatpush2.msra.mxu0 0.0
    %1037 = vmatprep.subr.mxu0 0.0
    %1038 = vmatpush2.msra.mxu0 0.0
    %1039 = vmatprep.subr.mxu0 0.0
    %1040 = vmatpush2.msra.mxu0 0.0
    %1041 = vmatprep.subr.mxu0 0.0
    %1042 = vmatpush2.msra.mxu0 0.0
    %1043 = vmatprep.subr.mxu0 0.0
    %1044 = vmatpush2.msra.mxu0 0.0
    %1045 = vmatprep.subr.mxu0 0.0
    %1046 = vmatpush2.msra.mxu0 0.0
    %1047 = vmatprep.subr.mxu0 0.0
    %1048 = vmatpush2.msra.mxu0 0.0
    %1049 = vmatprep.mubr.f32.mxu0 0.0
    %1050 = vmatmul.mubr.f32.gmra.mxu0 %v983
    %v1051 = vpop.f32.mrf.mxu0
    %v1052 = vadd.f32 0.0, %v1051
    %v1053 = vpop.f32.mrf.mxu0
    %1054 = vdwg.mxu0
    %1057 = vrot.lane.b32.xlu0 %v976, 8
    %v1058 = vpop.permute.xlu0 %1057
    %1059 = vrot.lane.b32.xlu0 %v1052, 8
    %v1060 = vpop.permute.xlu0 %1059
    %vm1063 = vcmask 130112
    %1064 = vst.msk [vmem:[#allocation3] sm:$0xff] %vm1063, %v1058
    %1065 = vst.msk [vmem:[#allocation3 + $0x8] sm:$0xff] %vm1063, %v1060
    %1066 = vrot.lane.b32.xlu0 %v303, 112
    %v1067 = vpop.permute.xlu0 %1066
    %1068 = vrot.lane.b32.xlu0 %v384, 112
    %v1069 = vpop.permute.xlu0 %1068
    %v1070 = vsel %vm392, %v1067, 0
    %v1072 = vsel %vm392, %v1069, 0
    %1074 = vmatprep.subr.mxu0 0.0
    %1075 = vmatpush1.xpose.msra.mxu0 0.0
    %1076 = vmatprep.subr.mxu0 0.0
    %1077 = vmatpush1.xpose.msra.mxu0 0.0
    %1078 = vmatprep.subr.mxu0 0.0
    %1079 = vmatpush1.xpose.msra.mxu0 0.0
    %1080 = vmatprep.subr.mxu0 0.0
    %1081 = vmatpush1.xpose.msra.mxu0 0.0
    %1082 = vmatprep.subr.mxu0 0.0
    %1083 = vmatpush1.xpose.msra.mxu0 0.0
    %1084 = vmatprep.subr.mxu0 0.0
    %1085 = vmatpush1.xpose.msra.mxu0 0.0
    %1086 = vmatprep.subr.mxu0 0.0
    %1087 = vmatpush1.xpose.msra.mxu0 0.0
    %1088 = vmatprep.subr.mxu0 0.0
    %1089 = vmatpush1.xpose.msra.mxu0 0.0
    %1090 = vmatprep.subr.mxu0 0.0
    %1091 = vmatpush1.xpose.msra.mxu0 0.0
    %1092 = vmatprep.subr.mxu0 0.0
    %1093 = vmatpush1.xpose.msra.mxu0 0.0
    %1094 = vmatprep.subr.mxu0 0.0
    %1095 = vmatpush1.xpose.msra.mxu0 0.0
    %1096 = vmatprep.subr.mxu0 0.0
    %1097 = vmatpush1.xpose.msra.mxu0 0.0
    %1098 = vmatprep.subr.mxu0 0.0
    %1099 = vmatpush1.xpose.msra.mxu0 0.0
    %1100 = vmatprep.subr.mxu0 0.0
    %1101 = vmatpush1.xpose.msra.mxu0 0.0
    %1102 = vmatprep.subr.mxu0 0.0
    %1103 = vmatpush1.xpose.msra.mxu0 0.0
    %1104 = vmatprep.subr.mxu0 0.0
    %1105 = vmatpush1.xpose.msra.mxu0 %v1072
    %1106 = vmatprep.subr.mxu0 0.0
    %1107 = vmatpush2.xpose.msra.mxu0 0.0
    %1108 = vmatprep.subr.mxu0 0.0
    %1109 = vmatpush2.xpose.msra.mxu0 0.0
    %1110 = vmatprep.subr.mxu0 0.0
    %1111 = vmatpush2.xpose.msra.mxu0 0.0
    %1112 = vmatprep.subr.mxu0 0.0
    %1113 = vmatpush2.xpose.msra.mxu0 0.0
    %1114 = vmatprep.subr.mxu0 0.0
    %1115 = vmatpush2.xpose.msra.mxu0 0.0
    %1116 = vmatprep.subr.mxu0 0.0
    %1117 = vmatpush2.xpose.msra.mxu0 0.0
    %1118 = vmatprep.subr.mxu0 0.0
    %1119 = vmatpush2.xpose.msra.mxu0 0.0
    %1120 = vmatprep.subr.mxu0 0.0
    %1121 = vmatpush2.xpose.msra.mxu0 0.0
    %1122 = vmatprep.subr.mxu0 0.0
    %1123 = vmatpush2.xpose.msra.mxu0 0.0
    %1124 = vmatprep.subr.mxu0 0.0
    %1125 = vmatpush2.xpose.msra.mxu0 0.0
    %1126 = vmatprep.subr.mxu0 0.0
    %1127 = vmatpush2.xpose.msra.mxu0 0.0
    %1128 = vmatprep.subr.mxu0 0.0
    %1129 = vmatpush2.xpose.msra.mxu0 0.0
    %1130 = vmatprep.subr.mxu0 0.0
    %1131 = vmatpush2.xpose.msra.mxu0 0.0
    %1132 = vmatprep.subr.mxu0 0.0
    %1133 = vmatpush2.xpose.msra.mxu0 0.0
    %1134 = vmatprep.subr.mxu0 0.0
    %1135 = vmatpush2.xpose.msra.mxu0 0.0
    %1136 = vmatprep.subr.mxu0 0.0
    %1137 = vmatpush2.xpose.msra.mxu0 0.0
    %1138 = vmatprep.mubr.f32.mxu0 0.0
    %1139 = vmatmul.mubr.f32.gmra.mxu0 %v1070
    %v1140 = vpop.f32.mrf.mxu0
    %v1141 = vadd.f32 0.0, %v1140
    %v1142 = vpop.f32.mrf.mxu0
    %1143 = vdwg.mxu0
    %1144 = vrot.lane.b32.xlu0 %v308, 112
    %v1145 = vpop.permute.xlu0 %1144
    %1146 = vrot.lane.b32.xlu0 %v389, 112
    %v1147 = vpop.permute.xlu0 %1146
    %v1148 = vsel %vm392, %v1145, 0
    %v1150 = vsel %vm392, %v1147, 0
    %1152 = vmatprep.subr.mxu0 0.0
    %1153 = vmatpush1.xpose.msra.mxu0 0.0
    %1154 = vmatprep.subr.mxu0 0.0
    %1155 = vmatpush1.xpose.msra.mxu0 0.0
    %1156 = vmatprep.subr.mxu0 0.0
    %1157 = vmatpush1.xpose.msra.mxu0 0.0
    %1158 = vmatprep.subr.mxu0 0.0
    %1159 = vmatpush1.xpose.msra.mxu0 0.0
    %1160 = vmatprep.subr.mxu0 0.0
    %1161 = vmatpush1.xpose.msra.mxu0 0.0
    %1162 = vmatprep.subr.mxu0 0.0
    %1163 = vmatpush1.xpose.msra.mxu0 0.0
    %1164 = vmatprep.subr.mxu0 0.0
    %1165 = vmatpush1.xpose.msra.mxu0 0.0
    %1166 = vmatprep.subr.mxu0 0.0
    %1167 = vmatpush1.xpose.msra.mxu0 0.0
    %1168 = vmatprep.subr.mxu0 0.0
    %1169 = vmatpush1.xpose.msra.mxu0 0.0
    %1170 = vmatprep.subr.mxu0 0.0
    %1171 = vmatpush1.xpose.msra.mxu0 0.0
    %1172 = vmatprep.subr.mxu0 0.0
    %1173 = vmatpush1.xpose.msra.mxu0 0.0
    %1174 = vmatprep.subr.mxu0 0.0
    %1175 = vmatpush1.xpose.msra.mxu0 0.0
    %1176 = vmatprep.subr.mxu0 0.0
    %1177 = vmatpush1.xpose.msra.mxu0 0.0
    %1178 = vmatprep.subr.mxu0 0.0
    %1179 = vmatpush1.xpose.msra.mxu0 0.0
    %1180 = vmatprep.subr.mxu0 0.0
    %1181 = vmatpush1.xpose.msra.mxu0 0.0
    %1182 = vmatprep.subr.mxu0 0.0
    %1183 = vmatpush1.xpose.msra.mxu0 %v1150
    %1184 = vmatprep.subr.mxu0 0.0
    %1185 = vmatpush2.xpose.msra.mxu0 0.0
    %1186 = vmatprep.subr.mxu0 0.0
    %1187 = vmatpush2.xpose.msra.mxu0 0.0
    %1188 = vmatprep.subr.mxu0 0.0
    %1189 = vmatpush2.xpose.msra.mxu0 0.0
    %1190 = vmatprep.subr.mxu0 0.0
    %1191 = vmatpush2.xpose.msra.mxu0 0.0
    %1192 = vmatprep.subr.mxu0 0.0
    %1193 = vmatpush2.xpose.msra.mxu0 0.0
    %1194 = vmatprep.subr.mxu0 0.0
    %1195 = vmatpush2.xpose.msra.mxu0 0.0
    %1196 = vmatprep.subr.mxu0 0.0
    %1197 = vmatpush2.xpose.msra.mxu0 0.0
    %1198 = vmatprep.subr.mxu0 0.0
    %1199 = vmatpush2.xpose.msra.mxu0 0.0
    %1200 = vmatprep.subr.mxu0 0.0
    %1201 = vmatpush2.xpose.msra.mxu0 0.0
    %1202 = vmatprep.subr.mxu0 0.0
    %1203 = vmatpush2.xpose.msra.mxu0 0.0
    %1204 = vmatprep.subr.mxu0 0.0
    %1205 = vmatpush2.xpose.msra.mxu0 0.0
    %1206 = vmatprep.subr.mxu0 0.0
    %1207 = vmatpush2.xpose.msra.mxu0 0.0
    %1208 = vmatprep.subr.mxu0 0.0
    %1209 = vmatpush2.xpose.msra.mxu0 0.0
    %1210 = vmatprep.subr.mxu0 0.0
    %1211 = vmatpush2.xpose.msra.mxu0 0.0
    %1212 = vmatprep.subr.mxu0 0.0
    %1213 = vmatpush2.xpose.msra.mxu0 0.0
    %1214 = vmatprep.subr.mxu0 0.0
    %1215 = vmatpush2.xpose.msra.mxu0 0.0
    %1216 = vmatprep.mubr.f32.mxu0 0.0
    %1217 = vmatmul.mubr.f32.gmra.mxu0 %v1148
    %v1218 = vpop.f32.mrf.mxu0
    %v1219 = vadd.f32 0.0, %v1218
    %v1220 = vpop.f32.mrf.mxu0
    %1221 = vdwg.mxu0
    %v1222 = vmul.f32 %v1141, 0.35355338
    %v1223 = vmul.f32 %v1219, 0.35355338
    %v1224 = vsel %vm392, %v1222, -inf
    %1225 = vmax.xlane.f32.xlu0 %v1224
    %v1226 = vpop.xlane.xlu0 %1225
    %v1227 = vsel %vm392, %v1223, -inf
    %1228 = vmax.xlane.f32.xlu0 %v1227
    %v1229 = vpop.xlane.xlu0 %1228
    %v1230 = vsub.f32 %v1222, %v1226
    %v1231 = vsub.f32 %v1223, %v1229
    %v1232 = vmul.f32 %v1230, 1.442695
    %v1233 = vpow.pop %v1232
    %v1234 = vmul.f32 %v1231, 1.442695
    %v1235 = vpow.pop %v1234
    %v1236 = vsel %vm392, %v1233, 0.0
    %1237 = vadd.xlane.f32.xlu0 %v1236
    %v1238 = vpop.xlane.xlu0 %1237
    %v1239 = vsel %vm392, %v1235, 0.0
    %1240 = vadd.xlane.f32.xlu0 %v1239
    %v1241 = vpop.xlane.xlu0 %1240
    %v1242 = vrcp.pop %v1238
    %v1243 = vrcp.pop %v1241
    %v1244 = vmul.f32 %v1233, %v1242
    %v1245 = vmul.f32 %v1235, %v1243
    %1246 = vrot.lane.b32.xlu0 %v384, 80
    %v1247 = vpop.permute.xlu0 %1246
    %v1250 = vsel %vm392, %v1244, 0
    %1252 = vmatprep.subr.mxu0 0.0
    %1253 = vmatpush1.msra.mxu0 0.0
    %1254 = vmatprep.subr.mxu0 0.0
    %1255 = vmatpush1.msra.mxu0 0.0
    %1256 = vmatprep.subr.mxu0 0.0
    %1257 = vmatpush1.msra.mxu0 0.0
    %1258 = vmatprep.subr.mxu0 0.0
    %1259 = vmatpush1.msra.mxu0 0.0
    %1260 = vmatprep.subr.mxu0 0.0
    %1261 = vmatpush1.msra.mxu0 0.0
    %1262 = vmatprep.subr.mxu0 0.0
    %1263 = vmatpush1.msra.mxu0 0.0
    %1264 = vmatprep.subr.mxu0 0.0
    %1265 = vmatpush1.msra.mxu0 0.0
    %1266 = vmatprep.subr.mxu0 0.0
    %1267 = vmatpush1.msra.mxu0 0.0
    %1268 = vmatprep.subr.mxu0 0.0
    %1269 = vmatpush1.msra.mxu0 0.0
    %1270 = vmatprep.subr.mxu0 0.0
    %1271 = vmatpush1.msra.mxu0 0.0
    %1272 = vmatprep.subr.mxu0 0.0
    %1273 = vmatpush1.msra.mxu0 0.0
    %1274 = vmatprep.subr.mxu0 0.0
    %1275 = vmatpush1.msra.mxu0 0.0
    %1276 = vmatprep.subr.mxu0 0.0
    %1277 = vmatpush1.msra.mxu0 0.0
    %1278 = vmatprep.subr.mxu0 0.0
    %1279 = vmatpush1.msra.mxu0 0.0
    %1280 = vmatprep.subr.mxu0 0.0
    %1281 = vmatpush1.msra.mxu0 0.0
    %1282 = vmatprep.subr.mxu0 0.0
    %1283 = vmatpush1.msra.mxu0 %v1247
    %1284 = vmatprep.subr.mxu0 0.0
    %1285 = vmatpush2.msra.mxu0 0.0
    %1286 = vmatprep.subr.mxu0 0.0
    %1287 = vmatpush2.msra.mxu0 0.0
    %1288 = vmatprep.subr.mxu0 0.0
    %1289 = vmatpush2.msra.mxu0 0.0
    %1290 = vmatprep.subr.mxu0 0.0
    %1291 = vmatpush2.msra.mxu0 0.0
    %1292 = vmatprep.subr.mxu0 0.0
    %1293 = vmatpush2.msra.mxu0 0.0
    %1294 = vmatprep.subr.mxu0 0.0
    %1295 = vmatpush2.msra.mxu0 0.0
    %1296 = vmatprep.subr.mxu0 0.0
    %1297 = vmatpush2.msra.mxu0 0.0
    %1298 = vmatprep.subr.mxu0 0.0
    %1299 = vmatpush2.msra.mxu0 0.0
    %1300 = vmatprep.subr.mxu0 0.0
    %1301 = vmatpush2.msra.mxu0 0.0
    %1302 = vmatprep.subr.mxu0 0.0
    %1303 = vmatpush2.msra.mxu0 0.0
    %1304 = vmatprep.subr.mxu0 0.0
    %1305 = vmatpush2.msra.mxu0 0.0
    %1306 = vmatprep.subr.mxu0 0.0
    %1307 = vmatpush2.msra.mxu0 0.0
    %1308 = vmatprep.subr.mxu0 0.0
    %1309 = vmatpush2.msra.mxu0 0.0
    %1310 = vmatprep.subr.mxu0 0.0
    %1311 = vmatpush2.msra.mxu0 0.0
    %1312 = vmatprep.subr.mxu0 0.0
    %1313 = vmatpush2.msra.mxu0 0.0
    %1314 = vmatprep.subr.mxu0 0.0
    %1315 = vmatpush2.msra.mxu0 0.0
    %1316 = vmatprep.mubr.f32.mxu0 0.0
    %1317 = vmatmul.mubr.f32.gmra.mxu0 %v1250
    %v1318 = vpop.f32.mrf.mxu0
    %v1319 = vadd.f32 0.0, %v1318
    %v1320 = vpop.f32.mrf.mxu0
    %1321 = vdwg.mxu0
    %1322 = vrot.lane.b32.xlu0 %v389, 80
    %v1323 = vpop.permute.xlu0 %1322
    %v1326 = vsel %vm392, %v1245, 0
    %1328 = vmatprep.subr.mxu0 0.0
    %1329 = vmatpush1.msra.mxu0 0.0
    %1330 = vmatprep.subr.mxu0 0.0
    %1331 = vmatpush1.msra.mxu0 0.0
    %1332 = vmatprep.subr.mxu0 0.0
    %1333 = vmatpush1.msra.mxu0 0.0
    %1334 = vmatprep.subr.mxu0 0.0
    %1335 = vmatpush1.msra.mxu0 0.0
    %1336 = vmatprep.subr.mxu0 0.0
    %1337 = vmatpush1.msra.mxu0 0.0
    %1338 = vmatprep.subr.mxu0 0.0
    %1339 = vmatpush1.msra.mxu0 0.0
    %1340 = vmatprep.subr.mxu0 0.0
    %1341 = vmatpush1.msra.mxu0 0.0
    %1342 = vmatprep.subr.mxu0 0.0
    %1343 = vmatpush1.msra.mxu0 0.0
    %1344 = vmatprep.subr.mxu0 0.0
    %1345 = vmatpush1.msra.mxu0 0.0
    %1346 = vmatprep.subr.mxu0 0.0
    %1347 = vmatpush1.msra.mxu0 0.0
    %1348 = vmatprep.subr.mxu0 0.0
    %1349 = vmatpush1.msra.mxu0 0.0
    %1350 = vmatprep.subr.mxu0 0.0
    %1351 = vmatpush1.msra.mxu0 0.0
    %1352 = vmatprep.subr.mxu0 0.0
    %1353 = vmatpush1.msra.mxu0 0.0
    %1354 = vmatprep.subr.mxu0 0.0
    %1355 = vmatpush1.msra.mxu0 0.0
    %1356 = vmatprep.subr.mxu0 0.0
    %1357 = vmatpush1.msra.mxu0 0.0
    %1358 = vmatprep.subr.mxu0 0.0
    %1359 = vmatpush1.msra.mxu0 %v1323
    %1360 = vmatprep.subr.mxu0 0.0
    %1361 = vmatpush2.msra.mxu0 0.0
    %1362 = vmatprep.subr.mxu0 0.0
    %1363 = vmatpush2.msra.mxu0 0.0
    %1364 = vmatprep.subr.mxu0 0.0
    %1365 = vmatpush2.msra.mxu0 0.0
    %1366 = vmatprep.subr.mxu0 0.0
    %1367 = vmatpush2.msra.mxu0 0.0
    %1368 = vmatprep.subr.mxu0 0.0
    %1369 = vmatpush2.msra.mxu0 0.0
    %1370 = vmatprep.subr.mxu0 0.0
    %1371 = vmatpush2.msra.mxu0 0.0
    %1372 = vmatprep.subr.mxu0 0.0
    %1373 = vmatpush2.msra.mxu0 0.0
    %1374 = vmatprep.subr.mxu0 0.0
    %1375 = vmatpush2.msra.mxu0 0.0
    %1376 = vmatprep.subr.mxu0 0.0
    %1377 = vmatpush2.msra.mxu0 0.0
    %1378 = vmatprep.subr.mxu0 0.0
    %1379 = vmatpush2.msra.mxu0 0.0
    %1380 = vmatprep.subr.mxu0 0.0
    %1381 = vmatpush2.msra.mxu0 0.0
    %1382 = vmatprep.subr.mxu0 0.0
    %1383 = vmatpush2.msra.mxu0 0.0
    %1384 = vmatprep.subr.mxu0 0.0
    %1385 = vmatpush2.msra.mxu0 0.0
    %1386 = vmatprep.subr.mxu0 0.0
    %1387 = vmatpush2.msra.mxu0 0.0
    %1388 = vmatprep.subr.mxu0 0.0
    %1389 = vmatpush2.msra.mxu0 0.0
    %1390 = vmatprep.subr.mxu0 0.0
    %1391 = vmatpush2.msra.mxu0 0.0
    %1392 = vmatprep.mubr.f32.mxu0 0.0
    %1393 = vmatmul.mubr.f32.gmra.mxu0 %v1326
    %v1394 = vpop.f32.mrf.mxu0
    %v1395 = vadd.f32 0.0, %v1394
    %v1396 = vpop.f32.mrf.mxu0
    %1397 = vdwg.mxu0
    %1400 = vrot.lane.b32.xlu0 %v1319, 16
    %v1401 = vpop.permute.xlu0 %1400
    %1402 = vrot.lane.b32.xlu0 %v1395, 16
    %v1403 = vpop.permute.xlu0 %1402
    %vm1406 = vcmask 195712
    %1407 = vst.msk [vmem:[#allocation3] sm:$0xff] %vm1406, %v1401
    %1408 = vst.msk [vmem:[#allocation3 + $0x8] sm:$0xff] %vm1406, %v1403
    %1409 = vrot.lane.b32.xlu0 %v303, 104
    %v1410 = vpop.permute.xlu0 %1409
    %1411 = vrot.lane.b32.xlu0 %v384, 104
    %v1412 = vpop.permute.xlu0 %1411
    %v1413 = vsel %vm392, %v1410, 0
    %v1415 = vsel %vm392, %v1412, 0
    %1417 = vmatprep.subr.mxu0 0.0
    %1418 = vmatpush1.xpose.msra.mxu0 0.0
    %1419 = vmatprep.subr.mxu0 0.0
    %1420 = vmatpush1.xpose.msra.mxu0 0.0
    %1421 = vmatprep.subr.mxu0 0.0
    %1422 = vmatpush1.xpose.msra.mxu0 0.0
    %1423 = vmatprep.subr.mxu0 0.0
    %1424 = vmatpush1.xpose.msra.mxu0 0.0
    %1425 = vmatprep.subr.mxu0 0.0
    %1426 = vmatpush1.xpose.msra.mxu0 0.0
    %1427 = vmatprep.subr.mxu0 0.0
    %1428 = vmatpush1.xpose.msra.mxu0 0.0
    %1429 = vmatprep.subr.mxu0 0.0
    %1430 = vmatpush1.xpose.msra.mxu0 0.0
    %1431 = vmatprep.subr.mxu0 0.0
    %1432 = vmatpush1.xpose.msra.mxu0 0.0
    %1433 = vmatprep.subr.mxu0 0.0
    %1434 = vmatpush1.xpose.msra.mxu0 0.0
    %1435 = vmatprep.subr.mxu0 0.0
    %1436 = vmatpush1.xpose.msra.mxu0 0.0
    %1437 = vmatprep.subr.mxu0 0.0
    %1438 = vmatpush1.xpose.msra.mxu0 0.0
    %1439 = vmatprep.subr.mxu0 0.0
    %1440 = vmatpush1.xpose.msra.mxu0 0.0
    %1441 = vmatprep.subr.mxu0 0.0
    %1442 = vmatpush1.xpose.msra.mxu0 0.0
    %1443 = vmatprep.subr.mxu0 0.0
    %1444 = vmatpush1.xpose.msra.mxu0 0.0
    %1445 = vmatprep.subr.mxu0 0.0
    %1446 = vmatpush1.xpose.msra.mxu0 0.0
    %1447 = vmatprep.subr.mxu0 0.0
    %1448 = vmatpush1.xpose.msra.mxu0 %v1415
    %1449 = vmatprep.subr.mxu0 0.0
    %1450 = vmatpush2.xpose.msra.mxu0 0.0
    %1451 = vmatprep.subr.mxu0 0.0
    %1452 = vmatpush2.xpose.msra.mxu0 0.0
    %1453 = vmatprep.subr.mxu0 0.0
    %1454 = vmatpush2.xpose.msra.mxu0 0.0
    %1455 = vmatprep.subr.mxu0 0.0
    %1456 = vmatpush2.xpose.msra.mxu0 0.0
    %1457 = vmatprep.subr.mxu0 0.0
    %1458 = vmatpush2.xpose.msra.mxu0 0.0
    %1459 = vmatprep.subr.mxu0 0.0
    %1460 = vmatpush2.xpose.msra.mxu0 0.0
    %1461 = vmatprep.subr.mxu0 0.0
    %1462 = vmatpush2.xpose.msra.mxu0 0.0
    %1463 = vmatprep.subr.mxu0 0.0
    %1464 = vmatpush2.xpose.msra.mxu0 0.0
    %1465 = vmatprep.subr.mxu0 0.0
    %1466 = vmatpush2.xpose.msra.mxu0 0.0
    %1467 = vmatprep.subr.mxu0 0.0
    %1468 = vmatpush2.xpose.msra.mxu0 0.0
    %1469 = vmatprep.subr.mxu0 0.0
    %1470 = vmatpush2.xpose.msra.mxu0 0.0
    %1471 = vmatprep.subr.mxu0 0.0
    %1472 = vmatpush2.xpose.msra.mxu0 0.0
    %1473 = vmatprep.subr.mxu0 0.0
    %1474 = vmatpush2.xpose.msra.mxu0 0.0
    %1475 = vmatprep.subr.mxu0 0.0
    %1476 = vmatpush2.xpose.msra.mxu0 0.0
    %1477 = vmatprep.subr.mxu0 0.0
    %1478 = vmatpush2.xpose.msra.mxu0 0.0
    %1479 = vmatprep.subr.mxu0 0.0
    %1480 = vmatpush2.xpose.msra.mxu0 0.0
    %1481 = vmatprep.mubr.f32.mxu0 0.0
    %1482 = vmatmul.mubr.f32.gmra.mxu0 %v1413
    %v1483 = vpop.f32.mrf.mxu0
    %v1484 = vadd.f32 0.0, %v1483
    %v1485 = vpop.f32.mrf.mxu0
    %1486 = vdwg.mxu0
    %1487 = vrot.lane.b32.xlu0 %v308, 104
    %v1488 = vpop.permute.xlu0 %1487
    %1489 = vrot.lane.b32.xlu0 %v389, 104
    %v1490 = vpop.permute.xlu0 %1489
    %v1491 = vsel %vm392, %v1488, 0
    %v1493 = vsel %vm392, %v1490, 0
    %1495 = vmatprep.subr.mxu0 0.0
    %1496 = vmatpush1.xpose.msra.mxu0 0.0
    %1497 = vmatprep.subr.mxu0 0.0
    %1498 = vmatpush1.xpose.msra.mxu0 0.0
    %1499 = vmatprep.subr.mxu0 0.0
    %1500 = vmatpush1.xpose.msra.mxu0 0.0
    %1501 = vmatprep.subr.mxu0 0.0
    %1502 = vmatpush1.xpose.msra.mxu0 0.0
    %1503 = vmatprep.subr.mxu0 0.0
    %1504 = vmatpush1.xpose.msra.mxu0 0.0
    %1505 = vmatprep.subr.mxu0 0.0
    %1506 = vmatpush1.xpose.msra.mxu0 0.0
    %1507 = vmatprep.subr.mxu0 0.0
    %1508 = vmatpush1.xpose.msra.mxu0 0.0
    %1509 = vmatprep.subr.mxu0 0.0
    %1510 = vmatpush1.xpose.msra.mxu0 0.0
    %1511 = vmatprep.subr.mxu0 0.0
    %1512 = vmatpush1.xpose.msra.mxu0 0.0
    %1513 = vmatprep.subr.mxu0 0.0
    %1514 = vmatpush1.xpose.msra.mxu0 0.0
    %1515 = vmatprep.subr.mxu0 0.0
    %1516 = vmatpush1.xpose.msra.mxu0 0.0
    %1517 = vmatprep.subr.mxu0 0.0
    %1518 = vmatpush1.xpose.msra.mxu0 0.0
    %1519 = vmatprep.subr.mxu0 0.0
    %1520 = vmatpush1.xpose.msra.mxu0 0.0
    %1521 = vmatprep.subr.mxu0 0.0
    %1522 = vmatpush1.xpose.msra.mxu0 0.0
    %1523 = vmatprep.subr.mxu0 0.0
    %1524 = vmatpush1.xpose.msra.mxu0 0.0
    %1525 = vmatprep.subr.mxu0 0.0
    %1526 = vmatpush1.xpose.msra.mxu0 %v1493
    %1527 = vmatprep.subr.mxu0 0.0
    %1528 = vmatpush2.xpose.msra.mxu0 0.0
    %1529 = vmatprep.subr.mxu0 0.0
    %1530 = vmatpush2.xpose.msra.mxu0 0.0
    %1531 = vmatprep.subr.mxu0 0.0
    %1532 = vmatpush2.xpose.msra.mxu0 0.0
    %1533 = vmatprep.subr.mxu0 0.0
    %1534 = vmatpush2.xpose.msra.mxu0 0.0
    %1535 = vmatprep.subr.mxu0 0.0
    %1536 = vmatpush2.xpose.msra.mxu0 0.0
    %1537 = vmatprep.subr.mxu0 0.0
    %1538 = vmatpush2.xpose.msra.mxu0 0.0
    %1539 = vmatprep.subr.mxu0 0.0
    %1540 = vmatpush2.xpose.msra.mxu0 0.0
    %1541 = vmatprep.subr.mxu0 0.0
    %1542 = vmatpush2.xpose.msra.mxu0 0.0
    %1543 = vmatprep.subr.mxu0 0.0
    %1544 = vmatpush2.xpose.msra.mxu0 0.0
    %1545 = vmatprep.subr.mxu0 0.0
    %1546 = vmatpush2.xpose.msra.mxu0 0.0
    %1547 = vmatprep.subr.mxu0 0.0
    %1548 = vmatpush2.xpose.msra.mxu0 0.0
    %1549 = vmatprep.subr.mxu0 0.0
    %1550 = vmatpush2.xpose.msra.mxu0 0.0
    %1551 = vmatprep.subr.mxu0 0.0
    %1552 = vmatpush2.xpose.msra.mxu0 0.0
    %1553 = vmatprep.subr.mxu0 0.0
    %1554 = vmatpush2.xpose.msra.mxu0 0.0
    %1555 = vmatprep.subr.mxu0 0.0
    %1556 = vmatpush2.xpose.msra.mxu0 0.0
    %1557 = vmatprep.subr.mxu0 0.0
    %1558 = vmatpush2.xpose.msra.mxu0 0.0
    %1559 = vmatprep.mubr.f32.mxu0 0.0
    %1560 = vmatmul.mubr.f32.gmra.mxu0 %v1491
    %v1561 = vpop.f32.mrf.mxu0
    %v1562 = vadd.f32 0.0, %v1561
    %v1563 = vpop.f32.mrf.mxu0
    %1564 = vdwg.mxu0
    %v1565 = vmul.f32 %v1484, 0.35355338
    %v1566 = vmul.f32 %v1562, 0.35355338
    %v1567 = vsel %vm392, %v1565, -inf
    %1568 = vmax.xlane.f32.xlu0 %v1567
    %v1569 = vpop.xlane.xlu0 %1568
    %v1570 = vsel %vm392, %v1566, -inf
    %1571 = vmax.xlane.f32.xlu0 %v1570
    %v1572 = vpop.xlane.xlu0 %1571
    %v1573 = vsub.f32 %v1565, %v1569
    %v1574 = vsub.f32 %v1566, %v1572
    %v1575 = vmul.f32 %v1573, 1.442695
    %v1576 = vpow.pop %v1575
    %v1577 = vmul.f32 %v1574, 1.442695
    %v1578 = vpow.pop %v1577
    %v1579 = vsel %vm392, %v1576, 0.0
    %1580 = vadd.xlane.f32.xlu0 %v1579
    %v1581 = vpop.xlane.xlu0 %1580
    %v1582 = vsel %vm392, %v1578, 0.0
    %1583 = vadd.xlane.f32.xlu0 %v1582
    %v1584 = vpop.xlane.xlu0 %1583
    %v1585 = vrcp.pop %v1581
    %v1586 = vrcp.pop %v1584
    %v1587 = vmul.f32 %v1576, %v1585
    %v1588 = vmul.f32 %v1578, %v1586
    %1589 = vrot.lane.b32.xlu0 %v384, 72
    %v1590 = vpop.permute.xlu0 %1589
    %v1593 = vsel %vm392, %v1587, 0
    %1595 = vmatprep.subr.mxu0 0.0
    %1596 = vmatpush1.msra.mxu0 0.0
    %1597 = vmatprep.subr.mxu0 0.0
    %1598 = vmatpush1.msra.mxu0 0.0
    %1599 = vmatprep.subr.mxu0 0.0
    %1600 = vmatpush1.msra.mxu0 0.0
    %1601 = vmatprep.subr.mxu0 0.0
    %1602 = vmatpush1.msra.mxu0 0.0
    %1603 = vmatprep.subr.mxu0 0.0
    %1604 = vmatpush1.msra.mxu0 0.0
    %1605 = vmatprep.subr.mxu0 0.0
    %1606 = vmatpush1.msra.mxu0 0.0
    %1607 = vmatprep.subr.mxu0 0.0
    %1608 = vmatpush1.msra.mxu0 0.0
    %1609 = vmatprep.subr.mxu0 0.0
    %1610 = vmatpush1.msra.mxu0 0.0
    %1611 = vmatprep.subr.mxu0 0.0
    %1612 = vmatpush1.msra.mxu0 0.0
    %1613 = vmatprep.subr.mxu0 0.0
    %1614 = vmatpush1.msra.mxu0 0.0
    %1615 = vmatprep.subr.mxu0 0.0
    %1616 = vmatpush1.msra.mxu0 0.0
    %1617 = vmatprep.subr.mxu0 0.0
    %1618 = vmatpush1.msra.mxu0 0.0
    %1619 = vmatprep.subr.mxu0 0.0
    %1620 = vmatpush1.msra.mxu0 0.0
    %1621 = vmatprep.subr.mxu0 0.0
    %1622 = vmatpush1.msra.mxu0 0.0
    %1623 = vmatprep.subr.mxu0 0.0
    %1624 = vmatpush1.msra.mxu0 0.0
    %1625 = vmatprep.subr.mxu0 0.0
    %1626 = vmatpush1.msra.mxu0 %v1590
    %1627 = vmatprep.subr.mxu0 0.0
    %1628 = vmatpush2.msra.mxu0 0.0
    %1629 = vmatprep.subr.mxu0 0.0
    %1630 = vmatpush2.msra.mxu0 0.0
    %1631 = vmatprep.subr.mxu0 0.0
    %1632 = vmatpush2.msra.mxu0 0.0
    %1633 = vmatprep.subr.mxu0 0.0
    %1634 = vmatpush2.msra.mxu0 0.0
    %1635 = vmatprep.subr.mxu0 0.0
    %1636 = vmatpush2.msra.mxu0 0.0
    %1637 = vmatprep.subr.mxu0 0.0
    %1638 = vmatpush2.msra.mxu0 0.0
    %1639 = vmatprep.subr.mxu0 0.0
    %1640 = vmatpush2.msra.mxu0 0.0
    %1641 = vmatprep.subr.mxu0 0.0
    %1642 = vmatpush2.msra.mxu0 0.0
    %1643 = vmatprep.subr.mxu0 0.0
    %1644 = vmatpush2.msra.mxu0 0.0
    %1645 = vmatprep.subr.mxu0 0.0
    %1646 = vmatpush2.msra.mxu0 0.0
    %1647 = vmatprep.subr.mxu0 0.0
    %1648 = vmatpush2.msra.mxu0 0.0
    %1649 = vmatprep.subr.mxu0 0.0
    %1650 = vmatpush2.msra.mxu0 0.0
    %1651 = vmatprep.subr.mxu0 0.0
    %1652 = vmatpush2.msra.mxu0 0.0
    %1653 = vmatprep.subr.mxu0 0.0
    %1654 = vmatpush2.msra.mxu0 0.0
    %1655 = vmatprep.subr.mxu0 0.0
    %1656 = vmatpush2.msra.mxu0 0.0
    %1657 = vmatprep.subr.mxu0 0.0
    %1658 = vmatpush2.msra.mxu0 0.0
    %1659 = vmatprep.mubr.f32.mxu0 0.0
    %1660 = vmatmul.mubr.f32.gmra.mxu0 %v1593
    %v1661 = vpop.f32.mrf.mxu0
    %v1662 = vadd.f32 0.0, %v1661
    %v1663 = vpop.f32.mrf.mxu0
    %1664 = vdwg.mxu0
    %1665 = vrot.lane.b32.xlu0 %v389, 72
    %v1666 = vpop.permute.xlu0 %1665
    %v1669 = vsel %vm392, %v1588, 0
    %1671 = vmatprep.subr.mxu0 0.0
    %1672 = vmatpush1.msra.mxu0 0.0
    %1673 = vmatprep.subr.mxu0 0.0
    %1674 = vmatpush1.msra.mxu0 0.0
    %1675 = vmatprep.subr.mxu0 0.0
    %1676 = vmatpush1.msra.mxu0 0.0
    %1677 = vmatprep.subr.mxu0 0.0
    %1678 = vmatpush1.msra.mxu0 0.0
    %1679 = vmatprep.subr.mxu0 0.0
    %1680 = vmatpush1.msra.mxu0 0.0
    %1681 = vmatprep.subr.mxu0 0.0
    %1682 = vmatpush1.msra.mxu0 0.0
    %1683 = vmatprep.subr.mxu0 0.0
    %1684 = vmatpush1.msra.mxu0 0.0
    %1685 = vmatprep.subr.mxu0 0.0
    %1686 = vmatpush1.msra.mxu0 0.0
    %1687 = vmatprep.subr.mxu0 0.0
    %1688 = vmatpush1.msra.mxu0 0.0
    %1689 = vmatprep.subr.mxu0 0.0
    %1690 = vmatpush1.msra.mxu0 0.0
    %1691 = vmatprep.subr.mxu0 0.0
    %1692 = vmatpush1.msra.mxu0 0.0
    %1693 = vmatprep.subr.mxu0 0.0
    %1694 = vmatpush1.msra.mxu0 0.0
    %1695 = vmatprep.subr.mxu0 0.0
    %1696 = vmatpush1.msra.mxu0 0.0
    %1697 = vmatprep.subr.mxu0 0.0
    %1698 = vmatpush1.msra.mxu0 0.0
    %1699 = vmatprep.subr.mxu0 0.0
    %1700 = vmatpush1.msra.mxu0 0.0
    %1701 = vmatprep.subr.mxu0 0.0
    %1702 = vmatpush1.msra.mxu0 %v1666
    %1703 = vmatprep.subr.mxu0 0.0
    %1704 = vmatpush2.msra.mxu0 0.0
    %1705 = vmatprep.subr.mxu0 0.0
    %1706 = vmatpush2.msra.mxu0 0.0
    %1707 = vmatprep.subr.mxu0 0.0
    %1708 = vmatpush2.msra.mxu0 0.0
    %1709 = vmatprep.subr.mxu0 0.0
    %1710 = vmatpush2.msra.mxu0 0.0
    %1711 = vmatprep.subr.mxu0 0.0
    %1712 = vmatpush2.msra.mxu0 0.0
    %1713 = vmatprep.subr.mxu0 0.0
    %1714 = vmatpush2.msra.mxu0 0.0
    %1715 = vmatprep.subr.mxu0 0.0
    %1716 = vmatpush2.msra.mxu0 0.0
    %1717 = vmatprep.subr.mxu0 0.0
    %1718 = vmatpush2.msra.mxu0 0.0
    %1719 = vmatprep.subr.mxu0 0.0
    %1720 = vmatpush2.msra.mxu0 0.0
    %1721 = vmatprep.subr.mxu0 0.0
    %1722 = vmatpush2.msra.mxu0 0.0
    %1723 = vmatprep.subr.mxu0 0.0
    %1724 = vmatpush2.msra.mxu0 0.0
    %1725 = vmatprep.subr.mxu0 0.0
    %1726 = vmatpush2.msra.mxu0 0.0
    %1727 = vmatprep.subr.mxu0 0.0
    %1728 = vmatpush2.msra.mxu0 0.0
    %1729 = vmatprep.subr.mxu0 0.0
    %1730 = vmatpush2.msra.mxu0 0.0
    %1731 = vmatprep.subr.mxu0 0.0
    %1732 = vmatpush2.msra.mxu0 0.0
    %1733 = vmatprep.subr.mxu0 0.0
    %1734 = vmatpush2.msra.mxu0 0.0
    %1735 = vmatprep.mubr.f32.mxu0 0.0
    %1736 = vmatmul.mubr.f32.gmra.mxu0 %v1669
    %v1737 = vpop.f32.mrf.mxu0
    %v1738 = vadd.f32 0.0, %v1737
    %v1739 = vpop.f32.mrf.mxu0
    %1740 = vdwg.mxu0
    %1743 = vrot.lane.b32.xlu0 %v1662, 24
    %v1744 = vpop.permute.xlu0 %1743
    %1745 = vrot.lane.b32.xlu0 %v1738, 24
    %v1746 = vpop.permute.xlu0 %1745
    %vm1749 = vcmask 261312
    %1750 = vst.msk [vmem:[#allocation3] sm:$0xff] %vm1749, %v1744
    %1751 = vst.msk [vmem:[#allocation3 + $0x8] sm:$0xff] %vm1749, %v1746
    %v1752 = vld [vmem:[#allocation3] sm:$0xff]
    %v1753 = vld [vmem:[#allocation3 + $0x8] sm:$0xff]
    %v1755 = vlaneseq
    %v1756 = vshrl.u32 %v1755, 7
    %v1757 = vsub.s32 0, %v1756
    %v1758 = vrot.slane %v220, %v1757
    %v1761 = vsel %vm229, %v1752, 0
    %v1764 = vsel %vm229, %v1753, 0
    %1766 = vmatprep.subr.mxu0 0.0
    %1767 = vmatpush1.msra.mxu0 0.0
    %1768 = vmatprep.subr.mxu0 0.0
    %1769 = vmatpush1.msra.mxu0 0.0
    %1770 = vmatprep.subr.mxu0 0.0
    %1771 = vmatpush1.msra.mxu0 0.0
    %1772 = vmatprep.subr.mxu0 0.0
    %1773 = vmatpush1.msra.mxu0 0.0
    %1774 = vmatprep.subr.mxu0 0.0
    %1775 = vmatpush1.msra.mxu0 0.0
    %1776 = vmatprep.subr.mxu0 0.0
    %1777 = vmatpush1.msra.mxu0 0.0
    %1778 = vmatprep.subr.mxu0 0.0
    %1779 = vmatpush1.msra.mxu0 0.0
    %1780 = vmatprep.subr.mxu0 0.0
    %1781 = vmatpush1.msra.mxu0 0.0
    %1782 = vmatprep.subr.mxu0 0.0
    %1783 = vmatpush1.msra.mxu0 0.0
    %1784 = vmatprep.subr.mxu0 0.0
    %1785 = vmatpush1.msra.mxu0 0.0
    %1786 = vmatprep.subr.mxu0 0.0
    %1787 = vmatpush1.msra.mxu0 0.0
    %1788 = vmatprep.subr.mxu0 0.0
    %1789 = vmatpush1.msra.mxu0 0.0
    %1790 = vmatprep.subr.mxu0 0.0
    %1791 = vmatpush1.msra.mxu0 %v219
    %1792 = vmatprep.subr.mxu0 0.0
    %1793 = vmatpush1.msra.mxu0 %v218
    %1794 = vmatprep.subr.mxu0 0.0
    %1795 = vmatpush1.msra.mxu0 %v217
    %1796 = vmatprep.subr.mxu0 0.0
    %1797 = vmatpush1.msra.mxu0 %v216
    %1798 = vmatprep.subr.mxu0 0.0
    %1799 = vmatpush2.msra.mxu0 0.0
    %1800 = vmatprep.subr.mxu0 0.0
    %1801 = vmatpush2.msra.mxu0 0.0
    %1802 = vmatprep.subr.mxu0 0.0
    %1803 = vmatpush2.msra.mxu0 0.0
    %1804 = vmatprep.subr.mxu0 0.0
    %1805 = vmatpush2.msra.mxu0 0.0
    %1806 = vmatprep.subr.mxu0 0.0
    %1807 = vmatpush2.msra.mxu0 0.0
    %1808 = vmatprep.subr.mxu0 0.0
    %1809 = vmatpush2.msra.mxu0 0.0
    %1810 = vmatprep.subr.mxu0 0.0
    %1811 = vmatpush2.msra.mxu0 0.0
    %1812 = vmatprep.subr.mxu0 0.0
    %1813 = vmatpush2.msra.mxu0 0.0
    %1814 = vmatprep.subr.mxu0 0.0
    %1815 = vmatpush2.msra.mxu0 0.0
    %1816 = vmatprep.subr.mxu0 0.0
    %1817 = vmatpush2.msra.mxu0 0.0
    %1818 = vmatprep.subr.mxu0 0.0
    %1819 = vmatpush2.msra.mxu0 0.0
    %1820 = vmatprep.subr.mxu0 0.0
    %1821 = vmatpush2.msra.mxu0 0.0
    %1822 = vmatprep.subr.mxu0 0.0
    %1823 = vmatpush2.msra.mxu0 0.0
    %1824 = vmatprep.subr.mxu0 0.0
    %1825 = vmatpush2.msra.mxu0 0.0
    %1826 = vmatprep.subr.mxu0 0.0
    %1827 = vmatpush2.msra.mxu0 0.0
    %1828 = vmatprep.subr.mxu0 0.0
    %1829 = vmatpush2.msra.mxu0 0.0
    %1830 = vmatprep.mubr.f32.mxu0 0.0
    %1831 = vmatmul.mubr.f32.gmra.mxu0 %v1761
    %v1832 = vpop.f32.mrf.mxu0
    %v1833 = vadd.f32 %v1758, %v1832
    %v1834 = vpop.f32.mrf.mxu0
    %1835 = vmatprep.mubr.f32.mxu0 0.0
    %1836 = vmatmul.mubr.f32.gmra.mxu0 %v1764
    %v1837 = vpop.f32.mrf.mxu0
    %v1838 = vadd.f32 %v1758, %v1837
    %v1839 = vpop.f32.mrf.mxu0
    %1840 = vdwg.mxu0
    %v1841 = vadd.f32 %v204, %v1833
    %v1842 = vadd.f32 %v205, %v1838
    %v1843 = vsel %vm229, %v1841, 0.0
    %1844 = vadd.xlane.f32.xlu0 %v1843
    %v1845 = vpop.xlane.xlu0 %1844
    %v1846 = vsel %vm229, %v1842, 0.0
    %1847 = vadd.xlane.f32.xlu0 %v1846
    %v1848 = vpop.xlane.xlu0 %1847
    %v1849 = vrcp.pop 32.0
    %v1850 = vmul.f32 %v1845, %v1849
    %v1851 = vmul.f32 %v1848, %v1849
    %v1852 = vsub.f32 %v1841, %v1850
    %v1853 = vsub.f32 %v1842, %v1851
    %v1854 = vmul.f32 %v1852, %v1852
    %v1855 = vmul.f32 %v1853, %v1853
    %v1856 = vsel %vm229, %v1854, 0.0
    %1857 = vadd.xlane.f32.xlu0 %v1856
    %v1858 = vpop.xlane.xlu0 %1857
    %v1859 = vsel %vm229, %v1855, 0.0
    %1860 = vadd.xlane.f32.xlu0 %v1859
    %v1861 = vpop.xlane.xlu0 %1860
    %v1862 = vmul.f32 %v1858, %v1849
    %v1863 = vmul.f32 %v1861, %v1849
    %v1864 = vadd.f32 %v1862, 1e-05
    %v1865 = vadd.f32 %v1863, 1e-05
    %v1866 = vrsqrt.pop %v1864
    %v1867 = vrsqrt.pop %v1865
    %v1868 = vmul.f32 %v1852, %v1866
    %v1869 = vmul.f32 %v1853, %v1867
    %v1871 = vlaneseq
    %v1872 = vshrl.u32 %v1871, 7
    %v1873 = vsub.s32 0, %v1872
    %v1874 = vrot.slane %v221, %v1873
    %v1876 = vmul.f32 %v1868, %v1874
    %v1877 = vmul.f32 %v1869, %v1874
    %v1879 = vlaneseq
    %v1880 = vshrl.u32 %v1879, 7
    %v1881 = vsub.s32 0, %v1880
    %v1882 = vrot.slane %v222, %v1881
    %v1884 = vadd.f32 %v1876, %v1882
    %v1885 = vadd.f32 %v1877, %v1882
    %v1886 = vld [vmem:[#allocation15] sm:$0xff]
    %v1887 = vld [vmem:[#allocation15 + $0x8] sm:$0xff]
    %v1888 = vld [vmem:[#allocation15 + $0x10] sm:$0xff]
    %v1889 = vld [vmem:[#allocation15 + $0x18] sm:$0xff]
    %v1890 = vld [vmem:[#allocation17] sm:$0x1]
    %v1891 = vld [vmem:[%s11] sm:$0xff]
    %v1892 = vld [vmem:[%s11 + $0x8] sm:$0xff]
    %v1893 = vld [vmem:[%s11 + $0x10] sm:$0xff]
    %v1894 = vld [vmem:[%s11 + $0x18] sm:$0xff]
    %v1895 = vld [vmem:[%s11 + $0x20] sm:$0xff]
    %v1896 = vld [vmem:[%s11 + $0x28] sm:$0xff]
    %v1897 = vld [vmem:[%s11 + $0x30] sm:$0xff]
    %v1898 = vld [vmem:[%s11 + $0x38] sm:$0xff]
    %v1899 = vld [vmem:[#allocation18] sm:$0x1]
    %v1900 = vld [vmem:[#allocation20] sm:$0x1]
    %v1901 = vld [vmem:[#allocation21] sm:$0x1]
    %v1903 = vlaneseq
    %v1904 = vshrl.u32 %v1903, 7
    %v1905 = vsub.s32 0, %v1904
    %v1906 = vrot.slane %v1890, %v1905
    %v1909 = vsel %vm229, %v1884, 0
    %v1912 = vsel %vm229, %v1885, 0
    %1914 = vmatprep.subr.mxu0 0.0
    %1915 = vmatpush1.msra.mxu0 0.0
    %1916 = vmatprep.subr.mxu0 0.0
    %1917 = vmatpush1.msra.mxu0 0.0
    %1918 = vmatprep.subr.mxu0 0.0
    %1919 = vmatpush1.msra.mxu0 0.0
    %1920 = vmatprep.subr.mxu0 0.0
    %1921 = vmatpush1.msra.mxu0 0.0
    %1922 = vmatprep.subr.mxu0 0.0
    %1923 = vmatpush1.msra.mxu0 0.0
    %1924 = vmatprep.subr.mxu0 0.0
    %1925 = vmatpush1.msra.mxu0 0.0
    %1926 = vmatprep.subr.mxu0 0.0
    %1927 = vmatpush1.msra.mxu0 0.0
    %1928 = vmatprep.subr.mxu0 0.0
    %1929 = vmatpush1.msra.mxu0 0.0
    %1930 = vmatprep.subr.mxu0 0.0
    %1931 = vmatpush1.msra.mxu0 0.0
    %1932 = vmatprep.subr.mxu0 0.0
    %1933 = vmatpush1.msra.mxu0 0.0
    %1934 = vmatprep.subr.mxu0 0.0
    %1935 = vmatpush1.msra.mxu0 0.0
    %1936 = vmatprep.subr.mxu0 0.0
    %1937 = vmatpush1.msra.mxu0 0.0
    %1938 = vmatprep.subr.mxu0 0.0
    %1939 = vmatpush1.msra.mxu0 %v1889
    %1940 = vmatprep.subr.mxu0 0.0
    %1941 = vmatpush1.msra.mxu0 %v1888
    %1942 = vmatprep.subr.mxu0 0.0
    %1943 = vmatpush1.msra.mxu0 %v1887
    %1944 = vmatprep.subr.mxu0 0.0
    %1945 = vmatpush1.msra.mxu0 %v1886
    %1946 = vmatprep.subr.mxu0 0.0
    %1947 = vmatpush2.msra.mxu0 0.0
    %1948 = vmatprep.subr.mxu0 0.0
    %1949 = vmatpush2.msra.mxu0 0.0
    %1950 = vmatprep.subr.mxu0 0.0
    %1951 = vmatpush2.msra.mxu0 0.0
    %1952 = vmatprep.subr.mxu0 0.0
    %1953 = vmatpush2.msra.mxu0 0.0
    %1954 = vmatprep.subr.mxu0 0.0
    %1955 = vmatpush2.msra.mxu0 0.0
    %1956 = vmatprep.subr.mxu0 0.0
    %1957 = vmatpush2.msra.mxu0 0.0
    %1958 = vmatprep.subr.mxu0 0.0
    %1959 = vmatpush2.msra.mxu0 0.0
    %1960 = vmatprep.subr.mxu0 0.0
    %1961 = vmatpush2.msra.mxu0 0.0
    %1962 = vmatprep.subr.mxu0 0.0
    %1963 = vmatpush2.msra.mxu0 0.0
    %1964 = vmatprep.subr.mxu0 0.0
    %1965 = vmatpush2.msra.mxu0 0.0
    %1966 = vmatprep.subr.mxu0 0.0
    %1967 = vmatpush2.msra.mxu0 0.0
    %1968 = vmatprep.subr.mxu0 0.0
    %1969 = vmatpush2.msra.mxu0 0.0
    %1970 = vmatprep.subr.mxu0 0.0
    %1971 = vmatpush2.msra.mxu0 0.0
    %1972 = vmatprep.subr.mxu0 0.0
    %1973 = vmatpush2.msra.mxu0 0.0
    %1974 = vmatprep.subr.mxu0 0.0
    %1975 = vmatpush2.msra.mxu0 0.0
    %1976 = vmatprep.subr.mxu0 0.0
    %1977 = vmatpush2.msra.mxu0 0.0
    %1978 = vmatprep.mubr.f32.mxu0 0.0
    %1979 = vmatmul.mubr.f32.gmra.mxu0 %v1909
    %v1980 = vpop.f32.mrf.mxu0
    %v1981 = vadd.f32 %v1906, %v1980
    %v1982 = vpop.f32.mrf.mxu0
    %1983 = vmatprep.mubr.f32.mxu0 0.0
    %1984 = vmatmul.mubr.f32.gmra.mxu0 %v1912
    %v1985 = vpop.f32.mrf.mxu0
    %v1986 = vadd.f32 %v1906, %v1985
    %v1987 = vpop.f32.mrf.mxu0
    %1988 = vdwg.mxu0
    %v1989 = vmax.f32 %v1981, 0.0
    %v1990 = vmax.f32 %v1986, 0.0
    %v1992 = vlaneseq
    %v1993 = vshrl.u32 %v1992, 7
    %v1994 = vsub.s32 0, %v1993
    %v1995 = vrot.slane %v1899, %v1994
    %vm1997 = vcmask 523264
    %v1999 = vsel %vm1997, %v1989, 0
    %v2002 = vsel %vm1997, %v1990, 0
    %2004 = vmatprep.subr.mxu0 0.0
    %2005 = vmatpush1.msra.mxu0 0.0
    %2006 = vmatprep.subr.mxu0 0.0
    %2007 = vmatpush1.msra.mxu0 0.0
    %2008 = vmatprep.subr.mxu0 0.0
    %2009 = vmatpush1.msra.mxu0 0.0
    %2010 = vmatprep.subr.mxu0 0.0
    %2011 = vmatpush1.msra.mxu0 0.0
    %2012 = vmatprep.subr.mxu0 0.0
    %2013 = vmatpush1.msra.mxu0 0.0
    %2014 = vmatprep.subr.mxu0 0.0
    %2015 = vmatpush1.msra.mxu0 0.0
    %2016 = vmatprep.subr.mxu0 0.0
    %2017 = vmatpush1.msra.mxu0 0.0
    %2018 = vmatprep.subr.mxu0 0.0
    %2019 = vmatpush1.msra.mxu0 0.0
    %2020 = vmatprep.subr.mxu0 0.0
    %2021 = vmatpush1.msra.mxu0 %v1898
    %2022 = vmatprep.subr.mxu0 0.0
    %2023 = vmatpush1.msra.mxu0 %v1897
    %2024 = vmatprep.subr.mxu0 0.0
    %2025 = vmatpush1.msra.mxu0 %v1896
    %2026 = vmatprep.subr.mxu0 0.0
    %2027 = vmatpush1.msra.mxu0 %v1895
    %2028 = vmatprep.subr.mxu0 0.0
    %2029 = vmatpush1.msra.mxu0 %v1894
    %2030 = vmatprep.subr.mxu0 0.0
    %2031 = vmatpush1.msra.mxu0 %v1893
    %2032 = vmatprep.subr.mxu0 0.0
    %2033 = vmatpush1.msra.mxu0 %v1892
    %2034 = vmatprep.subr.mxu0 0.0
    %2035 = vmatpush1.msra.mxu0 %v1891
    %2036 = vmatprep.subr.mxu0 0.0
    %2037 = vmatpush2.msra.mxu0 0.0
    %2038 = vmatprep.subr.mxu0 0.0
    %2039 = vmatpush2.msra.mxu0 0.0
    %2040 = vmatprep.subr.mxu0 0.0
    %2041 = vmatpush2.msra.mxu0 0.0
    %2042 = vmatprep.subr.mxu0 0.0
    %2043 = vmatpush2.msra.mxu0 0.0
    %2044 = vmatprep.subr.mxu0 0.0
    %2045 = vmatpush2.msra.mxu0 0.0
    %2046 = vmatprep.subr.mxu0 0.0
    %2047 = vmatpush2.msra.mxu0 0.0
    %2048 = vmatprep.subr.mxu0 0.0
    %2049 = vmatpush2.msra.mxu0 0.0
    %2050 = vmatprep.subr.mxu0 0.0
    %2051 = vmatpush2.msra.mxu0 0.0
    %2052 = vmatprep.subr.mxu0 0.0
    %2053 = vmatpush2.msra.mxu0 0.0
    %2054 = vmatprep.subr.mxu0 0.0
    %2055 = vmatpush2.msra.mxu0 0.0
    %2056 = vmatprep.subr.mxu0 0.0
    %2057 = vmatpush2.msra.mxu0 0.0
    %2058 = vmatprep.subr.mxu0 0.0
    %2059 = vmatpush2.msra.mxu0 0.0
    %2060 = vmatprep.subr.mxu0 0.0
    %2061 = vmatpush2.msra.mxu0 0.0
    %2062 = vmatprep.subr.mxu0 0.0
    %2063 = vmatpush2.msra.mxu0 0.0
    %2064 = vmatprep.subr.mxu0 0.0
    %2065 = vmatpush2.msra.mxu0 0.0
    %2066 = vmatprep.subr.mxu0 0.0
    %2067 = vmatpush2.msra.mxu0 0.0
    %2068 = vmatprep.mubr.f32.mxu0 0.0
    %2069 = vmatmul.mubr.f32.gmra.mxu0 %v1999
    %v2070 = vpop.f32.mrf.mxu0
    %v2071 = vadd.f32 %v1995, %v2070
    %v2072 = vpop.f32.mrf.mxu0
    %2073 = vmatprep.mubr.f32.mxu0 0.0
    %2074 = vmatmul.mubr.f32.gmra.mxu0 %v2002
    %v2075 = vpop.f32.mrf.mxu0
    %v2076 = vadd.f32 %v1995, %v2075
    %v2077 = vpop.f32.mrf.mxu0
    %2078 = vdwg.mxu0
    %v2079 = vadd.f32 %v1884, %v2071
    %v2080 = vadd.f32 %v1885, %v2076
    %v2081 = vsel %vm229, %v2079, 0.0
    %2082 = vadd.xlane.f32.xlu0 %v2081
    %v2083 = vpop.xlane.xlu0 %2082
    %v2084 = vsel %vm229, %v2080, 0.0
    %2085 = vadd.xlane.f32.xlu0 %v2084
    %v2086 = vpop.xlane.xlu0 %2085
    %v2087 = vmul.f32 %v2083, %v1849
    %v2088 = vmul.f32 %v2086, %v1849
    %v2089 = vsub.f32 %v2079, %v2087
    %v2090 = vsub.f32 %v2080, %v2088
    %v2091 = vmul.f32 %v2089, %v2089
    %v2092 = vmul.f32 %v2090, %v2090
    %v2093 = vsel %vm229, %v2091, 0.0
    %2094 = vadd.xlane.f32.xlu0 %v2093
    %v2095 = vpop.xlane.xlu0 %2094
    %v2096 = vsel %vm229, %v2092, 0.0
    %2097 = vadd.xlane.f32.xlu0 %v2096
    %v2098 = vpop.xlane.xlu0 %2097
    %v2099 = vmul.f32 %v2095, %v1849
    %v2100 = vmul.f32 %v2098, %v1849
    %v2101 = vadd.f32 %v2099, 1e-05
    %v2102 = vadd.f32 %v2100, 1e-05
    %v2103 = vrsqrt.pop %v2101
    %v2104 = vrsqrt.pop %v2102
    %v2105 = vmul.f32 %v2089, %v2103
    %v2106 = vmul.f32 %v2090, %v2104
    %v2108 = vlaneseq
    %v2109 = vshrl.u32 %v2108, 7
    %v2110 = vsub.s32 0, %v2109
    %v2111 = vrot.slane %v1900, %v2110
    %v2113 = vmul.f32 %v2105, %v2111
    %v2114 = vmul.f32 %v2106, %v2111
    %v2116 = vlaneseq
    %v2117 = vshrl.u32 %v2116, 7
    %v2118 = vsub.s32 0, %v2117
    %v2119 = vrot.slane %v1901, %v2118
    %v2121 = vadd.f32 %v2113, %v2119
    %v2122 = vadd.f32 %v2114, %v2119
    %2123 = vst.msk [vmem:[#allocation2] sm:$0xff] %vm229, %v2121
    %2124 = vst.msk [vmem:[#allocation2 + $0x8] sm:$0xff] %vm229, %v2122
    %2125 = vst.msk [vmem:[%s15] sm:$0xff] %vm229, %v2121
    %2126 = vst.msk [vmem:[%s15 + $0x8] sm:$0xff] %vm229, %v2122
    // Predicated region
    $region114: #{_transformer_forward.2} parent=1 // pred_check
      _
    $region115: #{_transformer_forward.2} parent=1 // pred_check_branch
      %2128 = sbr.rel (0) target = $region117
    $region116: #{_transformer_forward.2} parent=1 // pred_region
      _
    $region117: #{_transformer_forward.2} parent=1 // pred_fallthru
      _
    // Predicated region
    $region118: #{_transformer_forward.2} parent=1 // pred_check
      _
    $region119: #{_transformer_forward.2} parent=1 // pred_check_branch
      %2130 = sbr.rel (0) target = $region121
    $region120: #{_transformer_forward.2} parent=1 // pred_region
      _
    $region121: #{_transformer_forward.2} parent=1 // pred_fallthru
      _
    %2131 = vsyncpa [#allocation5], 1
    %2132 = vsyncpa [#allocation7], 1
    %2133 = vsyncpa [#allocation10], 1
    %2134 = vsyncpa [#allocation13], 1
    %2135 = vsyncpa [#allocation16], 1
    %2136 = vsyncpa [#allocation19], 1
    %2137 = vsyncpa [#allocation22], 1

// kernel: _transformer_forward.3
$region0: #{_transformer_forward.3}
  #allocation0 [shape = 'u32[]', space=smem, size = 0x4, offset = 0x4, fixed_abs, tag = 'smem constant byte address 0x4 - core index']
  #allocation1 [shape = 'u32[144,128]{1,0:T(1,128)}', space=vmem, size = 0x12000, scoped, tag = 'internal scratch']
  #allocation2 [shape = 'f32[2,8,32]{2,1,0:T(8,128)}', space=vmem, size = 0x2000, scoped, tag = 'scratch operand']
  #allocation3 [shape = 'f32[2,8,32]{2,1,0:T(8,128)}', space=vmem, size = 0x2000, scoped, tag = 'scratch operand']
  %s0 = inlined_call_operand.vmem [shape: f32[2,8,32], index: 0, kind: input, shape index: {}]
  %s1 = inlined_call_operand.vmem [shape: f32[2,8,32], index: 1, kind: input, shape index: {}]
  %s2 = inlined_call_operand.vmem [shape: f32[8,8], index: 2, kind: input, shape index: {}]
  %s3 = inlined_call_operand.vmem [shape: f32[4,32,32], index: 3, kind: input, shape index: {}]
  %s4 = inlined_call_operand.vmem [shape: f32[4,1,32], index: 4, kind: input, shape index: {}]
  %s5 = inlined_call_operand.vmem [shape: f32[4,32,64], index: 5, kind: input, shape index: {}]
  %s6 = inlined_call_operand.vmem [shape: f32[4,1,64], index: 6, kind: input, shape index: {}]
  %s7 = inlined_call_operand.vmem [shape: f32[4,32,32], index: 7, kind: input, shape index: {}]
  %s8 = inlined_call_operand.vmem [shape: f32[4,1,32], index: 8, kind: input, shape index: {}]
  %s9 = inlined_call_operand.hbm [shape: f32[4,1,32], index: 9, kind: input, shape index: {}]
  %s10 = inlined_call_operand.hbm [shape: f32[4,1,32], index: 10, kind: input, shape index: {}]
  %s11 = inlined_call_operand.vmem [shape: f32[4,32,32], index: 11, kind: input, shape index: {}]
  %s12 = inlined_call_operand.hbm [shape: f32[4,1,32], index: 12, kind: input, shape index: {}]
  %s13 = inlined_call_operand.vmem [shape: f32[4,32,64], index: 13, kind: input, shape index: {}]
  %s14 = inlined_call_operand.hbm [shape: f32[4,1,64], index: 14, kind: input, shape index: {}]
  %s15 = inlined_call_operand.vmem [shape: f32[4,32,32], index: 15, kind: input, shape index: {}]
  %s16 = inlined_call_operand.hbm [shape: f32[4,1,32], index: 16, kind: input, shape index: {}]
  %s17 = inlined_call_operand.hbm [shape: f32[4,1,32], index: 17, kind: input, shape index: {}]
  %s18 = inlined_call_operand.hbm [shape: f32[4,1,32], index: 18, kind: input, shape index: {}]
  %s19 = inlined_call_operand.hbm [shape: f32[4,32,64], index: 19, kind: input, shape index: {}]
  %s20 = inlined_call_operand.hbm [shape: f32[4,1,64], index: 20, kind: input, shape index: {}]
  %s21 = inlined_call_operand.vmem [shape: f32[4,64,32], index: 21, kind: input, shape index: {}]
  %s22 = inlined_call_operand.hbm [shape: f32[4,1,32], index: 22, kind: input, shape index: {}]
  %s23 = inlined_call_operand.hbm [shape: f32[4,1,32], index: 23, kind: input, shape index: {}]
  %s24 = inlined_call_operand.hbm [shape: f32[4,1,32], index: 24, kind: input, shape index: {}]
  %s25 = inlined_call_operand.vmem [shape: f32[2,8,32], index: 25, kind: output, shape index: {}]
  %s26 = sld [smem:[#allocation0]]
  $region185: #{_transformer_forward.3} parent=0
    _
  %s28 = ssub.s32 1, %s26
  %s29 = scalar_select 0, %s28, %s26
  $region1: #{_transformer_forward.3} parent=0
    #allocation4 [shape = 'u8[1024]{0}', space=vmem, size = 0x400, scoped, tag = 'input window, operand 9']
    #allocation5 [shape = 's32[2]{0}', space=sflag, size = 0x8, scoped, tag = 'scoped memory for _transformer_forward.3']
    #allocation6 [shape = 'u8[1024]{0}', space=vmem, size = 0x400, scoped, tag = 'input window, operand 10']
    #allocation7 [shape = 's32[2]{0}', space=sflag, size = 0x8, scoped, tag = 'scoped memory for _transformer_forward.3']
    #allocation8 [shape = 'u8[1024]{0}', space=vmem, size = 0x400, scoped, tag = 'input window, operand 12']
    #allocation9 [shape = 'u8[1024]{0}', space=vmem, size = 0x400, scoped, tag = 'input window, operand 14']
    #allocation10 [shape = 's32[2]{0}', space=sflag, size = 0x8, scoped, tag = 'scoped memory for _transformer_forward.3']
    #allocation11 [shape = 'u8[1024]{0}', space=vmem, size = 0x400, scoped, tag = 'input window, operand 16']
    #allocation12 [shape = 'u8[1024]{0}', space=vmem, size = 0x400, scoped, tag = 'input window, operand 17']
    #allocation13 [shape = 's32[2]{0}', space=sflag, size = 0x8, scoped, tag = 'scoped memory for _transformer_forward.3']
    #allocation14 [shape = 'u8[1024]{0}', space=vmem, size = 0x400, scoped, tag = 'input window, operand 18']
    #allocation15 [shape = 'u8[32768]{0}', space=vmem, size = 0x8000, scoped, tag = 'input window, operand 19']
    #allocation16 [shape = 's32[2]{0}', space=sflag, size = 0x8, scoped, tag = 'scoped memory for _transformer_forward.3']
    #allocation17 [shape = 'u8[1024]{0}', space=vmem, size = 0x400, scoped, tag = 'input window, operand 20']
    #allocation18 [shape = 'u8[1024]{0}', space=vmem, size = 0x400, scoped, tag = 'input window, operand 22']
    #allocation19 [shape = 's32[2]{0}', space=sflag, size = 0x8, scoped, tag = 'scoped memory for _transformer_forward.3']
    #allocation20 [shape = 'u8[1024]{0}', space=vmem, size = 0x400, scoped, tag = 'input window, operand 23']
    #allocation21 [shape = 'u8[1024]{0}', space=vmem, size = 0x400, scoped, tag = 'input window, operand 24']
    #allocation22 [shape = 's32[2]{0}', space=sflag, size = 0x8, scoped, tag = 'scoped memory for _transformer_forward.3']
    %30 = vsyncpa [#allocation5], 0
    %s31 = scalar_lea.sflag [#allocation5], 1
    %32 = vsyncpa %s31, 0
    %33 = vsyncpa [#allocation7], 0
    %s34 = scalar_lea.sflag [#allocation7], 1
    %35 = vsyncpa %s34, 0
    %36 = vsyncpa [#allocation10], 0
    %s37 = scalar_lea.sflag [#allocation10], 1
    %38 = vsyncpa %s37, 0
    %39 = vsyncpa [#allocation13], 0
    %s40 = scalar_lea.sflag [#allocation13], 1
    %41 = vsyncpa %s40, 0
    %42 = vsyncpa [#allocation16], 0
    %s43 = scalar_lea.sflag [#allocation16], 1
    %44 = vsyncpa %s43, 0
    %45 = vsyncpa [#allocation19], 0
    %s46 = scalar_lea.sflag [#allocation19], 1
    %47 = vsyncpa %s46, 0
    %48 = vsyncpa [#allocation22], 0
    %s49 = scalar_lea.sflag [#allocation22], 1
    %50 = vsyncpa %s49, 0
    loop: start=0, step=1, limit=6
    $region2: #{_transformer_forward.3} parent=1 // loop_pre_header
      _
    $region3: #{_transformer_forward.3} parent=1 // loop_header
      %s52 = sphi 0, %s56
      %p53 = scmp.ge.s32.totalorder %s52, 6
      %s60 = sphi 0, %s60
      %s62 = sphi 0, %s60
      %s63 = sphi 0, %s62
      %s77 = sphi 0, %s63
      %s81 = sphi 0, %s81
      %s83 = sphi 0, %s81
      %s84 = sphi 0, %s83
      %s98 = sphi 0, %s84
      %s102 = sphi 0, %s102
      %s104 = sphi 0, %s102
      %s105 = sphi 0, %s104
      %s119 = sphi 0, %s105
      %s125 = sphi 0, %s127
      %s128 = sphi 0, %s125
      %s129 = sphi 0, %s128
      %s145 = sphi 0, %s129
      %s151 = sphi 0, %s153
      %s154 = sphi 0, %s151
      %s155 = sphi 0, %s154
      %s171 = sphi 0, %s155
      %s177 = sphi 0, %s179
      %s180 = sphi 0, %s177
      %s181 = sphi 0, %s180
      %s197 = sphi 0, %s181
      %s203 = sphi 0, %s205
      %s206 = sphi 0, %s203
      %s207 = sphi 0, %s206
      %s223 = sphi 0, %s207
      %s229 = sphi 0, %s231
      %s232 = sphi 0, %s229
      %s233 = sphi 0, %s232
      %s249 = sphi 0, %s233
      %s255 = sphi 0, %s257
      %s258 = sphi 0, %s255
      %s259 = sphi 0, %s258
      %s275 = sphi 0, %s259
      %s281 = sphi 0, %s283
      %s284 = sphi 0, %s281
      %s285 = sphi 0, %s284
      %s301 = sphi 0, %s285
      %s307 = sphi 0, %s309
      %s310 = sphi 0, %s307
      %s311 = sphi 0, %s310
      %s327 = sphi 0, %s311
      %s333 = sphi 0, %s335
      %s336 = sphi 0, %s333
      %s337 = sphi 0, %s336
      %s353 = sphi 0, %s337
      %s359 = sphi 0, %s361
      %s362 = sphi 0, %s359
      %s363 = sphi 0, %s362
      %s379 = sphi 0, %s363
      %s385 = sphi 0, %s387
      %s388 = sphi 0, %s385
      %s389 = sphi 0, %s388
      %s405 = sphi 0, %s389
      %s411 = sphi 0, %s413
      %s414 = sphi 0, %s411
      %s415 = sphi 0, %s414
      %s431 = sphi 0, %s415
      %s437 = sphi 0, %s439
      %s440 = sphi 0, %s437
      %s441 = sphi 0, %s440
      %s457 = sphi 0, %s441
      %s463 = sphi 0, %s465
      %s466 = sphi 0, %s463
      %s467 = sphi 0, %s466
      %s483 = sphi 0, %s467
      %s489 = sphi 0, %s491
      %s492 = sphi 0, %s489
      %s493 = sphi 0, %s492
      %s509 = sphi 0, %s493
      %s515 = sphi 0, %s517
      %s518 = sphi 0, %s515
      %s519 = sphi 0, %s518
      %s535 = sphi 0, %s519
      %s541 = sphi 0, %s543
      %s544 = sphi 0, %s541
      %s545 = sphi 0, %s544
      %s561 = sphi 0, %s545
      %s567 = sphi 0, %s569
      %s570 = sphi 0, %s567
      %s571 = sphi 0, %s570
      %s587 = sphi 0, %s571
      %s593 = sphi 0, %s595
      %s596 = sphi 0, %s593
      %s597 = sphi 0, %s596
      %s613 = sphi 0, %s597
      %s619 = sphi 0, %s621
      %s622 = sphi 0, %s619
      %s623 = sphi 0, %s622
      %s639 = sphi 0, %s623
      %s645 = sphi 0, %s647
      %s648 = sphi 0, %s645
      %s649 = sphi 0, %s648
      %s665 = sphi 0, %s649
      %s671 = sphi 0, %s673
      %s674 = sphi 0, %s671
      %s675 = sphi 0, %s674
      %s691 = sphi 0, %s675
      %s695 = sphi 0, %s695
      %s697 = sphi 0, %s695
      %s698 = sphi 0, %s697
      %s712 = sphi 0, %s698
    $region4: #{_transformer_forward.3} parent=1 // loop_header_branch
      %55 = sbr.rel (%p53) target = $region8
    $region5: #{_transformer_forward.3} parent=1 // loop_body
      %s57 = ssub.s32 %s52, 1
      %s58 = ssub.s32 %s52, 2
      %s59 = sadd.s32 %s52, 1
      %s61 = sadd.s32 %s60, 1
      %p64 = scmp.eq.s32.totalorder %s52, 3
      %p65 = scmp.ne.s32.totalorder %s60, %s62
      %p66 = scmp.eq.s32.totalorder %s52, 0
      %p67 = por %p65, %p66
      %p68 = scmp.ne.s32.totalorder %s60, %s62
      %p69 = scmp.eq.s32.totalorder %s57, 3
      %p70 = por %p68, %p69
      %p71 = scmp.ne.s32.totalorder %s62, %s63
      %p72 = scmp.eq.s32.totalorder %s57, 0
      %p73 = por %p71, %p72
      %p74 = scmp.ne.s32.totalorder %s62, %s63
      %p75 = scmp.eq.s32.totalorder %s58, 3
      %p76 = por %p74, %p75
      %p78 = scmp.ne.s32.totalorder %s63, %s77
      %p79 = scmp.eq.s32.totalorder %s58, 0
      %p80 = por %p78, %p79
      %s82 = sadd.s32 %s81, 1
      %p85 = scmp.eq.s32.totalorder %s52, 3
      %p86 = scmp.ne.s32.totalorder %s81, %s83
      %p87 = scmp.eq.s32.totalorder %s52, 0
      %p88 = por %p86, %p87
      %p89 = scmp.ne.s32.totalorder %s81, %s83
      %p90 = scmp.eq.s32.totalorder %s57, 3
      %p91 = por %p89, %p90
      %p92 = scmp.ne.s32.totalorder %s83, %s84
      %p93 = scmp.eq.s32.totalorder %s57, 0
      %p94 = por %p92, %p93
      %p95 = scmp.ne.s32.totalorder %s83, %s84
      %p96 = scmp.eq.s32.totalorder %s58, 3
      %p97 = por %p95, %p96
      %p99 = scmp.ne.s32.totalorder %s84, %s98
      %p100 = scmp.eq.s32.totalorder %s58, 0
      %p101 = por %p99, %p100
      %s103 = sadd.s32 %s102, 1
      %p106 = scmp.eq.s32.totalorder %s52, 3
      %p107 = scmp.ne.s32.totalorder %s102, %s104
      %p108 = scmp.eq.s32.totalorder %s52, 0
      %p109 = por %p107, %p108
      %p110 = scmp.ne.s32.totalorder %s102, %s104
      %p111 = scmp.eq.s32.totalorder %s57, 3
      %p112 = por %p110, %p111
      %p113 = scmp.ne.s32.totalorder %s104, %s105
      %p114 = scmp.eq.s32.totalorder %s57, 0
      %p115 = por %p113, %p114
      %p116 = scmp.ne.s32.totalorder %s104, %s105
      %p117 = scmp.eq.s32.totalorder %s58, 3
      %p118 = por %p116, %p117
      %p120 = scmp.ne.s32.totalorder %s105, %s119
      %p121 = scmp.eq.s32.totalorder %s58, 0
      %p122 = por %p120, %p121
      %s123 = ssub.s32 %s52, %s59
      %p124 = scmp.eq.s32.totalorder %s123, 0
      %s126 = sadd.s32 %s125, 1
      %s127 = scalar_select %p124, %s125, %s126
      %p130 = pneg %p124
      %p131 = scmp.eq.s32.totalorder %s52, 3
      %p132 = por %p130, %p131
      %p133 = scmp.ne.s32.totalorder %s125, %s128
      %p134 = scmp.eq.s32.totalorder %s52, 0
      %p135 = por %p133, %p134
      %p136 = scmp.ne.s32.totalorder %s125, %s128
      %p137 = scmp.eq.s32.totalorder %s57, 3
      %p138 = por %p136, %p137
      %p139 = scmp.ne.s32.totalorder %s128, %s129
      %p140 = scmp.eq.s32.totalorder %s57, 0
      %p141 = por %p139, %p140
      %p142 = scmp.ne.s32.totalorder %s128, %s129
      %p143 = scmp.eq.s32.totalorder %s58, 3
      %p144 = por %p142, %p143
      %p146 = scmp.ne.s32.totalorder %s129, %s145
      %p147 = scmp.eq.s32.totalorder %s58, 0
      %p148 = por %p146, %p147
      %s149 = ssub.s32 %s52, %s59
      %p150 = scmp.eq.s32.totalorder %s149, 0
      %s152 = sadd.s32 %s151, 1
      %s153 = scalar_select %p150, %s151, %s152
      %p156 = pneg %p150
      %p157 = scmp.eq.s32.totalorder %s52, 3
      %p158 = por %p156, %p157
      %p159 = scmp.ne.s32.totalorder %s151, %s154
      %p160 = scmp.eq.s32.totalorder %s52, 0
      %p161 = por %p159, %p160
      %p162 = scmp.ne.s32.totalorder %s151, %s154
      %p163 = scmp.eq.s32.totalorder %s57, 3
      %p164 = por %p162, %p163
      %p165 = scmp.ne.s32.totalorder %s154, %s155
      %p166 = scmp.eq.s32.totalorder %s57, 0
      %p167 = por %p165, %p166
      %p168 = scmp.ne.s32.totalorder %s154, %s155
      %p169 = scmp.eq.s32.totalorder %s58, 3
      %p170 = por %p168, %p169
      %p172 = scmp.ne.s32.totalorder %s155, %s171
      %p173 = scmp.eq.s32.totalorder %s58, 0
      %p174 = por %p172, %p173
      %s175 = ssub.s32 %s52, %s59
      %p176 = scmp.eq.s32.totalorder %s175, 0
      %s178 = sadd.s32 %s177, 1
      %s179 = scalar_select %p176, %s177, %s178
      %p182 = pneg %p176
      %p183 = scmp.eq.s32.totalorder %s52, 3
      %p184 = por %p182, %p183
      %p185 = scmp.ne.s32.totalorder %s177, %s180
      %p186 = scmp.eq.s32.totalorder %s52, 0
      %p187 = por %p185, %p186
      %p188 = scmp.ne.s32.totalorder %s177, %s180
      %p189 = scmp.eq.s32.totalorder %s57, 3
      %p190 = por %p188, %p189
      %p191 = scmp.ne.s32.totalorder %s180, %s181
      %p192 = scmp.eq.s32.totalorder %s57, 0
      %p193 = por %p191, %p192
      %p194 = scmp.ne.s32.totalorder %s180, %s181
      %p195 = scmp.eq.s32.totalorder %s58, 3
      %p196 = por %p194, %p195
      %p198 = scmp.ne.s32.totalorder %s181, %s197
      %p199 = scmp.eq.s32.totalorder %s58, 0
      %p200 = por %p198, %p199
      %s201 = ssub.s32 %s52, %s59
      %p202 = scmp.eq.s32.totalorder %s201, 0
      %s204 = sadd.s32 %s203, 1
      %s205 = scalar_select %p202, %s203, %s204
      %p208 = pneg %p202
      %p209 = scmp.eq.s32.totalorder %s52, 3
      %p210 = por %p208, %p209
      %p211 = scmp.ne.s32.totalorder %s203, %s206
      %p212 = scmp.eq.s32.totalorder %s52, 0
      %p213 = por %p211, %p212
      %p214 = scmp.ne.s32.totalorder %s203, %s206
      %p215 = scmp.eq.s32.totalorder %s57, 3
      %p216 = por %p214, %p215
      %p217 = scmp.ne.s32.totalorder %s206, %s207
      %p218 = scmp.eq.s32.totalorder %s57, 0
      %p219 = por %p217, %p218
      %p220 = scmp.ne.s32.totalorder %s206, %s207
      %p221 = scmp.eq.s32.totalorder %s58, 3
      %p222 = por %p220, %p221
      %p224 = scmp.ne.s32.totalorder %s207, %s223
      %p225 = scmp.eq.s32.totalorder %s58, 0
      %p226 = por %p224, %p225
      %s227 = ssub.s32 %s52, %s59
      %p228 = scmp.eq.s32.totalorder %s227, 0
      %s230 = sadd.s32 %s229, 1
      %s231 = scalar_select %p228, %s229, %s230
      %p234 = pneg %p228
      %p235 = scmp.eq.s32.totalorder %s52, 3
      %p236 = por %p234, %p235
      %p237 = scmp.ne.s32.totalorder %s229, %s232
      %p238 = scmp.eq.s32.totalorder %s52, 0
      %p239 = por %p237, %p238
      %p240 = scmp.ne.s32.totalorder %s229, %s232
      %p241 = scmp.eq.s32.totalorder %s57, 3
      %p242 = por %p240, %p241
      %p243 = scmp.ne.s32.totalorder %s232, %s233
      %p244 = scmp.eq.s32.totalorder %s57, 0
      %p245 = por %p243, %p244
      %p246 = scmp.ne.s32.totalorder %s232, %s233
      %p247 = scmp.eq.s32.totalorder %s58, 3
      %p248 = por %p246, %p247
      %p250 = scmp.ne.s32.totalorder %s233, %s249
      %p251 = scmp.eq.s32.totalorder %s58, 0
      %p252 = por %p250, %p251
      %s253 = ssub.s32 %s52, %s59
      %p254 = scmp.eq.s32.totalorder %s253, 0
      %s256 = sadd.s32 %s255, 1
      %s257 = scalar_select %p254, %s255, %s256
      %p260 = pneg %p254
      %p261 = scmp.eq.s32.totalorder %s52, 3
      %p262 = por %p260, %p261
      %p263 = scmp.ne.s32.totalorder %s255, %s258
      %p264 = scmp.eq.s32.totalorder %s52, 0
      %p265 = por %p263, %p264
      %p266 = scmp.ne.s32.totalorder %s255, %s258
      %p267 = scmp.eq.s32.totalorder %s57, 3
      %p268 = por %p266, %p267
      %p269 = scmp.ne.s32.totalorder %s258, %s259
      %p270 = scmp.eq.s32.totalorder %s57, 0
      %p271 = por %p269, %p270
      %p272 = scmp.ne.s32.totalorder %s258, %s259
      %p273 = scmp.eq.s32.totalorder %s58, 3
      %p274 = por %p272, %p273
      %p276 = scmp.ne.s32.totalorder %s259, %s275
      %p277 = scmp.eq.s32.totalorder %s58, 0
      %p278 = por %p276, %p277
      %s279 = ssub.s32 %s52, %s59
      %p280 = scmp.eq.s32.totalorder %s279, 0
      %s282 = sadd.s32 %s281, 1
      %s283 = scalar_select %p280, %s281, %s282
      %p286 = pneg %p280
      %p287 = scmp.eq.s32.totalorder %s52, 3
      %p288 = por %p286, %p287
      %p289 = scmp.ne.s32.totalorder %s281, %s284
      %p290 = scmp.eq.s32.totalorder %s52, 0
      %p291 = por %p289, %p290
      %p292 = scmp.ne.s32.totalorder %s281, %s284
      %p293 = scmp.eq.s32.totalorder %s57, 3
      %p294 = por %p292, %p293
      %p295 = scmp.ne.s32.totalorder %s284, %s285
      %p296 = scmp.eq.s32.totalorder %s57, 0
      %p297 = por %p295, %p296
      %p298 = scmp.ne.s32.totalorder %s284, %s285
      %p299 = scmp.eq.s32.totalorder %s58, 3
      %p300 = por %p298, %p299
      %p302 = scmp.ne.s32.totalorder %s285, %s301
      %p303 = scmp.eq.s32.totalorder %s58, 0
      %p304 = por %p302, %p303
      %s305 = ssub.s32 %s52, %s59
      %p306 = scmp.eq.s32.totalorder %s305, 0
      %s308 = sadd.s32 %s307, 1
      %s309 = scalar_select %p306, %s307, %s308
      %p312 = pneg %p306
      %p313 = scmp.eq.s32.totalorder %s52, 3
      %p314 = por %p312, %p313
      %p315 = scmp.ne.s32.totalorder %s307, %s310
      %p316 = scmp.eq.s32.totalorder %s52, 0
      %p317 = por %p315, %p316
      %p318 = scmp.ne.s32.totalorder %s307, %s310
      %p319 = scmp.eq.s32.totalorder %s57, 3
      %p320 = por %p318, %p319
      %p321 = scmp.ne.s32.totalorder %s310, %s311
      %p322 = scmp.eq.s32.totalorder %s57, 0
      %p323 = por %p321, %p322
      %p324 = scmp.ne.s32.totalorder %s310, %s311
      %p325 = scmp.eq.s32.totalorder %s58, 3
      %p326 = por %p324, %p325
      %p328 = scmp.ne.s32.totalorder %s311, %s327
      %p329 = scmp.eq.s32.totalorder %s58, 0
      %p330 = por %p328, %p329
      %s331 = ssub.s32 %s52, %s59
      %p332 = scmp.eq.s32.totalorder %s331, 0
      %s334 = sadd.s32 %s333, 1
      %s335 = scalar_select %p332, %s333, %s334
      %p338 = pneg %p332
      %p339 = scmp.eq.s32.totalorder %s52, 3
      %p340 = por %p338, %p339
      %p341 = scmp.ne.s32.totalorder %s333, %s336
      %p342 = scmp.eq.s32.totalorder %s52, 0
      %p343 = por %p341, %p342
      %p344 = scmp.ne.s32.totalorder %s333, %s336
      %p345 = scmp.eq.s32.totalorder %s57, 3
      %p346 = por %p344, %p345
      %p347 = scmp.ne.s32.totalorder %s336, %s337
      %p348 = scmp.eq.s32.totalorder %s57, 0
      %p349 = por %p347, %p348
      %p350 = scmp.ne.s32.totalorder %s336, %s337
      %p351 = scmp.eq.s32.totalorder %s58, 3
      %p352 = por %p350, %p351
      %p354 = scmp.ne.s32.totalorder %s337, %s353
      %p355 = scmp.eq.s32.totalorder %s58, 0
      %p356 = por %p354, %p355
      %s357 = ssub.s32 %s52, %s59
      %p358 = scmp.eq.s32.totalorder %s357, 0
      %s360 = sadd.s32 %s359, 1
      %s361 = scalar_select %p358, %s359, %s360
      %p364 = pneg %p358
      %p365 = scmp.eq.s32.totalorder %s52, 3
      %p366 = por %p364, %p365
      %p367 = scmp.ne.s32.totalorder %s359, %s362
      %p368 = scmp.eq.s32.totalorder %s52, 0
      %p369 = por %p367, %p368
      %p370 = scmp.ne.s32.totalorder %s359, %s362
      %p371 = scmp.eq.s32.totalorder %s57, 3
      %p372 = por %p370, %p371
      %p373 = scmp.ne.s32.totalorder %s362, %s363
      %p374 = scmp.eq.s32.totalorder %s57, 0
      %p375 = por %p373, %p374
      %p376 = scmp.ne.s32.totalorder %s362, %s363
      %p377 = scmp.eq.s32.totalorder %s58, 3
      %p378 = por %p376, %p377
      %p380 = scmp.ne.s32.totalorder %s363, %s379
      %p381 = scmp.eq.s32.totalorder %s58, 0
      %p382 = por %p380, %p381
      %s383 = ssub.s32 %s52, %s59
      %p384 = scmp.eq.s32.totalorder %s383, 0
      %s386 = sadd.s32 %s385, 1
      %s387 = scalar_select %p384, %s385, %s386
      %p390 = pneg %p384
      %p391 = scmp.eq.s32.totalorder %s52, 3
      %p392 = por %p390, %p391
      %p393 = scmp.ne.s32.totalorder %s385, %s388
      %p394 = scmp.eq.s32.totalorder %s52, 0
      %p395 = por %p393, %p394
      %p396 = scmp.ne.s32.totalorder %s385, %s388
      %p397 = scmp.eq.s32.totalorder %s57, 3
      %p398 = por %p396, %p397
      %p399 = scmp.ne.s32.totalorder %s388, %s389
      %p400 = scmp.eq.s32.totalorder %s57, 0
      %p401 = por %p399, %p400
      %p402 = scmp.ne.s32.totalorder %s388, %s389
      %p403 = scmp.eq.s32.totalorder %s58, 3
      %p404 = por %p402, %p403
      %p406 = scmp.ne.s32.totalorder %s389, %s405
      %p407 = scmp.eq.s32.totalorder %s58, 0
      %p408 = por %p406, %p407
      %s409 = ssub.s32 %s52, %s59
      %p410 = scmp.eq.s32.totalorder %s409, 0
      %s412 = sadd.s32 %s411, 1
      %s413 = scalar_select %p410, %s411, %s412
      %p416 = pneg %p410
      %p417 = scmp.eq.s32.totalorder %s52, 3
      %p418 = por %p416, %p417
      %p419 = scmp.ne.s32.totalorder %s411, %s414
      %p420 = scmp.eq.s32.totalorder %s52, 0
      %p421 = por %p419, %p420
      %p422 = scmp.ne.s32.totalorder %s411, %s414
      %p423 = scmp.eq.s32.totalorder %s57, 3
      %p424 = por %p422, %p423
      %p425 = scmp.ne.s32.totalorder %s414, %s415
      %p426 = scmp.eq.s32.totalorder %s57, 0
      %p427 = por %p425, %p426
      %p428 = scmp.ne.s32.totalorder %s414, %s415
      %p429 = scmp.eq.s32.totalorder %s58, 3
      %p430 = por %p428, %p429
      %p432 = scmp.ne.s32.totalorder %s415, %s431
      %p433 = scmp.eq.s32.totalorder %s58, 0
      %p434 = por %p432, %p433
      %s435 = ssub.s32 %s52, %s59
      %p436 = scmp.eq.s32.totalorder %s435, 0
      %s438 = sadd.s32 %s437, 1
      %s439 = scalar_select %p436, %s437, %s438
      %p442 = pneg %p436
      %p443 = scmp.eq.s32.totalorder %s52, 3
      %p444 = por %p442, %p443
      %p445 = scmp.ne.s32.totalorder %s437, %s440
      %p446 = scmp.eq.s32.totalorder %s52, 0
      %p447 = por %p445, %p446
      %p448 = scmp.ne.s32.totalorder %s437, %s440
      %p449 = scmp.eq.s32.totalorder %s57, 3
      %p450 = por %p448, %p449
      %p451 = scmp.ne.s32.totalorder %s440, %s441
      %p452 = scmp.eq.s32.totalorder %s57, 0
      %p453 = por %p451, %p452
      %p454 = scmp.ne.s32.totalorder %s440, %s441
      %p455 = scmp.eq.s32.totalorder %s58, 3
      %p456 = por %p454, %p455
      %p458 = scmp.ne.s32.totalorder %s441, %s457
      %p459 = scmp.eq.s32.totalorder %s58, 0
      %p460 = por %p458, %p459
      %s461 = ssub.s32 %s52, %s59
      %p462 = scmp.eq.s32.totalorder %s461, 0
      %s464 = sadd.s32 %s463, 1
      %s465 = scalar_select %p462, %s463, %s464
      %p468 = pneg %p462
      %p469 = scmp.eq.s32.totalorder %s52, 3
      %p470 = por %p468, %p469
      %p471 = scmp.ne.s32.totalorder %s463, %s466
      %p472 = scmp.eq.s32.totalorder %s52, 0
      %p473 = por %p471, %p472
      %p474 = scmp.ne.s32.totalorder %s463, %s466
      %p475 = scmp.eq.s32.totalorder %s57, 3
      %p476 = por %p474, %p475
      %p477 = scmp.ne.s32.totalorder %s466, %s467
      %p478 = scmp.eq.s32.totalorder %s57, 0
      %p479 = por %p477, %p478
      %p480 = scmp.ne.s32.totalorder %s466, %s467
      %p481 = scmp.eq.s32.totalorder %s58, 3
      %p482 = por %p480, %p481
      %p484 = scmp.ne.s32.totalorder %s467, %s483
      %p485 = scmp.eq.s32.totalorder %s58, 0
      %p486 = por %p484, %p485
      %s487 = ssub.s32 %s52, %s59
      %p488 = scmp.eq.s32.totalorder %s487, 0
      %s490 = sadd.s32 %s489, 1
      %s491 = scalar_select %p488, %s489, %s490
      %p494 = pneg %p488
      %p495 = scmp.eq.s32.totalorder %s52, 3
      %p496 = por %p494, %p495
      %p497 = scmp.ne.s32.totalorder %s489, %s492
      %p498 = scmp.eq.s32.totalorder %s52, 0
      %p499 = por %p497, %p498
      %p500 = scmp.ne.s32.totalorder %s489, %s492
      %p501 = scmp.eq.s32.totalorder %s57, 3
      %p502 = por %p500, %p501
      %p503 = scmp.ne.s32.totalorder %s492, %s493
      %p504 = scmp.eq.s32.totalorder %s57, 0
      %p505 = por %p503, %p504
      %p506 = scmp.ne.s32.totalorder %s492, %s493
      %p507 = scmp.eq.s32.totalorder %s58, 3
      %p508 = por %p506, %p507
      %p510 = scmp.ne.s32.totalorder %s493, %s509
      %p511 = scmp.eq.s32.totalorder %s58, 0
      %p512 = por %p510, %p511
      %s513 = ssub.s32 %s52, %s59
      %p514 = scmp.eq.s32.totalorder %s513, 0
      %s516 = sadd.s32 %s515, 1
      %s517 = scalar_select %p514, %s515, %s516
      %p520 = pneg %p514
      %p521 = scmp.eq.s32.totalorder %s52, 3
      %p522 = por %p520, %p521
      %p523 = scmp.ne.s32.totalorder %s515, %s518
      %p524 = scmp.eq.s32.totalorder %s52, 0
      %p525 = por %p523, %p524
      %p526 = scmp.ne.s32.totalorder %s515, %s518
      %p527 = scmp.eq.s32.totalorder %s57, 3
      %p528 = por %p526, %p527
      %p529 = scmp.ne.s32.totalorder %s518, %s519
      %p530 = scmp.eq.s32.totalorder %s57, 0
      %p531 = por %p529, %p530
      %p532 = scmp.ne.s32.totalorder %s518, %s519
      %p533 = scmp.eq.s32.totalorder %s58, 3
      %p534 = por %p532, %p533
      %p536 = scmp.ne.s32.totalorder %s519, %s535
      %p537 = scmp.eq.s32.totalorder %s58, 0
      %p538 = por %p536, %p537
      %s539 = ssub.s32 %s52, %s59
      %p540 = scmp.eq.s32.totalorder %s539, 0
      %s542 = sadd.s32 %s541, 1
      %s543 = scalar_select %p540, %s541, %s542
      %p546 = pneg %p540
      %p547 = scmp.eq.s32.totalorder %s52, 3
      %p548 = por %p546, %p547
      %p549 = scmp.ne.s32.totalorder %s541, %s544
      %p550 = scmp.eq.s32.totalorder %s52, 0
      %p551 = por %p549, %p550
      %p552 = scmp.ne.s32.totalorder %s541, %s544
      %p553 = scmp.eq.s32.totalorder %s57, 3
      %p554 = por %p552, %p553
      %p555 = scmp.ne.s32.totalorder %s544, %s545
      %p556 = scmp.eq.s32.totalorder %s57, 0
      %p557 = por %p555, %p556
      %p558 = scmp.ne.s32.totalorder %s544, %s545
      %p559 = scmp.eq.s32.totalorder %s58, 3
      %p560 = por %p558, %p559
      %p562 = scmp.ne.s32.totalorder %s545, %s561
      %p563 = scmp.eq.s32.totalorder %s58, 0
      %p564 = por %p562, %p563
      %s565 = ssub.s32 %s52, %s59
      %p566 = scmp.eq.s32.totalorder %s565, 0
      %s568 = sadd.s32 %s567, 1
      %s569 = scalar_select %p566, %s567, %s568
      %p572 = pneg %p566
      %p573 = scmp.eq.s32.totalorder %s52, 3
      %p574 = por %p572, %p573
      %p575 = scmp.ne.s32.totalorder %s567, %s570
      %p576 = scmp.eq.s32.totalorder %s52, 0
      %p577 = por %p575, %p576
      %p578 = scmp.ne.s32.totalorder %s567, %s570
      %p579 = scmp.eq.s32.totalorder %s57, 3
      %p580 = por %p578, %p579
      %p581 = scmp.ne.s32.totalorder %s570, %s571
      %p582 = scmp.eq.s32.totalorder %s57, 0
      %p583 = por %p581, %p582
      %p584 = scmp.ne.s32.totalorder %s570, %s571
      %p585 = scmp.eq.s32.totalorder %s58, 3
      %p586 = por %p584, %p585
      %p588 = scmp.ne.s32.totalorder %s571, %s587
      %p589 = scmp.eq.s32.totalorder %s58, 0
      %p590 = por %p588, %p589
      %s591 = ssub.s32 %s52, %s59
      %p592 = scmp.eq.s32.totalorder %s591, 0
      %s594 = sadd.s32 %s593, 1
      %s595 = scalar_select %p592, %s593, %s594
      %p598 = pneg %p592
      %p599 = scmp.eq.s32.totalorder %s52, 3
      %p600 = por %p598, %p599
      %p601 = scmp.ne.s32.totalorder %s593, %s596
      %p602 = scmp.eq.s32.totalorder %s52, 0
      %p603 = por %p601, %p602
      %p604 = scmp.ne.s32.totalorder %s593, %s596
      %p605 = scmp.eq.s32.totalorder %s57, 3
      %p606 = por %p604, %p605
      %p607 = scmp.ne.s32.totalorder %s596, %s597
      %p608 = scmp.eq.s32.totalorder %s57, 0
      %p609 = por %p607, %p608
      %p610 = scmp.ne.s32.totalorder %s596, %s597
      %p611 = scmp.eq.s32.totalorder %s58, 3
      %p612 = por %p610, %p611
      %p614 = scmp.ne.s32.totalorder %s597, %s613
      %p615 = scmp.eq.s32.totalorder %s58, 0
      %p616 = por %p614, %p615
      %s617 = ssub.s32 %s52, %s59
      %p618 = scmp.eq.s32.totalorder %s617, 0
      %s620 = sadd.s32 %s619, 1
      %s621 = scalar_select %p618, %s619, %s620
      %p624 = pneg %p618
      %p625 = scmp.eq.s32.totalorder %s52, 3
      %p626 = por %p624, %p625
      %p627 = scmp.ne.s32.totalorder %s619, %s622
      %p628 = scmp.eq.s32.totalorder %s52, 0
      %p629 = por %p627, %p628
      %p630 = scmp.ne.s32.totalorder %s619, %s622
      %p631 = scmp.eq.s32.totalorder %s57, 3
      %p632 = por %p630, %p631
      %p633 = scmp.ne.s32.totalorder %s622, %s623
      %p634 = scmp.eq.s32.totalorder %s57, 0
      %p635 = por %p633, %p634
      %p636 = scmp.ne.s32.totalorder %s622, %s623
      %p637 = scmp.eq.s32.totalorder %s58, 3
      %p638 = por %p636, %p637
      %p640 = scmp.ne.s32.totalorder %s623, %s639
      %p641 = scmp.eq.s32.totalorder %s58, 0
      %p642 = por %p640, %p641
      %s643 = ssub.s32 %s52, %s59
      %p644 = scmp.eq.s32.totalorder %s643, 0
      %s646 = sadd.s32 %s645, 1
      %s647 = scalar_select %p644, %s645, %s646
      %p650 = pneg %p644
      %p651 = scmp.eq.s32.totalorder %s52, 3
      %p652 = por %p650, %p651
      %p653 = scmp.ne.s32.totalorder %s645, %s648
      %p654 = scmp.eq.s32.totalorder %s52, 0
      %p655 = por %p653, %p654
      %p656 = scmp.ne.s32.totalorder %s645, %s648
      %p657 = scmp.eq.s32.totalorder %s57, 3
      %p658 = por %p656, %p657
      %p659 = scmp.ne.s32.totalorder %s648, %s649
      %p660 = scmp.eq.s32.totalorder %s57, 0
      %p661 = por %p659, %p660
      %p662 = scmp.ne.s32.totalorder %s648, %s649
      %p663 = scmp.eq.s32.totalorder %s58, 3
      %p664 = por %p662, %p663
      %p666 = scmp.ne.s32.totalorder %s649, %s665
      %p667 = scmp.eq.s32.totalorder %s58, 0
      %p668 = por %p666, %p667
      %s669 = ssub.s32 %s52, %s59
      %p670 = scmp.eq.s32.totalorder %s669, 0
      %s672 = sadd.s32 %s671, 1
      %s673 = scalar_select %p670, %s671, %s672
      %p676 = pneg %p670
      %p677 = scmp.eq.s32.totalorder %s52, 3
      %p678 = por %p676, %p677
      %p679 = scmp.ne.s32.totalorder %s671, %s674
      %p680 = scmp.eq.s32.totalorder %s52, 0
      %p681 = por %p679, %p680
      %p682 = scmp.ne.s32.totalorder %s671, %s674
      %p683 = scmp.eq.s32.totalorder %s57, 3
      %p684 = por %p682, %p683
      %p685 = scmp.ne.s32.totalorder %s674, %s675
      %p686 = scmp.eq.s32.totalorder %s57, 0
      %p687 = por %p685, %p686
      %p688 = scmp.ne.s32.totalorder %s674, %s675
      %p689 = scmp.eq.s32.totalorder %s58, 3
      %p690 = por %p688, %p689
      %p692 = scmp.ne.s32.totalorder %s675, %s691
      %p693 = scmp.eq.s32.totalorder %s58, 0
      %p694 = por %p692, %p693
      %s696 = sadd.s32 %s695, 1
      %p699 = scmp.eq.s32.totalorder %s52, 3
      %p700 = scmp.ne.s32.totalorder %s695, %s697
      %p701 = scmp.eq.s32.totalorder %s52, 0
      %p702 = por %p700, %p701
      %p703 = scmp.ne.s32.totalorder %s695, %s697
      %p704 = scmp.eq.s32.totalorder %s57, 3
      %p705 = por %p703, %p704
      %p706 = scmp.ne.s32.totalorder %s697, %s698
      %p707 = scmp.eq.s32.totalorder %s57, 0
      %p708 = por %p706, %p707
      %p709 = scmp.ne.s32.totalorder %s697, %s698
      %p710 = scmp.eq.s32.totalorder %s58, 3
      %p711 = por %p709, %p710
      %p713 = scmp.ne.s32.totalorder %s698, %s712
      %p714 = scmp.eq.s32.totalorder %s58, 0
      %p715 = por %p713, %p714
      %p716 = scmp.le.s32.totalorder 1, %s52
      %p717 = scmp.lt.s32.totalorder %s52, 5
      %p718 = pnand %p716, %p717
      %p719 = pneg %p718
      // Predicated region
      $region9: #{_transformer_forward.3} parent=5 // pred_check
        _
      $region10: #{_transformer_forward.3} parent=5 // pred_check_branch
        %721 = sbr.rel (%p718) target = $region12
      $region11: #{_transformer_forward.3} parent=5 // pred_region
        %s722 = ssub.s32 %s52, 1
        // Predicated region
        $region13: #{_transformer_forward.3} parent=11 // pred_check
          %p723 = pneg %p73
        $region14: #{_transformer_forward.3} parent=11 // pred_check_branch
          %725 = sbr.rel (%p723) target = $region16
        $region15: #{_transformer_forward.3} parent=11 // pred_region
          _
        $region16: #{_transformer_forward.3} parent=11 // pred_fallthru
          _
        // Predicated region
        $region17: #{_transformer_forward.3} parent=11 // pred_check
          %p726 = pneg %p94
        $region18: #{_transformer_forward.3} parent=11 // pred_check_branch
          %728 = sbr.rel (%p726) target = $region20
        $region19: #{_transformer_forward.3} parent=11 // pred_region
          _
        $region20: #{_transformer_forward.3} parent=11 // pred_fallthru
          _
        // Predicated region
        $region21: #{_transformer_forward.3} parent=11 // pred_check
          %p729 = pneg %p115
        $region22: #{_transformer_forward.3} parent=11 // pred_check_branch
          %731 = sbr.rel (%p729) target = $region24
        $region23: #{_transformer_forward.3} parent=11 // pred_region
          _
        $region24: #{_transformer_forward.3} parent=11 // pred_fallthru
          _
      $region12: #{_transformer_forward.3} parent=5 // pred_fallthru
        _
      %p732 = scmp.lt.s32.totalorder %s52, 4
      // Predicated region
      $region25: #{_transformer_forward.3} parent=5 // pred_check
        %p733 = pneg %p732
      $region26: #{_transformer_forward.3} parent=5 // pred_check_branch
        %735 = sbr.rel (%p733) target = $region28
      $region27: #{_transformer_forward.3} parent=5 // pred_region
        // Predicated region
        $region29: #{_transformer_forward.3} parent=27 // pred_check
          %p736 = pneg %p135
        $region30: #{_transformer_forward.3} parent=27 // pred_check_branch
          %738 = sbr.rel (%p736) target = $region32
        $region31: #{_transformer_forward.3} parent=27 // pred_region
          %p739 = scmp.lt.s32.totalorder %s52, 3
          %s740 = scalar_select %p739, %s52, 3
          %s741 = smul.addr %s740, 4
          %s742 = smul.addr %s741, 8
          %s743 = scalar_lea.vmem %s3, %s742
        $region32: #{_transformer_forward.3} parent=27 // pred_fallthru
          _
        // Predicated region
        $region33: #{_transformer_forward.3} parent=27 // pred_check
          %p744 = pneg %p161
        $region34: #{_transformer_forward.3} parent=27 // pred_check_branch
          %746 = sbr.rel (%p744) target = $region36
        $region35: #{_transformer_forward.3} parent=27 // pred_region
          %p747 = scmp.lt.s32.totalorder %s52, 3
          %s748 = scalar_select %p747, %s52, 3
          %s749 = scalar_lea.vmem %s4, %s748
        $region36: #{_transformer_forward.3} parent=27 // pred_fallthru
          _
        // Predicated region
        $region37: #{_transformer_forward.3} parent=27 // pred_check
          %p750 = pneg %p187
        $region38: #{_transformer_forward.3} parent=27 // pred_check_branch
          %752 = sbr.rel (%p750) target = $region40
        $region39: #{_transformer_forward.3} parent=27 // pred_region
          %p753 = scmp.lt.s32.totalorder %s52, 3
          %s754 = scalar_select %p753, %s52, 3
          %s755 = smul.addr %s754, 4
          %s756 = smul.addr %s755, 8
          %s757 = scalar_lea.vmem %s5, %s756
        $region40: #{_transformer_forward.3} parent=27 // pred_fallthru
          _
        // Predicated region
        $region41: #{_transformer_forward.3} parent=27 // pred_check
          %p758 = pneg %p213
        $region42: #{_transformer_forward.3} parent=27 // pred_check_branch
          %760 = sbr.rel (%p758) target = $region44
        $region43: #{_transformer_forward.3} parent=27 // pred_region
          %p761 = scmp.lt.s32.totalorder %s52, 3
          %s762 = scalar_select %p761, %s52, 3
          %s763 = scalar_lea.vmem %s6, %s762
        $region44: #{_transformer_forward.3} parent=27 // pred_fallthru
          _
        // Predicated region
        $region45: #{_transformer_forward.3} parent=27 // pred_check
          %p764 = pneg %p239
        $region46: #{_transformer_forward.3} parent=27 // pred_check_branch
          %766 = sbr.rel (%p764) target = $region48
        $region47: #{_transformer_forward.3} parent=27 // pred_region
          %p767 = scmp.lt.s32.totalorder %s52, 3
          %s768 = scalar_select %p767, %s52, 3
          %s769 = smul.addr %s768, 4
          %s770 = smul.addr %s769, 8
          %s771 = scalar_lea.vmem %s7, %s770
        $region48: #{_transformer_forward.3} parent=27 // pred_fallthru
          _
        // Predicated region
        $region49: #{_transformer_forward.3} parent=27 // pred_check
          %p772 = pneg %p265
        $region50: #{_transformer_forward.3} parent=27 // pred_check_branch
          %774 = sbr.rel (%p772) target = $region52
        $region51: #{_transformer_forward.3} parent=27 // pred_region
          %p775 = scmp.lt.s32.totalorder %s52, 3
          %s776 = scalar_select %p775, %s52, 3
          %s777 = scalar_lea.vmem %s8, %s776
        $region52: #{_transformer_forward.3} parent=27 // pred_fallthru
          _
        // Predicated region
        $region53: #{_transformer_forward.3} parent=27 // pred_check
          %p778 = pneg %p291
        $region54: #{_transformer_forward.3} parent=27 // pred_check_branch
          %780 = sbr.rel (%p778) target = $region56
        $region55: #{_transformer_forward.3} parent=27 // pred_region
          %s781 = sand.u32 %s281, 1
          %s782 = scalar_lea.sflag [#allocation5], %s781
          %s783 = sand.u32 %s281, 1
          %s784 = scalar_lea.vmem [#allocation4], %s783
          %s786 = ssub.s32 16, 16
          %787 = vsyncadd %s782, %s786
          %s788 = smul.addr %s52, 16
          %s789 = scalar_lea.hbm %s9, %s788
          %s791 = sshll.u32 %s784, 4
          %s792 = int_to_ptr.vmem [resolvable:$true] %s791
          %794 = dma.hbm_to_vmem [thread:$0]  %s789, 16, %s792, %s782
        $region56: #{_transformer_forward.3} parent=27 // pred_fallthru
          _
        // Predicated region
        $region57: #{_transformer_forward.3} parent=27 // pred_check
          %p795 = pneg %p317
        $region58: #{_transformer_forward.3} parent=27 // pred_check_branch
          %797 = sbr.rel (%p795) target = $region60
        $region59: #{_transformer_forward.3} parent=27 // pred_region
          %s798 = sand.u32 %s52, 1
          %s799 = scalar_lea.sflag [#allocation7], %s798
          %s800 = sand.u32 %s307, 1
          %s801 = scalar_lea.vmem [#allocation6], %s800
          %s803 = ssub.s32 16, 16
          %804 = vsyncadd %s799, %s803
          %s805 = smul.addr %s52, 16
          %s806 = scalar_lea.hbm %s10, %s805
          %s808 = sshll.u32 %s801, 4
          %s809 = int_to_ptr.vmem [resolvable:$true] %s808
          %811 = dma.hbm_to_vmem [thread:$0]  %s806, 16, %s809, %s799
        $region60: #{_transformer_forward.3} parent=27 // pred_fallthru
          _
        // Predicated region
        $region61: #{_transformer_forward.3} parent=27 // pred_check
          %p812 = pneg %p343
        $region62: #{_transformer_forward.3} parent=27 // pred_check_branch
          %814 = sbr.rel (%p812) target = $region64
        $region63: #{_transformer_forward.3} parent=27 // pred_region
          %p815 = scmp.lt.s32.totalorder %s52, 3
          %s816 = scalar_select %p815, %s52, 3
          %s817 = smul.addr %s816, 4
          %s818 = smul.addr %s817, 8
          %s819 = scalar_lea.vmem %s11, %s818
        $region64: #{_transformer_forward.3} parent=27 // pred_fallthru
          _
        // Predicated region
        $region65: #{_transformer_forward.3} parent=27 // pred_check
          %p820 = pneg %p369
        $region66: #{_transformer_forward.3} parent=27 // pred_check_branch
          %822 = sbr.rel (%p820) target = $region68
        $region67: #{_transformer_forward.3} parent=27 // pred_region
          %s823 = sand.u32 %s52, 1
          %s824 = scalar_lea.sflag [#allocation7], %s823
          %s825 = sand.u32 %s359, 1
          %s826 = scalar_lea.vmem [#allocation8], %s825
          %s828 = ssub.s32 16, 16
          %829 = vsyncadd %s824, %s828
          %s830 = smul.addr %s52, 16
          %s831 = scalar_lea.hbm %s12, %s830
          %s833 = sshll.u32 %s826, 4
          %s834 = int_to_ptr.vmem [resolvable:$true] %s833
          %836 = dma.hbm_to_vmem [thread:$0]  %s831, 16, %s834, %s824
        $region68: #{_transformer_forward.3} parent=27 // pred_fallthru
          _
        // Predicated region
        $region69: #{_transformer_forward.3} parent=27 // pred_check
          %p837 = pneg %p395
        $region70: #{_transformer_forward.3} parent=27 // pred_check_branch
          %839 = sbr.rel (%p837) target = $region72
        $region71: #{_transformer_forward.3} parent=27 // pred_region
          %p840 = scmp.lt.s32.totalorder %s52, 3
          %s841 = scalar_select %p840, %s52, 3
          %s842 = smul.addr %s841, 4
          %s843 = smul.addr %s842, 8
          %s844 = scalar_lea.vmem %s13, %s843
        $region72: #{_transformer_forward.3} parent=27 // pred_fallthru
          _
        // Predicated region
        $region73: #{_transformer_forward.3} parent=27 // pred_check
          %p845 = pneg %p421
        $region74: #{_transformer_forward.3} parent=27 // pred_check_branch
          %847 = sbr.rel (%p845) target = $region76
        $region75: #{_transformer_forward.3} parent=27 // pred_region
          %s848 = sand.u32 %s52, 1
          %s849 = scalar_lea.sflag [#allocation10], %s848
          %s850 = sand.u32 %s411, 1
          %s851 = scalar_lea.vmem [#allocation9], %s850
          %s853 = ssub.s32 16, 16
          %854 = vsyncadd %s849, %s853
          %s855 = smul.addr %s52, 16
          %s856 = scalar_lea.hbm %s14, %s855
          %s858 = sshll.u32 %s851, 4
          %s859 = int_to_ptr.vmem [resolvable:$true] %s858
          %861 = dma.hbm_to_vmem [thread:$0]  %s856, 16, %s859, %s849
        $region76: #{_transformer_forward.3} parent=27 // pred_fallthru
          _
        // Predicated region
        $region77: #{_transformer_forward.3} parent=27 // pred_check
          %p862 = pneg %p447
        $region78: #{_transformer_forward.3} parent=27 // pred_check_branch
          %864 = sbr.rel (%p862) target = $region80
        $region79: #{_transformer_forward.3} parent=27 // pred_region
          %p865 = scmp.lt.s32.totalorder %s52, 3
          %s866 = scalar_select %p865, %s52, 3
          %s867 = smul.addr %s866, 4
          %s868 = smul.addr %s867, 8
          %s869 = scalar_lea.vmem %s15, %s868
        $region80: #{_transformer_forward.3} parent=27 // pred_fallthru
          _
        // Predicated region
        $region81: #{_transformer_forward.3} parent=27 // pred_check
          %p870 = pneg %p473
        $region82: #{_transformer_forward.3} parent=27 // pred_check_branch
          %872 = sbr.rel (%p870) target = $region84
        $region83: #{_transformer_forward.3} parent=27 // pred_region
          %s873 = sand.u32 %s52, 1
          %s874 = scalar_lea.sflag [#allocation10], %s873
          %s875 = sand.u32 %s463, 1
          %s876 = scalar_lea.vmem [#allocation11], %s875
          %s878 = ssub.s32 16, 16
          %879 = vsyncadd %s874, %s878
          %s880 = smul.addr %s52, 16
          %s881 = scalar_lea.hbm %s16, %s880
          %s883 = sshll.u32 %s876, 4
          %s884 = int_to_ptr.vmem [resolvable:$true] %s883
          %886 = dma.hbm_to_vmem [thread:$0]  %s881, 16, %s884, %s874
        $region84: #{_transformer_forward.3} parent=27 // pred_fallthru
          _
        // Predicated region
        $region85: #{_transformer_forward.3} parent=27 // pred_check
          %p887 = pneg %p499
        $region86: #{_transformer_forward.3} parent=27 // pred_check_branch
          %889 = sbr.rel (%p887) target = $region88
        $region87: #{_transformer_forward.3} parent=27 // pred_region
          %s890 = sand.u32 %s52, 1
          %s891 = scalar_lea.sflag [#allocation13], %s890
          %s892 = sand.u32 %s489, 1
          %s893 = scalar_lea.vmem [#allocation12], %s892
          %s895 = ssub.s32 16, 16
          %896 = vsyncadd %s891, %s895
          %s897 = smul.addr %s52, 16
          %s898 = scalar_lea.hbm %s17, %s897
          %s900 = sshll.u32 %s893, 4
          %s901 = int_to_ptr.vmem [resolvable:$true] %s900
          %903 = dma.hbm_to_vmem [thread:$0]  %s898, 16, %s901, %s891
        $region88: #{_transformer_forward.3} parent=27 // pred_fallthru
          _
        // Predicated region
        $region89: #{_transformer_forward.3} parent=27 // pred_check
          %p904 = pneg %p525
        $region90: #{_transformer_forward.3} parent=27 // pred_check_branch
          %906 = sbr.rel (%p904) target = $region92
        $region91: #{_transformer_forward.3} parent=27 // pred_region
          %s907 = sand.u32 %s52, 1
          %s908 = scalar_lea.sflag [#allocation13], %s907
          %s909 = sand.u32 %s515, 1
          %s910 = scalar_lea.vmem [#allocation14], %s909
          %s912 = ssub.s32 16, 16
          %913 = vsyncadd %s908, %s912
          %s914 = smul.addr %s52, 16
          %s915 = scalar_lea.hbm %s18, %s914
          %s917 = sshll.u32 %s910, 4
          %s918 = int_to_ptr.vmem [resolvable:$true] %s917
          %920 = dma.hbm_to_vmem [thread:$0]  %s915, 16, %s918, %s908
        $region92: #{_transformer_forward.3} parent=27 // pred_fallthru
          _
        // Predicated region
        $region93: #{_transformer_forward.3} parent=27 // pred_check
          %p921 = pneg %p551
        $region94: #{_transformer_forward.3} parent=27 // pred_check_branch
          %923 = sbr.rel (%p921) target = $region96
        $region95: #{_transformer_forward.3} parent=27 // pred_region
          %s924 = sand.u32 %s52, 1
          %s925 = scalar_lea.sflag [#allocation16], %s924
          %s926 = sand.u32 %s541, 1
          %s927 = smul.addr %s926, 32
          %s928 = scalar_lea.vmem [#allocation15], %s927
          %s930 = ssub.s32 512, 512
          %931 = vsyncadd %s925, %s930
          %s932 = smul.addr %s52, 4
          %s933 = smul.addr %s932, 128
          %s934 = scalar_lea.hbm %s19, %s933
          %s935 = sshll.u32 %s928, 4
          %s936 = int_to_ptr.vmem [resolvable:$true] %s935
          %941 = dma.hbm_to_vmem [thread:$0]  %s934, 512, %s936, %s925, 128, 128, 8
        $region96: #{_transformer_forward.3} parent=27 // pred_fallthru
          _
        // Predicated region
        $region97: #{_transformer_forward.3} parent=27 // pred_check
          %p942 = pneg %p577
        $region98: #{_transformer_forward.3} parent=27 // pred_check_branch
          %944 = sbr.rel (%p942) target = $region100
        $region99: #{_transformer_forward.3} parent=27 // pred_region
          %s945 = sand.u32 %s52, 1
          %s946 = scalar_lea.sflag [#allocation16], %s945
          %s947 = sand.u32 %s567, 1
          %s948 = scalar_lea.vmem [#allocation17], %s947
          %s950 = ssub.s32 16, 16
          %951 = vsyncadd %s946, %s950
          %s952 = smul.addr %s52, 16
          %s953 = scalar_lea.hbm %s20, %s952
          %s955 = sshll.u32 %s948, 4
          %s956 = int_to_ptr.vmem [resolvable:$true] %s955
          %958 = dma.hbm_to_vmem [thread:$0]  %s953, 16, %s956, %s946
        $region100: #{_transformer_forward.3} parent=27 // pred_fallthru
          _
        // Predicated region
        $region101: #{_transformer_forward.3} parent=27 // pred_check
          %p959 = pneg %p603
        $region102: #{_transformer_forward.3} parent=27 // pred_check_branch
          %961 = sbr.rel (%p959) target = $region104
        $region103: #{_transformer_forward.3} parent=27 // pred_region
          %p962 = scmp.lt.s32.totalorder %s52, 3
          %s963 = scalar_select %p962, %s52, 3
          %s964 = smul.addr %s963, 8
          %s965 = smul.addr %s964, 8
          %s966 = scalar_lea.vmem %s21, %s965
        $region104: #{_transformer_forward.3} parent=27 // pred_fallthru
          _
        // Predicated region
        $region105: #{_transformer_forward.3} parent=27 // pred_check
          %p967 = pneg %p629
        $region106: #{_transformer_forward.3} parent=27 // pred_check_branch
          %969 = sbr.rel (%p967) target = $region108
        $region107: #{_transformer_forward.3} parent=27 // pred_region
          %s970 = sand.u32 %s52, 1
          %s971 = scalar_lea.sflag [#allocation19], %s970
          %s972 = sand.u32 %s619, 1
          %s973 = scalar_lea.vmem [#allocation18], %s972
          %s975 = ssub.s32 16, 16
          %976 = vsyncadd %s971, %s975
          %s977 = smul.addr %s52, 16
          %s978 = scalar_lea.hbm %s22, %s977
          %s980 = sshll.u32 %s973, 4
          %s981 = int_to_ptr.vmem [resolvable:$true] %s980
          %983 = dma.hbm_to_vmem [thread:$0]  %s978, 16, %s981, %s971
        $region108: #{_transformer_forward.3} parent=27 // pred_fallthru
          _
        // Predicated region
        $region109: #{_transformer_forward.3} parent=27 // pred_check
          %p984 = pneg %p655
        $region110: #{_transformer_forward.3} parent=27 // pred_check_branch
          %986 = sbr.rel (%p984) target = $region112
        $region111: #{_transformer_forward.3} parent=27 // pred_region
          %s987 = sand.u32 %s52, 1
          %s988 = scalar_lea.sflag [#allocation19], %s987
          %s989 = sand.u32 %s645, 1
          %s990 = scalar_lea.vmem [#allocation20], %s989
          %s992 = ssub.s32 16, 16
          %993 = vsyncadd %s988, %s992
          %s994 = smul.addr %s52, 16
          %s995 = scalar_lea.hbm %s23, %s994
          %s997 = sshll.u32 %s990, 4
          %s998 = int_to_ptr.vmem [resolvable:$true] %s997
          %1000 = dma.hbm_to_vmem [thread:$0]  %s995, 16, %s998, %s988
        $region112: #{_transformer_forward.3} parent=27 // pred_fallthru
          _
        // Predicated region
        $region113: #{_transformer_forward.3} parent=27 // pred_check
          %p1001 = pneg %p681
        $region114: #{_transformer_forward.3} parent=27 // pred_check_branch
          %1003 = sbr.rel (%p1001) target = $region116
        $region115: #{_transformer_forward.3} parent=27 // pred_region
          %s1004 = sand.u32 %s671, 1
          %s1005 = scalar_lea.sflag [#allocation22], %s1004
          %s1006 = sand.u32 %s671, 1
          %s1007 = scalar_lea.vmem [#allocation21], %s1006
          %s1009 = ssub.s32 16, 16
          %1010 = vsyncadd %s1005, %s1009
          %s1011 = smul.addr %s52, 16
          %s1012 = scalar_lea.hbm %s24, %s1011
          %s1014 = sshll.u32 %s1007, 4
          %s1015 = int_to_ptr.vmem [resolvable:$true] %s1014
          %1017 = dma.hbm_to_vmem [thread:$0]  %s1012, 16, %s1015, %s1005
        $region116: #{_transformer_forward.3} parent=27 // pred_fallthru
          _
      $region28: #{_transformer_forward.3} parent=5 // pred_fallthru
        _
      %p1018 = scmp.le.s32.totalorder 1, %s52
      %p1019 = scmp.lt.s32.totalorder %s52, 5
      %p1020 = pnand %p1018, %p1019
      %p1021 = pneg %p1020
      // Predicated region
      $region117: #{_transformer_forward.3} parent=5 // pred_check
        _
      $region118: #{_transformer_forward.3} parent=5 // pred_check_branch
        %1023 = sbr.rel (%p1020) target = $region120
      $region119: #{_transformer_forward.3} parent=5 // pred_region
        %s1024 = ssub.s32 %s52, 1
        %s1025 = sand.u32 %s284, 1
        %s1026 = scalar_lea.sflag [#allocation5], %s1025
        %s1027 = sand.u32 %s284, 1
        %s1028 = scalar_lea.vmem [#allocation4], %s1027
        // Predicated region
        $region121: #{_transformer_forward.3} parent=119 // pred_check
          %p1029 = pneg %p297
        $region122: #{_transformer_forward.3} parent=119 // pred_check_branch
          %1031 = sbr.rel (%p1029) target = $region124
        $region123: #{_transformer_forward.3} parent=119 // pred_region
          %1032 = dma.done %s1026, 16
        $region124: #{_transformer_forward.3} parent=119 // pred_fallthru
          _
        %s1033 = sand.u32 %s57, 1
        %s1034 = scalar_lea.sflag [#allocation7], %s1033
        %s1035 = sand.u32 %s310, 1
        %s1036 = scalar_lea.vmem [#allocation6], %s1035
        // Predicated region
        $region125: #{_transformer_forward.3} parent=119 // pred_check
          %p1037 = pneg %p323
        $region126: #{_transformer_forward.3} parent=119 // pred_check_branch
          %1039 = sbr.rel (%p1037) target = $region128
        $region127: #{_transformer_forward.3} parent=119 // pred_region
          %1040 = dma.done %s1034, 16
        $region128: #{_transformer_forward.3} parent=119 // pred_fallthru
          _
        %s1041 = sand.u32 %s57, 1
        %s1042 = scalar_lea.sflag [#allocation7], %s1041
        %s1043 = sand.u32 %s362, 1
        %s1044 = scalar_lea.vmem [#allocation8], %s1043
        // Predicated region
        $region129: #{_transformer_forward.3} parent=119 // pred_check
          %p1045 = pneg %p375
        $region130: #{_transformer_forward.3} parent=119 // pred_check_branch
          %1047 = sbr.rel (%p1045) target = $region132
        $region131: #{_transformer_forward.3} parent=119 // pred_region
          %1048 = dma.done %s1042, 16
        $region132: #{_transformer_forward.3} parent=119 // pred_fallthru
          _
        %s1049 = sand.u32 %s57, 1
        %s1050 = scalar_lea.sflag [#allocation10], %s1049
        %s1051 = sand.u32 %s414, 1
        %s1052 = scalar_lea.vmem [#allocation9], %s1051
        // Predicated region
        $region133: #{_transformer_forward.3} parent=119 // pred_check
          %p1053 = pneg %p427
        $region134: #{_transformer_forward.3} parent=119 // pred_check_branch
          %1055 = sbr.rel (%p1053) target = $region136
        $region135: #{_transformer_forward.3} parent=119 // pred_region
          %1056 = dma.done %s1050, 16
        $region136: #{_transformer_forward.3} parent=119 // pred_fallthru
          _
        %s1057 = sand.u32 %s57, 1
        %s1058 = scalar_lea.sflag [#allocation10], %s1057
        %s1059 = sand.u32 %s466, 1
        %s1060 = scalar_lea.vmem [#allocation11], %s1059
        // Predicated region
        $region137: #{_transformer_forward.3} parent=119 // pred_check
          %p1061 = pneg %p479
        $region138: #{_transformer_forward.3} parent=119 // pred_check_branch
          %1063 = sbr.rel (%p1061) target = $region140
        $region139: #{_transformer_forward.3} parent=119 // pred_region
          %1064 = dma.done %s1058, 16
        $region140: #{_transformer_forward.3} parent=119 // pred_fallthru
          _
        %s1065 = sand.u32 %s57, 1
        %s1066 = scalar_lea.sflag [#allocation13], %s1065
        %s1067 = sand.u32 %s492, 1
        %s1068 = scalar_lea.vmem [#allocation12], %s1067
        // Predicated region
        $region141: #{_transformer_forward.3} parent=119 // pred_check
          %p1069 = pneg %p505
        $region142: #{_transformer_forward.3} parent=119 // pred_check_branch
          %1071 = sbr.rel (%p1069) target = $region144
        $region143: #{_transformer_forward.3} parent=119 // pred_region
          %1072 = dma.done %s1066, 16
        $region144: #{_transformer_forward.3} parent=119 // pred_fallthru
          _
        %s1073 = sand.u32 %s57, 1
        %s1074 = scalar_lea.sflag [#allocation13], %s1073
        %s1075 = sand.u32 %s518, 1
        %s1076 = scalar_lea.vmem [#allocation14], %s1075
        // Predicated region
        $region145: #{_transformer_forward.3} parent=119 // pred_check
          %p1077 = pneg %p531
        $region146: #{_transformer_forward.3} parent=119 // pred_check_branch
          %1079 = sbr.rel (%p1077) target = $region148
        $region147: #{_transformer_forward.3} parent=119 // pred_region
          %1080 = dma.done %s1074, 16
        $region148: #{_transformer_forward.3} parent=119 // pred_fallthru
          _
        %s1081 = sand.u32 %s57, 1
        %s1082 = scalar_lea.sflag [#allocation16], %s1081
        %s1083 = sand.u32 %s544, 1
        %s1084 = smul.addr %s1083, 32
        %s1085 = scalar_lea.vmem [#allocation15], %s1084
        // Predicated region
        $region149: #{_transformer_forward.3} parent=119 // pred_check
          %p1086 = pneg %p557
        $region150: #{_transformer_forward.3} parent=119 // pred_check_branch
          %1088 = sbr.rel (%p1086) target = $region152
        $region151: #{_transformer_forward.3} parent=119 // pred_region
          %1089 = dma.done %s1082, 512
        $region152: #{_transformer_forward.3} parent=119 // pred_fallthru
          _
        %s1090 = sand.u32 %s57, 1
        %s1091 = scalar_lea.sflag [#allocation16], %s1090
        %s1092 = sand.u32 %s570, 1
        %s1093 = scalar_lea.vmem [#allocation17], %s1092
        // Predicated region
        $region153: #{_transformer_forward.3} parent=119 // pred_check
          %p1094 = pneg %p583
        $region154: #{_transformer_forward.3} parent=119 // pred_check_branch
          %1096 = sbr.rel (%p1094) target = $region156
        $region155: #{_transformer_forward.3} parent=119 // pred_region
          %1097 = dma.done %s1091, 16
        $region156: #{_transformer_forward.3} parent=119 // pred_fallthru
          _
        %s1098 = sand.u32 %s57, 1
        %s1099 = scalar_lea.sflag [#allocation19], %s1098
        %s1100 = sand.u32 %s622, 1
        %s1101 = scalar_lea.vmem [#allocation18], %s1100
        // Predicated region
        $region157: #{_transformer_forward.3} parent=119 // pred_check
          %p1102 = pneg %p635
        $region158: #{_transformer_forward.3} parent=119 // pred_check_branch
          %1104 = sbr.rel (%p1102) target = $region160
        $region159: #{_transformer_forward.3} parent=119 // pred_region
          %1105 = dma.done %s1099, 16
        $region160: #{_transformer_forward.3} parent=119 // pred_fallthru
          _
        %s1106 = sand.u32 %s57, 1
        %s1107 = scalar_lea.sflag [#allocation19], %s1106
        %s1108 = sand.u32 %s648, 1
        %s1109 = scalar_lea.vmem [#allocation20], %s1108
        // Predicated region
        $region161: #{_transformer_forward.3} parent=119 // pred_check
          %p1110 = pneg %p661
        $region162: #{_transformer_forward.3} parent=119 // pred_check_branch
          %1112 = sbr.rel (%p1110) target = $region164
        $region163: #{_transformer_forward.3} parent=119 // pred_region
          %1113 = dma.done %s1107, 16
        $region164: #{_transformer_forward.3} parent=119 // pred_fallthru
          _
        %s1114 = sand.u32 %s674, 1
        %s1115 = scalar_lea.sflag [#allocation22], %s1114
        %s1116 = sand.u32 %s674, 1
        %s1117 = scalar_lea.vmem [#allocation21], %s1116
        // Predicated region
        $region165: #{_transformer_forward.3} parent=119 // pred_check
          %p1118 = pneg %p687
        $region166: #{_transformer_forward.3} parent=119 // pred_check_branch
          %1120 = sbr.rel (%p1118) target = $region168
        $region167: #{_transformer_forward.3} parent=119 // pred_region
          %1121 = dma.done %s1115, 16
        $region168: #{_transformer_forward.3} parent=119 // pred_fallthru
          _
        %p1122 = pneg %p73
        %p1123 = pneg %p70
        %p1124 = pneg %p94
        %p1125 = pneg %p91
        %p1126 = pneg %p115
        %p1127 = pneg %p112
        %p1128 = scmp.lt.s32.totalorder %s57, 3
        %s1129 = scalar_select %p1128, %s57, 3
        %s1130 = smul.addr %s1129, 4
        %s1131 = smul.addr %s1130, 8
        %s1132 = scalar_lea.vmem %s3, %s1131
        %p1133 = pneg %p141
        %p1134 = pneg %p138
        %p1135 = scmp.lt.s32.totalorder %s57, 3
        %s1136 = scalar_select %p1135, %s57, 3
        %s1137 = scalar_lea.vmem %s4, %s1136
        %p1138 = pneg %p167
        %p1139 = pneg %p164
        %p1140 = scmp.lt.s32.totalorder %s57, 3
        %s1141 = scalar_select %p1140, %s57, 3
        %s1142 = smul.addr %s1141, 4
        %s1143 = smul.addr %s1142, 8
        %s1144 = scalar_lea.vmem %s5, %s1143
        %p1145 = pneg %p193
        %p1146 = pneg %p190
        %p1147 = scmp.lt.s32.totalorder %s57, 3
        %s1148 = scalar_select %p1147, %s57, 3
        %s1149 = scalar_lea.vmem %s6, %s1148
        %p1150 = pneg %p219
        %p1151 = pneg %p216
        %p1152 = scmp.lt.s32.totalorder %s57, 3
        %s1153 = scalar_select %p1152, %s57, 3
        %s1154 = smul.addr %s1153, 4
        %s1155 = smul.addr %s1154, 8
        %s1156 = scalar_lea.vmem %s7, %s1155
        %p1157 = pneg %p245
        %p1158 = pneg %p242
        %p1159 = scmp.lt.s32.totalorder %s57, 3
        %s1160 = scalar_select %p1159, %s57, 3
        %s1161 = scalar_lea.vmem %s8, %s1160
        %p1162 = pneg %p271
        %p1163 = pneg %p268
        %s1164 = sand.u32 %s284, 1
        %s1165 = scalar_lea.sflag [#allocation5], %s1164
        %s1166 = sand.u32 %s284, 1
        %s1167 = scalar_lea.vmem [#allocation4], %s1166
        %p1168 = pneg %p297
        %p1169 = pneg %p294
        %s1170 = sand.u32 %s57, 1
        %s1171 = scalar_lea.sflag [#allocation7], %s1170
        %s1172 = sand.u32 %s310, 1
        %s1173 = scalar_lea.vmem [#allocation6], %s1172
        %p1174 = pneg %p323
        %p1175 = pneg %p320
        %p1176 = scmp.lt.s32.totalorder %s57, 3
        %s1177 = scalar_select %p1176, %s57, 3
        %s1178 = smul.addr %s1177, 4
        %s1179 = smul.addr %s1178, 8
        %s1180 = scalar_lea.vmem %s11, %s1179
        %p1181 = pneg %p349
        %p1182 = pneg %p346
        %s1183 = sand.u32 %s57, 1
        %s1184 = scalar_lea.sflag [#allocation7], %s1183
        %s1185 = sand.u32 %s362, 1
        %s1186 = scalar_lea.vmem [#allocation8], %s1185
        %p1187 = pneg %p375
        %p1188 = pneg %p372
        %p1189 = scmp.lt.s32.totalorder %s57, 3
        %s1190 = scalar_select %p1189, %s57, 3
        %s1191 = smul.addr %s1190, 4
        %s1192 = smul.addr %s1191, 8
        %s1193 = scalar_lea.vmem %s13, %s1192
        %p1194 = pneg %p401
        %p1195 = pneg %p398
        %s1196 = sand.u32 %s57, 1
        %s1197 = scalar_lea.sflag [#allocation10], %s1196
        %s1198 = sand.u32 %s414, 1
        %s1199 = scalar_lea.vmem [#allocation9], %s1198
        %p1200 = pneg %p427
        %p1201 = pneg %p424
        %p1202 = scmp.lt.s32.totalorder %s57, 3
        %s1203 = scalar_select %p1202, %s57, 3
        %s1204 = smul.addr %s1203, 4
        %s1205 = smul.addr %s1204, 8
        %s1206 = scalar_lea.vmem %s15, %s1205
        %p1207 = pneg %p453
        %p1208 = pneg %p450
        %s1209 = sand.u32 %s57, 1
        %s1210 = scalar_lea.sflag [#allocation10], %s1209
        %s1211 = sand.u32 %s466, 1
        %s1212 = scalar_lea.vmem [#allocation11], %s1211
        %p1213 = pneg %p479
        %p1214 = pneg %p476
        %s1215 = sand.u32 %s57, 1
        %s1216 = scalar_lea.sflag [#allocation13], %s1215
        %s1217 = sand.u32 %s492, 1
        %s1218 = scalar_lea.vmem [#allocation12], %s1217
        %p1219 = pneg %p505
        %p1220 = pneg %p502
        %s1221 = sand.u32 %s57, 1
        %s1222 = scalar_lea.sflag [#allocation13], %s1221
        %s1223 = sand.u32 %s518, 1
        %s1224 = scalar_lea.vmem [#allocation14], %s1223
        %p1225 = pneg %p531
        %p1226 = pneg %p528
        %s1227 = sand.u32 %s57, 1
        %s1228 = scalar_lea.sflag [#allocation16], %s1227
        %s1229 = sand.u32 %s544, 1
        %s1230 = smul.addr %s1229, 32
        %s1231 = scalar_lea.vmem [#allocation15], %s1230
        %p1232 = pneg %p557
        %p1233 = pneg %p554
        %s1234 = sand.u32 %s57, 1
        %s1235 = scalar_lea.sflag [#allocation16], %s1234
        %s1236 = sand.u32 %s570, 1
        %s1237 = scalar_lea.vmem [#allocation17], %s1236
        %p1238 = pneg %p583
        %p1239 = pneg %p580
        %p1240 = scmp.lt.s32.totalorder %s57, 3
        %s1241 = scalar_select %p1240, %s57, 3
        %s1242 = smul.addr %s1241, 8
        %s1243 = smul.addr %s1242, 8
        %s1244 = scalar_lea.vmem %s21, %s1243
        %p1245 = pneg %p609
        %p1246 = pneg %p606
        %s1247 = sand.u32 %s57, 1
        %s1248 = scalar_lea.sflag [#allocation19], %s1247
        %s1249 = sand.u32 %s622, 1
        %s1250 = scalar_lea.vmem [#allocation18], %s1249
        %p1251 = pneg %p635
        %p1252 = pneg %p632
        %s1253 = sand.u32 %s57, 1
        %s1254 = scalar_lea.sflag [#allocation19], %s1253
        %s1255 = sand.u32 %s648, 1
        %s1256 = scalar_lea.vmem [#allocation20], %s1255
        %p1257 = pneg %p661
        %p1258 = pneg %p658
        %s1259 = sand.u32 %s674, 1
        %s1260 = scalar_lea.sflag [#allocation22], %s1259
        %s1261 = sand.u32 %s674, 1
        %s1262 = scalar_lea.vmem [#allocation21], %s1261
        %p1263 = pneg %p687
        %p1264 = pneg %p684
        %p1265 = pneg %p708
        %p1266 = pneg %p705
        %p1267 = scmp.lt.s32.totalorder %s57, 3
        %s1268 = scalar_select %p1267, %s57, 3
        %s1269 = smul.addr %s1268, 4
        %s1270 = smul.addr %s1269, 8
        %s1271 = scalar_lea.vmem %s3, %s1270
        %p1272 = scmp.lt.s32.totalorder %s57, 3
        %s1273 = scalar_select %p1272, %s57, 3
        %s1274 = scalar_lea.vmem %s4, %s1273
        %p1275 = scmp.lt.s32.totalorder %s57, 3
        %s1276 = scalar_select %p1275, %s57, 3
        %s1277 = smul.addr %s1276, 4
        %s1278 = smul.addr %s1277, 8
        %s1279 = scalar_lea.vmem %s5, %s1278
        %p1280 = scmp.lt.s32.totalorder %s57, 3
        %s1281 = scalar_select %p1280, %s57, 3
        %s1282 = scalar_lea.vmem %s6, %s1281
        %p1283 = scmp.lt.s32.totalorder %s57, 3
        %s1284 = scalar_select %p1283, %s57, 3
        %s1285 = smul.addr %s1284, 4
        %s1286 = smul.addr %s1285, 8
        %s1287 = scalar_lea.vmem %s7, %s1286
        %p1288 = scmp.lt.s32.totalorder %s57, 3
        %s1289 = scalar_select %p1288, %s57, 3
        %s1290 = scalar_lea.vmem %s8, %s1289
        %p1291 = scmp.lt.s32.totalorder %s57, 3
        %s1292 = scalar_select %p1291, %s57, 3
        %s1293 = smul.addr %s1292, 4
        %s1294 = smul.addr %s1293, 8
        %s1295 = scalar_lea.vmem %s11, %s1294
        %p1296 = scmp.lt.s32.totalorder %s57, 3
        %s1297 = scalar_select %p1296, %s57, 3
        %s1298 = smul.addr %s1297, 4
        %s1299 = smul.addr %s1298, 8
        %s1300 = scalar_lea.vmem %s13, %s1299
        %p1301 = scmp.lt.s32.totalorder %s57, 3
        %s1302 = scalar_select %p1301, %s57, 3
        %s1303 = smul.addr %s1302, 4
        %s1304 = smul.addr %s1303, 8
        %s1305 = scalar_lea.vmem %s15, %s1304
        %p1306 = scmp.lt.s32.totalorder %s57, 3
        %s1307 = scalar_select %p1306, %s57, 3
        %s1308 = smul.addr %s1307, 8
        %s1309 = smul.addr %s1308, 8
        %s1310 = scalar_lea.vmem %s21, %s1309
        %v1311 = vld [vmem:[%s2] sm:$0xff]
        %p1312 = scmp.eq.s32.totalorder %s57, 0
        // Predicated region
        $region169: #{_transformer_forward.3} parent=119 // pred_check
          %p1313 = pneg %p1312
        $region170: #{_transformer_forward.3} parent=119 // pred_check_branch
          %1315 = sbr.rel (%p1313) target = $region172
        $region171: #{_transformer_forward.3} parent=119 // pred_region
          %v1316 = vld [vmem:[%s0] sm:$0xff]
          %v1317 = vld [vmem:[%s0 + $0x8] sm:$0xff]
          %vm1318 = vcmask 261120
          %1319 = vst.msk [vmem:[#allocation2] sm:$0xff] %vm1318, %v1316
          %1320 = vst.msk [vmem:[#allocation2 + $0x8] sm:$0xff] %vm1318, %v1317
        $region172: #{_transformer_forward.3} parent=119 // pred_fallthru
          _
        %v1321 = vld [vmem:[#allocation2] sm:$0xff]
        %v1322 = vld [vmem:[#allocation2 + $0x8] sm:$0xff]
        %v1323 = vld [vmem:[%s1] sm:$0xff]
        %v1324 = vld [vmem:[%s1 + $0x8] sm:$0xff]
        %v1325 = vld [vmem:[%s1271] sm:$0xff]
        %v1326 = vld [vmem:[%s1271 + $0x8] sm:$0xff]
        %v1327 = vld [vmem:[%s1271 + $0x10] sm:$0xff]
        %v1328 = vld [vmem:[%s1271 + $0x18] sm:$0xff]
        %v1329 = vld [vmem:[%s1274] sm:$0x1]
        %v1330 = vld [vmem:[%s1279] sm:$0xff]
        %v1331 = vld [vmem:[%s1279 + $0x8] sm:$0xff]
        %v1332 = vld [vmem:[%s1279 + $0x10] sm:$0xff]
        %v1333 = vld [vmem:[%s1279 + $0x18] sm:$0xff]
        %v1334 = vld [vmem:[%s1282] sm:$0x1]
        %v1335 = vld [vmem:[%s1287] sm:$0xff]
        %v1336 = vld [vmem:[%s1287 + $0x8] sm:$0xff]
        %v1337 = vld [vmem:[%s1287 + $0x10] sm:$0xff]
        %v1338 = vld [vmem:[%s1287 + $0x18] sm:$0xff]
        %v1339 = vld [vmem:[%s1290] sm:$0x1]
        %v1340 = vld [vmem:[%s1028] sm:$0x1]
        %v1341 = vld [vmem:[%s1036] sm:$0x1]
        %v1343 = vlaneseq
        %v1344 = vshrl.u32 %v1343, 7
        %v1345 = vsub.s32 0, %v1344
        %v1346 = vrot.slane %v1329, %v1345
        %vm1348 = vcmask 261120
        %v1350 = vsel %vm1348, %v1321, 0
        %v1353 = vsel %vm1348, %v1322, 0
        %1355 = vmatprep.subr.mxu0 0.0
        %1356 = vmatpush1.msra.mxu0 0.0
        %1357 = vmatprep.subr.mxu0 0.0
        %1358 = vmatpush1.msra.mxu0 0.0
        %1359 = vmatprep.subr.mxu0 0.0
        %1360 = vmatpush1.msra.mxu0 0.0
        %1361 = vmatprep.subr.mxu0 0.0
        %1362 = vmatpush1.msra.mxu0 0.0
        %1363 = vmatprep.subr.mxu0 0.0
        %1364 = vmatpush1.msra.mxu0 0.0
        %1365 = vmatprep.subr.mxu0 0.0
        %1366 = vmatpush1.msra.mxu0 0.0
        %1367 = vmatprep.subr.mxu0 0.0
        %1368 = vmatpush1.msra.mxu0 0.0
        %1369 = vmatprep.subr.mxu0 0.0
        %1370 = vmatpush1.msra.mxu0 0.0
        %1371 = vmatprep.subr.mxu0 0.0
        %1372 = vmatpush1.msra.mxu0 0.0
        %1373 = vmatprep.subr.mxu0 0.0
        %1374 = vmatpush1.msra.mxu0 0.0
        %1375 = vmatprep.subr.mxu0 0.0
        %1376 = vmatpush1.msra.mxu0 0.0
        %1377 = vmatprep.subr.mxu0 0.0
        %1378 = vmatpush1.msra.mxu0 0.0
        %1379 = vmatprep.subr.mxu0 0.0
        %1380 = vmatpush1.msra.mxu0 %v1328
        %1381 = vmatprep.subr.mxu0 0.0
        %1382 = vmatpush1.msra.mxu0 %v1327
        %1383 = vmatprep.subr.mxu0 0.0
        %1384 = vmatpush1.msra.mxu0 %v1326
        %1385 = vmatprep.subr.mxu0 0.0
        %1386 = vmatpush1.msra.mxu0 %v1325
        %1387 = vmatprep.subr.mxu0 0.0
        %1388 = vmatpush2.msra.mxu0 0.0
        %1389 = vmatprep.subr.mxu0 0.0
        %1390 = vmatpush2.msra.mxu0 0.0
        %1391 = vmatprep.subr.mxu0 0.0
        %1392 = vmatpush2.msra.mxu0 0.0
        %1393 = vmatprep.subr.mxu0 0.0
        %1394 = vmatpush2.msra.mxu0 0.0
        %1395 = vmatprep.subr.mxu0 0.0
        %1396 = vmatpush2.msra.mxu0 0.0
        %1397 = vmatprep.subr.mxu0 0.0
        %1398 = vmatpush2.msra.mxu0 0.0
        %1399 = vmatprep.subr.mxu0 0.0
        %1400 = vmatpush2.msra.mxu0 0.0
        %1401 = vmatprep.subr.mxu0 0.0
        %1402 = vmatpush2.msra.mxu0 0.0
        %1403 = vmatprep.subr.mxu0 0.0
        %1404 = vmatpush2.msra.mxu0 0.0
        %1405 = vmatprep.subr.mxu0 0.0
        %1406 = vmatpush2.msra.mxu0 0.0
        %1407 = vmatprep.subr.mxu0 0.0
        %1408 = vmatpush2.msra.mxu0 0.0
        %1409 = vmatprep.subr.mxu0 0.0
        %1410 = vmatpush2.msra.mxu0 0.0
        %1411 = vmatprep.subr.mxu0 0.0
        %1412 = vmatpush2.msra.mxu0 0.0
        %1413 = vmatprep.subr.mxu0 0.0
        %1414 = vmatpush2.msra.mxu0 0.0
        %1415 = vmatprep.subr.mxu0 0.0
        %1416 = vmatpush2.msra.mxu0 0.0
        %1417 = vmatprep.subr.mxu0 0.0
        %1418 = vmatpush2.msra.mxu0 0.0
        %1419 = vmatprep.mubr.f32.mxu0 0.0
        %1420 = vmatmul.mubr.f32.gmra.mxu0 %v1350
        %v1421 = vpop.f32.mrf.mxu0
        %v1422 = vadd.f32 %v1346, %v1421
        %v1423 = vpop.f32.mrf.mxu0
        %1424 = vmatprep.mubr.f32.mxu0 0.0
        %1425 = vmatmul.mubr.f32.gmra.mxu0 %v1353
        %v1426 = vpop.f32.mrf.mxu0
        %v1427 = vadd.f32 %v1346, %v1426
        %v1428 = vpop.f32.mrf.mxu0
        %1429 = vdwg.mxu0
        %v1431 = vlaneseq
        %v1432 = vshrl.u32 %v1431, 7
        %v1433 = vsub.s32 0, %v1432
        %v1434 = vrot.slane %v1334, %v1433
        %1436 = vmatprep.subr.mxu0 0.0
        %1437 = vmatpush1.msra.mxu0 0.0
        %1438 = vmatprep.subr.mxu0 0.0
        %1439 = vmatpush1.msra.mxu0 0.0
        %1440 = vmatprep.subr.mxu0 0.0
        %1441 = vmatpush1.msra.mxu0 0.0
        %1442 = vmatprep.subr.mxu0 0.0
        %1443 = vmatpush1.msra.mxu0 0.0
        %1444 = vmatprep.subr.mxu0 0.0
        %1445 = vmatpush1.msra.mxu0 0.0
        %1446 = vmatprep.subr.mxu0 0.0
        %1447 = vmatpush1.msra.mxu0 0.0
        %1448 = vmatprep.subr.mxu0 0.0
        %1449 = vmatpush1.msra.mxu0 0.0
        %1450 = vmatprep.subr.mxu0 0.0
        %1451 = vmatpush1.msra.mxu0 0.0
        %1452 = vmatprep.subr.mxu0 0.0
        %1453 = vmatpush1.msra.mxu0 0.0
        %1454 = vmatprep.subr.mxu0 0.0
        %1455 = vmatpush1.msra.mxu0 0.0
        %1456 = vmatprep.subr.mxu0 0.0
        %1457 = vmatpush1.msra.mxu0 0.0
        %1458 = vmatprep.subr.mxu0 0.0
        %1459 = vmatpush1.msra.mxu0 0.0
        %1460 = vmatprep.subr.mxu0 0.0
        %1461 = vmatpush1.msra.mxu0 %v1333
        %1462 = vmatprep.subr.mxu0 0.0
        %1463 = vmatpush1.msra.mxu0 %v1332
        %1464 = vmatprep.subr.mxu0 0.0
        %1465 = vmatpush1.msra.mxu0 %v1331
        %1466 = vmatprep.subr.mxu0 0.0
        %1467 = vmatpush1.msra.mxu0 %v1330
        %1468 = vmatprep.subr.mxu0 0.0
        %1469 = vmatpush2.msra.mxu0 0.0
        %1470 = vmatprep.subr.mxu0 0.0
        %1471 = vmatpush2.msra.mxu0 0.0
        %1472 = vmatprep.subr.mxu0 0.0
        %1473 = vmatpush2.msra.mxu0 0.0
        %1474 = vmatprep.subr.mxu0 0.0
        %1475 = vmatpush2.msra.mxu0 0.0
        %1476 = vmatprep.subr.mxu0 0.0
        %1477 = vmatpush2.msra.mxu0 0.0
        %1478 = vmatprep.subr.mxu0 0.0
        %1479 = vmatpush2.msra.mxu0 0.0
        %1480 = vmatprep.subr.mxu0 0.0
        %1481 = vmatpush2.msra.mxu0 0.0
        %1482 = vmatprep.subr.mxu0 0.0
        %1483 = vmatpush2.msra.mxu0 0.0
        %1484 = vmatprep.subr.mxu0 0.0
        %1485 = vmatpush2.msra.mxu0 0.0
        %1486 = vmatprep.subr.mxu0 0.0
        %1487 = vmatpush2.msra.mxu0 0.0
        %1488 = vmatprep.subr.mxu0 0.0
        %1489 = vmatpush2.msra.mxu0 0.0
        %1490 = vmatprep.subr.mxu0 0.0
        %1491 = vmatpush2.msra.mxu0 0.0
        %1492 = vmatprep.subr.mxu0 0.0
        %1493 = vmatpush2.msra.mxu0 0.0
        %1494 = vmatprep.subr.mxu0 0.0
        %1495 = vmatpush2.msra.mxu0 0.0
        %1496 = vmatprep.subr.mxu0 0.0
        %1497 = vmatpush2.msra.mxu0 0.0
        %1498 = vmatprep.subr.mxu0 0.0
        %1499 = vmatpush2.msra.mxu0 0.0
        %1500 = vmatprep.mubr.f32.mxu0 0.0
        %1501 = vmatmul.mubr.f32.gmra.mxu0 %v1350
        %v1502 = vpop.f32.mrf.mxu0
        %v1503 = vadd.f32 %v1434, %v1502
        %v1504 = vpop.f32.mrf.mxu0
        %1505 = vmatprep.mubr.f32.mxu0 0.0
        %1506 = vmatmul.mubr.f32.gmra.mxu0 %v1353
        %v1507 = vpop.f32.mrf.mxu0
        %v1508 = vadd.f32 %v1434, %v1507
        %v1509 = vpop.f32.mrf.mxu0
        %1510 = vdwg.mxu0
        %vm1511 = vcmask 64512
        %v1513 = vsel %vm1511, %v1422, 0
        %v1516 = vsel %vm1511, %v1503, 0
        %1518 = vmatprep.subr.mxu0 0.0
        %1519 = vmatpush1.xpose.msra.mxu0 0.0
        %1520 = vmatprep.subr.mxu0 0.0
        %1521 = vmatpush1.xpose.msra.mxu0 0.0
        %1522 = vmatprep.subr.mxu0 0.0
        %1523 = vmatpush1.xpose.msra.mxu0 0.0
        %1524 = vmatprep.subr.mxu0 0.0
        %1525 = vmatpush1.xpose.msra.mxu0 0.0
        %1526 = vmatprep.subr.mxu0 0.0
        %1527 = vmatpush1.xpose.msra.mxu0 0.0
        %1528 = vmatprep.subr.mxu0 0.0
        %1529 = vmatpush1.xpose.msra.mxu0 0.0
        %1530 = vmatprep.subr.mxu0 0.0
        %1531 = vmatpush1.xpose.msra.mxu0 0.0
        %1532 = vmatprep.subr.mxu0 0.0
        %1533 = vmatpush1.xpose.msra.mxu0 0.0
        %1534 = vmatprep.subr.mxu0 0.0
        %1535 = vmatpush1.xpose.msra.mxu0 0.0
        %1536 = vmatprep.subr.mxu0 0.0
        %1537 = vmatpush1.xpose.msra.mxu0 0.0
        %1538 = vmatprep.subr.mxu0 0.0
        %1539 = vmatpush1.xpose.msra.mxu0 0.0
        %1540 = vmatprep.subr.mxu0 0.0
        %1541 = vmatpush1.xpose.msra.mxu0 0.0
        %1542 = vmatprep.subr.mxu0 0.0
        %1543 = vmatpush1.xpose.msra.mxu0 0.0
        %1544 = vmatprep.subr.mxu0 0.0
        %1545 = vmatpush1.xpose.msra.mxu0 0.0
        %1546 = vmatprep.subr.mxu0 0.0
        %1547 = vmatpush1.xpose.msra.mxu0 0.0
        %1548 = vmatprep.subr.mxu0 0.0
        %1549 = vmatpush1.xpose.msra.mxu0 %v1516
        %1550 = vmatprep.subr.mxu0 0.0
        %1551 = vmatpush2.xpose.msra.mxu0 0.0
        %1552 = vmatprep.subr.mxu0 0.0
        %1553 = vmatpush2.xpose.msra.mxu0 0.0
        %1554 = vmatprep.subr.mxu0 0.0
        %1555 = vmatpush2.xpose.msra.mxu0 0.0
        %1556 = vmatprep.subr.mxu0 0.0
        %1557 = vmatpush2.xpose.msra.mxu0 0.0
        %1558 = vmatprep.subr.mxu0 0.0
        %1559 = vmatpush2.xpose.msra.mxu0 0.0
        %1560 = vmatprep.subr.mxu0 0.0
        %1561 = vmatpush2.xpose.msra.mxu0 0.0
        %1562 = vmatprep.subr.mxu0 0.0
        %1563 = vmatpush2.xpose.msra.mxu0 0.0
        %1564 = vmatprep.subr.mxu0 0.0
        %1565 = vmatpush2.xpose.msra.mxu0 0.0
        %1566 = vmatprep.subr.mxu0 0.0
        %1567 = vmatpush2.xpose.msra.mxu0 0.0
        %1568 = vmatprep.subr.mxu0 0.0
        %1569 = vmatpush2.xpose.msra.mxu0 0.0
        %1570 = vmatprep.subr.mxu0 0.0
        %1571 = vmatpush2.xpose.msra.mxu0 0.0
        %1572 = vmatprep.subr.mxu0 0.0
        %1573 = vmatpush2.xpose.msra.mxu0 0.0
        %1574 = vmatprep.subr.mxu0 0.0
        %1575 = vmatpush2.xpose.msra.mxu0 0.0
        %1576 = vmatprep.subr.mxu0 0.0
        %1577 = vmatpush2.xpose.msra.mxu0 0.0
        %1578 = vmatprep.subr.mxu0 0.0
        %1579 = vmatpush2.xpose.msra.mxu0 0.0
        %1580 = vmatprep.subr.mxu0 0.0
        %1581 = vmatpush2.xpose.msra.mxu0 0.0
        %1582 = vmatprep.mubr.f32.mxu0 0.0
        %1583 = vmatmul.mubr.f32.gmra.mxu0 %v1513
        %v1584 = vpop.f32.mrf.mxu0
        %v1585 = vadd.f32 0.0, %v1584
        %v1586 = vpop.f32.mrf.mxu0
        %1587 = vdwg.mxu0
        %v1589 = vsel %vm1511, %v1427, 0
        %v1592 = vsel %vm1511, %v1508, 0
        %1594 = vmatprep.subr.mxu0 0.0
        %1595 = vmatpush1.xpose.msra.mxu0 0.0
        %1596 = vmatprep.subr.mxu0 0.0
        %1597 = vmatpush1.xpose.msra.mxu0 0.0
        %1598 = vmatprep.subr.mxu0 0.0
        %1599 = vmatpush1.xpose.msra.mxu0 0.0
        %1600 = vmatprep.subr.mxu0 0.0
        %1601 = vmatpush1.xpose.msra.mxu0 0.0
        %1602 = vmatprep.subr.mxu0 0.0
        %1603 = vmatpush1.xpose.msra.mxu0 0.0
        %1604 = vmatprep.subr.mxu0 0.0
        %1605 = vmatpush1.xpose.msra.mxu0 0.0
        %1606 = vmatprep.subr.mxu0 0.0
        %1607 = vmatpush1.xpose.msra.mxu0 0.0
        %1608 = vmatprep.subr.mxu0 0.0
        %1609 = vmatpush1.xpose.msra.mxu0 0.0
        %1610 = vmatprep.subr.mxu0 0.0
        %1611 = vmatpush1.xpose.msra.mxu0 0.0
        %1612 = vmatprep.subr.mxu0 0.0
        %1613 = vmatpush1.xpose.msra.mxu0 0.0
        %1614 = vmatprep.subr.mxu0 0.0
        %1615 = vmatpush1.xpose.msra.mxu0 0.0
        %1616 = vmatprep.subr.mxu0 0.0
        %1617 = vmatpush1.xpose.msra.mxu0 0.0
        %1618 = vmatprep.subr.mxu0 0.0
        %1619 = vmatpush1.xpose.msra.mxu0 0.0
        %1620 = vmatprep.subr.mxu0 0.0
        %1621 = vmatpush1.xpose.msra.mxu0 0.0
        %1622 = vmatprep.subr.mxu0 0.0
        %1623 = vmatpush1.xpose.msra.mxu0 0.0
        %1624 = vmatprep.subr.mxu0 0.0
        %1625 = vmatpush1.xpose.msra.mxu0 %v1592
        %1626 = vmatprep.subr.mxu0 0.0
        %1627 = vmatpush2.xpose.msra.mxu0 0.0
        %1628 = vmatprep.subr.mxu0 0.0
        %1629 = vmatpush2.xpose.msra.mxu0 0.0
        %1630 = vmatprep.subr.mxu0 0.0
        %1631 = vmatpush2.xpose.msra.mxu0 0.0
        %1632 = vmatprep.subr.mxu0 0.0
        %1633 = vmatpush2.xpose.msra.mxu0 0.0
        %1634 = vmatprep.subr.mxu0 0.0
        %1635 = vmatpush2.xpose.msra.mxu0 0.0
        %1636 = vmatprep.subr.mxu0 0.0
        %1637 = vmatpush2.xpose.msra.mxu0 0.0
        %1638 = vmatprep.subr.mxu0 0.0
        %1639 = vmatpush2.xpose.msra.mxu0 0.0
        %1640 = vmatprep.subr.mxu0 0.0
        %1641 = vmatpush2.xpose.msra.mxu0 0.0
        %1642 = vmatprep.subr.mxu0 0.0
        %1643 = vmatpush2.xpose.msra.mxu0 0.0
        %1644 = vmatprep.subr.mxu0 0.0
        %1645 = vmatpush2.xpose.msra.mxu0 0.0
        %1646 = vmatprep.subr.mxu0 0.0
        %1647 = vmatpush2.xpose.msra.mxu0 0.0
        %1648 = vmatprep.subr.mxu0 0.0
        %1649 = vmatpush2.xpose.msra.mxu0 0.0
        %1650 = vmatprep.subr.mxu0 0.0
        %1651 = vmatpush2.xpose.msra.mxu0 0.0
        %1652 = vmatprep.subr.mxu0 0.0
        %1653 = vmatpush2.xpose.msra.mxu0 0.0
        %1654 = vmatprep.subr.mxu0 0.0
        %1655 = vmatpush2.xpose.msra.mxu0 0.0
        %1656 = vmatprep.subr.mxu0 0.0
        %1657 = vmatpush2.xpose.msra.mxu0 0.0
        %1658 = vmatprep.mubr.f32.mxu0 0.0
        %1659 = vmatmul.mubr.f32.gmra.mxu0 %v1589
        %v1660 = vpop.f32.mrf.mxu0
        %v1661 = vadd.f32 0.0, %v1660
        %v1662 = vpop.f32.mrf.mxu0
        %1663 = vdwg.mxu0
        %v1664 = vmul.f32 %v1585, 0.35355338
        %v1665 = vmul.f32 %v1661, 0.35355338
        %v1666 = vadd.f32 %v1664, %v1311
        %v1667 = vadd.f32 %v1665, %v1311
        %v1668 = vsel %vm1511, %v1666, -inf
        %1669 = vmax.xlane.f32.xlu0 %v1668
        %v1670 = vpop.xlane.xlu0 %1669
        %v1671 = vsel %vm1511, %v1667, -inf
        %1672 = vmax.xlane.f32.xlu0 %v1671
        %v1673 = vpop.xlane.xlu0 %1672
        %v1674 = vsub.f32 %v1666, %v1670
        %v1675 = vsub.f32 %v1667, %v1673
        %v1676 = vmul.f32 %v1674, 1.442695
        %v1677 = vpow.pop %v1676
        %v1678 = vmul.f32 %v1675, 1.442695
        %v1679 = vpow.pop %v1678
        %v1680 = vsel %vm1511, %v1677, 0.0
        %1681 = vadd.xlane.f32.xlu0 %v1680
        %v1682 = vpop.xlane.xlu0 %1681
        %v1683 = vsel %vm1511, %v1679, 0.0
        %1684 = vadd.xlane.f32.xlu0 %v1683
        %v1685 = vpop.xlane.xlu0 %1684
        %v1686 = vrcp.pop %v1682
        %v1687 = vrcp.pop %v1685
        %v1688 = vmul.f32 %v1677, %v1686
        %v1689 = vmul.f32 %v1679, %v1687
        %1690 = vrot.lane.b32.xlu0 %v1503, 96
        %v1691 = vpop.permute.xlu0 %1690
        %v1694 = vsel %vm1511, %v1688, 0
        %1696 = vmatprep.subr.mxu0 0.0
        %1697 = vmatpush1.msra.mxu0 0.0
        %1698 = vmatprep.subr.mxu0 0.0
        %1699 = vmatpush1.msra.mxu0 0.0
        %1700 = vmatprep.subr.mxu0 0.0
        %1701 = vmatpush1.msra.mxu0 0.0
        %1702 = vmatprep.subr.mxu0 0.0
        %1703 = vmatpush1.msra.mxu0 0.0
        %1704 = vmatprep.subr.mxu0 0.0
        %1705 = vmatpush1.msra.mxu0 0.0
        %1706 = vmatprep.subr.mxu0 0.0
        %1707 = vmatpush1.msra.mxu0 0.0
        %1708 = vmatprep.subr.mxu0 0.0
        %1709 = vmatpush1.msra.mxu0 0.0
        %1710 = vmatprep.subr.mxu0 0.0
        %1711 = vmatpush1.msra.mxu0 0.0
        %1712 = vmatprep.subr.mxu0 0.0
        %1713 = vmatpush1.msra.mxu0 0.0
        %1714 = vmatprep.subr.mxu0 0.0
        %1715 = vmatpush1.msra.mxu0 0.0
        %1716 = vmatprep.subr.mxu0 0.0
        %1717 = vmatpush1.msra.mxu0 0.0
        %1718 = vmatprep.subr.mxu0 0.0
        %1719 = vmatpush1.msra.mxu0 0.0
        %1720 = vmatprep.subr.mxu0 0.0
        %1721 = vmatpush1.msra.mxu0 0.0
        %1722 = vmatprep.subr.mxu0 0.0
        %1723 = vmatpush1.msra.mxu0 0.0
        %1724 = vmatprep.subr.mxu0 0.0
        %1725 = vmatpush1.msra.mxu0 0.0
        %1726 = vmatprep.subr.mxu0 0.0
        %1727 = vmatpush1.msra.mxu0 %v1691
        %1728 = vmatprep.subr.mxu0 0.0
        %1729 = vmatpush2.msra.mxu0 0.0
        %1730 = vmatprep.subr.mxu0 0.0
        %1731 = vmatpush2.msra.mxu0 0.0
        %1732 = vmatprep.subr.mxu0 0.0
        %1733 = vmatpush2.msra.mxu0 0.0
        %1734 = vmatprep.subr.mxu0 0.0
        %1735 = vmatpush2.msra.mxu0 0.0
        %1736 = vmatprep.subr.mxu0 0.0
        %1737 = vmatpush2.msra.mxu0 0.0
        %1738 = vmatprep.subr.mxu0 0.0
        %1739 = vmatpush2.msra.mxu0 0.0
        %1740 = vmatprep.subr.mxu0 0.0
        %1741 = vmatpush2.msra.mxu0 0.0
        %1742 = vmatprep.subr.mxu0 0.0
        %1743 = vmatpush2.msra.mxu0 0.0
        %1744 = vmatprep.subr.mxu0 0.0
        %1745 = vmatpush2.msra.mxu0 0.0
        %1746 = vmatprep.subr.mxu0 0.0
        %1747 = vmatpush2.msra.mxu0 0.0
        %1748 = vmatprep.subr.mxu0 0.0
        %1749 = vmatpush2.msra.mxu0 0.0
        %1750 = vmatprep.subr.mxu0 0.0
        %1751 = vmatpush2.msra.mxu0 0.0
        %1752 = vmatprep.subr.mxu0 0.0
        %1753 = vmatpush2.msra.mxu0 0.0
        %1754 = vmatprep.subr.mxu0 0.0
        %1755 = vmatpush2.msra.mxu0 0.0
        %1756 = vmatprep.subr.mxu0 0.0
        %1757 = vmatpush2.msra.mxu0 0.0
        %1758 = vmatprep.subr.mxu0 0.0
        %1759 = vmatpush2.msra.mxu0 0.0
        %1760 = vmatprep.mubr.f32.mxu0 0.0
        %1761 = vmatmul.mubr.f32.gmra.mxu0 %v1694
        %v1762 = vpop.f32.mrf.mxu0
        %v1763 = vadd.f32 0.0, %v1762
        %v1764 = vpop.f32.mrf.mxu0
        %1765 = vdwg.mxu0
        %1766 = vrot.lane.b32.xlu0 %v1508, 96
        %v1767 = vpop.permute.xlu0 %1766
        %v1770 = vsel %vm1511, %v1689, 0
        %1772 = vmatprep.subr.mxu0 0.0
        %1773 = vmatpush1.msra.mxu0 0.0
        %1774 = vmatprep.subr.mxu0 0.0
        %1775 = vmatpush1.msra.mxu0 0.0
        %1776 = vmatprep.subr.mxu0 0.0
        %1777 = vmatpush1.msra.mxu0 0.0
        %1778 = vmatprep.subr.mxu0 0.0
        %1779 = vmatpush1.msra.mxu0 0.0
        %1780 = vmatprep.subr.mxu0 0.0
        %1781 = vmatpush1.msra.mxu0 0.0
        %1782 = vmatprep.subr.mxu0 0.0
        %1783 = vmatpush1.msra.mxu0 0.0
        %1784 = vmatprep.subr.mxu0 0.0
        %1785 = vmatpush1.msra.mxu0 0.0
        %1786 = vmatprep.subr.mxu0 0.0
        %1787 = vmatpush1.msra.mxu0 0.0
        %1788 = vmatprep.subr.mxu0 0.0
        %1789 = vmatpush1.msra.mxu0 0.0
        %1790 = vmatprep.subr.mxu0 0.0
        %1791 = vmatpush1.msra.mxu0 0.0
        %1792 = vmatprep.subr.mxu0 0.0
        %1793 = vmatpush1.msra.mxu0 0.0
        %1794 = vmatprep.subr.mxu0 0.0
        %1795 = vmatpush1.msra.mxu0 0.0
        %1796 = vmatprep.subr.mxu0 0.0
        %1797 = vmatpush1.msra.mxu0 0.0
        %1798 = vmatprep.subr.mxu0 0.0
        %1799 = vmatpush1.msra.mxu0 0.0
        %1800 = vmatprep.subr.mxu0 0.0
        %1801 = vmatpush1.msra.mxu0 0.0
        %1802 = vmatprep.subr.mxu0 0.0
        %1803 = vmatpush1.msra.mxu0 %v1767
        %1804 = vmatprep.subr.mxu0 0.0
        %1805 = vmatpush2.msra.mxu0 0.0
        %1806 = vmatprep.subr.mxu0 0.0
        %1807 = vmatpush2.msra.mxu0 0.0
        %1808 = vmatprep.subr.mxu0 0.0
        %1809 = vmatpush2.msra.mxu0 0.0
        %1810 = vmatprep.subr.mxu0 0.0
        %1811 = vmatpush2.msra.mxu0 0.0
        %1812 = vmatprep.subr.mxu0 0.0
        %1813 = vmatpush2.msra.mxu0 0.0
        %1814 = vmatprep.subr.mxu0 0.0
        %1815 = vmatpush2.msra.mxu0 0.0
        %1816 = vmatprep.subr.mxu0 0.0
        %1817 = vmatpush2.msra.mxu0 0.0
        %1818 = vmatprep.subr.mxu0 0.0
        %1819 = vmatpush2.msra.mxu0 0.0
        %1820 = vmatprep.subr.mxu0 0.0
        %1821 = vmatpush2.msra.mxu0 0.0
        %1822 = vmatprep.subr.mxu0 0.0
        %1823 = vmatpush2.msra.mxu0 0.0
        %1824 = vmatprep.subr.mxu0 0.0
        %1825 = vmatpush2.msra.mxu0 0.0
        %1826 = vmatprep.subr.mxu0 0.0
        %1827 = vmatpush2.msra.mxu0 0.0
        %1828 = vmatprep.subr.mxu0 0.0
        %1829 = vmatpush2.msra.mxu0 0.0
        %1830 = vmatprep.subr.mxu0 0.0
        %1831 = vmatpush2.msra.mxu0 0.0
        %1832 = vmatprep.subr.mxu0 0.0
        %1833 = vmatpush2.msra.mxu0 0.0
        %1834 = vmatprep.subr.mxu0 0.0
        %1835 = vmatpush2.msra.mxu0 0.0
        %1836 = vmatprep.mubr.f32.mxu0 0.0
        %1837 = vmatmul.mubr.f32.gmra.mxu0 %v1770
        %v1838 = vpop.f32.mrf.mxu0
        %v1839 = vadd.f32 0.0, %v1838
        %v1840 = vpop.f32.mrf.mxu0
        %1841 = vdwg.mxu0
        %1842 = vst.msk [vmem:[#allocation3] sm:$0xff] %vm1511, %v1763
        %1843 = vst.msk [vmem:[#allocation3 + $0x8] sm:$0xff] %vm1511, %v1839
        %1844 = vrot.lane.b32.xlu0 %v1422, 120
        %v1845 = vpop.permute.xlu0 %1844
        %1846 = vrot.lane.b32.xlu0 %v1503, 120
        %v1847 = vpop.permute.xlu0 %1846
        %v1848 = vsel %vm1511, %v1845, 0
        %v1850 = vsel %vm1511, %v1847, 0
        %1852 = vmatprep.subr.mxu0 0.0
        %1853 = vmatpush1.xpose.msra.mxu0 0.0
        %1854 = vmatprep.subr.mxu0 0.0
        %1855 = vmatpush1.xpose.msra.mxu0 0.0
        %1856 = vmatprep.subr.mxu0 0.0
        %1857 = vmatpush1.xpose.msra.mxu0 0.0
        %1858 = vmatprep.subr.mxu0 0.0
        %1859 = vmatpush1.xpose.msra.mxu0 0.0
        %1860 = vmatprep.subr.mxu0 0.0
        %1861 = vmatpush1.xpose.msra.mxu0 0.0
        %1862 = vmatprep.subr.mxu0 0.0
        %1863 = vmatpush1.xpose.msra.mxu0 0.0
        %1864 = vmatprep.subr.mxu0 0.0
        %1865 = vmatpush1.xpose.msra.mxu0 0.0
        %1866 = vmatprep.subr.mxu0 0.0
        %1867 = vmatpush1.xpose.msra.mxu0 0.0
        %1868 = vmatprep.subr.mxu0 0.0
        %1869 = vmatpush1.xpose.msra.mxu0 0.0
        %1870 = vmatprep.subr.mxu0 0.0
        %1871 = vmatpush1.xpose.msra.mxu0 0.0
        %1872 = vmatprep.subr.mxu0 0.0
        %1873 = vmatpush1.xpose.msra.mxu0 0.0
        %1874 = vmatprep.subr.mxu0 0.0
        %1875 = vmatpush1.xpose.msra.mxu0 0.0
        %1876 = vmatprep.subr.mxu0 0.0
        %1877 = vmatpush1.xpose.msra.mxu0 0.0
        %1878 = vmatprep.subr.mxu0 0.0
        %1879 = vmatpush1.xpose.msra.mxu0 0.0
        %1880 = vmatprep.subr.mxu0 0.0
        %1881 = vmatpush1.xpose.msra.mxu0 0.0
        %1882 = vmatprep.subr.mxu0 0.0
        %1883 = vmatpush1.xpose.msra.mxu0 %v1850
        %1884 = vmatprep.subr.mxu0 0.0
        %1885 = vmatpush2.xpose.msra.mxu0 0.0
        %1886 = vmatprep.subr.mxu0 0.0
        %1887 = vmatpush2.xpose.msra.mxu0 0.0
        %1888 = vmatprep.subr.mxu0 0.0
        %1889 = vmatpush2.xpose.msra.mxu0 0.0
        %1890 = vmatprep.subr.mxu0 0.0
        %1891 = vmatpush2.xpose.msra.mxu0 0.0
        %1892 = vmatprep.subr.mxu0 0.0
        %1893 = vmatpush2.xpose.msra.mxu0 0.0
        %1894 = vmatprep.subr.mxu0 0.0
        %1895 = vmatpush2.xpose.msra.mxu0 0.0
        %1896 = vmatprep.subr.mxu0 0.0
        %1897 = vmatpush2.xpose.msra.mxu0 0.0
        %1898 = vmatprep.subr.mxu0 0.0
        %1899 = vmatpush2.xpose.msra.mxu0 0.0
        %1900 = vmatprep.subr.mxu0 0.0
        %1901 = vmatpush2.xpose.msra.mxu0 0.0
        %1902 = vmatprep.subr.mxu0 0.0
        %1903 = vmatpush2.xpose.msra.mxu0 0.0
        %1904 = vmatprep.subr.mxu0 0.0
        %1905 = vmatpush2.xpose.msra.mxu0 0.0
        %1906 = vmatprep.subr.mxu0 0.0
        %1907 = vmatpush2.xpose.msra.mxu0 0.0
        %1908 = vmatprep.subr.mxu0 0.0
        %1909 = vmatpush2.xpose.msra.mxu0 0.0
        %1910 = vmatprep.subr.mxu0 0.0
        %1911 = vmatpush2.xpose.msra.mxu0 0.0
        %1912 = vmatprep.subr.mxu0 0.0
        %1913 = vmatpush2.xpose.msra.mxu0 0.0
        %1914 = vmatprep.subr.mxu0 0.0
        %1915 = vmatpush2.xpose.msra.mxu0 0.0
        %1916 = vmatprep.mubr.f32.mxu0 0.0
        %1917 = vmatmul.mubr.f32.gmra.mxu0 %v1848
        %v1918 = vpop.f32.mrf.mxu0
        %v1919 = vadd.f32 0.0, %v1918
        %v1920 = vpop.f32.mrf.mxu0
        %1921 = vdwg.mxu0
        %1922 = vrot.lane.b32.xlu0 %v1427, 120
        %v1923 = vpop.permute.xlu0 %1922
        %1924 = vrot.lane.b32.xlu0 %v1508, 120
        %v1925 = vpop.permute.xlu0 %1924
        %v1926 = vsel %vm1511, %v1923, 0
        %v1928 = vsel %vm1511, %v1925, 0
        %1930 = vmatprep.subr.mxu0 0.0
        %1931 = vmatpush1.xpose.msra.mxu0 0.0
        %1932 = vmatprep.subr.mxu0 0.0
        %1933 = vmatpush1.xpose.msra.mxu0 0.0
        %1934 = vmatprep.subr.mxu0 0.0
        %1935 = vmatpush1.xpose.msra.mxu0 0.0
        %1936 = vmatprep.subr.mxu0 0.0
        %1937 = vmatpush1.xpose.msra.mxu0 0.0
        %1938 = vmatprep.subr.mxu0 0.0
        %1939 = vmatpush1.xpose.msra.mxu0 0.0
        %1940 = vmatprep.subr.mxu0 0.0
        %1941 = vmatpush1.xpose.msra.mxu0 0.0
        %1942 = vmatprep.subr.mxu0 0.0
        %1943 = vmatpush1.xpose.msra.mxu0 0.0
        %1944 = vmatprep.subr.mxu0 0.0
        %1945 = vmatpush1.xpose.msra.mxu0 0.0
        %1946 = vmatprep.subr.mxu0 0.0
        %1947 = vmatpush1.xpose.msra.mxu0 0.0
        %1948 = vmatprep.subr.mxu0 0.0
        %1949 = vmatpush1.xpose.msra.mxu0 0.0
        %1950 = vmatprep.subr.mxu0 0.0
        %1951 = vmatpush1.xpose.msra.mxu0 0.0
        %1952 = vmatprep.subr.mxu0 0.0
        %1953 = vmatpush1.xpose.msra.mxu0 0.0
        %1954 = vmatprep.subr.mxu0 0.0
        %1955 = vmatpush1.xpose.msra.mxu0 0.0
        %1956 = vmatprep.subr.mxu0 0.0
        %1957 = vmatpush1.xpose.msra.mxu0 0.0
        %1958 = vmatprep.subr.mxu0 0.0
        %1959 = vmatpush1.xpose.msra.mxu0 0.0
        %1960 = vmatprep.subr.mxu0 0.0
        %1961 = vmatpush1.xpose.msra.mxu0 %v1928
        %1962 = vmatprep.subr.mxu0 0.0
        %1963 = vmatpush2.xpose.msra.mxu0 0.0
        %1964 = vmatprep.subr.mxu0 0.0
        %1965 = vmatpush2.xpose.msra.mxu0 0.0
        %1966 = vmatprep.subr.mxu0 0.0
        %1967 = vmatpush2.xpose.msra.mxu0 0.0
        %1968 = vmatprep.subr.mxu0 0.0
        %1969 = vmatpush2.xpose.msra.mxu0 0.0
        %1970 = vmatprep.subr.mxu0 0.0
        %1971 = vmatpush2.xpose.msra.mxu0 0.0
        %1972 = vmatprep.subr.mxu0 0.0
        %1973 = vmatpush2.xpose.msra.mxu0 0.0
        %1974 = vmatprep.subr.mxu0 0.0
        %1975 = vmatpush2.xpose.msra.mxu0 0.0
        %1976 = vmatprep.subr.mxu0 0.0
        %1977 = vmatpush2.xpose.msra.mxu0 0.0
        %1978 = vmatprep.subr.mxu0 0.0
        %1979 = vmatpush2.xpose.msra.mxu0 0.0
        %1980 = vmatprep.subr.mxu0 0.0
        %1981 = vmatpush2.xpose.msra.mxu0 0.0
        %1982 = vmatprep.subr.mxu0 0.0
        %1983 = vmatpush2.xpose.msra.mxu0 0.0
        %1984 = vmatprep.subr.mxu0 0.0
        %1985 = vmatpush2.xpose.msra.mxu0 0.0
        %1986 = vmatprep.subr.mxu0 0.0
        %1987 = vmatpush2.xpose.msra.mxu0 0.0
        %1988 = vmatprep.subr.mxu0 0.0
        %1989 = vmatpush2.xpose.msra.mxu0 0.0
        %1990 = vmatprep.subr.mxu0 0.0
        %1991 = vmatpush2.xpose.msra.mxu0 0.0
        %1992 = vmatprep.subr.mxu0 0.0
        %1993 = vmatpush2.xpose.msra.mxu0 0.0
        %1994 = vmatprep.mubr.f32.mxu0 0.0
        %1995 = vmatmul.mubr.f32.gmra.mxu0 %v1926
        %v1996 = vpop.f32.mrf.mxu0
        %v1997 = vadd.f32 0.0, %v1996
        %v1998 = vpop.f32.mrf.mxu0
        %1999 = vdwg.mxu0
        %v2000 = vmul.f32 %v1919, 0.35355338
        %v2001 = vmul.f32 %v1997, 0.35355338
        %v2002 = vadd.f32 %v2000, %v1311
        %v2003 = vadd.f32 %v2001, %v1311
        %v2004 = vsel %vm1511, %v2002, -inf
        %2005 = vmax.xlane.f32.xlu0 %v2004
        %v2006 = vpop.xlane.xlu0 %2005
        %v2007 = vsel %vm1511, %v2003, -inf
        %2008 = vmax.xlane.f32.xlu0 %v2007
        %v2009 = vpop.xlane.xlu0 %2008
        %v2010 = vsub.f32 %v2002, %v2006
        %v2011 = vsub.f32 %v2003, %v2009
        %v2012 = vmul.f32 %v2010, 1.442695
        %v2013 = vpow.pop %v2012
        %v2014 = vmul.f32 %v2011, 1.442695
        %v2015 = vpow.pop %v2014
        %v2016 = vsel %vm1511, %v2013, 0.0
        %2017 = vadd.xlane.f32.xlu0 %v2016
        %v2018 = vpop.xlane.xlu0 %2017
        %v2019 = vsel %vm1511, %v2015, 0.0
        %2020 = vadd.xlane.f32.xlu0 %v2019
        %v2021 = vpop.xlane.xlu0 %2020
        %v2022 = vrcp.pop %v2018
        %v2023 = vrcp.pop %v2021
        %v2024 = vmul.f32 %v2013, %v2022
        %v2025 = vmul.f32 %v2015, %v2023
        %2026 = vrot.lane.b32.xlu0 %v1503, 88
        %v2027 = vpop.permute.xlu0 %2026
        %v2030 = vsel %vm1511, %v2024, 0
        %2032 = vmatprep.subr.mxu0 0.0
        %2033 = vmatpush1.msra.mxu0 0.0
        %2034 = vmatprep.subr.mxu0 0.0
        %2035 = vmatpush1.msra.mxu0 0.0
        %2036 = vmatprep.subr.mxu0 0.0
        %2037 = vmatpush1.msra.mxu0 0.0
        %2038 = vmatprep.subr.mxu0 0.0
        %2039 = vmatpush1.msra.mxu0 0.0
        %2040 = vmatprep.subr.mxu0 0.0
        %2041 = vmatpush1.msra.mxu0 0.0
        %2042 = vmatprep.subr.mxu0 0.0
        %2043 = vmatpush1.msra.mxu0 0.0
        %2044 = vmatprep.subr.mxu0 0.0
        %2045 = vmatpush1.msra.mxu0 0.0
        %2046 = vmatprep.subr.mxu0 0.0
        %2047 = vmatpush1.msra.mxu0 0.0
        %2048 = vmatprep.subr.mxu0 0.0
        %2049 = vmatpush1.msra.mxu0 0.0
        %2050 = vmatprep.subr.mxu0 0.0
        %2051 = vmatpush1.msra.mxu0 0.0
        %2052 = vmatprep.subr.mxu0 0.0
        %2053 = vmatpush1.msra.mxu0 0.0
        %2054 = vmatprep.subr.mxu0 0.0
        %2055 = vmatpush1.msra.mxu0 0.0
        %2056 = vmatprep.subr.mxu0 0.0
        %2057 = vmatpush1.msra.mxu0 0.0
        %2058 = vmatprep.subr.mxu0 0.0
        %2059 = vmatpush1.msra.mxu0 0.0
        %2060 = vmatprep.subr.mxu0 0.0
        %2061 = vmatpush1.msra.mxu0 0.0
        %2062 = vmatprep.subr.mxu0 0.0
        %2063 = vmatpush1.msra.mxu0 %v2027
        %2064 = vmatprep.subr.mxu0 0.0
        %2065 = vmatpush2.msra.mxu0 0.0
        %2066 = vmatprep.subr.mxu0 0.0
        %2067 = vmatpush2.msra.mxu0 0.0
        %2068 = vmatprep.subr.mxu0 0.0
        %2069 = vmatpush2.msra.mxu0 0.0
        %2070 = vmatprep.subr.mxu0 0.0
        %2071 = vmatpush2.msra.mxu0 0.0
        %2072 = vmatprep.subr.mxu0 0.0
        %2073 = vmatpush2.msra.mxu0 0.0
        %2074 = vmatprep.subr.mxu0 0.0
        %2075 = vmatpush2.msra.mxu0 0.0
        %2076 = vmatprep.subr.mxu0 0.0
        %2077 = vmatpush2.msra.mxu0 0.0
        %2078 = vmatprep.subr.mxu0 0.0
        %2079 = vmatpush2.msra.mxu0 0.0
        %2080 = vmatprep.subr.mxu0 0.0
        %2081 = vmatpush2.msra.mxu0 0.0
        %2082 = vmatprep.subr.mxu0 0.0
        %2083 = vmatpush2.msra.mxu0 0.0
        %2084 = vmatprep.subr.mxu0 0.0
        %2085 = vmatpush2.msra.mxu0 0.0
        %2086 = vmatprep.subr.mxu0 0.0
        %2087 = vmatpush2.msra.mxu0 0.0
        %2088 = vmatprep.subr.mxu0 0.0
        %2089 = vmatpush2.msra.mxu0 0.0
        %2090 = vmatprep.subr.mxu0 0.0
        %2091 = vmatpush2.msra.mxu0 0.0
        %2092 = vmatprep.subr.mxu0 0.0
        %2093 = vmatpush2.msra.mxu0 0.0
        %2094 = vmatprep.subr.mxu0 0.0
        %2095 = vmatpush2.msra.mxu0 0.0
        %2096 = vmatprep.mubr.f32.mxu0 0.0
        %2097 = vmatmul.mubr.f32.gmra.mxu0 %v2030
        %v2098 = vpop.f32.mrf.mxu0
        %v2099 = vadd.f32 0.0, %v2098
        %v2100 = vpop.f32.mrf.mxu0
        %2101 = vdwg.mxu0
        %2102 = vrot.lane.b32.xlu0 %v1508, 88
        %v2103 = vpop.permute.xlu0 %2102
        %v2106 = vsel %vm1511, %v2025, 0
        %2108 = vmatprep.subr.mxu0 0.0
        %2109 = vmatpush1.msra.mxu0 0.0
        %2110 = vmatprep.subr.mxu0 0.0
        %2111 = vmatpush1.msra.mxu0 0.0
        %2112 = vmatprep.subr.mxu0 0.0
        %2113 = vmatpush1.msra.mxu0 0.0
        %2114 = vmatprep.subr.mxu0 0.0
        %2115 = vmatpush1.msra.mxu0 0.0
        %2116 = vmatprep.subr.mxu0 0.0
        %2117 = vmatpush1.msra.mxu0 0.0
        %2118 = vmatprep.subr.mxu0 0.0
        %2119 = vmatpush1.msra.mxu0 0.0
        %2120 = vmatprep.subr.mxu0 0.0
        %2121 = vmatpush1.msra.mxu0 0.0
        %2122 = vmatprep.subr.mxu0 0.0
        %2123 = vmatpush1.msra.mxu0 0.0
        %2124 = vmatprep.subr.mxu0 0.0
        %2125 = vmatpush1.msra.mxu0 0.0
        %2126 = vmatprep.subr.mxu0 0.0
        %2127 = vmatpush1.msra.mxu0 0.0
        %2128 = vmatprep.subr.mxu0 0.0
        %2129 = vmatpush1.msra.mxu0 0.0
        %2130 = vmatprep.subr.mxu0 0.0
        %2131 = vmatpush1.msra.mxu0 0.0
        %2132 = vmatprep.subr.mxu0 0.0
        %2133 = vmatpush1.msra.mxu0 0.0
        %2134 = vmatprep.subr.mxu0 0.0
        %2135 = vmatpush1.msra.mxu0 0.0
        %2136 = vmatprep.subr.mxu0 0.0
        %2137 = vmatpush1.msra.mxu0 0.0
        %2138 = vmatprep.subr.mxu0 0.0
        %2139 = vmatpush1.msra.mxu0 %v2103
        %2140 = vmatprep.subr.mxu0 0.0
        %2141 = vmatpush2.msra.mxu0 0.0
        %2142 = vmatprep.subr.mxu0 0.0
        %2143 = vmatpush2.msra.mxu0 0.0
        %2144 = vmatprep.subr.mxu0 0.0
        %2145 = vmatpush2.msra.mxu0 0.0
        %2146 = vmatprep.subr.mxu0 0.0
        %2147 = vmatpush2.msra.mxu0 0.0
        %2148 = vmatprep.subr.mxu0 0.0
        %2149 = vmatpush2.msra.mxu0 0.0
        %2150 = vmatprep.subr.mxu0 0.0
        %2151 = vmatpush2.msra.mxu0 0.0
        %2152 = vmatprep.subr.mxu0 0.0
        %2153 = vmatpush2.msra.mxu0 0.0
        %2154 = vmatprep.subr.mxu0 0.0
        %2155 = vmatpush2.msra.mxu0 0.0
        %2156 = vmatprep.subr.mxu0 0.0
        %2157 = vmatpush2.msra.mxu0 0.0
        %2158 = vmatprep.subr.mxu0 0.0
        %2159 = vmatpush2.msra.mxu0 0.0
        %2160 = vmatprep.subr.mxu0 0.0
        %2161 = vmatpush2.msra.mxu0 0.0
        %2162 = vmatprep.subr.mxu0 0.0
        %2163 = vmatpush2.msra.mxu0 0.0
        %2164 = vmatprep.subr.mxu0 0.0
        %2165 = vmatpush2.msra.mxu0 0.0
        %2166 = vmatprep.subr.mxu0 0.0
        %2167 = vmatpush2.msra.mxu0 0.0
        %2168 = vmatprep.subr.mxu0 0.0
        %2169 = vmatpush2.msra.mxu0 0.0
        %2170 = vmatprep.subr.mxu0 0.0
        %2171 = vmatpush2.msra.mxu0 0.0
        %2172 = vmatprep.mubr.f32.mxu0 0.0
        %2173 = vmatmul.mubr.f32.gmra.mxu0 %v2106
        %v2174 = vpop.f32.mrf.mxu0
        %v2175 = vadd.f32 0.0, %v2174
        %v2176 = vpop.f32.mrf.mxu0
        %2177 = vdwg.mxu0
        %2180 = vrot.lane.b32.xlu0 %v2099, 8
        %v2181 = vpop.permute.xlu0 %2180
        %2182 = vrot.lane.b32.xlu0 %v2175, 8
        %v2183 = vpop.permute.xlu0 %2182
        %vm2186 = vcmask 130112
        %2187 = vst.msk [vmem:[#allocation3] sm:$0xff] %vm2186, %v2181
        %2188 = vst.msk [vmem:[#allocation3 + $0x8] sm:$0xff] %vm2186, %v2183
        %2189 = vrot.lane.b32.xlu0 %v1422, 112
        %v2190 = vpop.permute.xlu0 %2189
        %2191 = vrot.lane.b32.xlu0 %v1503, 112
        %v2192 = vpop.permute.xlu0 %2191
        %v2193 = vsel %vm1511, %v2190, 0
        %v2195 = vsel %vm1511, %v2192, 0
        %2197 = vmatprep.subr.mxu0 0.0
        %2198 = vmatpush1.xpose.msra.mxu0 0.0
        %2199 = vmatprep.subr.mxu0 0.0
        %2200 = vmatpush1.xpose.msra.mxu0 0.0
        %2201 = vmatprep.subr.mxu0 0.0
        %2202 = vmatpush1.xpose.msra.mxu0 0.0
        %2203 = vmatprep.subr.mxu0 0.0
        %2204 = vmatpush1.xpose.msra.mxu0 0.0
        %2205 = vmatprep.subr.mxu0 0.0
        %2206 = vmatpush1.xpose.msra.mxu0 0.0
        %2207 = vmatprep.subr.mxu0 0.0
        %2208 = vmatpush1.xpose.msra.mxu0 0.0
        %2209 = vmatprep.subr.mxu0 0.0
        %2210 = vmatpush1.xpose.msra.mxu0 0.0
        %2211 = vmatprep.subr.mxu0 0.0
        %2212 = vmatpush1.xpose.msra.mxu0 0.0
        %2213 = vmatprep.subr.mxu0 0.0
        %2214 = vmatpush1.xpose.msra.mxu0 0.0
        %2215 = vmatprep.subr.mxu0 0.0
        %2216 = vmatpush1.xpose.msra.mxu0 0.0
        %2217 = vmatprep.subr.mxu0 0.0
        %2218 = vmatpush1.xpose.msra.mxu0 0.0
        %2219 = vmatprep.subr.mxu0 0.0
        %2220 = vmatpush1.xpose.msra.mxu0 0.0
        %2221 = vmatprep.subr.mxu0 0.0
        %2222 = vmatpush1.xpose.msra.mxu0 0.0
        %2223 = vmatprep.subr.mxu0 0.0
        %2224 = vmatpush1.xpose.msra.mxu0 0.0
        %2225 = vmatprep.subr.mxu0 0.0
        %2226 = vmatpush1.xpose.msra.mxu0 0.0
        %2227 = vmatprep.subr.mxu0 0.0
        %2228 = vmatpush1.xpose.msra.mxu0 %v2195
        %2229 = vmatprep.subr.mxu0 0.0
        %2230 = vmatpush2.xpose.msra.mxu0 0.0
        %2231 = vmatprep.subr.mxu0 0.0
        %2232 = vmatpush2.xpose.msra.mxu0 0.0
        %2233 = vmatprep.subr.mxu0 0.0
        %2234 = vmatpush2.xpose.msra.mxu0 0.0
        %2235 = vmatprep.subr.mxu0 0.0
        %2236 = vmatpush2.xpose.msra.mxu0 0.0
        %2237 = vmatprep.subr.mxu0 0.0
        %2238 = vmatpush2.xpose.msra.mxu0 0.0
        %2239 = vmatprep.subr.mxu0 0.0
        %2240 = vmatpush2.xpose.msra.mxu0 0.0
        %2241 = vmatprep.subr.mxu0 0.0
        %2242 = vmatpush2.xpose.msra.mxu0 0.0
        %2243 = vmatprep.subr.mxu0 0.0
        %2244 = vmatpush2.xpose.msra.mxu0 0.0
        %2245 = vmatprep.subr.mxu0 0.0
        %2246 = vmatpush2.xpose.msra.mxu0 0.0
        %2247 = vmatprep.subr.mxu0 0.0
        %2248 = vmatpush2.xpose.msra.mxu0 0.0
        %2249 = vmatprep.subr.mxu0 0.0
        %2250 = vmatpush2.xpose.msra.mxu0 0.0
        %2251 = vmatprep.subr.mxu0 0.0
        %2252 = vmatpush2.xpose.msra.mxu0 0.0
        %2253 = vmatprep.subr.mxu0 0.0
        %2254 = vmatpush2.xpose.msra.mxu0 0.0
        %2255 = vmatprep.subr.mxu0 0.0
        %2256 = vmatpush2.xpose.msra.mxu0 0.0
        %2257 = vmatprep.subr.mxu0 0.0
        %2258 = vmatpush2.xpose.msra.mxu0 0.0
        %2259 = vmatprep.subr.mxu0 0.0
        %2260 = vmatpush2.xpose.msra.mxu0 0.0
        %2261 = vmatprep.mubr.f32.mxu0 0.0
        %2262 = vmatmul.mubr.f32.gmra.mxu0 %v2193
        %v2263 = vpop.f32.mrf.mxu0
        %v2264 = vadd.f32 0.0, %v2263
        %v2265 = vpop.f32.mrf.mxu0
        %2266 = vdwg.mxu0
        %2267 = vrot.lane.b32.xlu0 %v1427, 112
        %v2268 = vpop.permute.xlu0 %2267
        %2269 = vrot.lane.b32.xlu0 %v1508, 112
        %v2270 = vpop.permute.xlu0 %2269
        %v2271 = vsel %vm1511, %v2268, 0
        %v2273 = vsel %vm1511, %v2270, 0
        %2275 = vmatprep.subr.mxu0 0.0
        %2276 = vmatpush1.xpose.msra.mxu0 0.0
        %2277 = vmatprep.subr.mxu0 0.0
        %2278 = vmatpush1.xpose.msra.mxu0 0.0
        %2279 = vmatprep.subr.mxu0 0.0
        %2280 = vmatpush1.xpose.msra.mxu0 0.0
        %2281 = vmatprep.subr.mxu0 0.0
        %2282 = vmatpush1.xpose.msra.mxu0 0.0
        %2283 = vmatprep.subr.mxu0 0.0
        %2284 = vmatpush1.xpose.msra.mxu0 0.0
        %2285 = vmatprep.subr.mxu0 0.0
        %2286 = vmatpush1.xpose.msra.mxu0 0.0
        %2287 = vmatprep.subr.mxu0 0.0
        %2288 = vmatpush1.xpose.msra.mxu0 0.0
        %2289 = vmatprep.subr.mxu0 0.0
        %2290 = vmatpush1.xpose.msra.mxu0 0.0
        %2291 = vmatprep.subr.mxu0 0.0
        %2292 = vmatpush1.xpose.msra.mxu0 0.0
        %2293 = vmatprep.subr.mxu0 0.0
        %2294 = vmatpush1.xpose.msra.mxu0 0.0
        %2295 = vmatprep.subr.mxu0 0.0
        %2296 = vmatpush1.xpose.msra.mxu0 0.0
        %2297 = vmatprep.subr.mxu0 0.0
        %2298 = vmatpush1.xpose.msra.mxu0 0.0
        %2299 = vmatprep.subr.mxu0 0.0
        %2300 = vmatpush1.xpose.msra.mxu0 0.0
        %2301 = vmatprep.subr.mxu0 0.0
        %2302 = vmatpush1.xpose.msra.mxu0 0.0
        %2303 = vmatprep.subr.mxu0 0.0
        %2304 = vmatpush1.xpose.msra.mxu0 0.0
        %2305 = vmatprep.subr.mxu0 0.0
        %2306 = vmatpush1.xpose.msra.mxu0 %v2273
        %2307 = vmatprep.subr.mxu0 0.0
        %2308 = vmatpush2.xpose.msra.mxu0 0.0
        %2309 = vmatprep.subr.mxu0 0.0
        %2310 = vmatpush2.xpose.msra.mxu0 0.0
        %2311 = vmatprep.subr.mxu0 0.0
        %2312 = vmatpush2.xpose.msra.mxu0 0.0
        %2313 = vmatprep.subr.mxu0 0.0
        %2314 = vmatpush2.xpose.msra.mxu0 0.0
        %2315 = vmatprep.subr.mxu0 0.0
        %2316 = vmatpush2.xpose.msra.mxu0 0.0
        %2317 = vmatprep.subr.mxu0 0.0
        %2318 = vmatpush2.xpose.msra.mxu0 0.0
        %2319 = vmatprep.subr.mxu0 0.0
        %2320 = vmatpush2.xpose.msra.mxu0 0.0
        %2321 = vmatprep.subr.mxu0 0.0
        %2322 = vmatpush2.xpose.msra.mxu0 0.0
        %2323 = vmatprep.subr.mxu0 0.0
        %2324 = vmatpush2.xpose.msra.mxu0 0.0
        %2325 = vmatprep.subr.mxu0 0.0
        %2326 = vmatpush2.xpose.msra.mxu0 0.0
        %2327 = vmatprep.subr.mxu0 0.0
        %2328 = vmatpush2.xpose.msra.mxu0 0.0
        %2329 = vmatprep.subr.mxu0 0.0
        %2330 = vmatpush2.xpose.msra.mxu0 0.0
        %2331 = vmatprep.subr.mxu0 0.0
        %2332 = vmatpush2.xpose.msra.mxu0 0.0
        %2333 = vmatprep.subr.mxu0 0.0
        %2334 = vmatpush2.xpose.msra.mxu0 0.0
        %2335 = vmatprep.subr.mxu0 0.0
        %2336 = vmatpush2.xpose.msra.mxu0 0.0
        %2337 = vmatprep.subr.mxu0 0.0
        %2338 = vmatpush2.xpose.msra.mxu0 0.0
        %2339 = vmatprep.mubr.f32.mxu0 0.0
        %2340 = vmatmul.mubr.f32.gmra.mxu0 %v2271
        %v2341 = vpop.f32.mrf.mxu0
        %v2342 = vadd.f32 0.0, %v2341
        %v2343 = vpop.f32.mrf.mxu0
        %2344 = vdwg.mxu0
        %v2345 = vmul.f32 %v2264, 0.35355338
        %v2346 = vmul.f32 %v2342, 0.35355338
        %v2347 = vadd.f32 %v2345, %v1311
        %v2348 = vadd.f32 %v2346, %v1311
        %v2349 = vsel %vm1511, %v2347, -inf
        %2350 = vmax.xlane.f32.xlu0 %v2349
        %v2351 = vpop.xlane.xlu0 %2350
        %v2352 = vsel %vm1511, %v2348, -inf
        %2353 = vmax.xlane.f32.xlu0 %v2352
        %v2354 = vpop.xlane.xlu0 %2353
        %v2355 = vsub.f32 %v2347, %v2351
        %v2356 = vsub.f32 %v2348, %v2354
        %v2357 = vmul.f32 %v2355, 1.442695
        %v2358 = vpow.pop %v2357
        %v2359 = vmul.f32 %v2356, 1.442695
        %v2360 = vpow.pop %v2359
        %v2361 = vsel %vm1511, %v2358, 0.0
        %2362 = vadd.xlane.f32.xlu0 %v2361
        %v2363 = vpop.xlane.xlu0 %2362
        %v2364 = vsel %vm1511, %v2360, 0.0
        %2365 = vadd.xlane.f32.xlu0 %v2364
        %v2366 = vpop.xlane.xlu0 %2365
        %v2367 = vrcp.pop %v2363
        %v2368 = vrcp.pop %v2366
        %v2369 = vmul.f32 %v2358, %v2367
        %v2370 = vmul.f32 %v2360, %v2368
        %2371 = vrot.lane.b32.xlu0 %v1503, 80
        %v2372 = vpop.permute.xlu0 %2371
        %v2375 = vsel %vm1511, %v2369, 0
        %2377 = vmatprep.subr.mxu0 0.0
        %2378 = vmatpush1.msra.mxu0 0.0
        %2379 = vmatprep.subr.mxu0 0.0
        %2380 = vmatpush1.msra.mxu0 0.0
        %2381 = vmatprep.subr.mxu0 0.0
        %2382 = vmatpush1.msra.mxu0 0.0
        %2383 = vmatprep.subr.mxu0 0.0
        %2384 = vmatpush1.msra.mxu0 0.0
        %2385 = vmatprep.subr.mxu0 0.0
        %2386 = vmatpush1.msra.mxu0 0.0
        %2387 = vmatprep.subr.mxu0 0.0
        %2388 = vmatpush1.msra.mxu0 0.0
        %2389 = vmatprep.subr.mxu0 0.0
        %2390 = vmatpush1.msra.mxu0 0.0
        %2391 = vmatprep.subr.mxu0 0.0
        %2392 = vmatpush1.msra.mxu0 0.0
        %2393 = vmatprep.subr.mxu0 0.0
        %2394 = vmatpush1.msra.mxu0 0.0
        %2395 = vmatprep.subr.mxu0 0.0
        %2396 = vmatpush1.msra.mxu0 0.0
        %2397 = vmatprep.subr.mxu0 0.0
        %2398 = vmatpush1.msra.mxu0 0.0
        %2399 = vmatprep.subr.mxu0 0.0
        %2400 = vmatpush1.msra.mxu0 0.0
        %2401 = vmatprep.subr.mxu0 0.0
        %2402 = vmatpush1.msra.mxu0 0.0
        %2403 = vmatprep.subr.mxu0 0.0
        %2404 = vmatpush1.msra.mxu0 0.0
        %2405 = vmatprep.subr.mxu0 0.0
        %2406 = vmatpush1.msra.mxu0 0.0
        %2407 = vmatprep.subr.mxu0 0.0
        %2408 = vmatpush1.msra.mxu0 %v2372
        %2409 = vmatprep.subr.mxu0 0.0
        %2410 = vmatpush2.msra.mxu0 0.0
        %2411 = vmatprep.subr.mxu0 0.0
        %2412 = vmatpush2.msra.mxu0 0.0
        %2413 = vmatprep.subr.mxu0 0.0
        %2414 = vmatpush2.msra.mxu0 0.0
        %2415 = vmatprep.subr.mxu0 0.0
        %2416 = vmatpush2.msra.mxu0 0.0
        %2417 = vmatprep.subr.mxu0 0.0
        %2418 = vmatpush2.msra.mxu0 0.0
        %2419 = vmatprep.subr.mxu0 0.0
        %2420 = vmatpush2.msra.mxu0 0.0
        %2421 = vmatprep.subr.mxu0 0.0
        %2422 = vmatpush2.msra.mxu0 0.0
        %2423 = vmatprep.subr.mxu0 0.0
        %2424 = vmatpush2.msra.mxu0 0.0
        %2425 = vmatprep.subr.mxu0 0.0
        %2426 = vmatpush2.msra.mxu0 0.0
        %2427 = vmatprep.subr.mxu0 0.0
        %2428 = vmatpush2.msra.mxu0 0.0
        %2429 = vmatprep.subr.mxu0 0.0
        %2430 = vmatpush2.msra.mxu0 0.0
        %2431 = vmatprep.subr.mxu0 0.0
        %2432 = vmatpush2.msra.mxu0 0.0
        %2433 = vmatprep.subr.mxu0 0.0
        %2434 = vmatpush2.msra.mxu0 0.0
        %2435 = vmatprep.subr.mxu0 0.0
        %2436 = vmatpush2.msra.mxu0 0.0
        %2437 = vmatprep.subr.mxu0 0.0
        %2438 = vmatpush2.msra.mxu0 0.0
        %2439 = vmatprep.subr.mxu0 0.0
        %2440 = vmatpush2.msra.mxu0 0.0
        %2441 = vmatprep.mubr.f32.mxu0 0.0
        %2442 = vmatmul.mubr.f32.gmra.mxu0 %v2375
        %v2443 = vpop.f32.mrf.mxu0
        %v2444 = vadd.f32 0.0, %v2443
        %v2445 = vpop.f32.mrf.mxu0
        %2446 = vdwg.mxu0
        %2447 = vrot.lane.b32.xlu0 %v1508, 80
        %v2448 = vpop.permute.xlu0 %2447
        %v2451 = vsel %vm1511, %v2370, 0
        %2453 = vmatprep.subr.mxu0 0.0
        %2454 = vmatpush1.msra.mxu0 0.0
        %2455 = vmatprep.subr.mxu0 0.0
        %2456 = vmatpush1.msra.mxu0 0.0
        %2457 = vmatprep.subr.mxu0 0.0
        %2458 = vmatpush1.msra.mxu0 0.0
        %2459 = vmatprep.subr.mxu0 0.0
        %2460 = vmatpush1.msra.mxu0 0.0
        %2461 = vmatprep.subr.mxu0 0.0
        %2462 = vmatpush1.msra.mxu0 0.0
        %2463 = vmatprep.subr.mxu0 0.0
        %2464 = vmatpush1.msra.mxu0 0.0
        %2465 = vmatprep.subr.mxu0 0.0
        %2466 = vmatpush1.msra.mxu0 0.0
        %2467 = vmatprep.subr.mxu0 0.0
        %2468 = vmatpush1.msra.mxu0 0.0
        %2469 = vmatprep.subr.mxu0 0.0
        %2470 = vmatpush1.msra.mxu0 0.0
        %2471 = vmatprep.subr.mxu0 0.0
        %2472 = vmatpush1.msra.mxu0 0.0
        %2473 = vmatprep.subr.mxu0 0.0
        %2474 = vmatpush1.msra.mxu0 0.0
        %2475 = vmatprep.subr.mxu0 0.0
        %2476 = vmatpush1.msra.mxu0 0.0
        %2477 = vmatprep.subr.mxu0 0.0
        %2478 = vmatpush1.msra.mxu0 0.0
        %2479 = vmatprep.subr.mxu0 0.0
        %2480 = vmatpush1.msra.mxu0 0.0
        %2481 = vmatprep.subr.mxu0 0.0
        %2482 = vmatpush1.msra.mxu0 0.0
        %2483 = vmatprep.subr.mxu0 0.0
        %2484 = vmatpush1.msra.mxu0 %v2448
        %2485 = vmatprep.subr.mxu0 0.0
        %2486 = vmatpush2.msra.mxu0 0.0
        %2487 = vmatprep.subr.mxu0 0.0
        %2488 = vmatpush2.msra.mxu0 0.0
        %2489 = vmatprep.subr.mxu0 0.0
        %2490 = vmatpush2.msra.mxu0 0.0
        %2491 = vmatprep.subr.mxu0 0.0
        %2492 = vmatpush2.msra.mxu0 0.0
        %2493 = vmatprep.subr.mxu0 0.0
        %2494 = vmatpush2.msra.mxu0 0.0
        %2495 = vmatprep.subr.mxu0 0.0
        %2496 = vmatpush2.msra.mxu0 0.0
        %2497 = vmatprep.subr.mxu0 0.0
        %2498 = vmatpush2.msra.mxu0 0.0
        %2499 = vmatprep.subr.mxu0 0.0
        %2500 = vmatpush2.msra.mxu0 0.0
        %2501 = vmatprep.subr.mxu0 0.0
        %2502 = vmatpush2.msra.mxu0 0.0
        %2503 = vmatprep.subr.mxu0 0.0
        %2504 = vmatpush2.msra.mxu0 0.0
        %2505 = vmatprep.subr.mxu0 0.0
        %2506 = vmatpush2.msra.mxu0 0.0
        %2507 = vmatprep.subr.mxu0 0.0
        %2508 = vmatpush2.msra.mxu0 0.0
        %2509 = vmatprep.subr.mxu0 0.0
        %2510 = vmatpush2.msra.mxu0 0.0
        %2511 = vmatprep.subr.mxu0 0.0
        %2512 = vmatpush2.msra.mxu0 0.0
        %2513 = vmatprep.subr.mxu0 0.0
        %2514 = vmatpush2.msra.mxu0 0.0
        %2515 = vmatprep.subr.mxu0 0.0
        %2516 = vmatpush2.msra.mxu0 0.0
        %2517 = vmatprep.mubr.f32.mxu0 0.0
        %2518 = vmatmul.mubr.f32.gmra.mxu0 %v2451
        %v2519 = vpop.f32.mrf.mxu0
        %v2520 = vadd.f32 0.0, %v2519
        %v2521 = vpop.f32.mrf.mxu0
        %2522 = vdwg.mxu0
        %2525 = vrot.lane.b32.xlu0 %v2444, 16
        %v2526 = vpop.permute.xlu0 %2525
        %2527 = vrot.lane.b32.xlu0 %v2520, 16
        %v2528 = vpop.permute.xlu0 %2527
        %vm2531 = vcmask 195712
        %2532 = vst.msk [vmem:[#allocation3] sm:$0xff] %vm2531, %v2526
        %2533 = vst.msk [vmem:[#allocation3 + $0x8] sm:$0xff] %vm2531, %v2528
        %2534 = vrot.lane.b32.xlu0 %v1422, 104
        %v2535 = vpop.permute.xlu0 %2534
        %2536 = vrot.lane.b32.xlu0 %v1503, 104
        %v2537 = vpop.permute.xlu0 %2536
        %v2538 = vsel %vm1511, %v2535, 0
        %v2540 = vsel %vm1511, %v2537, 0
        %2542 = vmatprep.subr.mxu0 0.0
        %2543 = vmatpush1.xpose.msra.mxu0 0.0
        %2544 = vmatprep.subr.mxu0 0.0
        %2545 = vmatpush1.xpose.msra.mxu0 0.0
        %2546 = vmatprep.subr.mxu0 0.0
        %2547 = vmatpush1.xpose.msra.mxu0 0.0
        %2548 = vmatprep.subr.mxu0 0.0
        %2549 = vmatpush1.xpose.msra.mxu0 0.0
        %2550 = vmatprep.subr.mxu0 0.0
        %2551 = vmatpush1.xpose.msra.mxu0 0.0
        %2552 = vmatprep.subr.mxu0 0.0
        %2553 = vmatpush1.xpose.msra.mxu0 0.0
        %2554 = vmatprep.subr.mxu0 0.0
        %2555 = vmatpush1.xpose.msra.mxu0 0.0
        %2556 = vmatprep.subr.mxu0 0.0
        %2557 = vmatpush1.xpose.msra.mxu0 0.0
        %2558 = vmatprep.subr.mxu0 0.0
        %2559 = vmatpush1.xpose.msra.mxu0 0.0
        %2560 = vmatprep.subr.mxu0 0.0
        %2561 = vmatpush1.xpose.msra.mxu0 0.0
        %2562 = vmatprep.subr.mxu0 0.0
        %2563 = vmatpush1.xpose.msra.mxu0 0.0
        %2564 = vmatprep.subr.mxu0 0.0
        %2565 = vmatpush1.xpose.msra.mxu0 0.0
        %2566 = vmatprep.subr.mxu0 0.0
        %2567 = vmatpush1.xpose.msra.mxu0 0.0
        %2568 = vmatprep.subr.mxu0 0.0
        %2569 = vmatpush1.xpose.msra.mxu0 0.0
        %2570 = vmatprep.subr.mxu0 0.0
        %2571 = vmatpush1.xpose.msra.mxu0 0.0
        %2572 = vmatprep.subr.mxu0 0.0
        %2573 = vmatpush1.xpose.msra.mxu0 %v2540
        %2574 = vmatprep.subr.mxu0 0.0
        %2575 = vmatpush2.xpose.msra.mxu0 0.0
        %2576 = vmatprep.subr.mxu0 0.0
        %2577 = vmatpush2.xpose.msra.mxu0 0.0
        %2578 = vmatprep.subr.mxu0 0.0
        %2579 = vmatpush2.xpose.msra.mxu0 0.0
        %2580 = vmatprep.subr.mxu0 0.0
        %2581 = vmatpush2.xpose.msra.mxu0 0.0
        %2582 = vmatprep.subr.mxu0 0.0
        %2583 = vmatpush2.xpose.msra.mxu0 0.0
        %2584 = vmatprep.subr.mxu0 0.0
        %2585 = vmatpush2.xpose.msra.mxu0 0.0
        %2586 = vmatprep.subr.mxu0 0.0
        %2587 = vmatpush2.xpose.msra.mxu0 0.0
        %2588 = vmatprep.subr.mxu0 0.0
        %2589 = vmatpush2.xpose.msra.mxu0 0.0
        %2590 = vmatprep.subr.mxu0 0.0
        %2591 = vmatpush2.xpose.msra.mxu0 0.0
        %2592 = vmatprep.subr.mxu0 0.0
        %2593 = vmatpush2.xpose.msra.mxu0 0.0
        %2594 = vmatprep.subr.mxu0 0.0
        %2595 = vmatpush2.xpose.msra.mxu0 0.0
        %2596 = vmatprep.subr.mxu0 0.0
        %2597 = vmatpush2.xpose.msra.mxu0 0.0
        %2598 = vmatprep.subr.mxu0 0.0
        %2599 = vmatpush2.xpose.msra.mxu0 0.0
        %2600 = vmatprep.subr.mxu0 0.0
        %2601 = vmatpush2.xpose.msra.mxu0 0.0
        %2602 = vmatprep.subr.mxu0 0.0
        %2603 = vmatpush2.xpose.msra.mxu0 0.0
        %2604 = vmatprep.subr.mxu0 0.0
        %2605 = vmatpush2.xpose.msra.mxu0 0.0
        %2606 = vmatprep.mubr.f32.mxu0 0.0
        %2607 = vmatmul.mubr.f32.gmra.mxu0 %v2538
        %v2608 = vpop.f32.mrf.mxu0
        %v2609 = vadd.f32 0.0, %v2608
        %v2610 = vpop.f32.mrf.mxu0
        %2611 = vdwg.mxu0
        %2612 = vrot.lane.b32.xlu0 %v1427, 104
        %v2613 = vpop.permute.xlu0 %2612
        %2614 = vrot.lane.b32.xlu0 %v1508, 104
        %v2615 = vpop.permute.xlu0 %2614
        %v2616 = vsel %vm1511, %v2613, 0
        %v2618 = vsel %vm1511, %v2615, 0
        %2620 = vmatprep.subr.mxu0 0.0
        %2621 = vmatpush1.xpose.msra.mxu0 0.0
        %2622 = vmatprep.subr.mxu0 0.0
        %2623 = vmatpush1.xpose.msra.mxu0 0.0
        %2624 = vmatprep.subr.mxu0 0.0
        %2625 = vmatpush1.xpose.msra.mxu0 0.0
        %2626 = vmatprep.subr.mxu0 0.0
        %2627 = vmatpush1.xpose.msra.mxu0 0.0
        %2628 = vmatprep.subr.mxu0 0.0
        %2629 = vmatpush1.xpose.msra.mxu0 0.0
        %2630 = vmatprep.subr.mxu0 0.0
        %2631 = vmatpush1.xpose.msra.mxu0 0.0
        %2632 = vmatprep.subr.mxu0 0.0
        %2633 = vmatpush1.xpose.msra.mxu0 0.0
        %2634 = vmatprep.subr.mxu0 0.0
        %2635 = vmatpush1.xpose.msra.mxu0 0.0
        %2636 = vmatprep.subr.mxu0 0.0
        %2637 = vmatpush1.xpose.msra.mxu0 0.0
        %2638 = vmatprep.subr.mxu0 0.0
        %2639 = vmatpush1.xpose.msra.mxu0 0.0
        %2640 = vmatprep.subr.mxu0 0.0
        %2641 = vmatpush1.xpose.msra.mxu0 0.0
        %2642 = vmatprep.subr.mxu0 0.0
        %2643 = vmatpush1.xpose.msra.mxu0 0.0
        %2644 = vmatprep.subr.mxu0 0.0
        %2645 = vmatpush1.xpose.msra.mxu0 0.0
        %2646 = vmatprep.subr.mxu0 0.0
        %2647 = vmatpush1.xpose.msra.mxu0 0.0
        %2648 = vmatprep.subr.mxu0 0.0
        %2649 = vmatpush1.xpose.msra.mxu0 0.0
        %2650 = vmatprep.subr.mxu0 0.0
        %2651 = vmatpush1.xpose.msra.mxu0 %v2618
        %2652 = vmatprep.subr.mxu0 0.0
        %2653 = vmatpush2.xpose.msra.mxu0 0.0
        %2654 = vmatprep.subr.mxu0 0.0
        %2655 = vmatpush2.xpose.msra.mxu0 0.0
        %2656 = vmatprep.subr.mxu0 0.0
        %2657 = vmatpush2.xpose.msra.mxu0 0.0
        %2658 = vmatprep.subr.mxu0 0.0
        %2659 = vmatpush2.xpose.msra.mxu0 0.0
        %2660 = vmatprep.subr.mxu0 0.0
        %2661 = vmatpush2.xpose.msra.mxu0 0.0
        %2662 = vmatprep.subr.mxu0 0.0
        %2663 = vmatpush2.xpose.msra.mxu0 0.0
        %2664 = vmatprep.subr.mxu0 0.0
        %2665 = vmatpush2.xpose.msra.mxu0 0.0
        %2666 = vmatprep.subr.mxu0 0.0
        %2667 = vmatpush2.xpose.msra.mxu0 0.0
        %2668 = vmatprep.subr.mxu0 0.0
        %2669 = vmatpush2.xpose.msra.mxu0 0.0
        %2670 = vmatprep.subr.mxu0 0.0
        %2671 = vmatpush2.xpose.msra.mxu0 0.0
        %2672 = vmatprep.subr.mxu0 0.0
        %2673 = vmatpush2.xpose.msra.mxu0 0.0
        %2674 = vmatprep.subr.mxu0 0.0
        %2675 = vmatpush2.xpose.msra.mxu0 0.0
        %2676 = vmatprep.subr.mxu0 0.0
        %2677 = vmatpush2.xpose.msra.mxu0 0.0
        %2678 = vmatprep.subr.mxu0 0.0
        %2679 = vmatpush2.xpose.msra.mxu0 0.0
        %2680 = vmatprep.subr.mxu0 0.0
        %2681 = vmatpush2.xpose.msra.mxu0 0.0
        %2682 = vmatprep.subr.mxu0 0.0
        %2683 = vmatpush2.xpose.msra.mxu0 0.0
        %2684 = vmatprep.mubr.f32.mxu0 0.0
        %2685 = vmatmul.mubr.f32.gmra.mxu0 %v2616
        %v2686 = vpop.f32.mrf.mxu0
        %v2687 = vadd.f32 0.0, %v2686
        %v2688 = vpop.f32.mrf.mxu0
        %2689 = vdwg.mxu0
        %v2690 = vmul.f32 %v2609, 0.35355338
        %v2691 = vmul.f32 %v2687, 0.35355338
        %v2692 = vadd.f32 %v2690, %v1311
        %v2693 = vadd.f32 %v2691, %v1311
        %v2694 = vsel %vm1511, %v2692, -inf
        %2695 = vmax.xlane.f32.xlu0 %v2694
        %v2696 = vpop.xlane.xlu0 %2695
        %v2697 = vsel %vm1511, %v2693, -inf
        %2698 = vmax.xlane.f32.xlu0 %v2697
        %v2699 = vpop.xlane.xlu0 %2698
        %v2700 = vsub.f32 %v2692, %v2696
        %v2701 = vsub.f32 %v2693, %v2699
        %v2702 = vmul.f32 %v2700, 1.442695
        %v2703 = vpow.pop %v2702
        %v2704 = vmul.f32 %v2701, 1.442695
        %v2705 = vpow.pop %v2704
        %v2706 = vsel %vm1511, %v2703, 0.0
        %2707 = vadd.xlane.f32.xlu0 %v2706
        %v2708 = vpop.xlane.xlu0 %2707
        %v2709 = vsel %vm1511, %v2705, 0.0
        %2710 = vadd.xlane.f32.xlu0 %v2709
        %v2711 = vpop.xlane.xlu0 %2710
        %v2712 = vrcp.pop %v2708
        %v2713 = vrcp.pop %v2711
        %v2714 = vmul.f32 %v2703, %v2712
        %v2715 = vmul.f32 %v2705, %v2713
        %2716 = vrot.lane.b32.xlu0 %v1503, 72
        %v2717 = vpop.permute.xlu0 %2716
        %v2720 = vsel %vm1511, %v2714, 0
        %2722 = vmatprep.subr.mxu0 0.0
        %2723 = vmatpush1.msra.mxu0 0.0
        %2724 = vmatprep.subr.mxu0 0.0
        %2725 = vmatpush1.msra.mxu0 0.0
        %2726 = vmatprep.subr.mxu0 0.0
        %2727 = vmatpush1.msra.mxu0 0.0
        %2728 = vmatprep.subr.mxu0 0.0
        %2729 = vmatpush1.msra.mxu0 0.0
        %2730 = vmatprep.subr.mxu0 0.0
        %2731 = vmatpush1.msra.mxu0 0.0
        %2732 = vmatprep.subr.mxu0 0.0
        %2733 = vmatpush1.msra.mxu0 0.0
        %2734 = vmatprep.subr.mxu0 0.0
        %2735 = vmatpush1.msra.mxu0 0.0
        %2736 = vmatprep.subr.mxu0 0.0
        %2737 = vmatpush1.msra.mxu0 0.0
        %2738 = vmatprep.subr.mxu0 0.0
        %2739 = vmatpush1.msra.mxu0 0.0
        %2740 = vmatprep.subr.mxu0 0.0
        %2741 = vmatpush1.msra.mxu0 0.0
        %2742 = vmatprep.subr.mxu0 0.0
        %2743 = vmatpush1.msra.mxu0 0.0
        %2744 = vmatprep.subr.mxu0 0.0
        %2745 = vmatpush1.msra.mxu0 0.0
        %2746 = vmatprep.subr.mxu0 0.0
        %2747 = vmatpush1.msra.mxu0 0.0
        %2748 = vmatprep.subr.mxu0 0.0
        %2749 = vmatpush1.msra.mxu0 0.0
        %2750 = vmatprep.subr.mxu0 0.0
        %2751 = vmatpush1.msra.mxu0 0.0
        %2752 = vmatprep.subr.mxu0 0.0
        %2753 = vmatpush1.msra.mxu0 %v2717
        %2754 = vmatprep.subr.mxu0 0.0
        %2755 = vmatpush2.msra.mxu0 0.0
        %2756 = vmatprep.subr.mxu0 0.0
        %2757 = vmatpush2.msra.mxu0 0.0
        %2758 = vmatprep.subr.mxu0 0.0
        %2759 = vmatpush2.msra.mxu0 0.0
        %2760 = vmatprep.subr.mxu0 0.0
        %2761 = vmatpush2.msra.mxu0 0.0
        %2762 = vmatprep.subr.mxu0 0.0
        %2763 = vmatpush2.msra.mxu0 0.0
        %2764 = vmatprep.subr.mxu0 0.0
        %2765 = vmatpush2.msra.mxu0 0.0
        %2766 = vmatprep.subr.mxu0 0.0
        %2767 = vmatpush2.msra.mxu0 0.0
        %2768 = vmatprep.subr.mxu0 0.0
        %2769 = vmatpush2.msra.mxu0 0.0
        %2770 = vmatprep.subr.mxu0 0.0
        %2771 = vmatpush2.msra.mxu0 0.0
        %2772 = vmatprep.subr.mxu0 0.0
        %2773 = vmatpush2.msra.mxu0 0.0
        %2774 = vmatprep.subr.mxu0 0.0
        %2775 = vmatpush2.msra.mxu0 0.0
        %2776 = vmatprep.subr.mxu0 0.0
        %2777 = vmatpush2.msra.mxu0 0.0
        %2778 = vmatprep.subr.mxu0 0.0
        %2779 = vmatpush2.msra.mxu0 0.0
        %2780 = vmatprep.subr.mxu0 0.0
        %2781 = vmatpush2.msra.mxu0 0.0
        %2782 = vmatprep.subr.mxu0 0.0
        %2783 = vmatpush2.msra.mxu0 0.0
        %2784 = vmatprep.subr.mxu0 0.0
        %2785 = vmatpush2.msra.mxu0 0.0
        %2786 = vmatprep.mubr.f32.mxu0 0.0
        %2787 = vmatmul.mubr.f32.gmra.mxu0 %v2720
        %v2788 = vpop.f32.mrf.mxu0
        %v2789 = vadd.f32 0.0, %v2788
        %v2790 = vpop.f32.mrf.mxu0
        %2791 = vdwg.mxu0
        %2792 = vrot.lane.b32.xlu0 %v1508, 72
        %v2793 = vpop.permute.xlu0 %2792
        %v2796 = vsel %vm1511, %v2715, 0
        %2798 = vmatprep.subr.mxu0 0.0
        %2799 = vmatpush1.msra.mxu0 0.0
        %2800 = vmatprep.subr.mxu0 0.0
        %2801 = vmatpush1.msra.mxu0 0.0
        %2802 = vmatprep.subr.mxu0 0.0
        %2803 = vmatpush1.msra.mxu0 0.0
        %2804 = vmatprep.subr.mxu0 0.0
        %2805 = vmatpush1.msra.mxu0 0.0
        %2806 = vmatprep.subr.mxu0 0.0
        %2807 = vmatpush1.msra.mxu0 0.0
        %2808 = vmatprep.subr.mxu0 0.0
        %2809 = vmatpush1.msra.mxu0 0.0
        %2810 = vmatprep.subr.mxu0 0.0
        %2811 = vmatpush1.msra.mxu0 0.0
        %2812 = vmatprep.subr.mxu0 0.0
        %2813 = vmatpush1.msra.mxu0 0.0
        %2814 = vmatprep.subr.mxu0 0.0
        %2815 = vmatpush1.msra.mxu0 0.0
        %2816 = vmatprep.subr.mxu0 0.0
        %2817 = vmatpush1.msra.mxu0 0.0
        %2818 = vmatprep.subr.mxu0 0.0
        %2819 = vmatpush1.msra.mxu0 0.0
        %2820 = vmatprep.subr.mxu0 0.0
        %2821 = vmatpush1.msra.mxu0 0.0
        %2822 = vmatprep.subr.mxu0 0.0
        %2823 = vmatpush1.msra.mxu0 0.0
        %2824 = vmatprep.subr.mxu0 0.0
        %2825 = vmatpush1.msra.mxu0 0.0
        %2826 = vmatprep.subr.mxu0 0.0
        %2827 = vmatpush1.msra.mxu0 0.0
        %2828 = vmatprep.subr.mxu0 0.0
        %2829 = vmatpush1.msra.mxu0 %v2793
        %2830 = vmatprep.subr.mxu0 0.0
        %2831 = vmatpush2.msra.mxu0 0.0
        %2832 = vmatprep.subr.mxu0 0.0
        %2833 = vmatpush2.msra.mxu0 0.0
        %2834 = vmatprep.subr.mxu0 0.0
        %2835 = vmatpush2.msra.mxu0 0.0
        %2836 = vmatprep.subr.mxu0 0.0
        %2837 = vmatpush2.msra.mxu0 0.0
        %2838 = vmatprep.subr.mxu0 0.0
        %2839 = vmatpush2.msra.mxu0 0.0
        %2840 = vmatprep.subr.mxu0 0.0
        %2841 = vmatpush2.msra.mxu0 0.0
        %2842 = vmatprep.subr.mxu0 0.0
        %2843 = vmatpush2.msra.mxu0 0.0
        %2844 = vmatprep.subr.mxu0 0.0
        %2845 = vmatpush2.msra.mxu0 0.0
        %2846 = vmatprep.subr.mxu0 0.0
        %2847 = vmatpush2.msra.mxu0 0.0
        %2848 = vmatprep.subr.mxu0 0.0
        %2849 = vmatpush2.msra.mxu0 0.0
        %2850 = vmatprep.subr.mxu0 0.0
        %2851 = vmatpush2.msra.mxu0 0.0
        %2852 = vmatprep.subr.mxu0 0.0
        %2853 = vmatpush2.msra.mxu0 0.0
        %2854 = vmatprep.subr.mxu0 0.0
        %2855 = vmatpush2.msra.mxu0 0.0
        %2856 = vmatprep.subr.mxu0 0.0
        %2857 = vmatpush2.msra.mxu0 0.0
        %2858 = vmatprep.subr.mxu0 0.0
        %2859 = vmatpush2.msra.mxu0 0.0
        %2860 = vmatprep.subr.mxu0 0.0
        %2861 = vmatpush2.msra.mxu0 0.0
        %2862 = vmatprep.mubr.f32.mxu0 0.0
        %2863 = vmatmul.mubr.f32.gmra.mxu0 %v2796
        %v2864 = vpop.f32.mrf.mxu0
        %v2865 = vadd.f32 0.0, %v2864
        %v2866 = vpop.f32.mrf.mxu0
        %2867 = vdwg.mxu0
        %2870 = vrot.lane.b32.xlu0 %v2789, 24
        %v2871 = vpop.permute.xlu0 %2870
        %2872 = vrot.lane.b32.xlu0 %v2865, 24
        %v2873 = vpop.permute.xlu0 %2872
        %vm2876 = vcmask 261312
        %2877 = vst.msk [vmem:[#allocation3] sm:$0xff] %vm2876, %v2871
        %2878 = vst.msk [vmem:[#allocation3 + $0x8] sm:$0xff] %vm2876, %v2873
        %v2879 = vld [vmem:[#allocation3] sm:$0xff]
        %v2880 = vld [vmem:[#allocation3 + $0x8] sm:$0xff]
        %v2882 = vlaneseq
        %v2883 = vshrl.u32 %v2882, 7
        %v2884 = vsub.s32 0, %v2883
        %v2885 = vrot.slane %v1339, %v2884
        %v2888 = vsel %vm1348, %v2879, 0
        %v2891 = vsel %vm1348, %v2880, 0
        %2893 = vmatprep.subr.mxu0 0.0
        %2894 = vmatpush1.msra.mxu0 0.0
        %2895 = vmatprep.subr.mxu0 0.0
        %2896 = vmatpush1.msra.mxu0 0.0
        %2897 = vmatprep.subr.mxu0 0.0
        %2898 = vmatpush1.msra.mxu0 0.0
        %2899 = vmatprep.subr.mxu0 0.0
        %2900 = vmatpush1.msra.mxu0 0.0
        %2901 = vmatprep.subr.mxu0 0.0
        %2902 = vmatpush1.msra.mxu0 0.0
        %2903 = vmatprep.subr.mxu0 0.0
        %2904 = vmatpush1.msra.mxu0 0.0
        %2905 = vmatprep.subr.mxu0 0.0
        %2906 = vmatpush1.msra.mxu0 0.0
        %2907 = vmatprep.subr.mxu0 0.0
        %2908 = vmatpush1.msra.mxu0 0.0
        %2909 = vmatprep.subr.mxu0 0.0
        %2910 = vmatpush1.msra.mxu0 0.0
        %2911 = vmatprep.subr.mxu0 0.0
        %2912 = vmatpush1.msra.mxu0 0.0
        %2913 = vmatprep.subr.mxu0 0.0
        %2914 = vmatpush1.msra.mxu0 0.0
        %2915 = vmatprep.subr.mxu0 0.0
        %2916 = vmatpush1.msra.mxu0 0.0
        %2917 = vmatprep.subr.mxu0 0.0
        %2918 = vmatpush1.msra.mxu0 %v1338
        %2919 = vmatprep.subr.mxu0 0.0
        %2920 = vmatpush1.msra.mxu0 %v1337
        %2921 = vmatprep.subr.mxu0 0.0
        %2922 = vmatpush1.msra.mxu0 %v1336
        %2923 = vmatprep.subr.mxu0 0.0
        %2924 = vmatpush1.msra.mxu0 %v1335
        %2925 = vmatprep.subr.mxu0 0.0
        %2926 = vmatpush2.msra.mxu0 0.0
        %2927 = vmatprep.subr.mxu0 0.0
        %2928 = vmatpush2.msra.mxu0 0.0
        %2929 = vmatprep.subr.mxu0 0.0
        %2930 = vmatpush2.msra.mxu0 0.0
        %2931 = vmatprep.subr.mxu0 0.0
        %2932 = vmatpush2.msra.mxu0 0.0
        %2933 = vmatprep.subr.mxu0 0.0
        %2934 = vmatpush2.msra.mxu0 0.0
        %2935 = vmatprep.subr.mxu0 0.0
        %2936 = vmatpush2.msra.mxu0 0.0
        %2937 = vmatprep.subr.mxu0 0.0
        %2938 = vmatpush2.msra.mxu0 0.0
        %2939 = vmatprep.subr.mxu0 0.0
        %2940 = vmatpush2.msra.mxu0 0.0
        %2941 = vmatprep.subr.mxu0 0.0
        %2942 = vmatpush2.msra.mxu0 0.0
        %2943 = vmatprep.subr.mxu0 0.0
        %2944 = vmatpush2.msra.mxu0 0.0
        %2945 = vmatprep.subr.mxu0 0.0
        %2946 = vmatpush2.msra.mxu0 0.0
        %2947 = vmatprep.subr.mxu0 0.0
        %2948 = vmatpush2.msra.mxu0 0.0
        %2949 = vmatprep.subr.mxu0 0.0
        %2950 = vmatpush2.msra.mxu0 0.0
        %2951 = vmatprep.subr.mxu0 0.0
        %2952 = vmatpush2.msra.mxu0 0.0
        %2953 = vmatprep.subr.mxu0 0.0
        %2954 = vmatpush2.msra.mxu0 0.0
        %2955 = vmatprep.subr.mxu0 0.0
        %2956 = vmatpush2.msra.mxu0 0.0
        %2957 = vmatprep.mubr.f32.mxu0 0.0
        %2958 = vmatmul.mubr.f32.gmra.mxu0 %v2888
        %v2959 = vpop.f32.mrf.mxu0
        %v2960 = vadd.f32 %v2885, %v2959
        %v2961 = vpop.f32.mrf.mxu0
        %2962 = vmatprep.mubr.f32.mxu0 0.0
        %2963 = vmatmul.mubr.f32.gmra.mxu0 %v2891
        %v2964 = vpop.f32.mrf.mxu0
        %v2965 = vadd.f32 %v2885, %v2964
        %v2966 = vpop.f32.mrf.mxu0
        %2967 = vdwg.mxu0
        %v2968 = vadd.f32 %v1321, %v2960
        %v2969 = vadd.f32 %v1322, %v2965
        %v2970 = vsel %vm1348, %v2968, 0.0
        %2971 = vadd.xlane.f32.xlu0 %v2970
        %v2972 = vpop.xlane.xlu0 %2971
        %v2973 = vsel %vm1348, %v2969, 0.0
        %2974 = vadd.xlane.f32.xlu0 %v2973
        %v2975 = vpop.xlane.xlu0 %2974
        %v2976 = vrcp.pop 32.0
        %v2977 = vmul.f32 %v2972, %v2976
        %v2978 = vmul.f32 %v2975, %v2976
        %v2979 = vsub.f32 %v2968, %v2977
        %v2980 = vsub.f32 %v2969, %v2978
        %v2981 = vmul.f32 %v2979, %v2979
        %v2982 = vmul.f32 %v2980, %v2980
        %v2983 = vsel %vm1348, %v2981, 0.0
        %2984 = vadd.xlane.f32.xlu0 %v2983
        %v2985 = vpop.xlane.xlu0 %2984
        %v2986 = vsel %vm1348, %v2982, 0.0
        %2987 = vadd.xlane.f32.xlu0 %v2986
        %v2988 = vpop.xlane.xlu0 %2987
        %v2989 = vmul.f32 %v2985, %v2976
        %v2990 = vmul.f32 %v2988, %v2976
        %v2991 = vadd.f32 %v2989, 1e-05
        %v2992 = vadd.f32 %v2990, 1e-05
        %v2993 = vrsqrt.pop %v2991
        %v2994 = vrsqrt.pop %v2992
        %v2995 = vmul.f32 %v2979, %v2993
        %v2996 = vmul.f32 %v2980, %v2994
        %v2998 = vlaneseq
        %v2999 = vshrl.u32 %v2998, 7
        %v3000 = vsub.s32 0, %v2999
        %v3001 = vrot.slane %v1340, %v3000
        %v3003 = vmul.f32 %v2995, %v3001
        %v3004 = vmul.f32 %v2996, %v3001
        %v3006 = vlaneseq
        %v3007 = vshrl.u32 %v3006, 7
        %v3008 = vsub.s32 0, %v3007
        %v3009 = vrot.slane %v1341, %v3008
        %v3011 = vadd.f32 %v3003, %v3009
        %v3012 = vadd.f32 %v3004, %v3009
        %v3013 = vld [vmem:[%s1295] sm:$0xff]
        %v3014 = vld [vmem:[%s1295 + $0x8] sm:$0xff]
        %v3015 = vld [vmem:[%s1295 + $0x10] sm:$0xff]
        %v3016 = vld [vmem:[%s1295 + $0x18] sm:$0xff]
        %v3017 = vld [vmem:[%s1044] sm:$0x1]
        %v3018 = vld [vmem:[%s1300] sm:$0xff]
        %v3019 = vld [vmem:[%s1300 + $0x8] sm:$0xff]
        %v3020 = vld [vmem:[%s1300 + $0x10] sm:$0xff]
        %v3021 = vld [vmem:[%s1300 + $0x18] sm:$0xff]
        %v3022 = vld [vmem:[%s1052] sm:$0x1]
        %v3023 = vld [vmem:[%s1305] sm:$0xff]
        %v3024 = vld [vmem:[%s1305 + $0x8] sm:$0xff]
        %v3025 = vld [vmem:[%s1305 + $0x10] sm:$0xff]
        %v3026 = vld [vmem:[%s1305 + $0x18] sm:$0xff]
        %v3027 = vld [vmem:[%s1060] sm:$0x1]
        %v3028 = vld [vmem:[%s1068] sm:$0x1]
        %v3029 = vld [vmem:[%s1076] sm:$0x1]
        %v3031 = vlaneseq
        %v3032 = vshrl.u32 %v3031, 7
        %v3033 = vsub.s32 0, %v3032
        %v3034 = vrot.slane %v3017, %v3033
        %v3037 = vsel %vm1348, %v3011, 0
        %v3040 = vsel %vm1348, %v3012, 0
        %3042 = vmatprep.subr.mxu0 0.0
        %3043 = vmatpush1.msra.mxu0 0.0
        %3044 = vmatprep.subr.mxu0 0.0
        %3045 = vmatpush1.msra.mxu0 0.0
        %3046 = vmatprep.subr.mxu0 0.0
        %3047 = vmatpush1.msra.mxu0 0.0
        %3048 = vmatprep.subr.mxu0 0.0
        %3049 = vmatpush1.msra.mxu0 0.0
        %3050 = vmatprep.subr.mxu0 0.0
        %3051 = vmatpush1.msra.mxu0 0.0
        %3052 = vmatprep.subr.mxu0 0.0
        %3053 = vmatpush1.msra.mxu0 0.0
        %3054 = vmatprep.subr.mxu0 0.0
        %3055 = vmatpush1.msra.mxu0 0.0
        %3056 = vmatprep.subr.mxu0 0.0
        %3057 = vmatpush1.msra.mxu0 0.0
        %3058 = vmatprep.subr.mxu0 0.0
        %3059 = vmatpush1.msra.mxu0 0.0
        %3060 = vmatprep.subr.mxu0 0.0
        %3061 = vmatpush1.msra.mxu0 0.0
        %3062 = vmatprep.subr.mxu0 0.0
        %3063 = vmatpush1.msra.mxu0 0.0
        %3064 = vmatprep.subr.mxu0 0.0
        %3065 = vmatpush1.msra.mxu0 0.0
        %3066 = vmatprep.subr.mxu0 0.0
        %3067 = vmatpush1.msra.mxu0 %v3016
        %3068 = vmatprep.subr.mxu0 0.0
        %3069 = vmatpush1.msra.mxu0 %v3015
        %3070 = vmatprep.subr.mxu0 0.0
        %3071 = vmatpush1.msra.mxu0 %v3014
        %3072 = vmatprep.subr.mxu0 0.0
        %3073 = vmatpush1.msra.mxu0 %v3013
        %3074 = vmatprep.subr.mxu0 0.0
        %3075 = vmatpush2.msra.mxu0 0.0
        %3076 = vmatprep.subr.mxu0 0.0
        %3077 = vmatpush2.msra.mxu0 0.0
        %3078 = vmatprep.subr.mxu0 0.0
        %3079 = vmatpush2.msra.mxu0 0.0
        %3080 = vmatprep.subr.mxu0 0.0
        %3081 = vmatpush2.msra.mxu0 0.0
        %3082 = vmatprep.subr.mxu0 0.0
        %3083 = vmatpush2.msra.mxu0 0.0
        %3084 = vmatprep.subr.mxu0 0.0
        %3085 = vmatpush2.msra.mxu0 0.0
        %3086 = vmatprep.subr.mxu0 0.0
        %3087 = vmatpush2.msra.mxu0 0.0
        %3088 = vmatprep.subr.mxu0 0.0
        %3089 = vmatpush2.msra.mxu0 0.0
        %3090 = vmatprep.subr.mxu0 0.0
        %3091 = vmatpush2.msra.mxu0 0.0
        %3092 = vmatprep.subr.mxu0 0.0
        %3093 = vmatpush2.msra.mxu0 0.0
        %3094 = vmatprep.subr.mxu0 0.0
        %3095 = vmatpush2.msra.mxu0 0.0
        %3096 = vmatprep.subr.mxu0 0.0
        %3097 = vmatpush2.msra.mxu0 0.0
        %3098 = vmatprep.subr.mxu0 0.0
        %3099 = vmatpush2.msra.mxu0 0.0
        %3100 = vmatprep.subr.mxu0 0.0
        %3101 = vmatpush2.msra.mxu0 0.0
        %3102 = vmatprep.subr.mxu0 0.0
        %3103 = vmatpush2.msra.mxu0 0.0
        %3104 = vmatprep.subr.mxu0 0.0
        %3105 = vmatpush2.msra.mxu0 0.0
        %3106 = vmatprep.mubr.f32.mxu0 0.0
        %3107 = vmatmul.mubr.f32.gmra.mxu0 %v3037
        %v3108 = vpop.f32.mrf.mxu0
        %v3109 = vadd.f32 %v3034, %v3108
        %v3110 = vpop.f32.mrf.mxu0
        %3111 = vmatprep.mubr.f32.mxu0 0.0
        %3112 = vmatmul.mubr.f32.gmra.mxu0 %v3040
        %v3113 = vpop.f32.mrf.mxu0
        %v3114 = vadd.f32 %v3034, %v3113
        %v3115 = vpop.f32.mrf.mxu0
        %3116 = vdwg.mxu0
        %v3118 = vlaneseq
        %v3119 = vshrl.u32 %v3118, 7
        %v3120 = vsub.s32 0, %v3119
        %v3121 = vrot.slane %v3022, %v3120
        %v3124 = vsel %vm1348, %v1323, 0
        %v3127 = vsel %vm1348, %v1324, 0
        %3129 = vmatprep.subr.mxu0 0.0
        %3130 = vmatpush1.msra.mxu0 0.0
        %3131 = vmatprep.subr.mxu0 0.0
        %3132 = vmatpush1.msra.mxu0 0.0
        %3133 = vmatprep.subr.mxu0 0.0
        %3134 = vmatpush1.msra.mxu0 0.0
        %3135 = vmatprep.subr.mxu0 0.0
        %3136 = vmatpush1.msra.mxu0 0.0
        %3137 = vmatprep.subr.mxu0 0.0
        %3138 = vmatpush1.msra.mxu0 0.0
        %3139 = vmatprep.subr.mxu0 0.0
        %3140 = vmatpush1.msra.mxu0 0.0
        %3141 = vmatprep.subr.mxu0 0.0
        %3142 = vmatpush1.msra.mxu0 0.0
        %3143 = vmatprep.subr.mxu0 0.0
        %3144 = vmatpush1.msra.mxu0 0.0
        %3145 = vmatprep.subr.mxu0 0.0
        %3146 = vmatpush1.msra.mxu0 0.0
        %3147 = vmatprep.subr.mxu0 0.0
        %3148 = vmatpush1.msra.mxu0 0.0
        %3149 = vmatprep.subr.mxu0 0.0
        %3150 = vmatpush1.msra.mxu0 0.0
        %3151 = vmatprep.subr.mxu0 0.0
        %3152 = vmatpush1.msra.mxu0 0.0
        %3153 = vmatprep.subr.mxu0 0.0
        %3154 = vmatpush1.msra.mxu0 %v3021
        %3155 = vmatprep.subr.mxu0 0.0
        %3156 = vmatpush1.msra.mxu0 %v3020
        %3157 = vmatprep.subr.mxu0 0.0
        %3158 = vmatpush1.msra.mxu0 %v3019
        %3159 = vmatprep.subr.mxu0 0.0
        %3160 = vmatpush1.msra.mxu0 %v3018
        %3161 = vmatprep.subr.mxu0 0.0
        %3162 = vmatpush2.msra.mxu0 0.0
        %3163 = vmatprep.subr.mxu0 0.0
        %3164 = vmatpush2.msra.mxu0 0.0
        %3165 = vmatprep.subr.mxu0 0.0
        %3166 = vmatpush2.msra.mxu0 0.0
        %3167 = vmatprep.subr.mxu0 0.0
        %3168 = vmatpush2.msra.mxu0 0.0
        %3169 = vmatprep.subr.mxu0 0.0
        %3170 = vmatpush2.msra.mxu0 0.0
        %3171 = vmatprep.subr.mxu0 0.0
        %3172 = vmatpush2.msra.mxu0 0.0
        %3173 = vmatprep.subr.mxu0 0.0
        %3174 = vmatpush2.msra.mxu0 0.0
        %3175 = vmatprep.subr.mxu0 0.0
        %3176 = vmatpush2.msra.mxu0 0.0
        %3177 = vmatprep.subr.mxu0 0.0
        %3178 = vmatpush2.msra.mxu0 0.0
        %3179 = vmatprep.subr.mxu0 0.0
        %3180 = vmatpush2.msra.mxu0 0.0
        %3181 = vmatprep.subr.mxu0 0.0
        %3182 = vmatpush2.msra.mxu0 0.0
        %3183 = vmatprep.subr.mxu0 0.0
        %3184 = vmatpush2.msra.mxu0 0.0
        %3185 = vmatprep.subr.mxu0 0.0
        %3186 = vmatpush2.msra.mxu0 0.0
        %3187 = vmatprep.subr.mxu0 0.0
        %3188 = vmatpush2.msra.mxu0 0.0
        %3189 = vmatprep.subr.mxu0 0.0
        %3190 = vmatpush2.msra.mxu0 0.0
        %3191 = vmatprep.subr.mxu0 0.0
        %3192 = vmatpush2.msra.mxu0 0.0
        %3193 = vmatprep.mubr.f32.mxu0 0.0
        %3194 = vmatmul.mubr.f32.gmra.mxu0 %v3124
        %v3195 = vpop.f32.mrf.mxu0
        %v3196 = vadd.f32 %v3121, %v3195
        %v3197 = vpop.f32.mrf.mxu0
        %3198 = vmatprep.mubr.f32.mxu0 0.0
        %3199 = vmatmul.mubr.f32.gmra.mxu0 %v3127
        %v3200 = vpop.f32.mrf.mxu0
        %v3201 = vadd.f32 %v3121, %v3200
        %v3202 = vpop.f32.mrf.mxu0
        %3203 = vdwg.mxu0
        %v3205 = vsel %vm1511, %v3109, 0
        %v3208 = vsel %vm1511, %v3196, 0
        %3210 = vmatprep.subr.mxu0 0.0
        %3211 = vmatpush1.xpose.msra.mxu0 0.0
        %3212 = vmatprep.subr.mxu0 0.0
        %3213 = vmatpush1.xpose.msra.mxu0 0.0
        %3214 = vmatprep.subr.mxu0 0.0
        %3215 = vmatpush1.xpose.msra.mxu0 0.0
        %3216 = vmatprep.subr.mxu0 0.0
        %3217 = vmatpush1.xpose.msra.mxu0 0.0
        %3218 = vmatprep.subr.mxu0 0.0
        %3219 = vmatpush1.xpose.msra.mxu0 0.0
        %3220 = vmatprep.subr.mxu0 0.0
        %3221 = vmatpush1.xpose.msra.mxu0 0.0
        %3222 = vmatprep.subr.mxu0 0.0
        %3223 = vmatpush1.xpose.msra.mxu0 0.0
        %3224 = vmatprep.subr.mxu0 0.0
        %3225 = vmatpush1.xpose.msra.mxu0 0.0
        %3226 = vmatprep.subr.mxu0 0.0
        %3227 = vmatpush1.xpose.msra.mxu0 0.0
        %3228 = vmatprep.subr.mxu0 0.0
        %3229 = vmatpush1.xpose.msra.mxu0 0.0
        %3230 = vmatprep.subr.mxu0 0.0
        %3231 = vmatpush1.xpose.msra.mxu0 0.0
        %3232 = vmatprep.subr.mxu0 0.0
        %3233 = vmatpush1.xpose.msra.mxu0 0.0
        %3234 = vmatprep.subr.mxu0 0.0
        %3235 = vmatpush1.xpose.msra.mxu0 0.0
        %3236 = vmatprep.subr.mxu0 0.0
        %3237 = vmatpush1.xpose.msra.mxu0 0.0
        %3238 = vmatprep.subr.mxu0 0.0
        %3239 = vmatpush1.xpose.msra.mxu0 0.0
        %3240 = vmatprep.subr.mxu0 0.0
        %3241 = vmatpush1.xpose.msra.mxu0 %v3208
        %3242 = vmatprep.subr.mxu0 0.0
        %3243 = vmatpush2.xpose.msra.mxu0 0.0
        %3244 = vmatprep.subr.mxu0 0.0
        %3245 = vmatpush2.xpose.msra.mxu0 0.0
        %3246 = vmatprep.subr.mxu0 0.0
        %3247 = vmatpush2.xpose.msra.mxu0 0.0
        %3248 = vmatprep.subr.mxu0 0.0
        %3249 = vmatpush2.xpose.msra.mxu0 0.0
        %3250 = vmatprep.subr.mxu0 0.0
        %3251 = vmatpush2.xpose.msra.mxu0 0.0
        %3252 = vmatprep.subr.mxu0 0.0
        %3253 = vmatpush2.xpose.msra.mxu0 0.0
        %3254 = vmatprep.subr.mxu0 0.0
        %3255 = vmatpush2.xpose.msra.mxu0 0.0
        %3256 = vmatprep.subr.mxu0 0.0
        %3257 = vmatpush2.xpose.msra.mxu0 0.0
        %3258 = vmatprep.subr.mxu0 0.0
        %3259 = vmatpush2.xpose.msra.mxu0 0.0
        %3260 = vmatprep.subr.mxu0 0.0
        %3261 = vmatpush2.xpose.msra.mxu0 0.0
        %3262 = vmatprep.subr.mxu0 0.0
        %3263 = vmatpush2.xpose.msra.mxu0 0.0
        %3264 = vmatprep.subr.mxu0 0.0
        %3265 = vmatpush2.xpose.msra.mxu0 0.0
        %3266 = vmatprep.subr.mxu0 0.0
        %3267 = vmatpush2.xpose.msra.mxu0 0.0
        %3268 = vmatprep.subr.mxu0 0.0
        %3269 = vmatpush2.xpose.msra.mxu0 0.0
        %3270 = vmatprep.subr.mxu0 0.0
        %3271 = vmatpush2.xpose.msra.mxu0 0.0
        %3272 = vmatprep.subr.mxu0 0.0
        %3273 = vmatpush2.xpose.msra.mxu0 0.0
        %3274 = vmatprep.mubr.f32.mxu0 0.0
        %3275 = vmatmul.mubr.f32.gmra.mxu0 %v3205
        %v3276 = vpop.f32.mrf.mxu0
        %v3277 = vadd.f32 0.0, %v3276
        %v3278 = vpop.f32.mrf.mxu0
        %3279 = vdwg.mxu0
        %v3281 = vsel %vm1511, %v3114, 0
        %v3284 = vsel %vm1511, %v3201, 0
        %3286 = vmatprep.subr.mxu0 0.0
        %3287 = vmatpush1.xpose.msra.mxu0 0.0
        %3288 = vmatprep.subr.mxu0 0.0
        %3289 = vmatpush1.xpose.msra.mxu0 0.0
        %3290 = vmatprep.subr.mxu0 0.0
        %3291 = vmatpush1.xpose.msra.mxu0 0.0
        %3292 = vmatprep.subr.mxu0 0.0
        %3293 = vmatpush1.xpose.msra.mxu0 0.0
        %3294 = vmatprep.subr.mxu0 0.0
        %3295 = vmatpush1.xpose.msra.mxu0 0.0
        %3296 = vmatprep.subr.mxu0 0.0
        %3297 = vmatpush1.xpose.msra.mxu0 0.0
        %3298 = vmatprep.subr.mxu0 0.0
        %3299 = vmatpush1.xpose.msra.mxu0 0.0
        %3300 = vmatprep.subr.mxu0 0.0
        %3301 = vmatpush1.xpose.msra.mxu0 0.0
        %3302 = vmatprep.subr.mxu0 0.0
        %3303 = vmatpush1.xpose.msra.mxu0 0.0
        %3304 = vmatprep.subr.mxu0 0.0
        %3305 = vmatpush1.xpose.msra.mxu0 0.0
        %3306 = vmatprep.subr.mxu0 0.0
        %3307 = vmatpush1.xpose.msra.mxu0 0.0
        %3308 = vmatprep.subr.mxu0 0.0
        %3309 = vmatpush1.xpose.msra.mxu0 0.0
        %3310 = vmatprep.subr.mxu0 0.0
        %3311 = vmatpush1.xpose.msra.mxu0 0.0
        %3312 = vmatprep.subr.mxu0 0.0
        %3313 = vmatpush1.xpose.msra.mxu0 0.0
        %3314 = vmatprep.subr.mxu0 0.0
        %3315 = vmatpush1.xpose.msra.mxu0 0.0
        %3316 = vmatprep.subr.mxu0 0.0
        %3317 = vmatpush1.xpose.msra.mxu0 %v3284
        %3318 = vmatprep.subr.mxu0 0.0
        %3319 = vmatpush2.xpose.msra.mxu0 0.0
        %3320 = vmatprep.subr.mxu0 0.0
        %3321 = vmatpush2.xpose.msra.mxu0 0.0
        %3322 = vmatprep.subr.mxu0 0.0
        %3323 = vmatpush2.xpose.msra.mxu0 0.0
        %3324 = vmatprep.subr.mxu0 0.0
        %3325 = vmatpush2.xpose.msra.mxu0 0.0
        %3326 = vmatprep.subr.mxu0 0.0
        %3327 = vmatpush2.xpose.msra.mxu0 0.0
        %3328 = vmatprep.subr.mxu0 0.0
        %3329 = vmatpush2.xpose.msra.mxu0 0.0
        %3330 = vmatprep.subr.mxu0 0.0
        %3331 = vmatpush2.xpose.msra.mxu0 0.0
        %3332 = vmatprep.subr.mxu0 0.0
        %3333 = vmatpush2.xpose.msra.mxu0 0.0
        %3334 = vmatprep.subr.mxu0 0.0
        %3335 = vmatpush2.xpose.msra.mxu0 0.0
        %3336 = vmatprep.subr.mxu0 0.0
        %3337 = vmatpush2.xpose.msra.mxu0 0.0
        %3338 = vmatprep.subr.mxu0 0.0
        %3339 = vmatpush2.xpose.msra.mxu0 0.0
        %3340 = vmatprep.subr.mxu0 0.0
        %3341 = vmatpush2.xpose.msra.mxu0 0.0
        %3342 = vmatprep.subr.mxu0 0.0
        %3343 = vmatpush2.xpose.msra.mxu0 0.0
        %3344 = vmatprep.subr.mxu0 0.0
        %3345 = vmatpush2.xpose.msra.mxu0 0.0
        %3346 = vmatprep.subr.mxu0 0.0
        %3347 = vmatpush2.xpose.msra.mxu0 0.0
        %3348 = vmatprep.subr.mxu0 0.0
        %3349 = vmatpush2.xpose.msra.mxu0 0.0
        %3350 = vmatprep.mubr.f32.mxu0 0.0
        %3351 = vmatmul.mubr.f32.gmra.mxu0 %v3281
        %v3352 = vpop.f32.mrf.mxu0
        %v3353 = vadd.f32 0.0, %v3352
        %v3354 = vpop.f32.mrf.mxu0
        %3355 = vdwg.mxu0
        %v3356 = vmul.f32 %v3277, 0.35355338
        %v3357 = vmul.f32 %v3353, 0.35355338
        %v3358 = vsel %vm1511, %v3356, -inf
        %3359 = vmax.xlane.f32.xlu0 %v3358
        %v3360 = vpop.xlane.xlu0 %3359
        %v3361 = vsel %vm1511, %v3357, -inf
        %3362 = vmax.xlane.f32.xlu0 %v3361
        %v3363 = vpop.xlane.xlu0 %3362
        %v3364 = vsub.f32 %v3356, %v3360
        %v3365 = vsub.f32 %v3357, %v3363
        %v3366 = vmul.f32 %v3364, 1.442695
        %v3367 = vpow.pop %v3366
        %v3368 = vmul.f32 %v3365, 1.442695
        %v3369 = vpow.pop %v3368
        %v3370 = vsel %vm1511, %v3367, 0.0
        %3371 = vadd.xlane.f32.xlu0 %v3370
        %v3372 = vpop.xlane.xlu0 %3371
        %v3373 = vsel %vm1511, %v3369, 0.0
        %3374 = vadd.xlane.f32.xlu0 %v3373
        %v3375 = vpop.xlane.xlu0 %3374
        %v3376 = vrcp.pop %v3372
        %v3377 = vrcp.pop %v3375
        %v3378 = vmul.f32 %v3367, %v3376
        %v3379 = vmul.f32 %v3369, %v3377
        %3380 = vrot.lane.b32.xlu0 %v3196, 96
        %v3381 = vpop.permute.xlu0 %3380
        %v3384 = vsel %vm1511, %v3378, 0
        %3386 = vmatprep.subr.mxu0 0.0
        %3387 = vmatpush1.msra.mxu0 0.0
        %3388 = vmatprep.subr.mxu0 0.0
        %3389 = vmatpush1.msra.mxu0 0.0
        %3390 = vmatprep.subr.mxu0 0.0
        %3391 = vmatpush1.msra.mxu0 0.0
        %3392 = vmatprep.subr.mxu0 0.0
        %3393 = vmatpush1.msra.mxu0 0.0
        %3394 = vmatprep.subr.mxu0 0.0
        %3395 = vmatpush1.msra.mxu0 0.0
        %3396 = vmatprep.subr.mxu0 0.0
        %3397 = vmatpush1.msra.mxu0 0.0
        %3398 = vmatprep.subr.mxu0 0.0
        %3399 = vmatpush1.msra.mxu0 0.0
        %3400 = vmatprep.subr.mxu0 0.0
        %3401 = vmatpush1.msra.mxu0 0.0
        %3402 = vmatprep.subr.mxu0 0.0
        %3403 = vmatpush1.msra.mxu0 0.0
        %3404 = vmatprep.subr.mxu0 0.0
        %3405 = vmatpush1.msra.mxu0 0.0
        %3406 = vmatprep.subr.mxu0 0.0
        %3407 = vmatpush1.msra.mxu0 0.0
        %3408 = vmatprep.subr.mxu0 0.0
        %3409 = vmatpush1.msra.mxu0 0.0
        %3410 = vmatprep.subr.mxu0 0.0
        %3411 = vmatpush1.msra.mxu0 0.0
        %3412 = vmatprep.subr.mxu0 0.0
        %3413 = vmatpush1.msra.mxu0 0.0
        %3414 = vmatprep.subr.mxu0 0.0
        %3415 = vmatpush1.msra.mxu0 0.0
        %3416 = vmatprep.subr.mxu0 0.0
        %3417 = vmatpush1.msra.mxu0 %v3381
        %3418 = vmatprep.subr.mxu0 0.0
        %3419 = vmatpush2.msra.mxu0 0.0
        %3420 = vmatprep.subr.mxu0 0.0
        %3421 = vmatpush2.msra.mxu0 0.0
        %3422 = vmatprep.subr.mxu0 0.0
        %3423 = vmatpush2.msra.mxu0 0.0
        %3424 = vmatprep.subr.mxu0 0.0
        %3425 = vmatpush2.msra.mxu0 0.0
        %3426 = vmatprep.subr.mxu0 0.0
        %3427 = vmatpush2.msra.mxu0 0.0
        %3428 = vmatprep.subr.mxu0 0.0
        %3429 = vmatpush2.msra.mxu0 0.0
        %3430 = vmatprep.subr.mxu0 0.0
        %3431 = vmatpush2.msra.mxu0 0.0
        %3432 = vmatprep.subr.mxu0 0.0
        %3433 = vmatpush2.msra.mxu0 0.0
        %3434 = vmatprep.subr.mxu0 0.0
        %3435 = vmatpush2.msra.mxu0 0.0
        %3436 = vmatprep.subr.mxu0 0.0
        %3437 = vmatpush2.msra.mxu0 0.0
        %3438 = vmatprep.subr.mxu0 0.0
        %3439 = vmatpush2.msra.mxu0 0.0
        %3440 = vmatprep.subr.mxu0 0.0
        %3441 = vmatpush2.msra.mxu0 0.0
        %3442 = vmatprep.subr.mxu0 0.0
        %3443 = vmatpush2.msra.mxu0 0.0
        %3444 = vmatprep.subr.mxu0 0.0
        %3445 = vmatpush2.msra.mxu0 0.0
        %3446 = vmatprep.subr.mxu0 0.0
        %3447 = vmatpush2.msra.mxu0 0.0
        %3448 = vmatprep.subr.mxu0 0.0
        %3449 = vmatpush2.msra.mxu0 0.0
        %3450 = vmatprep.mubr.f32.mxu0 0.0
        %3451 = vmatmul.mubr.f32.gmra.mxu0 %v3384
        %v3452 = vpop.f32.mrf.mxu0
        %v3453 = vadd.f32 0.0, %v3452
        %v3454 = vpop.f32.mrf.mxu0
        %3455 = vdwg.mxu0
        %3456 = vrot.lane.b32.xlu0 %v3201, 96
        %v3457 = vpop.permute.xlu0 %3456
        %v3460 = vsel %vm1511, %v3379, 0
        %3462 = vmatprep.subr.mxu0 0.0
        %3463 = vmatpush1.msra.mxu0 0.0
        %3464 = vmatprep.subr.mxu0 0.0
        %3465 = vmatpush1.msra.mxu0 0.0
        %3466 = vmatprep.subr.mxu0 0.0
        %3467 = vmatpush1.msra.mxu0 0.0
        %3468 = vmatprep.subr.mxu0 0.0
        %3469 = vmatpush1.msra.mxu0 0.0
        %3470 = vmatprep.subr.mxu0 0.0
        %3471 = vmatpush1.msra.mxu0 0.0
        %3472 = vmatprep.subr.mxu0 0.0
        %3473 = vmatpush1.msra.mxu0 0.0
        %3474 = vmatprep.subr.mxu0 0.0
        %3475 = vmatpush1.msra.mxu0 0.0
        %3476 = vmatprep.subr.mxu0 0.0
        %3477 = vmatpush1.msra.mxu0 0.0
        %3478 = vmatprep.subr.mxu0 0.0
        %3479 = vmatpush1.msra.mxu0 0.0
        %3480 = vmatprep.subr.mxu0 0.0
        %3481 = vmatpush1.msra.mxu0 0.0
        %3482 = vmatprep.subr.mxu0 0.0
        %3483 = vmatpush1.msra.mxu0 0.0
        %3484 = vmatprep.subr.mxu0 0.0
        %3485 = vmatpush1.msra.mxu0 0.0
        %3486 = vmatprep.subr.mxu0 0.0
        %3487 = vmatpush1.msra.mxu0 0.0
        %3488 = vmatprep.subr.mxu0 0.0
        %3489 = vmatpush1.msra.mxu0 0.0
        %3490 = vmatprep.subr.mxu0 0.0
        %3491 = vmatpush1.msra.mxu0 0.0
        %3492 = vmatprep.subr.mxu0 0.0
        %3493 = vmatpush1.msra.mxu0 %v3457
        %3494 = vmatprep.subr.mxu0 0.0
        %3495 = vmatpush2.msra.mxu0 0.0
        %3496 = vmatprep.subr.mxu0 0.0
        %3497 = vmatpush2.msra.mxu0 0.0
        %3498 = vmatprep.subr.mxu0 0.0
        %3499 = vmatpush2.msra.mxu0 0.0
        %3500 = vmatprep.subr.mxu0 0.0
        %3501 = vmatpush2.msra.mxu0 0.0
        %3502 = vmatprep.subr.mxu0 0.0
        %3503 = vmatpush2.msra.mxu0 0.0
        %3504 = vmatprep.subr.mxu0 0.0
        %3505 = vmatpush2.msra.mxu0 0.0
        %3506 = vmatprep.subr.mxu0 0.0
        %3507 = vmatpush2.msra.mxu0 0.0
        %3508 = vmatprep.subr.mxu0 0.0
        %3509 = vmatpush2.msra.mxu0 0.0
        %3510 = vmatprep.subr.mxu0 0.0
        %3511 = vmatpush2.msra.mxu0 0.0
        %3512 = vmatprep.subr.mxu0 0.0
        %3513 = vmatpush2.msra.mxu0 0.0
        %3514 = vmatprep.subr.mxu0 0.0
        %3515 = vmatpush2.msra.mxu0 0.0
        %3516 = vmatprep.subr.mxu0 0.0
        %3517 = vmatpush2.msra.mxu0 0.0
        %3518 = vmatprep.subr.mxu0 0.0
        %3519 = vmatpush2.msra.mxu0 0.0
        %3520 = vmatprep.subr.mxu0 0.0
        %3521 = vmatpush2.msra.mxu0 0.0
        %3522 = vmatprep.subr.mxu0 0.0
        %3523 = vmatpush2.msra.mxu0 0.0
        %3524 = vmatprep.subr.mxu0 0.0
        %3525 = vmatpush2.msra.mxu0 0.0
        %3526 = vmatprep.mubr.f32.mxu0 0.0
        %3527 = vmatmul.mubr.f32.gmra.mxu0 %v3460
        %v3528 = vpop.f32.mrf.mxu0
        %v3529 = vadd.f32 0.0, %v3528
        %v3530 = vpop.f32.mrf.mxu0
        %3531 = vdwg.mxu0
        %3532 = vst.msk [vmem:[#allocation3] sm:$0xff] %vm1511, %v3453
        %3533 = vst.msk [vmem:[#allocation3 + $0x8] sm:$0xff] %vm1511, %v3529
        %3534 = vrot.lane.b32.xlu0 %v3109, 120
        %v3535 = vpop.permute.xlu0 %3534
        %3536 = vrot.lane.b32.xlu0 %v3196, 120
        %v3537 = vpop.permute.xlu0 %3536
        %v3538 = vsel %vm1511, %v3535, 0
        %v3540 = vsel %vm1511, %v3537, 0
        %3542 = vmatprep.subr.mxu0 0.0
        %3543 = vmatpush1.xpose.msra.mxu0 0.0
        %3544 = vmatprep.subr.mxu0 0.0
        %3545 = vmatpush1.xpose.msra.mxu0 0.0
        %3546 = vmatprep.subr.mxu0 0.0
        %3547 = vmatpush1.xpose.msra.mxu0 0.0
        %3548 = vmatprep.subr.mxu0 0.0
        %3549 = vmatpush1.xpose.msra.mxu0 0.0
        %3550 = vmatprep.subr.mxu0 0.0
        %3551 = vmatpush1.xpose.msra.mxu0 0.0
        %3552 = vmatprep.subr.mxu0 0.0
        %3553 = vmatpush1.xpose.msra.mxu0 0.0
        %3554 = vmatprep.subr.mxu0 0.0
        %3555 = vmatpush1.xpose.msra.mxu0 0.0
        %3556 = vmatprep.subr.mxu0 0.0
        %3557 = vmatpush1.xpose.msra.mxu0 0.0
        %3558 = vmatprep.subr.mxu0 0.0
        %3559 = vmatpush1.xpose.msra.mxu0 0.0
        %3560 = vmatprep.subr.mxu0 0.0
        %3561 = vmatpush1.xpose.msra.mxu0 0.0
        %3562 = vmatprep.subr.mxu0 0.0
        %3563 = vmatpush1.xpose.msra.mxu0 0.0
        %3564 = vmatprep.subr.mxu0 0.0
        %3565 = vmatpush1.xpose.msra.mxu0 0.0
        %3566 = vmatprep.subr.mxu0 0.0
        %3567 = vmatpush1.xpose.msra.mxu0 0.0
        %3568 = vmatprep.subr.mxu0 0.0
        %3569 = vmatpush1.xpose.msra.mxu0 0.0
        %3570 = vmatprep.subr.mxu0 0.0
        %3571 = vmatpush1.xpose.msra.mxu0 0.0
        %3572 = vmatprep.subr.mxu0 0.0
        %3573 = vmatpush1.xpose.msra.mxu0 %v3540
        %3574 = vmatprep.subr.mxu0 0.0
        %3575 = vmatpush2.xpose.msra.mxu0 0.0
        %3576 = vmatprep.subr.mxu0 0.0
        %3577 = vmatpush2.xpose.msra.mxu0 0.0
        %3578 = vmatprep.subr.mxu0 0.0
        %3579 = vmatpush2.xpose.msra.mxu0 0.0
        %3580 = vmatprep.subr.mxu0 0.0
        %3581 = vmatpush2.xpose.msra.mxu0 0.0
        %3582 = vmatprep.subr.mxu0 0.0
        %3583 = vmatpush2.xpose.msra.mxu0 0.0
        %3584 = vmatprep.subr.mxu0 0.0
        %3585 = vmatpush2.xpose.msra.mxu0 0.0
        %3586 = vmatprep.subr.mxu0 0.0
        %3587 = vmatpush2.xpose.msra.mxu0 0.0
        %3588 = vmatprep.subr.mxu0 0.0
        %3589 = vmatpush2.xpose.msra.mxu0 0.0
        %3590 = vmatprep.subr.mxu0 0.0
        %3591 = vmatpush2.xpose.msra.mxu0 0.0
        %3592 = vmatprep.subr.mxu0 0.0
        %3593 = vmatpush2.xpose.msra.mxu0 0.0
        %3594 = vmatprep.subr.mxu0 0.0
        %3595 = vmatpush2.xpose.msra.mxu0 0.0
        %3596 = vmatprep.subr.mxu0 0.0
        %3597 = vmatpush2.xpose.msra.mxu0 0.0
        %3598 = vmatprep.subr.mxu0 0.0
        %3599 = vmatpush2.xpose.msra.mxu0 0.0
        %3600 = vmatprep.subr.mxu0 0.0
        %3601 = vmatpush2.xpose.msra.mxu0 0.0
        %3602 = vmatprep.subr.mxu0 0.0
        %3603 = vmatpush2.xpose.msra.mxu0 0.0
        %3604 = vmatprep.subr.mxu0 0.0
        %3605 = vmatpush2.xpose.msra.mxu0 0.0
        %3606 = vmatprep.mubr.f32.mxu0 0.0
        %3607 = vmatmul.mubr.f32.gmra.mxu0 %v3538
        %v3608 = vpop.f32.mrf.mxu0
        %v3609 = vadd.f32 0.0, %v3608
        %v3610 = vpop.f32.mrf.mxu0
        %3611 = vdwg.mxu0
        %3612 = vrot.lane.b32.xlu0 %v3114, 120
        %v3613 = vpop.permute.xlu0 %3612
        %3614 = vrot.lane.b32.xlu0 %v3201, 120
        %v3615 = vpop.permute.xlu0 %3614
        %v3616 = vsel %vm1511, %v3613, 0
        %v3618 = vsel %vm1511, %v3615, 0
        %3620 = vmatprep.subr.mxu0 0.0
        %3621 = vmatpush1.xpose.msra.mxu0 0.0
        %3622 = vmatprep.subr.mxu0 0.0
        %3623 = vmatpush1.xpose.msra.mxu0 0.0
        %3624 = vmatprep.subr.mxu0 0.0
        %3625 = vmatpush1.xpose.msra.mxu0 0.0
        %3626 = vmatprep.subr.mxu0 0.0
        %3627 = vmatpush1.xpose.msra.mxu0 0.0
        %3628 = vmatprep.subr.mxu0 0.0
        %3629 = vmatpush1.xpose.msra.mxu0 0.0
        %3630 = vmatprep.subr.mxu0 0.0
        %3631 = vmatpush1.xpose.msra.mxu0 0.0
        %3632 = vmatprep.subr.mxu0 0.0
        %3633 = vmatpush1.xpose.msra.mxu0 0.0
        %3634 = vmatprep.subr.mxu0 0.0
        %3635 = vmatpush1.xpose.msra.mxu0 0.0
        %3636 = vmatprep.subr.mxu0 0.0
        %3637 = vmatpush1.xpose.msra.mxu0 0.0
        %3638 = vmatprep.subr.mxu0 0.0
        %3639 = vmatpush1.xpose.msra.mxu0 0.0
        %3640 = vmatprep.subr.mxu0 0.0
        %3641 = vmatpush1.xpose.msra.mxu0 0.0
        %3642 = vmatprep.subr.mxu0 0.0
        %3643 = vmatpush1.xpose.msra.mxu0 0.0
        %3644 = vmatprep.subr.mxu0 0.0
        %3645 = vmatpush1.xpose.msra.mxu0 0.0
        %3646 = vmatprep.subr.mxu0 0.0
        %3647 = vmatpush1.xpose.msra.mxu0 0.0
        %3648 = vmatprep.subr.mxu0 0.0
        %3649 = vmatpush1.xpose.msra.mxu0 0.0
        %3650 = vmatprep.subr.mxu0 0.0
        %3651 = vmatpush1.xpose.msra.mxu0 %v3618
        %3652 = vmatprep.subr.mxu0 0.0
        %3653 = vmatpush2.xpose.msra.mxu0 0.0
        %3654 = vmatprep.subr.mxu0 0.0
        %3655 = vmatpush2.xpose.msra.mxu0 0.0
        %3656 = vmatprep.subr.mxu0 0.0
        %3657 = vmatpush2.xpose.msra.mxu0 0.0
        %3658 = vmatprep.subr.mxu0 0.0
        %3659 = vmatpush2.xpose.msra.mxu0 0.0
        %3660 = vmatprep.subr.mxu0 0.0
        %3661 = vmatpush2.xpose.msra.mxu0 0.0
        %3662 = vmatprep.subr.mxu0 0.0
        %3663 = vmatpush2.xpose.msra.mxu0 0.0
        %3664 = vmatprep.subr.mxu0 0.0
        %3665 = vmatpush2.xpose.msra.mxu0 0.0
        %3666 = vmatprep.subr.mxu0 0.0
        %3667 = vmatpush2.xpose.msra.mxu0 0.0
        %3668 = vmatprep.subr.mxu0 0.0
        %3669 = vmatpush2.xpose.msra.mxu0 0.0
        %3670 = vmatprep.subr.mxu0 0.0
        %3671 = vmatpush2.xpose.msra.mxu0 0.0
        %3672 = vmatprep.subr.mxu0 0.0
        %3673 = vmatpush2.xpose.msra.mxu0 0.0
        %3674 = vmatprep.subr.mxu0 0.0
        %3675 = vmatpush2.xpose.msra.mxu0 0.0
        %3676 = vmatprep.subr.mxu0 0.0
        %3677 = vmatpush2.xpose.msra.mxu0 0.0
        %3678 = vmatprep.subr.mxu0 0.0
        %3679 = vmatpush2.xpose.msra.mxu0 0.0
        %3680 = vmatprep.subr.mxu0 0.0
        %3681 = vmatpush2.xpose.msra.mxu0 0.0
        %3682 = vmatprep.subr.mxu0 0.0
        %3683 = vmatpush2.xpose.msra.mxu0 0.0
        %3684 = vmatprep.mubr.f32.mxu0 0.0
        %3685 = vmatmul.mubr.f32.gmra.mxu0 %v3616
        %v3686 = vpop.f32.mrf.mxu0
        %v3687 = vadd.f32 0.0, %v3686
        %v3688 = vpop.f32.mrf.mxu0
        %3689 = vdwg.mxu0
        %v3690 = vmul.f32 %v3609, 0.35355338
        %v3691 = vmul.f32 %v3687, 0.35355338
        %v3692 = vsel %vm1511, %v3690, -inf
        %3693 = vmax.xlane.f32.xlu0 %v3692
        %v3694 = vpop.xlane.xlu0 %3693
        %v3695 = vsel %vm1511, %v3691, -inf
        %3696 = vmax.xlane.f32.xlu0 %v3695
        %v3697 = vpop.xlane.xlu0 %3696
        %v3698 = vsub.f32 %v3690, %v3694
        %v3699 = vsub.f32 %v3691, %v3697
        %v3700 = vmul.f32 %v3698, 1.442695
        %v3701 = vpow.pop %v3700
        %v3702 = vmul.f32 %v3699, 1.442695
        %v3703 = vpow.pop %v3702
        %v3704 = vsel %vm1511, %v3701, 0.0
        %3705 = vadd.xlane.f32.xlu0 %v3704
        %v3706 = vpop.xlane.xlu0 %3705
        %v3707 = vsel %vm1511, %v3703, 0.0
        %3708 = vadd.xlane.f32.xlu0 %v3707
        %v3709 = vpop.xlane.xlu0 %3708
        %v3710 = vrcp.pop %v3706
        %v3711 = vrcp.pop %v3709
        %v3712 = vmul.f32 %v3701, %v3710
        %v3713 = vmul.f32 %v3703, %v3711
        %3714 = vrot.lane.b32.xlu0 %v3196, 88
        %v3715 = vpop.permute.xlu0 %3714
        %v3718 = vsel %vm1511, %v3712, 0
        %3720 = vmatprep.subr.mxu0 0.0
        %3721 = vmatpush1.msra.mxu0 0.0
        %3722 = vmatprep.subr.mxu0 0.0
        %3723 = vmatpush1.msra.mxu0 0.0
        %3724 = vmatprep.subr.mxu0 0.0
        %3725 = vmatpush1.msra.mxu0 0.0
        %3726 = vmatprep.subr.mxu0 0.0
        %3727 = vmatpush1.msra.mxu0 0.0
        %3728 = vmatprep.subr.mxu0 0.0
        %3729 = vmatpush1.msra.mxu0 0.0
        %3730 = vmatprep.subr.mxu0 0.0
        %3731 = vmatpush1.msra.mxu0 0.0
        %3732 = vmatprep.subr.mxu0 0.0
        %3733 = vmatpush1.msra.mxu0 0.0
        %3734 = vmatprep.subr.mxu0 0.0
        %3735 = vmatpush1.msra.mxu0 0.0
        %3736 = vmatprep.subr.mxu0 0.0
        %3737 = vmatpush1.msra.mxu0 0.0
        %3738 = vmatprep.subr.mxu0 0.0
        %3739 = vmatpush1.msra.mxu0 0.0
        %3740 = vmatprep.subr.mxu0 0.0
        %3741 = vmatpush1.msra.mxu0 0.0
        %3742 = vmatprep.subr.mxu0 0.0
        %3743 = vmatpush1.msra.mxu0 0.0
        %3744 = vmatprep.subr.mxu0 0.0
        %3745 = vmatpush1.msra.mxu0 0.0
        %3746 = vmatprep.subr.mxu0 0.0
        %3747 = vmatpush1.msra.mxu0 0.0
        %3748 = vmatprep.subr.mxu0 0.0
        %3749 = vmatpush1.msra.mxu0 0.0
        %3750 = vmatprep.subr.mxu0 0.0
        %3751 = vmatpush1.msra.mxu0 %v3715
        %3752 = vmatprep.subr.mxu0 0.0
        %3753 = vmatpush2.msra.mxu0 0.0
        %3754 = vmatprep.subr.mxu0 0.0
        %3755 = vmatpush2.msra.mxu0 0.0
        %3756 = vmatprep.subr.mxu0 0.0
        %3757 = vmatpush2.msra.mxu0 0.0
        %3758 = vmatprep.subr.mxu0 0.0
        %3759 = vmatpush2.msra.mxu0 0.0
        %3760 = vmatprep.subr.mxu0 0.0
        %3761 = vmatpush2.msra.mxu0 0.0
        %3762 = vmatprep.subr.mxu0 0.0
        %3763 = vmatpush2.msra.mxu0 0.0
        %3764 = vmatprep.subr.mxu0 0.0
        %3765 = vmatpush2.msra.mxu0 0.0
        %3766 = vmatprep.subr.mxu0 0.0
        %3767 = vmatpush2.msra.mxu0 0.0
        %3768 = vmatprep.subr.mxu0 0.0
        %3769 = vmatpush2.msra.mxu0 0.0
        %3770 = vmatprep.subr.mxu0 0.0
        %3771 = vmatpush2.msra.mxu0 0.0
        %3772 = vmatprep.subr.mxu0 0.0
        %3773 = vmatpush2.msra.mxu0 0.0
        %3774 = vmatprep.subr.mxu0 0.0
        %3775 = vmatpush2.msra.mxu0 0.0
        %3776 = vmatprep.subr.mxu0 0.0
        %3777 = vmatpush2.msra.mxu0 0.0
        %3778 = vmatprep.subr.mxu0 0.0
        %3779 = vmatpush2.msra.mxu0 0.0
        %3780 = vmatprep.subr.mxu0 0.0
        %3781 = vmatpush2.msra.mxu0 0.0
        %3782 = vmatprep.subr.mxu0 0.0
        %3783 = vmatpush2.msra.mxu0 0.0
        %3784 = vmatprep.mubr.f32.mxu0 0.0
        %3785 = vmatmul.mubr.f32.gmra.mxu0 %v3718
        %v3786 = vpop.f32.mrf.mxu0
        %v3787 = vadd.f32 0.0, %v3786
        %v3788 = vpop.f32.mrf.mxu0
        %3789 = vdwg.mxu0
        %3790 = vrot.lane.b32.xlu0 %v3201, 88
        %v3791 = vpop.permute.xlu0 %3790
        %v3794 = vsel %vm1511, %v3713, 0
        %3796 = vmatprep.subr.mxu0 0.0
        %3797 = vmatpush1.msra.mxu0 0.0
        %3798 = vmatprep.subr.mxu0 0.0
        %3799 = vmatpush1.msra.mxu0 0.0
        %3800 = vmatprep.subr.mxu0 0.0
        %3801 = vmatpush1.msra.mxu0 0.0
        %3802 = vmatprep.subr.mxu0 0.0
        %3803 = vmatpush1.msra.mxu0 0.0
        %3804 = vmatprep.subr.mxu0 0.0
        %3805 = vmatpush1.msra.mxu0 0.0
        %3806 = vmatprep.subr.mxu0 0.0
        %3807 = vmatpush1.msra.mxu0 0.0
        %3808 = vmatprep.subr.mxu0 0.0
        %3809 = vmatpush1.msra.mxu0 0.0
        %3810 = vmatprep.subr.mxu0 0.0
        %3811 = vmatpush1.msra.mxu0 0.0
        %3812 = vmatprep.subr.mxu0 0.0
        %3813 = vmatpush1.msra.mxu0 0.0
        %3814 = vmatprep.subr.mxu0 0.0
        %3815 = vmatpush1.msra.mxu0 0.0
        %3816 = vmatprep.subr.mxu0 0.0
        %3817 = vmatpush1.msra.mxu0 0.0
        %3818 = vmatprep.subr.mxu0 0.0
        %3819 = vmatpush1.msra.mxu0 0.0
        %3820 = vmatprep.subr.mxu0 0.0
        %3821 = vmatpush1.msra.mxu0 0.0
        %3822 = vmatprep.subr.mxu0 0.0
        %3823 = vmatpush1.msra.mxu0 0.0
        %3824 = vmatprep.subr.mxu0 0.0
        %3825 = vmatpush1.msra.mxu0 0.0
        %3826 = vmatprep.subr.mxu0 0.0
        %3827 = vmatpush1.msra.mxu0 %v3791
        %3828 = vmatprep.subr.mxu0 0.0
        %3829 = vmatpush2.msra.mxu0 0.0
        %3830 = vmatprep.subr.mxu0 0.0
        %3831 = vmatpush2.msra.mxu0 0.0
        %3832 = vmatprep.subr.mxu0 0.0
        %3833 = vmatpush2.msra.mxu0 0.0
        %3834 = vmatprep.subr.mxu0 0.0
        %3835 = vmatpush2.msra.mxu0 0.0
        %3836 = vmatprep.subr.mxu0 0.0
        %3837 = vmatpush2.msra.mxu0 0.0
        %3838 = vmatprep.subr.mxu0 0.0
        %3839 = vmatpush2.msra.mxu0 0.0
        %3840 = vmatprep.subr.mxu0 0.0
        %3841 = vmatpush2.msra.mxu0 0.0
        %3842 = vmatprep.subr.mxu0 0.0
        %3843 = vmatpush2.msra.mxu0 0.0
        %3844 = vmatprep.subr.mxu0 0.0
        %3845 = vmatpush2.msra.mxu0 0.0
        %3846 = vmatprep.subr.mxu0 0.0
        %3847 = vmatpush2.msra.mxu0 0.0
        %3848 = vmatprep.subr.mxu0 0.0
        %3849 = vmatpush2.msra.mxu0 0.0
        %3850 = vmatprep.subr.mxu0 0.0
        %3851 = vmatpush2.msra.mxu0 0.0
        %3852 = vmatprep.subr.mxu0 0.0
        %3853 = vmatpush2.msra.mxu0 0.0
        %3854 = vmatprep.subr.mxu0 0.0
        %3855 = vmatpush2.msra.mxu0 0.0
        %3856 = vmatprep.subr.mxu0 0.0
        %3857 = vmatpush2.msra.mxu0 0.0
        %3858 = vmatprep.subr.mxu0 0.0
        %3859 = vmatpush2.msra.mxu0 0.0
        %3860 = vmatprep.mubr.f32.mxu0 0.0
        %3861 = vmatmul.mubr.f32.gmra.mxu0 %v3794
        %v3862 = vpop.f32.mrf.mxu0
        %v3863 = vadd.f32 0.0, %v3862
        %v3864 = vpop.f32.mrf.mxu0
        %3865 = vdwg.mxu0
        %3868 = vrot.lane.b32.xlu0 %v3787, 8
        %v3869 = vpop.permute.xlu0 %3868
        %3870 = vrot.lane.b32.xlu0 %v3863, 8
        %v3871 = vpop.permute.xlu0 %3870
        %3874 = vst.msk [vmem:[#allocation3] sm:$0xff] %vm2186, %v3869
        %3875 = vst.msk [vmem:[#allocation3 + $0x8] sm:$0xff] %vm2186, %v3871
        %3876 = vrot.lane.b32.xlu0 %v3109, 112
        %v3877 = vpop.permute.xlu0 %3876
        %3878 = vrot.lane.b32.xlu0 %v3196, 112
        %v3879 = vpop.permute.xlu0 %3878
        %v3880 = vsel %vm1511, %v3877, 0
        %v3882 = vsel %vm1511, %v3879, 0
        %3884 = vmatprep.subr.mxu0 0.0
        %3885 = vmatpush1.xpose.msra.mxu0 0.0
        %3886 = vmatprep.subr.mxu0 0.0
        %3887 = vmatpush1.xpose.msra.mxu0 0.0
        %3888 = vmatprep.subr.mxu0 0.0
        %3889 = vmatpush1.xpose.msra.mxu0 0.0
        %3890 = vmatprep.subr.mxu0 0.0
        %3891 = vmatpush1.xpose.msra.mxu0 0.0
        %3892 = vmatprep.subr.mxu0 0.0
        %3893 = vmatpush1.xpose.msra.mxu0 0.0
        %3894 = vmatprep.subr.mxu0 0.0
        %3895 = vmatpush1.xpose.msra.mxu0 0.0
        %3896 = vmatprep.subr.mxu0 0.0
        %3897 = vmatpush1.xpose.msra.mxu0 0.0
        %3898 = vmatprep.subr.mxu0 0.0
        %3899 = vmatpush1.xpose.msra.mxu0 0.0
        %3900 = vmatprep.subr.mxu0 0.0
        %3901 = vmatpush1.xpose.msra.mxu0 0.0
        %3902 = vmatprep.subr.mxu0 0.0
        %3903 = vmatpush1.xpose.msra.mxu0 0.0
        %3904 = vmatprep.subr.mxu0 0.0
        %3905 = vmatpush1.xpose.msra.mxu0 0.0
        %3906 = vmatprep.subr.mxu0 0.0
        %3907 = vmatpush1.xpose.msra.mxu0 0.0
        %3908 = vmatprep.subr.mxu0 0.0
        %3909 = vmatpush1.xpose.msra.mxu0 0.0
        %3910 = vmatprep.subr.mxu0 0.0
        %3911 = vmatpush1.xpose.msra.mxu0 0.0
        %3912 = vmatprep.subr.mxu0 0.0
        %3913 = vmatpush1.xpose.msra.mxu0 0.0
        %3914 = vmatprep.subr.mxu0 0.0
        %3915 = vmatpush1.xpose.msra.mxu0 %v3882
        %3916 = vmatprep.subr.mxu0 0.0
        %3917 = vmatpush2.xpose.msra.mxu0 0.0
        %3918 = vmatprep.subr.mxu0 0.0
        %3919 = vmatpush2.xpose.msra.mxu0 0.0
        %3920 = vmatprep.subr.mxu0 0.0
        %3921 = vmatpush2.xpose.msra.mxu0 0.0
        %3922 = vmatprep.subr.mxu0 0.0
        %3923 = vmatpush2.xpose.msra.mxu0 0.0
        %3924 = vmatprep.subr.mxu0 0.0
        %3925 = vmatpush2.xpose.msra.mxu0 0.0
        %3926 = vmatprep.subr.mxu0 0.0
        %3927 = vmatpush2.xpose.msra.mxu0 0.0
        %3928 = vmatprep.subr.mxu0 0.0
        %3929 = vmatpush2.xpose.msra.mxu0 0.0
        %3930 = vmatprep.subr.mxu0 0.0
        %3931 = vmatpush2.xpose.msra.mxu0 0.0
        %3932 = vmatprep.subr.mxu0 0.0
        %3933 = vmatpush2.xpose.msra.mxu0 0.0
        %3934 = vmatprep.subr.mxu0 0.0
        %3935 = vmatpush2.xpose.msra.mxu0 0.0
        %3936 = vmatprep.subr.mxu0 0.0
        %3937 = vmatpush2.xpose.msra.mxu0 0.0
        %3938 = vmatprep.subr.mxu0 0.0
        %3939 = vmatpush2.xpose.msra.mxu0 0.0
        %3940 = vmatprep.subr.mxu0 0.0
        %3941 = vmatpush2.xpose.msra.mxu0 0.0
        %3942 = vmatprep.subr.mxu0 0.0
        %3943 = vmatpush2.xpose.msra.mxu0 0.0
        %3944 = vmatprep.subr.mxu0 0.0
        %3945 = vmatpush2.xpose.msra.mxu0 0.0
        %3946 = vmatprep.subr.mxu0 0.0
        %3947 = vmatpush2.xpose.msra.mxu0 0.0
        %3948 = vmatprep.mubr.f32.mxu0 0.0
        %3949 = vmatmul.mubr.f32.gmra.mxu0 %v3880
        %v3950 = vpop.f32.mrf.mxu0
        %v3951 = vadd.f32 0.0, %v3950
        %v3952 = vpop.f32.mrf.mxu0
        %3953 = vdwg.mxu0
        %3954 = vrot.lane.b32.xlu0 %v3114, 112
        %v3955 = vpop.permute.xlu0 %3954
        %3956 = vrot.lane.b32.xlu0 %v3201, 112
        %v3957 = vpop.permute.xlu0 %3956
        %v3958 = vsel %vm1511, %v3955, 0
        %v3960 = vsel %vm1511, %v3957, 0
        %3962 = vmatprep.subr.mxu0 0.0
        %3963 = vmatpush1.xpose.msra.mxu0 0.0
        %3964 = vmatprep.subr.mxu0 0.0
        %3965 = vmatpush1.xpose.msra.mxu0 0.0
        %3966 = vmatprep.subr.mxu0 0.0
        %3967 = vmatpush1.xpose.msra.mxu0 0.0
        %3968 = vmatprep.subr.mxu0 0.0
        %3969 = vmatpush1.xpose.msra.mxu0 0.0
        %3970 = vmatprep.subr.mxu0 0.0
        %3971 = vmatpush1.xpose.msra.mxu0 0.0
        %3972 = vmatprep.subr.mxu0 0.0
        %3973 = vmatpush1.xpose.msra.mxu0 0.0
        %3974 = vmatprep.subr.mxu0 0.0
        %3975 = vmatpush1.xpose.msra.mxu0 0.0
        %3976 = vmatprep.subr.mxu0 0.0
        %3977 = vmatpush1.xpose.msra.mxu0 0.0
        %3978 = vmatprep.subr.mxu0 0.0
        %3979 = vmatpush1.xpose.msra.mxu0 0.0
        %3980 = vmatprep.subr.mxu0 0.0
        %3981 = vmatpush1.xpose.msra.mxu0 0.0
        %3982 = vmatprep.subr.mxu0 0.0
        %3983 = vmatpush1.xpose.msra.mxu0 0.0
        %3984 = vmatprep.subr.mxu0 0.0
        %3985 = vmatpush1.xpose.msra.mxu0 0.0
        %3986 = vmatprep.subr.mxu0 0.0
        %3987 = vmatpush1.xpose.msra.mxu0 0.0
        %3988 = vmatprep.subr.mxu0 0.0
        %3989 = vmatpush1.xpose.msra.mxu0 0.0
        %3990 = vmatprep.subr.mxu0 0.0
        %3991 = vmatpush1.xpose.msra.mxu0 0.0
        %3992 = vmatprep.subr.mxu0 0.0
        %3993 = vmatpush1.xpose.msra.mxu0 %v3960
        %3994 = vmatprep.subr.mxu0 0.0
        %3995 = vmatpush2.xpose.msra.mxu0 0.0
        %3996 = vmatprep.subr.mxu0 0.0
        %3997 = vmatpush2.xpose.msra.mxu0 0.0
        %3998 = vmatprep.subr.mxu0 0.0
        %3999 = vmatpush2.xpose.msra.mxu0 0.0
        %4000 = vmatprep.subr.mxu0 0.0
        %4001 = vmatpush2.xpose.msra.mxu0 0.0
        %4002 = vmatprep.subr.mxu0 0.0
        %4003 = vmatpush2.xpose.msra.mxu0 0.0
        %4004 = vmatprep.subr.mxu0 0.0
        %4005 = vmatpush2.xpose.msra.mxu0 0.0
        %4006 = vmatprep.subr.mxu0 0.0
        %4007 = vmatpush2.xpose.msra.mxu0 0.0
        %4008 = vmatprep.subr.mxu0 0.0
        %4009 = vmatpush2.xpose.msra.mxu0 0.0
        %4010 = vmatprep.subr.mxu0 0.0
        %4011 = vmatpush2.xpose.msra.mxu0 0.0
        %4012 = vmatprep.subr.mxu0 0.0
        %4013 = vmatpush2.xpose.msra.mxu0 0.0
        %4014 = vmatprep.subr.mxu0 0.0
        %4015 = vmatpush2.xpose.msra.mxu0 0.0
        %4016 = vmatprep.subr.mxu0 0.0
        %4017 = vmatpush2.xpose.msra.mxu0 0.0
        %4018 = vmatprep.subr.mxu0 0.0
        %4019 = vmatpush2.xpose.msra.mxu0 0.0
        %4020 = vmatprep.subr.mxu0 0.0
        %4021 = vmatpush2.xpose.msra.mxu0 0.0
        %4022 = vmatprep.subr.mxu0 0.0
        %4023 = vmatpush2.xpose.msra.mxu0 0.0
        %4024 = vmatprep.subr.mxu0 0.0
        %4025 = vmatpush2.xpose.msra.mxu0 0.0
        %4026 = vmatprep.mubr.f32.mxu0 0.0
        %4027 = vmatmul.mubr.f32.gmra.mxu0 %v3958
        %v4028 = vpop.f32.mrf.mxu0
        %v4029 = vadd.f32 0.0, %v4028
        %v4030 = vpop.f32.mrf.mxu0
        %4031 = vdwg.mxu0
        %v4032 = vmul.f32 %v3951, 0.35355338
        %v4033 = vmul.f32 %v4029, 0.35355338
        %v4034 = vsel %vm1511, %v4032, -inf
        %4035 = vmax.xlane.f32.xlu0 %v4034
        %v4036 = vpop.xlane.xlu0 %4035
        %v4037 = vsel %vm1511, %v4033, -inf
        %4038 = vmax.xlane.f32.xlu0 %v4037
        %v4039 = vpop.xlane.xlu0 %4038
        %v4040 = vsub.f32 %v4032, %v4036
        %v4041 = vsub.f32 %v4033, %v4039
        %v4042 = vmul.f32 %v4040, 1.442695
        %v4043 = vpow.pop %v4042
        %v4044 = vmul.f32 %v4041, 1.442695
        %v4045 = vpow.pop %v4044
        %v4046 = vsel %vm1511, %v4043, 0.0
        %4047 = vadd.xlane.f32.xlu0 %v4046
        %v4048 = vpop.xlane.xlu0 %4047
        %v4049 = vsel %vm1511, %v4045, 0.0
        %4050 = vadd.xlane.f32.xlu0 %v4049
        %v4051 = vpop.xlane.xlu0 %4050
        %v4052 = vrcp.pop %v4048
        %v4053 = vrcp.pop %v4051
        %v4054 = vmul.f32 %v4043, %v4052
        %v4055 = vmul.f32 %v4045, %v4053
        %4056 = vrot.lane.b32.xlu0 %v3196, 80
        %v4057 = vpop.permute.xlu0 %4056
        %v4060 = vsel %vm1511, %v4054, 0
        %4062 = vmatprep.subr.mxu0 0.0
        %4063 = vmatpush1.msra.mxu0 0.0
        %4064 = vmatprep.subr.mxu0 0.0
        %4065 = vmatpush1.msra.mxu0 0.0
        %4066 = vmatprep.subr.mxu0 0.0
        %4067 = vmatpush1.msra.mxu0 0.0
        %4068 = vmatprep.subr.mxu0 0.0
        %4069 = vmatpush1.msra.mxu0 0.0
        %4070 = vmatprep.subr.mxu0 0.0
        %4071 = vmatpush1.msra.mxu0 0.0
        %4072 = vmatprep.subr.mxu0 0.0
        %4073 = vmatpush1.msra.mxu0 0.0
        %4074 = vmatprep.subr.mxu0 0.0
        %4075 = vmatpush1.msra.mxu0 0.0
        %4076 = vmatprep.subr.mxu0 0.0
        %4077 = vmatpush1.msra.mxu0 0.0
        %4078 = vmatprep.subr.mxu0 0.0
        %4079 = vmatpush1.msra.mxu0 0.0
        %4080 = vmatprep.subr.mxu0 0.0
        %4081 = vmatpush1.msra.mxu0 0.0
        %4082 = vmatprep.subr.mxu0 0.0
        %4083 = vmatpush1.msra.mxu0 0.0
        %4084 = vmatprep.subr.mxu0 0.0
        %4085 = vmatpush1.msra.mxu0 0.0
        %4086 = vmatprep.subr.mxu0 0.0
        %4087 = vmatpush1.msra.mxu0 0.0
        %4088 = vmatprep.subr.mxu0 0.0
        %4089 = vmatpush1.msra.mxu0 0.0
        %4090 = vmatprep.subr.mxu0 0.0
        %4091 = vmatpush1.msra.mxu0 0.0
        %4092 = vmatprep.subr.mxu0 0.0
        %4093 = vmatpush1.msra.mxu0 %v4057
        %4094 = vmatprep.subr.mxu0 0.0
        %4095 = vmatpush2.msra.mxu0 0.0
        %4096 = vmatprep.subr.mxu0 0.0
        %4097 = vmatpush2.msra.mxu0 0.0
        %4098 = vmatprep.subr.mxu0 0.0
        %4099 = vmatpush2.msra.mxu0 0.0
        %4100 = vmatprep.subr.mxu0 0.0
        %4101 = vmatpush2.msra.mxu0 0.0
        %4102 = vmatprep.subr.mxu0 0.0
        %4103 = vmatpush2.msra.mxu0 0.0
        %4104 = vmatprep.subr.mxu0 0.0
        %4105 = vmatpush2.msra.mxu0 0.0
        %4106 = vmatprep.subr.mxu0 0.0
        %4107 = vmatpush2.msra.mxu0 0.0
        %4108 = vmatprep.subr.mxu0 0.0
        %4109 = vmatpush2.msra.mxu0 0.0
        %4110 = vmatprep.subr.mxu0 0.0
        %4111 = vmatpush2.msra.mxu0 0.0
        %4112 = vmatprep.subr.mxu0 0.0
        %4113 = vmatpush2.msra.mxu0 0.0
        %4114 = vmatprep.subr.mxu0 0.0
        %4115 = vmatpush2.msra.mxu0 0.0
        %4116 = vmatprep.subr.mxu0 0.0
        %4117 = vmatpush2.msra.mxu0 0.0
        %4118 = vmatprep.subr.mxu0 0.0
        %4119 = vmatpush2.msra.mxu0 0.0
        %4120 = vmatprep.subr.mxu0 0.0
        %4121 = vmatpush2.msra.mxu0 0.0
        %4122 = vmatprep.subr.mxu0 0.0
        %4123 = vmatpush2.msra.mxu0 0.0
        %4124 = vmatprep.subr.mxu0 0.0
        %4125 = vmatpush2.msra.mxu0 0.0
        %4126 = vmatprep.mubr.f32.mxu0 0.0
        %4127 = vmatmul.mubr.f32.gmra.mxu0 %v4060
        %v4128 = vpop.f32.mrf.mxu0
        %v4129 = vadd.f32 0.0, %v4128
        %v4130 = vpop.f32.mrf.mxu0
        %4131 = vdwg.mxu0
        %4132 = vrot.lane.b32.xlu0 %v3201, 80
        %v4133 = vpop.permute.xlu0 %4132
        %v4136 = vsel %vm1511, %v4055, 0
        %4138 = vmatprep.subr.mxu0 0.0
        %4139 = vmatpush1.msra.mxu0 0.0
        %4140 = vmatprep.subr.mxu0 0.0
        %4141 = vmatpush1.msra.mxu0 0.0
        %4142 = vmatprep.subr.mxu0 0.0
        %4143 = vmatpush1.msra.mxu0 0.0
        %4144 = vmatprep.subr.mxu0 0.0
        %4145 = vmatpush1.msra.mxu0 0.0
        %4146 = vmatprep.subr.mxu0 0.0
        %4147 = vmatpush1.msra.mxu0 0.0
        %4148 = vmatprep.subr.mxu0 0.0
        %4149 = vmatpush1.msra.mxu0 0.0
        %4150 = vmatprep.subr.mxu0 0.0
        %4151 = vmatpush1.msra.mxu0 0.0
        %4152 = vmatprep.subr.mxu0 0.0
        %4153 = vmatpush1.msra.mxu0 0.0
        %4154 = vmatprep.subr.mxu0 0.0
        %4155 = vmatpush1.msra.mxu0 0.0
        %4156 = vmatprep.subr.mxu0 0.0
        %4157 = vmatpush1.msra.mxu0 0.0
        %4158 = vmatprep.subr.mxu0 0.0
        %4159 = vmatpush1.msra.mxu0 0.0
        %4160 = vmatprep.subr.mxu0 0.0
        %4161 = vmatpush1.msra.mxu0 0.0
        %4162 = vmatprep.subr.mxu0 0.0
        %4163 = vmatpush1.msra.mxu0 0.0
        %4164 = vmatprep.subr.mxu0 0.0
        %4165 = vmatpush1.msra.mxu0 0.0
        %4166 = vmatprep.subr.mxu0 0.0
        %4167 = vmatpush1.msra.mxu0 0.0
        %4168 = vmatprep.subr.mxu0 0.0
        %4169 = vmatpush1.msra.mxu0 %v4133
        %4170 = vmatprep.subr.mxu0 0.0
        %4171 = vmatpush2.msra.mxu0 0.0
        %4172 = vmatprep.subr.mxu0 0.0
        %4173 = vmatpush2.msra.mxu0 0.0
        %4174 = vmatprep.subr.mxu0 0.0
        %4175 = vmatpush2.msra.mxu0 0.0
        %4176 = vmatprep.subr.mxu0 0.0
        %4177 = vmatpush2.msra.mxu0 0.0
        %4178 = vmatprep.subr.mxu0 0.0
        %4179 = vmatpush2.msra.mxu0 0.0
        %4180 = vmatprep.subr.mxu0 0.0
        %4181 = vmatpush2.msra.mxu0 0.0
        %4182 = vmatprep.subr.mxu0 0.0
        %4183 = vmatpush2.msra.mxu0 0.0
        %4184 = vmatprep.subr.mxu0 0.0
        %4185 = vmatpush2.msra.mxu0 0.0
        %4186 = vmatprep.subr.mxu0 0.0
        %4187 = vmatpush2.msra.mxu0 0.0
        %4188 = vmatprep.subr.mxu0 0.0
        %4189 = vmatpush2.msra.mxu0 0.0
        %4190 = vmatprep.subr.mxu0 0.0
        %4191 = vmatpush2.msra.mxu0 0.0
        %4192 = vmatprep.subr.mxu0 0.0
        %4193 = vmatpush2.msra.mxu0 0.0
        %4194 = vmatprep.subr.mxu0 0.0
        %4195 = vmatpush2.msra.mxu0 0.0
        %4196 = vmatprep.subr.mxu0 0.0
        %4197 = vmatpush2.msra.mxu0 0.0
        %4198 = vmatprep.subr.mxu0 0.0
        %4199 = vmatpush2.msra.mxu0 0.0
        %4200 = vmatprep.subr.mxu0 0.0
        %4201 = vmatpush2.msra.mxu0 0.0
        %4202 = vmatprep.mubr.f32.mxu0 0.0
        %4203 = vmatmul.mubr.f32.gmra.mxu0 %v4136
        %v4204 = vpop.f32.mrf.mxu0
        %v4205 = vadd.f32 0.0, %v4204
        %v4206 = vpop.f32.mrf.mxu0
        %4207 = vdwg.mxu0
        %4210 = vrot.lane.b32.xlu0 %v4129, 16
        %v4211 = vpop.permute.xlu0 %4210
        %4212 = vrot.lane.b32.xlu0 %v4205, 16
        %v4213 = vpop.permute.xlu0 %4212
        %4216 = vst.msk [vmem:[#allocation3] sm:$0xff] %vm2531, %v4211
        %4217 = vst.msk [vmem:[#allocation3 + $0x8] sm:$0xff] %vm2531, %v4213
        %4218 = vrot.lane.b32.xlu0 %v3109, 104
        %v4219 = vpop.permute.xlu0 %4218
        %4220 = vrot.lane.b32.xlu0 %v3196, 104
        %v4221 = vpop.permute.xlu0 %4220
        %v4222 = vsel %vm1511, %v4219, 0
        %v4224 = vsel %vm1511, %v4221, 0
        %4226 = vmatprep.subr.mxu0 0.0
        %4227 = vmatpush1.xpose.msra.mxu0 0.0
        %4228 = vmatprep.subr.mxu0 0.0
        %4229 = vmatpush1.xpose.msra.mxu0 0.0
        %4230 = vmatprep.subr.mxu0 0.0
        %4231 = vmatpush1.xpose.msra.mxu0 0.0
        %4232 = vmatprep.subr.mxu0 0.0
        %4233 = vmatpush1.xpose.msra.mxu0 0.0
        %4234 = vmatprep.subr.mxu0 0.0
        %4235 = vmatpush1.xpose.msra.mxu0 0.0
        %4236 = vmatprep.subr.mxu0 0.0
        %4237 = vmatpush1.xpose.msra.mxu0 0.0
        %4238 = vmatprep.subr.mxu0 0.0
        %4239 = vmatpush1.xpose.msra.mxu0 0.0
        %4240 = vmatprep.subr.mxu0 0.0
        %4241 = vmatpush1.xpose.msra.mxu0 0.0
        %4242 = vmatprep.subr.mxu0 0.0
        %4243 = vmatpush1.xpose.msra.mxu0 0.0
        %4244 = vmatprep.subr.mxu0 0.0
        %4245 = vmatpush1.xpose.msra.mxu0 0.0
        %4246 = vmatprep.subr.mxu0 0.0
        %4247 = vmatpush1.xpose.msra.mxu0 0.0
        %4248 = vmatprep.subr.mxu0 0.0
        %4249 = vmatpush1.xpose.msra.mxu0 0.0
        %4250 = vmatprep.subr.mxu0 0.0
        %4251 = vmatpush1.xpose.msra.mxu0 0.0
        %4252 = vmatprep.subr.mxu0 0.0
        %4253 = vmatpush1.xpose.msra.mxu0 0.0
        %4254 = vmatprep.subr.mxu0 0.0
        %4255 = vmatpush1.xpose.msra.mxu0 0.0
        %4256 = vmatprep.subr.mxu0 0.0
        %4257 = vmatpush1.xpose.msra.mxu0 %v4224
        %4258 = vmatprep.subr.mxu0 0.0
        %4259 = vmatpush2.xpose.msra.mxu0 0.0
        %4260 = vmatprep.subr.mxu0 0.0
        %4261 = vmatpush2.xpose.msra.mxu0 0.0
        %4262 = vmatprep.subr.mxu0 0.0
        %4263 = vmatpush2.xpose.msra.mxu0 0.0
        %4264 = vmatprep.subr.mxu0 0.0
        %4265 = vmatpush2.xpose.msra.mxu0 0.0
        %4266 = vmatprep.subr.mxu0 0.0
        %4267 = vmatpush2.xpose.msra.mxu0 0.0
        %4268 = vmatprep.subr.mxu0 0.0
        %4269 = vmatpush2.xpose.msra.mxu0 0.0
        %4270 = vmatprep.subr.mxu0 0.0
        %4271 = vmatpush2.xpose.msra.mxu0 0.0
        %4272 = vmatprep.subr.mxu0 0.0
        %4273 = vmatpush2.xpose.msra.mxu0 0.0
        %4274 = vmatprep.subr.mxu0 0.0
        %4275 = vmatpush2.xpose.msra.mxu0 0.0
        %4276 = vmatprep.subr.mxu0 0.0
        %4277 = vmatpush2.xpose.msra.mxu0 0.0
        %4278 = vmatprep.subr.mxu0 0.0
        %4279 = vmatpush2.xpose.msra.mxu0 0.0
        %4280 = vmatprep.subr.mxu0 0.0
        %4281 = vmatpush2.xpose.msra.mxu0 0.0
        %4282 = vmatprep.subr.mxu0 0.0
        %4283 = vmatpush2.xpose.msra.mxu0 0.0
        %4284 = vmatprep.subr.mxu0 0.0
        %4285 = vmatpush2.xpose.msra.mxu0 0.0
        %4286 = vmatprep.subr.mxu0 0.0
        %4287 = vmatpush2.xpose.msra.mxu0 0.0
        %4288 = vmatprep.subr.mxu0 0.0
        %4289 = vmatpush2.xpose.msra.mxu0 0.0
        %4290 = vmatprep.mubr.f32.mxu0 0.0
        %4291 = vmatmul.mubr.f32.gmra.mxu0 %v4222
        %v4292 = vpop.f32.mrf.mxu0
        %v4293 = vadd.f32 0.0, %v4292
        %v4294 = vpop.f32.mrf.mxu0
        %4295 = vdwg.mxu0
        %4296 = vrot.lane.b32.xlu0 %v3114, 104
        %v4297 = vpop.permute.xlu0 %4296
        %4298 = vrot.lane.b32.xlu0 %v3201, 104
        %v4299 = vpop.permute.xlu0 %4298
        %v4300 = vsel %vm1511, %v4297, 0
        %v4302 = vsel %vm1511, %v4299, 0
        %4304 = vmatprep.subr.mxu0 0.0
        %4305 = vmatpush1.xpose.msra.mxu0 0.0
        %4306 = vmatprep.subr.mxu0 0.0
        %4307 = vmatpush1.xpose.msra.mxu0 0.0
        %4308 = vmatprep.subr.mxu0 0.0
        %4309 = vmatpush1.xpose.msra.mxu0 0.0
        %4310 = vmatprep.subr.mxu0 0.0
        %4311 = vmatpush1.xpose.msra.mxu0 0.0
        %4312 = vmatprep.subr.mxu0 0.0
        %4313 = vmatpush1.xpose.msra.mxu0 0.0
        %4314 = vmatprep.subr.mxu0 0.0
        %4315 = vmatpush1.xpose.msra.mxu0 0.0
        %4316 = vmatprep.subr.mxu0 0.0
        %4317 = vmatpush1.xpose.msra.mxu0 0.0
        %4318 = vmatprep.subr.mxu0 0.0
        %4319 = vmatpush1.xpose.msra.mxu0 0.0
        %4320 = vmatprep.subr.mxu0 0.0
        %4321 = vmatpush1.xpose.msra.mxu0 0.0
        %4322 = vmatprep.subr.mxu0 0.0
        %4323 = vmatpush1.xpose.msra.mxu0 0.0
        %4324 = vmatprep.subr.mxu0 0.0
        %4325 = vmatpush1.xpose.msra.mxu0 0.0
        %4326 = vmatprep.subr.mxu0 0.0
        %4327 = vmatpush1.xpose.msra.mxu0 0.0
        %4328 = vmatprep.subr.mxu0 0.0
        %4329 = vmatpush1.xpose.msra.mxu0 0.0
        %4330 = vmatprep.subr.mxu0 0.0
        %4331 = vmatpush1.xpose.msra.mxu0 0.0
        %4332 = vmatprep.subr.mxu0 0.0
        %4333 = vmatpush1.xpose.msra.mxu0 0.0
        %4334 = vmatprep.subr.mxu0 0.0
        %4335 = vmatpush1.xpose.msra.mxu0 %v4302
        %4336 = vmatprep.subr.mxu0 0.0
        %4337 = vmatpush2.xpose.msra.mxu0 0.0
        %4338 = vmatprep.subr.mxu0 0.0
        %4339 = vmatpush2.xpose.msra.mxu0 0.0
        %4340 = vmatprep.subr.mxu0 0.0
        %4341 = vmatpush2.xpose.msra.mxu0 0.0
        %4342 = vmatprep.subr.mxu0 0.0
        %4343 = vmatpush2.xpose.msra.mxu0 0.0
        %4344 = vmatprep.subr.mxu0 0.0
        %4345 = vmatpush2.xpose.msra.mxu0 0.0
        %4346 = vmatprep.subr.mxu0 0.0
        %4347 = vmatpush2.xpose.msra.mxu0 0.0
        %4348 = vmatprep.subr.mxu0 0.0
        %4349 = vmatpush2.xpose.msra.mxu0 0.0
        %4350 = vmatprep.subr.mxu0 0.0
        %4351 = vmatpush2.xpose.msra.mxu0 0.0
        %4352 = vmatprep.subr.mxu0 0.0
        %4353 = vmatpush2.xpose.msra.mxu0 0.0
        %4354 = vmatprep.subr.mxu0 0.0
        %4355 = vmatpush2.xpose.msra.mxu0 0.0
        %4356 = vmatprep.subr.mxu0 0.0
        %4357 = vmatpush2.xpose.msra.mxu0 0.0
        %4358 = vmatprep.subr.mxu0 0.0
        %4359 = vmatpush2.xpose.msra.mxu0 0.0
        %4360 = vmatprep.subr.mxu0 0.0
        %4361 = vmatpush2.xpose.msra.mxu0 0.0
        %4362 = vmatprep.subr.mxu0 0.0
        %4363 = vmatpush2.xpose.msra.mxu0 0.0
        %4364 = vmatprep.subr.mxu0 0.0
        %4365 = vmatpush2.xpose.msra.mxu0 0.0
        %4366 = vmatprep.subr.mxu0 0.0
        %4367 = vmatpush2.xpose.msra.mxu0 0.0
        %4368 = vmatprep.mubr.f32.mxu0 0.0
        %4369 = vmatmul.mubr.f32.gmra.mxu0 %v4300
        %v4370 = vpop.f32.mrf.mxu0
        %v4371 = vadd.f32 0.0, %v4370
        %v4372 = vpop.f32.mrf.mxu0
        %4373 = vdwg.mxu0
        %v4374 = vmul.f32 %v4293, 0.35355338
        %v4375 = vmul.f32 %v4371, 0.35355338
        %v4376 = vsel %vm1511, %v4374, -inf
        %4377 = vmax.xlane.f32.xlu0 %v4376
        %v4378 = vpop.xlane.xlu0 %4377
        %v4379 = vsel %vm1511, %v4375, -inf
        %4380 = vmax.xlane.f32.xlu0 %v4379
        %v4381 = vpop.xlane.xlu0 %4380
        %v4382 = vsub.f32 %v4374, %v4378
        %v4383 = vsub.f32 %v4375, %v4381
        %v4384 = vmul.f32 %v4382, 1.442695
        %v4385 = vpow.pop %v4384
        %v4386 = vmul.f32 %v4383, 1.442695
        %v4387 = vpow.pop %v4386
        %v4388 = vsel %vm1511, %v4385, 0.0
        %4389 = vadd.xlane.f32.xlu0 %v4388
        %v4390 = vpop.xlane.xlu0 %4389
        %v4391 = vsel %vm1511, %v4387, 0.0
        %4392 = vadd.xlane.f32.xlu0 %v4391
        %v4393 = vpop.xlane.xlu0 %4392
        %v4394 = vrcp.pop %v4390
        %v4395 = vrcp.pop %v4393
        %v4396 = vmul.f32 %v4385, %v4394
        %v4397 = vmul.f32 %v4387, %v4395
        %4398 = vrot.lane.b32.xlu0 %v3196, 72
        %v4399 = vpop.permute.xlu0 %4398
        %v4402 = vsel %vm1511, %v4396, 0
        %4404 = vmatprep.subr.mxu0 0.0
        %4405 = vmatpush1.msra.mxu0 0.0
        %4406 = vmatprep.subr.mxu0 0.0
        %4407 = vmatpush1.msra.mxu0 0.0
        %4408 = vmatprep.subr.mxu0 0.0
        %4409 = vmatpush1.msra.mxu0 0.0
        %4410 = vmatprep.subr.mxu0 0.0
        %4411 = vmatpush1.msra.mxu0 0.0
        %4412 = vmatprep.subr.mxu0 0.0
        %4413 = vmatpush1.msra.mxu0 0.0
        %4414 = vmatprep.subr.mxu0 0.0
        %4415 = vmatpush1.msra.mxu0 0.0
        %4416 = vmatprep.subr.mxu0 0.0
        %4417 = vmatpush1.msra.mxu0 0.0
        %4418 = vmatprep.subr.mxu0 0.0
        %4419 = vmatpush1.msra.mxu0 0.0
        %4420 = vmatprep.subr.mxu0 0.0
        %4421 = vmatpush1.msra.mxu0 0.0
        %4422 = vmatprep.subr.mxu0 0.0
        %4423 = vmatpush1.msra.mxu0 0.0
        %4424 = vmatprep.subr.mxu0 0.0
        %4425 = vmatpush1.msra.mxu0 0.0
        %4426 = vmatprep.subr.mxu0 0.0
        %4427 = vmatpush1.msra.mxu0 0.0
        %4428 = vmatprep.subr.mxu0 0.0
        %4429 = vmatpush1.msra.mxu0 0.0
        %4430 = vmatprep.subr.mxu0 0.0
        %4431 = vmatpush1.msra.mxu0 0.0
        %4432 = vmatprep.subr.mxu0 0.0
        %4433 = vmatpush1.msra.mxu0 0.0
        %4434 = vmatprep.subr.mxu0 0.0
        %4435 = vmatpush1.msra.mxu0 %v4399
        %4436 = vmatprep.subr.mxu0 0.0
        %4437 = vmatpush2.msra.mxu0 0.0
        %4438 = vmatprep.subr.mxu0 0.0
        %4439 = vmatpush2.msra.mxu0 0.0
        %4440 = vmatprep.subr.mxu0 0.0
        %4441 = vmatpush2.msra.mxu0 0.0
        %4442 = vmatprep.subr.mxu0 0.0
        %4443 = vmatpush2.msra.mxu0 0.0
        %4444 = vmatprep.subr.mxu0 0.0
        %4445 = vmatpush2.msra.mxu0 0.0
        %4446 = vmatprep.subr.mxu0 0.0
        %4447 = vmatpush2.msra.mxu0 0.0
        %4448 = vmatprep.subr.mxu0 0.0
        %4449 = vmatpush2.msra.mxu0 0.0
        %4450 = vmatprep.subr.mxu0 0.0
        %4451 = vmatpush2.msra.mxu0 0.0
        %4452 = vmatprep.subr.mxu0 0.0
        %4453 = vmatpush2.msra.mxu0 0.0
        %4454 = vmatprep.subr.mxu0 0.0
        %4455 = vmatpush2.msra.mxu0 0.0
        %4456 = vmatprep.subr.mxu0 0.0
        %4457 = vmatpush2.msra.mxu0 0.0
        %4458 = vmatprep.subr.mxu0 0.0
        %4459 = vmatpush2.msra.mxu0 0.0
        %4460 = vmatprep.subr.mxu0 0.0
        %4461 = vmatpush2.msra.mxu0 0.0
        %4462 = vmatprep.subr.mxu0 0.0
        %4463 = vmatpush2.msra.mxu0 0.0
        %4464 = vmatprep.subr.mxu0 0.0
        %4465 = vmatpush2.msra.mxu0 0.0
        %4466 = vmatprep.subr.mxu0 0.0
        %4467 = vmatpush2.msra.mxu0 0.0
        %4468 = vmatprep.mubr.f32.mxu0 0.0
        %4469 = vmatmul.mubr.f32.gmra.mxu0 %v4402
        %v4470 = vpop.f32.mrf.mxu0
        %v4471 = vadd.f32 0.0, %v4470
        %v4472 = vpop.f32.mrf.mxu0
        %4473 = vdwg.mxu0
        %4474 = vrot.lane.b32.xlu0 %v3201, 72
        %v4475 = vpop.permute.xlu0 %4474
        %v4478 = vsel %vm1511, %v4397, 0
        %4480 = vmatprep.subr.mxu0 0.0
        %4481 = vmatpush1.msra.mxu0 0.0
        %4482 = vmatprep.subr.mxu0 0.0
        %4483 = vmatpush1.msra.mxu0 0.0
        %4484 = vmatprep.subr.mxu0 0.0
        %4485 = vmatpush1.msra.mxu0 0.0
        %4486 = vmatprep.subr.mxu0 0.0
        %4487 = vmatpush1.msra.mxu0 0.0
        %4488 = vmatprep.subr.mxu0 0.0
        %4489 = vmatpush1.msra.mxu0 0.0
        %4490 = vmatprep.subr.mxu0 0.0
        %4491 = vmatpush1.msra.mxu0 0.0
        %4492 = vmatprep.subr.mxu0 0.0
        %4493 = vmatpush1.msra.mxu0 0.0
        %4494 = vmatprep.subr.mxu0 0.0
        %4495 = vmatpush1.msra.mxu0 0.0
        %4496 = vmatprep.subr.mxu0 0.0
        %4497 = vmatpush1.msra.mxu0 0.0
        %4498 = vmatprep.subr.mxu0 0.0
        %4499 = vmatpush1.msra.mxu0 0.0
        %4500 = vmatprep.subr.mxu0 0.0
        %4501 = vmatpush1.msra.mxu0 0.0
        %4502 = vmatprep.subr.mxu0 0.0
        %4503 = vmatpush1.msra.mxu0 0.0
        %4504 = vmatprep.subr.mxu0 0.0
        %4505 = vmatpush1.msra.mxu0 0.0
        %4506 = vmatprep.subr.mxu0 0.0
        %4507 = vmatpush1.msra.mxu0 0.0
        %4508 = vmatprep.subr.mxu0 0.0
        %4509 = vmatpush1.msra.mxu0 0.0
        %4510 = vmatprep.subr.mxu0 0.0
        %4511 = vmatpush1.msra.mxu0 %v4475
        %4512 = vmatprep.subr.mxu0 0.0
        %4513 = vmatpush2.msra.mxu0 0.0
        %4514 = vmatprep.subr.mxu0 0.0
        %4515 = vmatpush2.msra.mxu0 0.0
        %4516 = vmatprep.subr.mxu0 0.0
        %4517 = vmatpush2.msra.mxu0 0.0
        %4518 = vmatprep.subr.mxu0 0.0
        %4519 = vmatpush2.msra.mxu0 0.0
        %4520 = vmatprep.subr.mxu0 0.0
        %4521 = vmatpush2.msra.mxu0 0.0
        %4522 = vmatprep.subr.mxu0 0.0
        %4523 = vmatpush2.msra.mxu0 0.0
        %4524 = vmatprep.subr.mxu0 0.0
        %4525 = vmatpush2.msra.mxu0 0.0
        %4526 = vmatprep.subr.mxu0 0.0
        %4527 = vmatpush2.msra.mxu0 0.0
        %4528 = vmatprep.subr.mxu0 0.0
        %4529 = vmatpush2.msra.mxu0 0.0
        %4530 = vmatprep.subr.mxu0 0.0
        %4531 = vmatpush2.msra.mxu0 0.0
        %4532 = vmatprep.subr.mxu0 0.0
        %4533 = vmatpush2.msra.mxu0 0.0
        %4534 = vmatprep.subr.mxu0 0.0
        %4535 = vmatpush2.msra.mxu0 0.0
        %4536 = vmatprep.subr.mxu0 0.0
        %4537 = vmatpush2.msra.mxu0 0.0
        %4538 = vmatprep.subr.mxu0 0.0
        %4539 = vmatpush2.msra.mxu0 0.0
        %4540 = vmatprep.subr.mxu0 0.0
        %4541 = vmatpush2.msra.mxu0 0.0
        %4542 = vmatprep.subr.mxu0 0.0
        %4543 = vmatpush2.msra.mxu0 0.0
        %4544 = vmatprep.mubr.f32.mxu0 0.0
        %4545 = vmatmul.mubr.f32.gmra.mxu0 %v4478
        %v4546 = vpop.f32.mrf.mxu0
        %v4547 = vadd.f32 0.0, %v4546
        %v4548 = vpop.f32.mrf.mxu0
        %4549 = vdwg.mxu0
        %4552 = vrot.lane.b32.xlu0 %v4471, 24
        %v4553 = vpop.permute.xlu0 %4552
        %4554 = vrot.lane.b32.xlu0 %v4547, 24
        %v4555 = vpop.permute.xlu0 %4554
        %4558 = vst.msk [vmem:[#allocation3] sm:$0xff] %vm2876, %v4553
        %4559 = vst.msk [vmem:[#allocation3 + $0x8] sm:$0xff] %vm2876, %v4555
        %v4560 = vld [vmem:[#allocation3] sm:$0xff]
        %v4561 = vld [vmem:[#allocation3 + $0x8] sm:$0xff]
        %v4563 = vlaneseq
        %v4564 = vshrl.u32 %v4563, 7
        %v4565 = vsub.s32 0, %v4564
        %v4566 = vrot.slane %v3027, %v4565
        %v4569 = vsel %vm1348, %v4560, 0
        %v4572 = vsel %vm1348, %v4561, 0
        %4574 = vmatprep.subr.mxu0 0.0
        %4575 = vmatpush1.msra.mxu0 0.0
        %4576 = vmatprep.subr.mxu0 0.0
        %4577 = vmatpush1.msra.mxu0 0.0
        %4578 = vmatprep.subr.mxu0 0.0
        %4579 = vmatpush1.msra.mxu0 0.0
        %4580 = vmatprep.subr.mxu0 0.0
        %4581 = vmatpush1.msra.mxu0 0.0
        %4582 = vmatprep.subr.mxu0 0.0
        %4583 = vmatpush1.msra.mxu0 0.0
        %4584 = vmatprep.subr.mxu0 0.0
        %4585 = vmatpush1.msra.mxu0 0.0
        %4586 = vmatprep.subr.mxu0 0.0
        %4587 = vmatpush1.msra.mxu0 0.0
        %4588 = vmatprep.subr.mxu0 0.0
        %4589 = vmatpush1.msra.mxu0 0.0
        %4590 = vmatprep.subr.mxu0 0.0
        %4591 = vmatpush1.msra.mxu0 0.0
        %4592 = vmatprep.subr.mxu0 0.0
        %4593 = vmatpush1.msra.mxu0 0.0
        %4594 = vmatprep.subr.mxu0 0.0
        %4595 = vmatpush1.msra.mxu0 0.0
        %4596 = vmatprep.subr.mxu0 0.0
        %4597 = vmatpush1.msra.mxu0 0.0
        %4598 = vmatprep.subr.mxu0 0.0
        %4599 = vmatpush1.msra.mxu0 %v3026
        %4600 = vmatprep.subr.mxu0 0.0
        %4601 = vmatpush1.msra.mxu0 %v3025
        %4602 = vmatprep.subr.mxu0 0.0
        %4603 = vmatpush1.msra.mxu0 %v3024
        %4604 = vmatprep.subr.mxu0 0.0
        %4605 = vmatpush1.msra.mxu0 %v3023
        %4606 = vmatprep.subr.mxu0 0.0
        %4607 = vmatpush2.msra.mxu0 0.0
        %4608 = vmatprep.subr.mxu0 0.0
        %4609 = vmatpush2.msra.mxu0 0.0
        %4610 = vmatprep.subr.mxu0 0.0
        %4611 = vmatpush2.msra.mxu0 0.0
        %4612 = vmatprep.subr.mxu0 0.0
        %4613 = vmatpush2.msra.mxu0 0.0
        %4614 = vmatprep.subr.mxu0 0.0
        %4615 = vmatpush2.msra.mxu0 0.0
        %4616 = vmatprep.subr.mxu0 0.0
        %4617 = vmatpush2.msra.mxu0 0.0
        %4618 = vmatprep.subr.mxu0 0.0
        %4619 = vmatpush2.msra.mxu0 0.0
        %4620 = vmatprep.subr.mxu0 0.0
        %4621 = vmatpush2.msra.mxu0 0.0
        %4622 = vmatprep.subr.mxu0 0.0
        %4623 = vmatpush2.msra.mxu0 0.0
        %4624 = vmatprep.subr.mxu0 0.0
        %4625 = vmatpush2.msra.mxu0 0.0
        %4626 = vmatprep.subr.mxu0 0.0
        %4627 = vmatpush2.msra.mxu0 0.0
        %4628 = vmatprep.subr.mxu0 0.0
        %4629 = vmatpush2.msra.mxu0 0.0
        %4630 = vmatprep.subr.mxu0 0.0
        %4631 = vmatpush2.msra.mxu0 0.0
        %4632 = vmatprep.subr.mxu0 0.0
        %4633 = vmatpush2.msra.mxu0 0.0
        %4634 = vmatprep.subr.mxu0 0.0
        %4635 = vmatpush2.msra.mxu0 0.0
        %4636 = vmatprep.subr.mxu0 0.0
        %4637 = vmatpush2.msra.mxu0 0.0
        %4638 = vmatprep.mubr.f32.mxu0 0.0
        %4639 = vmatmul.mubr.f32.gmra.mxu0 %v4569
        %v4640 = vpop.f32.mrf.mxu0
        %v4641 = vadd.f32 %v4566, %v4640
        %v4642 = vpop.f32.mrf.mxu0
        %4643 = vmatprep.mubr.f32.mxu0 0.0
        %4644 = vmatmul.mubr.f32.gmra.mxu0 %v4572
        %v4645 = vpop.f32.mrf.mxu0
        %v4646 = vadd.f32 %v4566, %v4645
        %v4647 = vpop.f32.mrf.mxu0
        %4648 = vdwg.mxu0
        %v4649 = vadd.f32 %v3011, %v4641
        %v4650 = vadd.f32 %v3012, %v4646
        %v4651 = vsel %vm1348, %v4649, 0.0
        %4652 = vadd.xlane.f32.xlu0 %v4651
        %v4653 = vpop.xlane.xlu0 %4652
        %v4654 = vsel %vm1348, %v4650, 0.0
        %4655 = vadd.xlane.f32.xlu0 %v4654
        %v4656 = vpop.xlane.xlu0 %4655
        %v4657 = vmul.f32 %v4653, %v2976
        %v4658 = vmul.f32 %v4656, %v2976
        %v4659 = vsub.f32 %v4649, %v4657
        %v4660 = vsub.f32 %v4650, %v4658
        %v4661 = vmul.f32 %v4659, %v4659
        %v4662 = vmul.f32 %v4660, %v4660
        %v4663 = vsel %vm1348, %v4661, 0.0
        %4664 = vadd.xlane.f32.xlu0 %v4663
        %v4665 = vpop.xlane.xlu0 %4664
        %v4666 = vsel %vm1348, %v4662, 0.0
        %4667 = vadd.xlane.f32.xlu0 %v4666
        %v4668 = vpop.xlane.xlu0 %4667
        %v4669 = vmul.f32 %v4665, %v2976
        %v4670 = vmul.f32 %v4668, %v2976
        %v4671 = vadd.f32 %v4669, 1e-05
        %v4672 = vadd.f32 %v4670, 1e-05
        %v4673 = vrsqrt.pop %v4671
        %v4674 = vrsqrt.pop %v4672
        %v4675 = vmul.f32 %v4659, %v4673
        %v4676 = vmul.f32 %v4660, %v4674
        %v4678 = vlaneseq
        %v4679 = vshrl.u32 %v4678, 7
        %v4680 = vsub.s32 0, %v4679
        %v4681 = vrot.slane %v3028, %v4680
        %v4683 = vmul.f32 %v4675, %v4681
        %v4684 = vmul.f32 %v4676, %v4681
        %v4686 = vlaneseq
        %v4687 = vshrl.u32 %v4686, 7
        %v4688 = vsub.s32 0, %v4687
        %v4689 = vrot.slane %v3029, %v4688
        %v4691 = vadd.f32 %v4683, %v4689
        %v4692 = vadd.f32 %v4684, %v4689
        %v4693 = vld [vmem:[%s1085] sm:$0xff]
        %v4694 = vld [vmem:[%s1085 + $0x8] sm:$0xff]
        %v4695 = vld [vmem:[%s1085 + $0x10] sm:$0xff]
        %v4696 = vld [vmem:[%s1085 + $0x18] sm:$0xff]
        %v4697 = vld [vmem:[%s1093] sm:$0x1]
        %v4698 = vld [vmem:[%s1310] sm:$0xff]
        %v4699 = vld [vmem:[%s1310 + $0x8] sm:$0xff]
        %v4700 = vld [vmem:[%s1310 + $0x10] sm:$0xff]
        %v4701 = vld [vmem:[%s1310 + $0x18] sm:$0xff]
        %v4702 = vld [vmem:[%s1310 + $0x20] sm:$0xff]
        %v4703 = vld [vmem:[%s1310 + $0x28] sm:$0xff]
        %v4704 = vld [vmem:[%s1310 + $0x30] sm:$0xff]
        %v4705 = vld [vmem:[%s1310 + $0x38] sm:$0xff]
        %v4706 = vld [vmem:[%s1101] sm:$0x1]
        %v4707 = vld [vmem:[%s1109] sm:$0x1]
        %v4708 = vld [vmem:[%s1117] sm:$0x1]
        %v4710 = vlaneseq
        %v4711 = vshrl.u32 %v4710, 7
        %v4712 = vsub.s32 0, %v4711
        %v4713 = vrot.slane %v4697, %v4712
        %v4716 = vsel %vm1348, %v4691, 0
        %v4719 = vsel %vm1348, %v4692, 0
        %4721 = vmatprep.subr.mxu0 0.0
        %4722 = vmatpush1.msra.mxu0 0.0
        %4723 = vmatprep.subr.mxu0 0.0
        %4724 = vmatpush1.msra.mxu0 0.0
        %4725 = vmatprep.subr.mxu0 0.0
        %4726 = vmatpush1.msra.mxu0 0.0
        %4727 = vmatprep.subr.mxu0 0.0
        %4728 = vmatpush1.msra.mxu0 0.0
        %4729 = vmatprep.subr.mxu0 0.0
        %4730 = vmatpush1.msra.mxu0 0.0
        %4731 = vmatprep.subr.mxu0 0.0
        %4732 = vmatpush1.msra.mxu0 0.0
        %4733 = vmatprep.subr.mxu0 0.0
        %4734 = vmatpush1.msra.mxu0 0.0
        %4735 = vmatprep.subr.mxu0 0.0
        %4736 = vmatpush1.msra.mxu0 0.0
        %4737 = vmatprep.subr.mxu0 0.0
        %4738 = vmatpush1.msra.mxu0 0.0
        %4739 = vmatprep.subr.mxu0 0.0
        %4740 = vmatpush1.msra.mxu0 0.0
        %4741 = vmatprep.subr.mxu0 0.0
        %4742 = vmatpush1.msra.mxu0 0.0
        %4743 = vmatprep.subr.mxu0 0.0
        %4744 = vmatpush1.msra.mxu0 0.0
        %4745 = vmatprep.subr.mxu0 0.0
        %4746 = vmatpush1.msra.mxu0 %v4696
        %4747 = vmatprep.subr.mxu0 0.0
        %4748 = vmatpush1.msra.mxu0 %v4695
        %4749 = vmatprep.subr.mxu0 0.0
        %4750 = vmatpush1.msra.mxu0 %v4694
        %4751 = vmatprep.subr.mxu0 0.0
        %4752 = vmatpush1.msra.mxu0 %v4693
        %4753 = vmatprep.subr.mxu0 0.0
        %4754 = vmatpush2.msra.mxu0 0.0
        %4755 = vmatprep.subr.mxu0 0.0
        %4756 = vmatpush2.msra.mxu0 0.0
        %4757 = vmatprep.subr.mxu0 0.0
        %4758 = vmatpush2.msra.mxu0 0.0
        %4759 = vmatprep.subr.mxu0 0.0
        %4760 = vmatpush2.msra.mxu0 0.0
        %4761 = vmatprep.subr.mxu0 0.0
        %4762 = vmatpush2.msra.mxu0 0.0
        %4763 = vmatprep.subr.mxu0 0.0
        %4764 = vmatpush2.msra.mxu0 0.0
        %4765 = vmatprep.subr.mxu0 0.0
        %4766 = vmatpush2.msra.mxu0 0.0
        %4767 = vmatprep.subr.mxu0 0.0
        %4768 = vmatpush2.msra.mxu0 0.0
        %4769 = vmatprep.subr.mxu0 0.0
        %4770 = vmatpush2.msra.mxu0 0.0
        %4771 = vmatprep.subr.mxu0 0.0
        %4772 = vmatpush2.msra.mxu0 0.0
        %4773 = vmatprep.subr.mxu0 0.0
        %4774 = vmatpush2.msra.mxu0 0.0
        %4775 = vmatprep.subr.mxu0 0.0
        %4776 = vmatpush2.msra.mxu0 0.0
        %4777 = vmatprep.subr.mxu0 0.0
        %4778 = vmatpush2.msra.mxu0 0.0
        %4779 = vmatprep.subr.mxu0 0.0
        %4780 = vmatpush2.msra.mxu0 0.0
        %4781 = vmatprep.subr.mxu0 0.0
        %4782 = vmatpush2.msra.mxu0 0.0
        %4783 = vmatprep.subr.mxu0 0.0
        %4784 = vmatpush2.msra.mxu0 0.0
        %4785 = vmatprep.mubr.f32.mxu0 0.0
        %4786 = vmatmul.mubr.f32.gmra.mxu0 %v4716
        %v4787 = vpop.f32.mrf.mxu0
        %v4788 = vadd.f32 %v4713, %v4787
        %v4789 = vpop.f32.mrf.mxu0
        %4790 = vmatprep.mubr.f32.mxu0 0.0
        %4791 = vmatmul.mubr.f32.gmra.mxu0 %v4719
        %v4792 = vpop.f32.mrf.mxu0
        %v4793 = vadd.f32 %v4713, %v4792
        %v4794 = vpop.f32.mrf.mxu0
        %4795 = vdwg.mxu0
        %v4796 = vmax.f32 %v4788, 0.0
        %v4797 = vmax.f32 %v4793, 0.0
        %v4799 = vlaneseq
        %v4800 = vshrl.u32 %v4799, 7
        %v4801 = vsub.s32 0, %v4800
        %v4802 = vrot.slane %v4706, %v4801
        %vm4804 = vcmask 523264
        %v4806 = vsel %vm4804, %v4796, 0
        %v4809 = vsel %vm4804, %v4797, 0
        %4811 = vmatprep.subr.mxu0 0.0
        %4812 = vmatpush1.msra.mxu0 0.0
        %4813 = vmatprep.subr.mxu0 0.0
        %4814 = vmatpush1.msra.mxu0 0.0
        %4815 = vmatprep.subr.mxu0 0.0
        %4816 = vmatpush1.msra.mxu0 0.0
        %4817 = vmatprep.subr.mxu0 0.0
        %4818 = vmatpush1.msra.mxu0 0.0
        %4819 = vmatprep.subr.mxu0 0.0
        %4820 = vmatpush1.msra.mxu0 0.0
        %4821 = vmatprep.subr.mxu0 0.0
        %4822 = vmatpush1.msra.mxu0 0.0
        %4823 = vmatprep.subr.mxu0 0.0
        %4824 = vmatpush1.msra.mxu0 0.0
        %4825 = vmatprep.subr.mxu0 0.0
        %4826 = vmatpush1.msra.mxu0 0.0
        %4827 = vmatprep.subr.mxu0 0.0
        %4828 = vmatpush1.msra.mxu0 %v4705
        %4829 = vmatprep.subr.mxu0 0.0
        %4830 = vmatpush1.msra.mxu0 %v4704
        %4831 = vmatprep.subr.mxu0 0.0
        %4832 = vmatpush1.msra.mxu0 %v4703
        %4833 = vmatprep.subr.mxu0 0.0
        %4834 = vmatpush1.msra.mxu0 %v4702
        %4835 = vmatprep.subr.mxu0 0.0
        %4836 = vmatpush1.msra.mxu0 %v4701
        %4837 = vmatprep.subr.mxu0 0.0
        %4838 = vmatpush1.msra.mxu0 %v4700
        %4839 = vmatprep.subr.mxu0 0.0
        %4840 = vmatpush1.msra.mxu0 %v4699
        %4841 = vmatprep.subr.mxu0 0.0
        %4842 = vmatpush1.msra.mxu0 %v4698
        %4843 = vmatprep.subr.mxu0 0.0
        %4844 = vmatpush2.msra.mxu0 0.0
        %4845 = vmatprep.subr.mxu0 0.0
        %4846 = vmatpush2.msra.mxu0 0.0
        %4847 = vmatprep.subr.mxu0 0.0
        %4848 = vmatpush2.msra.mxu0 0.0
        %4849 = vmatprep.subr.mxu0 0.0
        %4850 = vmatpush2.msra.mxu0 0.0
        %4851 = vmatprep.subr.mxu0 0.0
        %4852 = vmatpush2.msra.mxu0 0.0
        %4853 = vmatprep.subr.mxu0 0.0
        %4854 = vmatpush2.msra.mxu0 0.0
        %4855 = vmatprep.subr.mxu0 0.0
        %4856 = vmatpush2.msra.mxu0 0.0
        %4857 = vmatprep.subr.mxu0 0.0
        %4858 = vmatpush2.msra.mxu0 0.0
        %4859 = vmatprep.subr.mxu0 0.0
        %4860 = vmatpush2.msra.mxu0 0.0
        %4861 = vmatprep.subr.mxu0 0.0
        %4862 = vmatpush2.msra.mxu0 0.0
        %4863 = vmatprep.subr.mxu0 0.0
        %4864 = vmatpush2.msra.mxu0 0.0
        %4865 = vmatprep.subr.mxu0 0.0
        %4866 = vmatpush2.msra.mxu0 0.0
        %4867 = vmatprep.subr.mxu0 0.0
        %4868 = vmatpush2.msra.mxu0 0.0
        %4869 = vmatprep.subr.mxu0 0.0
        %4870 = vmatpush2.msra.mxu0 0.0
        %4871 = vmatprep.subr.mxu0 0.0
        %4872 = vmatpush2.msra.mxu0 0.0
        %4873 = vmatprep.subr.mxu0 0.0
        %4874 = vmatpush2.msra.mxu0 0.0
        %4875 = vmatprep.mubr.f32.mxu0 0.0
        %4876 = vmatmul.mubr.f32.gmra.mxu0 %v4806
        %v4877 = vpop.f32.mrf.mxu0
        %v4878 = vadd.f32 %v4802, %v4877
        %v4879 = vpop.f32.mrf.mxu0
        %4880 = vmatprep.mubr.f32.mxu0 0.0
        %4881 = vmatmul.mubr.f32.gmra.mxu0 %v4809
        %v4882 = vpop.f32.mrf.mxu0
        %v4883 = vadd.f32 %v4802, %v4882
        %v4884 = vpop.f32.mrf.mxu0
        %4885 = vdwg.mxu0
        %v4886 = vadd.f32 %v4691, %v4878
        %v4887 = vadd.f32 %v4692, %v4883
        %v4888 = vsel %vm1348, %v4886, 0.0
        %4889 = vadd.xlane.f32.xlu0 %v4888
        %v4890 = vpop.xlane.xlu0 %4889
        %v4891 = vsel %vm1348, %v4887, 0.0
        %4892 = vadd.xlane.f32.xlu0 %v4891
        %v4893 = vpop.xlane.xlu0 %4892
        %v4894 = vmul.f32 %v4890, %v2976
        %v4895 = vmul.f32 %v4893, %v2976
        %v4896 = vsub.f32 %v4886, %v4894
        %v4897 = vsub.f32 %v4887, %v4895
        %v4898 = vmul.f32 %v4896, %v4896
        %v4899 = vmul.f32 %v4897, %v4897
        %v4900 = vsel %vm1348, %v4898, 0.0
        %4901 = vadd.xlane.f32.xlu0 %v4900
        %v4902 = vpop.xlane.xlu0 %4901
        %v4903 = vsel %vm1348, %v4899, 0.0
        %4904 = vadd.xlane.f32.xlu0 %v4903
        %v4905 = vpop.xlane.xlu0 %4904
        %v4906 = vmul.f32 %v4902, %v2976
        %v4907 = vmul.f32 %v4905, %v2976
        %v4908 = vadd.f32 %v4906, 1e-05
        %v4909 = vadd.f32 %v4907, 1e-05
        %v4910 = vrsqrt.pop %v4908
        %v4911 = vrsqrt.pop %v4909
        %v4912 = vmul.f32 %v4896, %v4910
        %v4913 = vmul.f32 %v4897, %v4911
        %v4915 = vlaneseq
        %v4916 = vshrl.u32 %v4915, 7
        %v4917 = vsub.s32 0, %v4916
        %v4918 = vrot.slane %v4707, %v4917
        %v4920 = vmul.f32 %v4912, %v4918
        %v4921 = vmul.f32 %v4913, %v4918
        %v4923 = vlaneseq
        %v4924 = vshrl.u32 %v4923, 7
        %v4925 = vsub.s32 0, %v4924
        %v4926 = vrot.slane %v4708, %v4925
        %v4928 = vadd.f32 %v4920, %v4926
        %v4929 = vadd.f32 %v4921, %v4926
        %4930 = vst.msk [vmem:[#allocation2] sm:$0xff] %vm1348, %v4928
        %4931 = vst.msk [vmem:[#allocation2 + $0x8] sm:$0xff] %vm1348, %v4929
        %4932 = vst.msk [vmem:[%s25] sm:$0xff] %vm1348, %v4928
        %4933 = vst.msk [vmem:[%s25 + $0x8] sm:$0xff] %vm1348, %v4929
        // Predicated region
        $region173: #{_transformer_forward.3} parent=119 // pred_check
          %p4934 = pneg %p705
        $region174: #{_transformer_forward.3} parent=119 // pred_check_branch
          %4936 = sbr.rel (%p4934) target = $region176
        $region175: #{_transformer_forward.3} parent=119 // pred_region
          _
        $region176: #{_transformer_forward.3} parent=119 // pred_fallthru
          _
        // Predicated region
        $region177: #{_transformer_forward.3} parent=119 // pred_check
          %p4937 = pneg %p705
        $region178: #{_transformer_forward.3} parent=119 // pred_check_branch
          %4939 = sbr.rel (%p4937) target = $region180
        $region179: #{_transformer_forward.3} parent=119 // pred_region
          _
        $region180: #{_transformer_forward.3} parent=119 // pred_fallthru
          _
      $region120: #{_transformer_forward.3} parent=5 // pred_fallthru
        _
      %p4940 = scmp.le.s32.totalorder 2, %s52
      // Predicated region
      $region181: #{_transformer_forward.3} parent=5 // pred_check
        %p4941 = pneg %p4940
      $region182: #{_transformer_forward.3} parent=5 // pred_check_branch
        %4943 = sbr.rel (%p4941) target = $region184
      $region183: #{_transformer_forward.3} parent=5 // pred_region
        %s4944 = ssub.s32 %s52, 2
      $region184: #{_transformer_forward.3} parent=5 // pred_fallthru
        _
    $region6: #{_transformer_forward.3} parent=1 // loop_footer
      %s56 = sadd.s32 1, %s52
    $region7: #{_transformer_forward.3} parent=1 // loop_footer_branch
      %51 = sbr.rel target = $region3
    $region8: #{_transformer_forward.3} parent=1 // loop_exit
      _
    %4945 = vsyncpa [#allocation5], 1
    %s4946 = scalar_lea.sflag [#allocation5], 1
    %4947 = vsyncpa %s4946, 1
    %4948 = vsyncpa [#allocation7], 1
    %s4949 = scalar_lea.sflag [#allocation7], 1
    %4950 = vsyncpa %s4949, 1
    %4951 = vsyncpa [#allocation10], 1
    %s4952 = scalar_lea.sflag [#allocation10], 1
    %4953 = vsyncpa %s4952, 1
    %4954 = vsyncpa [#allocation13], 1
    %s4955 = scalar_lea.sflag [#allocation13], 1
    %4956 = vsyncpa %s4955, 1
    %4957 = vsyncpa [#allocation16], 1
    %s4958 = scalar_lea.sflag [#allocation16], 1
    %4959 = vsyncpa %s4958, 1
    %4960 = vsyncpa [#allocation19], 1
    %s4961 = scalar_lea.sflag [#allocation19], 1
    %4962 = vsyncpa %s4961, 1
    %4963 = vsyncpa [#allocation22], 1
    %s4964 = scalar_lea.sflag [#allocation22], 1
    %4965 = vsyncpa %s4964, 1

</llo_original>
